<compile_context>
chip_gen: v7x
topology: tpu7x:2x2x1
jax: 0.10.0
libtpu: 0.0.40
codegen_flags: <defaults>
</compile_context>

<pallas_src>
import jax
import jax.numpy as jnp
from jax.experimental import pallas as pl
from jax.experimental.pallas import tpu as pltpu


LANE = 128
_VMEM_LIMIT = 32 * 1024 * 1024  # explicit scoped-VMEM limit, safe on v5e/v6e/v7x


def _ceil_to(n, m):
    return ((n + m - 1) // m) * m


# ----------------------------------------------------------------------------
# Pallas kernel 1: K-tap, unit-stride, channels-last correlation
#   out[t, :] = bias + sum_k x[t + k, :] @ W[k, :, :]
# Used (after cheap wrapper-side phase folding) for both Conv1d(s=2) and
# ConvTranspose1d(s=2).  Grid is over batch ("parallel").
# ----------------------------------------------------------------------------
def _tapconv_kernel(x_ref, w_ref, b_ref, o_ref):
    # x_ref: (Tout + K - 1, Cin)   w_ref: (K, Cin, N)   b_ref: (1, N)
    # o_ref: (Tout, N)
    ktaps = w_ref.shape[0]
    tout = o_ref.shape[0]
    acc = jnp.dot(x_ref[0:tout, :], w_ref[0],
                  preferred_element_type=jnp.float32) + b_ref[...]
    for k in range(1, ktaps):                      # K = 3, static unroll
        acc = acc + jnp.dot(x_ref[k:k + tout, :], w_ref[k],
                            preferred_element_type=jnp.float32)
    o_ref[...] = acc


def _tapconv(x, w_taps, bias, tout):
    # x: (B, Tx, Cin) with Tx = tout + K - 1;  w_taps: (K, Cin, N);  bias: (1, N)
    B, Tx, Cin = x.shape
    K, _, N = w_taps.shape
    return pl.pallas_call(
        _tapconv_kernel,
        out_shape=jax.ShapeDtypeStruct((B, tout, N), jnp.float32),
        grid=(B,),
        in_specs=[
            pl.BlockSpec((pl.Squeezed(), Tx, Cin), lambda b: (b, 0, 0)),
            pl.BlockSpec((K, Cin, N), lambda b: (0, 0, 0)),
            pl.BlockSpec((1, N), lambda b: (0, 0)),
        ],
        out_specs=pl.BlockSpec((pl.Squeezed(), tout, N), lambda b: (b, 0, 0)),
        compiler_params=pltpu.CompilerParams(
            dimension_semantics=("parallel",),
            vmem_limit_bytes=_VMEM_LIMIT,
        ),
    )(x, w_taps, bias)


# ----------------------------------------------------------------------------
# Conv1d(k=5, s=2, p=2) in channels-last:
#   fold time pairs into channels (free reshape) -> 3-tap unit-stride conv.
# ----------------------------------------------------------------------------
def conv_s2(x, w_taps, bias):
    # x: (B, Tin, cin_p);  w_taps: (3, 2*cin_p, cout_p)
    B, Tin, cin_p = x.shape
    Tout = (Tin - 1) // 2 + 1
    rpad = 2 * Tout + 2 - Tin
    xp = jnp.pad(x, ((0, 0), (2, rpad), (0, 0)))        # explicit conv padding
    z = xp.reshape(B, Tout + 2, 2 * cin_p)              # free: pairs -> lanes
    return _tapconv(z, w_taps, bias, Tout)


# ----------------------------------------------------------------------------
# ConvTranspose1d(k=5, s=2, p=2, op=1) in channels-last:
#   phase-split (sub-pixel) -> 3-tap unit-stride conv with even/odd output
#   phases packed along lanes, unpacked by a free reshape.
# ----------------------------------------------------------------------------
def deconv_s2(x, w_taps, bias):
    # x: (B, Tin, cin_p);  w_taps: (3, cin_p, 2*cout_p)
    B, Tin, cin_p = x.shape
    cout_p = w_taps.shape[2] // 2
    xp = jnp.pad(x, ((0, 0), (1, 1), (0, 0)))
    out = _tapconv(xp, w_taps, bias, Tin)               # (B, Tin, 2*cout_p)
    return out.reshape(B, 2 * Tin, cout_p)              # free phase interleave


# ----------------------------------------------------------------------------
# Pallas kernel 2: single-layer LSTM (PyTorch gate order i|f|g|o), padded to
# (8, 128)-aligned tiles, time-tiled grid with persistent (h, c) scratch.
# ----------------------------------------------------------------------------
def _lstm_kernel(x_ref, wih_ref, whh_ref, b_ref, o_ref, xg_ref, h_ref, c_ref):
    # x_ref: (Tt, Bp, Dp)  wih_ref: (Dp, 4Hp)  whh_ref: (Hp, 4Hp)  b_ref: (1, 4Hp)
    # o_ref: (Tt, Bp, Hp)  xg_ref: (Tt, Bp, 4Hp)  h_ref/c_ref: (Bp, Hp)
    Tt, Bp, Dp = x_ref.shape
    Hp = whh_ref.shape[0]

    @pl.when(pl.program_id(0) == 0)
    def _init():
        h_ref[...] = jnp.zeros_like(h_ref)
        c_ref[...] = jnp.zeros_like(c_ref)

    # Hoisted input projection + bias: one MXU-shaped matmul per time tile.
    xg = jnp.dot(x_ref[...].reshape(Tt * Bp, Dp), wih_ref[...],
                 preferred_element_type=jnp.float32) + b_ref[...]
    xg_ref[...] = xg.reshape(Tt, Bp, 4 * Hp)

    def step(t, carry):
        h, c = carry
        # single fused (Bp, Hp) x (Hp, 4Hp) recurrence matmul per step
        g = xg_ref[t] + jnp.dot(h, whh_ref[...],
                                preferred_element_type=jnp.float32)
        i = jax.nn.sigmoid(g[:, 0 * Hp:1 * Hp])
        f = jax.nn.sigmoid(g[:, 1 * Hp:2 * Hp])
        gg = jnp.tanh(g[:, 2 * Hp:3 * Hp])
        o = jax.nn.sigmoid(g[:, 3 * Hp:4 * Hp])
        c = f * c + i * gg
        h = o * jnp.tanh(c)
        o_ref[t] = h                                   # full (8,128) vst
        return h, c

    h, c = jax.lax.fori_loop(0, Tt, step, (h_ref[...], c_ref[...]), unroll=True)
    h_ref[...] = h
    c_ref[...] = c


def lstm_fwd(x, wih_p, whh_p, b_p):
    # x: (B, T, Dp) channels-last, channels zero-padded to Dp.
    B, T, Dp = x.shape
    G = wih_p.shape[1]
    Hp = whh_p.shape[0]
    Bp = max(8, _ceil_to(B, 8))
    xt = jnp.transpose(x, (1, 0, 2))                   # time-major (T, B, Dp)
    xt = jnp.pad(xt, ((0, 0), (0, Bp - B), (0, 0)))
    Tt = 8 if T % 8 == 0 else T                        # time tile
    return pl.pallas_call(
        _lstm_kernel,
        out_shape=jax.ShapeDtypeStruct((T, Bp, Hp), jnp.float32),
        grid=(T // Tt,),
        in_specs=[
            pl.BlockSpec((Tt, Bp, Dp), lambda i: (i, 0, 0)),
            pl.BlockSpec((Dp, G), lambda i: (0, 0)),
            pl.BlockSpec((Hp, G), lambda i: (0, 0)),
            pl.BlockSpec((1, G), lambda i: (0, 0)),
        ],
        out_specs=pl.BlockSpec((Tt, Bp, Hp), lambda i: (i, 0, 0)),
        scratch_shapes=[
            pltpu.VMEM((Tt, Bp, G), jnp.float32),      # precomputed x@Wih + b
            pltpu.VMEM((Bp, Hp), jnp.float32),         # h carry (persistent)
            pltpu.VMEM((Bp, Hp), jnp.float32),         # c carry (persistent)
        ],
        compiler_params=pltpu.CompilerParams(
            dimension_semantics=("arbitrary",),        # sequential recurrence
            vmem_limit_bytes=_VMEM_LIMIT,
        ),
    )(xt, wih_p, whh_p, b_p)


# ----------------------------------------------------------------------------
# One-time weight packing (PyTorch layouts -> padded, tap-fused layouts)
# ----------------------------------------------------------------------------
def pack_conv(w, b):
    # torch Conv1d weight (Cout, Cin, 5) -> tap weights (3, 2*cin_p, cout_p)
    Cout, Cin, K = w.shape
    cin_p, cout_p = _ceil_to(Cin, LANE), _ceil_to(Cout, LANE)
    wp = jnp.zeros((K, cin_p, cout_p), jnp.float32)
    wp = wp.at[:, :Cin, :Cout].set(jnp.transpose(w, (2, 1, 0)))
    V = jnp.zeros((3, 2 * cin_p, cout_p), jnp.float32)
    V = V.at[0, :cin_p].set(wp[0]).at[0, cin_p:].set(wp[1])
    V = V.at[1, :cin_p].set(wp[2]).at[1, cin_p:].set(wp[3])
    V = V.at[2, :cin_p].set(wp[4])
    bp = jnp.zeros((1, cout_p), jnp.float32).at[0, :Cout].set(b)
    return V, bp


def pack_deconv(w, b):
    # torch ConvTranspose1d weight (Cin, Cout, 5) -> (3, cin_p, 2*cout_p)
    # even phase: taps a=0,1,2 use k=4,2,0 ; odd phase: a=1,2 use k=3,1.
    Cin, Cout, K = w.shape
    cin_p, cout_p = _ceil_to(Cin, LANE), _ceil_to(Cout, LANE)
    wp = jnp.zeros((cin_p, cout_p, K), jnp.float32).at[:Cin, :Cout, :].set(w)
    V = jnp.zeros((3, cin_p, 2 * cout_p), jnp.float32)
    V = V.at[0, :, :cout_p].set(wp[:, :, 4])
    V = V.at[1, :, :cout_p].set(wp[:, :, 2])
    V = V.at[2, :, :cout_p].set(wp[:, :, 0])
    V = V.at[1, :, cout_p:].set(wp[:, :, 3])
    V = V.at[2, :, cout_p:].set(wp[:, :, 1])
    bp = jnp.zeros((1, 2 * cout_p), jnp.float32)
    bp = bp.at[0, :Cout].set(b).at[0, cout_p:cout_p + Cout].set(b)
    return V, bp


def pack_lstm(wih, whh, bih, bhh, D, H):
    Dp, Hp = _ceil_to(D, LANE), _ceil_to(H, LANE)
    G = 4 * Hp
    wih_p = jnp.zeros((Dp, G), jnp.float32)
    whh_p = jnp.zeros((Hp, G), jnp.float32)
    b_p = jnp.zeros((1, G), jnp.float32)
    for g in range(4):                                 # PyTorch order i|f|g|o
        wih_p = wih_p.at[:D, g * Hp:g * Hp + H].set(wih[g * H:(g + 1) * H, :].T)
        whh_p = whh_p.at[:H, g * Hp:g * Hp + H].set(whh[g * H:(g + 1) * H, :].T)
        b_p = b_p.at[0, g * Hp:g * Hp + H].set(
            bih[g * H:(g + 1) * H] + bhh[g * H:(g + 1) * H])
    return wih_p, whh_p, b_p


def pack_params(p, D):
    packed = {}
    for i in range(3):
        packed[f"enc{i}"] = pack_conv(p[f"enc{i}_w"], p[f"enc{i}_b"])
        packed[f"dec{i}"] = pack_deconv(p[f"dec{i}_w"], p[f"dec{i}_b"])
    wih_p, whh_p, b_p = pack_lstm(p["lstm_wih"], p["lstm_whh"],
                                  p["lstm_bih"], p["lstm_bhh"], D, D)
    packed["lstm_wih"], packed["lstm_whh"], packed["lstm_b"] = wih_p, whh_p, b_p
    return packed


# ----------------------------------------------------------------------------
# Parameter init (deterministic, PyTorch-like uniform fan-in scaling)
# ----------------------------------------------------------------------------
def init_params(key, D):
    ks = jax.random.split(key, 16)

    def u(k, shape, fan_in):
        bound = 1.0 / jnp.sqrt(jnp.float32(fan_in))
        return jax.random.uniform(k, shape, jnp.float32, -bound, bound)

    p = {}
    enc = [(D, 64), (64, 128), (128, 256)]
    for i, (cin, cout) in enumerate(enc):
        p[f"enc{i}_w"] = u(ks[2 * i], (cout, cin, 5), cin * 5)
        p[f"enc{i}_b"] = u(ks[2 * i + 1], (cout,), cin * 5)
    dec = [(256, 128), (128, 64), (64, D)]
    for i, (cin, cout) in enumerate(dec):
        p[f"dec{i}_w"] = u(ks[6 + 2 * i], (cin, cout, 5), cin * 5)
        p[f"dec{i}_b"] = u(ks[7 + 2 * i], (cout,), cin * 5)
    H = D
    p["lstm_wih"] = u(ks[12], (4 * H, D), H)
    p["lstm_whh"] = u(ks[13], (4 * H, H), H)
    p["lstm_bih"] = u(ks[14], (4 * H,), H)
    p["lstm_bhh"] = u(ks[15], (4 * H,), H)
    return p


# ----------------------------------------------------------------------------
# Full forward pass (matches LSTMConvAutoencoder4.forward)
# ----------------------------------------------------------------------------
def forward(packed, x):
    # x: (B, 1, C, T)  ->  out: (B, 1, C, T)
    B, _, C, T = x.shape
    h = jnp.transpose(x[:, 0], (0, 2, 1))              # (B, T, C) channels-last
    cin0 = packed["enc0"][0].shape[1] // 2             # lane-padded input width
    h = jnp.pad(h, ((0, 0), (0, 0), (0, cin0 - C)))
    # encoder (no activations in the reference module)
    for name in ("enc0", "enc1", "enc2"):
        h = conv_s2(h, *packed[name])
    # decoder
    for name in ("dec0", "dec1", "dec2"):
        h = deconv_s2(h, *packed[name])
    # LSTM over (B, T, C) -- already channels-last, no transpose needed
    y = lstm_fwd(h, packed["lstm_wih"], packed["lstm_whh"], packed["lstm_b"])
    y = y[:, :B, :C]                                   # (T, B, C) un-pad
    return jnp.transpose(y, (1, 2, 0))[:, None]        # (B, 1, C, T)


if __name__ == "__main__":
    B, D, T = 2, 18, 16  # input_dim=18 (module default), small seq length
    key = jax.random.PRNGKey(0)
    pkey, xkey = jax.random.split(key)
    params = init_params(pkey, D)
    packed = pack_params(params, D)                    # one-time weight packing
    x = jax.random.normal(xkey, (B, 1, D, T), jnp.float32)

    out = jax.jit(forward)(packed, x)
    out = jax.block_until_ready(out)
    assert out.shape == (B, 1, D, T), out.shape
    assert out.dtype == jnp.float32
    print("KERNEL_OK")
</pallas_src>

<mosaic_0001>
module attributes {stable_mosaic.version = 11 : i64} {
  func.func @_tapconv_kernel(%arg0: i32, %arg1: memref<1x10x256xf32, #tpu.memory_space<vmem>>, %arg2: memref<3x256x128xf32, #tpu.memory_space<vmem>>, %arg3: memref<1x128xf32, #tpu.memory_space<vmem>>, %arg4: memref<1x8x128xf32, #tpu.memory_space<vmem>>) attributes {dimension_semantics = [#tpu.dimension_semantics<parallel>], iteration_bounds = array<i64: 2>, scalar_prefetch = 0 : i64, scratch_operands = 0 : i64, tpu.core_type = #tpu.core_type<tc>, window_params = [{transform_indices = @transform_0, window_bounds = array<i64: 1, 10, 256>}, {pipeline_mode = #tpu.pipeline_mode<synchronous>, transform_indices = @transform_1, window_bounds = array<i64: 3, 256, 128>}, {pipeline_mode = #tpu.pipeline_mode<synchronous>, transform_indices = @transform_2, window_bounds = array<i64: 1, 128>}, {transform_indices = @transform_3, window_bounds = array<i64: 1, 8, 128>}]} {
    %c0 = arith.constant 0 : index
    %c0_0 = arith.constant 0 : index
    %c0_1 = arith.constant 0 : index
    %0 = vector.load %arg1[%c0, %c0_0, %c0_1] : memref<1x10x256xf32, #tpu.memory_space<vmem>>, vector<1x8x256xf32>
    %1 = vector.shape_cast %0 : vector<1x8x256xf32> to vector<8x256xf32>
    %c0_2 = arith.constant 0 : index
    %c0_3 = arith.constant 0 : index
    %c0_4 = arith.constant 0 : index
    %2 = vector.load %arg2[%c0_2, %c0_3, %c0_4] : memref<3x256x128xf32, #tpu.memory_space<vmem>>, vector<1x256x128xf32>
    %3 = vector.shape_cast %2 : vector<1x256x128xf32> to vector<256x128xf32>
    %cst = arith.constant dense<0.000000e+00> : vector<8x128xf32>
    %4 = tpu.matmul %1, %3, %cst {dimension_numbers = #tpu.dot_dimension_numbers<[1], [0], [0], [1], [0, 0, 1, 1], [], []>} : vector<8x256xf32>, vector<256x128xf32>, vector<8x128xf32> -> vector<8x128xf32>
    %c0_5 = arith.constant 0 : index
    %c0_6 = arith.constant 0 : index
    %5 = vector.load %arg3[%c0_5, %c0_6] : memref<1x128xf32, #tpu.memory_space<vmem>>, vector<1x128xf32>
    %6 = vector.broadcast %5 : vector<1x128xf32> to vector<8x128xf32>
    %7 = arith.addf %4, %6 : vector<8x128xf32>
    %c0_7 = arith.constant 0 : index
    %c1 = arith.constant 1 : index
    %c0_8 = arith.constant 0 : index
    %8 = vector.load %arg1[%c0_7, %c1, %c0_8] : memref<1x10x256xf32, #tpu.memory_space<vmem>>, vector<1x8x256xf32>
    %9 = vector.shape_cast %8 : vector<1x8x256xf32> to vector<8x256xf32>
    %c1_9 = arith.constant 1 : index
    %c0_10 = arith.constant 0 : index
    %c0_11 = arith.constant 0 : index
    %10 = vector.load %arg2[%c1_9, %c0_10, %c0_11] : memref<3x256x128xf32, #tpu.memory_space<vmem>>, vector<1x256x128xf32>
    %11 = vector.shape_cast %10 : vector<1x256x128xf32> to vector<256x128xf32>
    %cst_12 = arith.constant dense<0.000000e+00> : vector<8x128xf32>
    %12 = tpu.matmul %9, %11, %cst_12 {dimension_numbers = #tpu.dot_dimension_numbers<[1], [0], [0], [1], [0, 0, 1, 1], [], []>} : vector<8x256xf32>, vector<256x128xf32>, vector<8x128xf32> -> vector<8x128xf32>
    %13 = arith.addf %7, %12 : vector<8x128xf32>
    %c0_13 = arith.constant 0 : index
    %c2 = arith.constant 2 : index
    %c0_14 = arith.constant 0 : index
    %14 = vector.load %arg1[%c0_13, %c2, %c0_14] : memref<1x10x256xf32, #tpu.memory_space<vmem>>, vector<1x8x256xf32>
    %15 = vector.shape_cast %14 : vector<1x8x256xf32> to vector<8x256xf32>
    %c2_15 = arith.constant 2 : index
    %c0_16 = arith.constant 0 : index
    %c0_17 = arith.constant 0 : index
    %16 = vector.load %arg2[%c2_15, %c0_16, %c0_17] : memref<3x256x128xf32, #tpu.memory_space<vmem>>, vector<1x256x128xf32>
    %17 = vector.shape_cast %16 : vector<1x256x128xf32> to vector<256x128xf32>
    %cst_18 = arith.constant dense<0.000000e+00> : vector<8x128xf32>
    %18 = tpu.matmul %15, %17, %cst_18 {dimension_numbers = #tpu.dot_dimension_numbers<[1], [0], [0], [1], [0, 0, 1, 1], [], []>} : vector<8x256xf32>, vector<256x128xf32>, vector<8x128xf32> -> vector<8x128xf32>
    %19 = arith.addf %13, %18 : vector<8x128xf32>
    %c0_19 = arith.constant 0 : index
    %c0_20 = arith.constant 0 : index
    %c0_21 = arith.constant 0 : index
    %20 = vector.load %arg4[%c0_19, %c0_20, %c0_21] : memref<1x8x128xf32, #tpu.memory_space<vmem>>, vector<1x8x128xf32>
    %21 = vector.shape_cast %20 : vector<1x8x128xf32> to vector<8x128xf32>
    %22 = vector.shape_cast %19 : vector<8x128xf32> to vector<1x8x128xf32>
    tpu.vector_store %arg4[%c0_19, %c0_20, %c0_21], %22 {strides = array<i32>} : memref<1x8x128xf32, #tpu.memory_space<vmem>>, vector<1x8x128xf32>,
    return
  }
  func.func @transform_0(%arg0: i32) -> (i32, i32, i32) {
    %c0_i32 = arith.constant 0 : i32
    %c0_i32_0 = arith.constant 0 : i32
    %c0_i32_1 = arith.constant 0 : i32
    return %arg0, %c0_i32, %c0_i32_0 : i32, i32, i32
  }
  func.func @transform_1(%arg0: i32) -> (i32, i32, i32) {
    %c0_i32 = arith.constant 0 : i32
    %c0_i32_0 = arith.constant 0 : i32
    %c0_i32_1 = arith.constant 0 : i32
    %c0_i32_2 = arith.constant 0 : i32
    return %c0_i32, %c0_i32_0, %c0_i32_1 : i32, i32, i32
  }
  func.func @transform_2(%arg0: i32) -> (i32, i32) {
    %c0_i32 = arith.constant 0 : i32
    %c0_i32_0 = arith.constant 0 : i32
    %c0_i32_1 = arith.constant 0 : i32
    return %c0_i32, %c0_i32_0 : i32, i32
  }
  func.func @transform_3(%arg0: i32) -> (i32, i32, i32) {
    %c0_i32 = arith.constant 0 : i32
    %c0_i32_0 = arith.constant 0 : i32
    %c0_i32_1 = arith.constant 0 : i32
    return %arg0, %c0_i32, %c0_i32_0 : i32, i32, i32
  }
}

module attributes {stable_mosaic.version = 11 : i64} {
  func.func @_tapconv_kernel(%arg0: i32, %arg1: memref<1x6x256xf32, #tpu.memory_space<vmem>>, %arg2: memref<3x256x128xf32, #tpu.memory_space<vmem>>, %arg3: memref<1x128xf32, #tpu.memory_space<vmem>>, %arg4: memref<1x4x128xf32, #tpu.memory_space<vmem>>) attributes {dimension_semantics = [#tpu.dimension_semantics<parallel>], iteration_bounds = array<i64: 2>, scalar_prefetch = 0 : i64, scratch_operands = 0 : i64, tpu.core_type = #tpu.core_type<tc>, window_params = [{transform_indices = @transform_0, window_bounds = array<i64: 1, 6, 256>}, {pipeline_mode = #tpu.pipeline_mode<synchronous>, transform_indices = @transform_1, window_bounds = array<i64: 3, 256, 128>}, {pipeline_mode = #tpu.pipeline_mode<synchronous>, transform_indices = @transform_2, window_bounds = array<i64: 1, 128>}, {transform_indices = @transform_3, window_bounds = array<i64: 1, 4, 128>}]} {
    %c0 = arith.constant 0 : index
    %c0_0 = arith.constant 0 : index
    %c0_1 = arith.constant 0 : index
    %0 = vector.load %arg1[%c0, %c0_0, %c0_1] : memref<1x6x256xf32, #tpu.memory_space<vmem>>, vector<1x4x256xf32>
    %1 = vector.shape_cast %0 : vector<1x4x256xf32> to vector<4x256xf32>
    %c0_2 = arith.constant 0 : index
    %c0_3 = arith.constant 0 : index
    %c0_4 = arith.constant 0 : index
    %2 = vector.load %arg2[%c0_2, %c0_3, %c0_4] : memref<3x256x128xf32, #tpu.memory_space<vmem>>, vector<1x256x128xf32>
    %3 = vector.shape_cast %2 : vector<1x256x128xf32> to vector<256x128xf32>
    %cst = arith.constant dense<0.000000e+00> : vector<4x128xf32>
    %4 = tpu.matmul %1, %3, %cst {dimension_numbers = #tpu.dot_dimension_numbers<[1], [0], [0], [1], [0, 0, 1, 1], [], []>} : vector<4x256xf32>, vector<256x128xf32>, vector<4x128xf32> -> vector<4x128xf32>
    %c0_5 = arith.constant 0 : index
    %c0_6 = arith.constant 0 : index
    %5 = vector.load %arg3[%c0_5, %c0_6] : memref<1x128xf32, #tpu.memory_space<vmem>>, vector<1x128xf32>
    %6 = vector.broadcast %5 : vector<1x128xf32> to vector<4x128xf32>
    %7 = arith.addf %4, %6 : vector<4x128xf32>
    %c0_7 = arith.constant 0 : index
    %c1 = arith.constant 1 : index
    %c0_8 = arith.constant 0 : index
    %8 = vector.load %arg1[%c0_7, %c1, %c0_8] : memref<1x6x256xf32, #tpu.memory_space<vmem>>, vector<1x4x256xf32>
    %9 = vector.shape_cast %8 : vector<1x4x256xf32> to vector<4x256xf32>
    %c1_9 = arith.constant 1 : index
    %c0_10 = arith.constant 0 : index
    %c0_11 = arith.constant 0 : index
    %10 = vector.load %arg2[%c1_9, %c0_10, %c0_11] : memref<3x256x128xf32, #tpu.memory_space<vmem>>, vector<1x256x128xf32>
    %11 = vector.shape_cast %10 : vector<1x256x128xf32> to vector<256x128xf32>
    %cst_12 = arith.constant dense<0.000000e+00> : vector<4x128xf32>
    %12 = tpu.matmul %9, %11, %cst_12 {dimension_numbers = #tpu.dot_dimension_numbers<[1], [0], [0], [1], [0, 0, 1, 1], [], []>} : vector<4x256xf32>, vector<256x128xf32>, vector<4x128xf32> -> vector<4x128xf32>
    %13 = arith.addf %7, %12 : vector<4x128xf32>
    %c0_13 = arith.constant 0 : index
    %c2 = arith.constant 2 : index
    %c0_14 = arith.constant 0 : index
    %14 = vector.load %arg1[%c0_13, %c2, %c0_14] : memref<1x6x256xf32, #tpu.memory_space<vmem>>, vector<1x4x256xf32>
    %15 = vector.shape_cast %14 : vector<1x4x256xf32> to vector<4x256xf32>
    %c2_15 = arith.constant 2 : index
    %c0_16 = arith.constant 0 : index
    %c0_17 = arith.constant 0 : index
    %16 = vector.load %arg2[%c2_15, %c0_16, %c0_17] : memref<3x256x128xf32, #tpu.memory_space<vmem>>, vector<1x256x128xf32>
    %17 = vector.shape_cast %16 : vector<1x256x128xf32> to vector<256x128xf32>
    %cst_18 = arith.constant dense<0.000000e+00> : vector<4x128xf32>
    %18 = tpu.matmul %15, %17, %cst_18 {dimension_numbers = #tpu.dot_dimension_numbers<[1], [0], [0], [1], [0, 0, 1, 1], [], []>} : vector<4x256xf32>, vector<256x128xf32>, vector<4x128xf32> -> vector<4x128xf32>
    %19 = arith.addf %13, %18 : vector<4x128xf32>
    %c0_19 = arith.constant 0 : index
    %c0_20 = arith.constant 0 : index
    %c0_21 = arith.constant 0 : index
    %20 = vector.load %arg4[%c0_19, %c0_20, %c0_21] : memref<1x4x128xf32, #tpu.memory_space<vmem>>, vector<1x4x128xf32>
    %21 = vector.shape_cast %20 : vector<1x4x128xf32> to vector<4x128xf32>
    %22 = vector.shape_cast %19 : vector<4x128xf32> to vector<1x4x128xf32>
    tpu.vector_store %arg4[%c0_19, %c0_20, %c0_21], %22 {strides = array<i32>} : memref<1x4x128xf32, #tpu.memory_space<vmem>>, vector<1x4x128xf32>,
    return
  }
  func.func @transform_0(%arg0: i32) -> (i32, i32, i32) {
    %c0_i32 = arith.constant 0 : i32
    %c0_i32_0 = arith.constant 0 : i32
    %c0_i32_1 = arith.constant 0 : i32
    return %arg0, %c0_i32, %c0_i32_0 : i32, i32, i32
  }
  func.func @transform_1(%arg0: i32) -> (i32, i32, i32) {
    %c0_i32 = arith.constant 0 : i32
    %c0_i32_0 = arith.constant 0 : i32
    %c0_i32_1 = arith.constant 0 : i32
    %c0_i32_2 = arith.constant 0 : i32
    return %c0_i32, %c0_i32_0, %c0_i32_1 : i32, i32, i32
  }
  func.func @transform_2(%arg0: i32) -> (i32, i32) {
    %c0_i32 = arith.constant 0 : i32
    %c0_i32_0 = arith.constant 0 : i32
    %c0_i32_1 = arith.constant 0 : i32
    return %c0_i32, %c0_i32_0 : i32, i32
  }
  func.func @transform_3(%arg0: i32) -> (i32, i32, i32) {
    %c0_i32 = arith.constant 0 : i32
    %c0_i32_0 = arith.constant 0 : i32
    %c0_i32_1 = arith.constant 0 : i32
    return %arg0, %c0_i32, %c0_i32_0 : i32, i32, i32
  }
}

module attributes {stable_mosaic.version = 11 : i64} {
  func.func @_tapconv_kernel(%arg0: i32, %arg1: memref<1x4x256xf32, #tpu.memory_space<vmem>>, %arg2: memref<3x256x256xf32, #tpu.memory_space<vmem>>, %arg3: memref<1x256xf32, #tpu.memory_space<vmem>>, %arg4: memref<1x2x256xf32, #tpu.memory_space<vmem>>) attributes {dimension_semantics = [#tpu.dimension_semantics<parallel>], iteration_bounds = array<i64: 2>, scalar_prefetch = 0 : i64, scratch_operands = 0 : i64, tpu.core_type = #tpu.core_type<tc>, window_params = [{transform_indices = @transform_0, window_bounds = array<i64: 1, 4, 256>}, {pipeline_mode = #tpu.pipeline_mode<synchronous>, transform_indices = @transform_1, window_bounds = array<i64: 3, 256, 256>}, {pipeline_mode = #tpu.pipeline_mode<synchronous>, transform_indices = @transform_2, window_bounds = array<i64: 1, 256>}, {transform_indices = @transform_3, window_bounds = array<i64: 1, 2, 256>}]} {
    %c0 = arith.constant 0 : index
    %c0_0 = arith.constant 0 : index
    %c0_1 = arith.constant 0 : index
    %0 = vector.load %arg1[%c0, %c0_0, %c0_1] : memref<1x4x256xf32, #tpu.memory_space<vmem>>, vector<1x2x256xf32>
    %1 = vector.shape_cast %0 : vector<1x2x256xf32> to vector<2x256xf32>
    %c0_2 = arith.constant 0 : index
    %c0_3 = arith.constant 0 : index
    %c0_4 = arith.constant 0 : index
    %2 = vector.load %arg2[%c0_2, %c0_3, %c0_4] : memref<3x256x256xf32, #tpu.memory_space<vmem>>, vector<1x256x256xf32>
    %3 = vector.shape_cast %2 : vector<1x256x256xf32> to vector<256x256xf32>
    %cst = arith.constant dense<0.000000e+00> : vector<2x256xf32>
    %4 = tpu.matmul %1, %3, %cst {dimension_numbers = #tpu.dot_dimension_numbers<[1], [0], [0], [1], [0, 0, 1, 1], [], []>} : vector<2x256xf32>, vector<256x256xf32>, vector<2x256xf32> -> vector<2x256xf32>
    %c0_5 = arith.constant 0 : index
    %c0_6 = arith.constant 0 : index
    %5 = vector.load %arg3[%c0_5, %c0_6] : memref<1x256xf32, #tpu.memory_space<vmem>>, vector<1x256xf32>
    %6 = vector.broadcast %5 : vector<1x256xf32> to vector<2x256xf32>
    %7 = arith.addf %4, %6 : vector<2x256xf32>
    %c0_7 = arith.constant 0 : index
    %c1 = arith.constant 1 : index
    %c0_8 = arith.constant 0 : index
    %8 = vector.load %arg1[%c0_7, %c1, %c0_8] : memref<1x4x256xf32, #tpu.memory_space<vmem>>, vector<1x2x256xf32>
    %9 = vector.shape_cast %8 : vector<1x2x256xf32> to vector<2x256xf32>
    %c1_9 = arith.constant 1 : index
    %c0_10 = arith.constant 0 : index
    %c0_11 = arith.constant 0 : index
    %10 = vector.load %arg2[%c1_9, %c0_10, %c0_11] : memref<3x256x256xf32, #tpu.memory_space<vmem>>, vector<1x256x256xf32>
    %11 = vector.shape_cast %10 : vector<1x256x256xf32> to vector<256x256xf32>
    %cst_12 = arith.constant dense<0.000000e+00> : vector<2x256xf32>
    %12 = tpu.matmul %9, %11, %cst_12 {dimension_numbers = #tpu.dot_dimension_numbers<[1], [0], [0], [1], [0, 0, 1, 1], [], []>} : vector<2x256xf32>, vector<256x256xf32>, vector<2x256xf32> -> vector<2x256xf32>
    %13 = arith.addf %7, %12 : vector<2x256xf32>
    %c0_13 = arith.constant 0 : index
    %c2 = arith.constant 2 : index
    %c0_14 = arith.constant 0 : index
    %14 = vector.load %arg1[%c0_13, %c2, %c0_14] : memref<1x4x256xf32, #tpu.memory_space<vmem>>, vector<1x2x256xf32>
    %15 = vector.shape_cast %14 : vector<1x2x256xf32> to vector<2x256xf32>
    %c2_15 = arith.constant 2 : index
    %c0_16 = arith.constant 0 : index
    %c0_17 = arith.constant 0 : index
    %16 = vector.load %arg2[%c2_15, %c0_16, %c0_17] : memref<3x256x256xf32, #tpu.memory_space<vmem>>, vector<1x256x256xf32>
    %17 = vector.shape_cast %16 : vector<1x256x256xf32> to vector<256x256xf32>
    %cst_18 = arith.constant dense<0.000000e+00> : vector<2x256xf32>
    %18 = tpu.matmul %15, %17, %cst_18 {dimension_numbers = #tpu.dot_dimension_numbers<[1], [0], [0], [1], [0, 0, 1, 1], [], []>} : vector<2x256xf32>, vector<256x256xf32>, vector<2x256xf32> -> vector<2x256xf32>
    %19 = arith.addf %13, %18 : vector<2x256xf32>
    %c0_19 = arith.constant 0 : index
    %c0_20 = arith.constant 0 : index
    %c0_21 = arith.constant 0 : index
    %20 = vector.load %arg4[%c0_19, %c0_20, %c0_21] : memref<1x2x256xf32, #tpu.memory_space<vmem>>, vector<1x2x256xf32>
    %21 = vector.shape_cast %20 : vector<1x2x256xf32> to vector<2x256xf32>
    %22 = vector.shape_cast %19 : vector<2x256xf32> to vector<1x2x256xf32>
    tpu.vector_store %arg4[%c0_19, %c0_20, %c0_21], %22 {strides = array<i32>} : memref<1x2x256xf32, #tpu.memory_space<vmem>>, vector<1x2x256xf32>,
    return
  }
  func.func @transform_0(%arg0: i32) -> (i32, i32, i32) {
    %c0_i32 = arith.constant 0 : i32
    %c0_i32_0 = arith.constant 0 : i32
    %c0_i32_1 = arith.constant 0 : i32
    return %arg0, %c0_i32, %c0_i32_0 : i32, i32, i32
  }
  func.func @transform_1(%arg0: i32) -> (i32, i32, i32) {
    %c0_i32 = arith.constant 0 : i32
    %c0_i32_0 = arith.constant 0 : i32
    %c0_i32_1 = arith.constant 0 : i32
    %c0_i32_2 = arith.constant 0 : i32
    return %c0_i32, %c0_i32_0, %c0_i32_1 : i32, i32, i32
  }
  func.func @transform_2(%arg0: i32) -> (i32, i32) {
    %c0_i32 = arith.constant 0 : i32
    %c0_i32_0 = arith.constant 0 : i32
    %c0_i32_1 = arith.constant 0 : i32
    return %c0_i32, %c0_i32_0 : i32, i32
  }
  func.func @transform_3(%arg0: i32) -> (i32, i32, i32) {
    %c0_i32 = arith.constant 0 : i32
    %c0_i32_0 = arith.constant 0 : i32
    %c0_i32_1 = arith.constant 0 : i32
    return %arg0, %c0_i32, %c0_i32_0 : i32, i32, i32
  }
}

module attributes {stable_mosaic.version = 11 : i64} {
  func.func @_tapconv_kernel(%arg0: i32, %arg1: memref<1x6x128xf32, #tpu.memory_space<vmem>>, %arg2: memref<3x128x256xf32, #tpu.memory_space<vmem>>, %arg3: memref<1x256xf32, #tpu.memory_space<vmem>>, %arg4: memref<1x4x256xf32, #tpu.memory_space<vmem>>) attributes {dimension_semantics = [#tpu.dimension_semantics<parallel>], iteration_bounds = array<i64: 2>, scalar_prefetch = 0 : i64, scratch_operands = 0 : i64, tpu.core_type = #tpu.core_type<tc>, window_params = [{transform_indices = @transform_0, window_bounds = array<i64: 1, 6, 128>}, {pipeline_mode = #tpu.pipeline_mode<synchronous>, transform_indices = @transform_1, window_bounds = array<i64: 3, 128, 256>}, {pipeline_mode = #tpu.pipeline_mode<synchronous>, transform_indices = @transform_2, window_bounds = array<i64: 1, 256>}, {transform_indices = @transform_3, window_bounds = array<i64: 1, 4, 256>}]} {
    %c0 = arith.constant 0 : index
    %c0_0 = arith.constant 0 : index
    %c0_1 = arith.constant 0 : index
    %0 = vector.load %arg1[%c0, %c0_0, %c0_1] : memref<1x6x128xf32, #tpu.memory_space<vmem>>, vector<1x4x128xf32>
    %1 = vector.shape_cast %0 : vector<1x4x128xf32> to vector<4x128xf32>
    %c0_2 = arith.constant 0 : index
    %c0_3 = arith.constant 0 : index
    %c0_4 = arith.constant 0 : index
    %2 = vector.load %arg2[%c0_2, %c0_3, %c0_4] : memref<3x128x256xf32, #tpu.memory_space<vmem>>, vector<1x128x256xf32>
    %3 = vector.shape_cast %2 : vector<1x128x256xf32> to vector<128x256xf32>
    %cst = arith.constant dense<0.000000e+00> : vector<4x256xf32>
    %4 = tpu.matmul %1, %3, %cst {dimension_numbers = #tpu.dot_dimension_numbers<[1], [0], [0], [1], [0, 0, 1, 1], [], []>} : vector<4x128xf32>, vector<128x256xf32>, vector<4x256xf32> -> vector<4x256xf32>
    %c0_5 = arith.constant 0 : index
    %c0_6 = arith.constant 0 : index
    %5 = vector.load %arg3[%c0_5, %c0_6] : memref<1x256xf32, #tpu.memory_space<vmem>>, vector<1x256xf32>
    %6 = vector.broadcast %5 : vector<1x256xf32> to vector<4x256xf32>
    %7 = arith.addf %4, %6 : vector<4x256xf32>
    %c0_7 = arith.constant 0 : index
    %c1 = arith.constant 1 : index
    %c0_8 = arith.constant 0 : index
    %8 = vector.load %arg1[%c0_7, %c1, %c0_8] : memref<1x6x128xf32, #tpu.memory_space<vmem>>, vector<1x4x128xf32>
    %9 = vector.shape_cast %8 : vector<1x4x128xf32> to vector<4x128xf32>
    %c1_9 = arith.constant 1 : index
    %c0_10 = arith.constant 0 : index
    %c0_11 = arith.constant 0 : index
    %10 = vector.load %arg2[%c1_9, %c0_10, %c0_11] : memref<3x128x256xf32, #tpu.memory_space<vmem>>, vector<1x128x256xf32>
    %11 = vector.shape_cast %10 : vector<1x128x256xf32> to vector<128x256xf32>
    %cst_12 = arith.constant dense<0.000000e+00> : vector<4x256xf32>
    %12 = tpu.matmul %9, %11, %cst_12 {dimension_numbers = #tpu.dot_dimension_numbers<[1], [0], [0], [1], [0, 0, 1, 1], [], []>} : vector<4x128xf32>, vector<128x256xf32>, vector<4x256xf32> -> vector<4x256xf32>
    %13 = arith.addf %7, %12 : vector<4x256xf32>
    %c0_13 = arith.constant 0 : index
    %c2 = arith.constant 2 : index
    %c0_14 = arith.constant 0 : index
    %14 = vector.load %arg1[%c0_13, %c2, %c0_14] : memref<1x6x128xf32, #tpu.memory_space<vmem>>, vector<1x4x128xf32>
    %15 = vector.shape_cast %14 : vector<1x4x128xf32> to vector<4x128xf32>
    %c2_15 = arith.constant 2 : index
    %c0_16 = arith.constant 0 : index
    %c0_17 = arith.constant 0 : index
    %16 = vector.load %arg2[%c2_15, %c0_16, %c0_17] : memref<3x128x256xf32, #tpu.memory_space<vmem>>, vector<1x128x256xf32>
    %17 = vector.shape_cast %16 : vector<1x128x256xf32> to vector<128x256xf32>
    %cst_18 = arith.constant dense<0.000000e+00> : vector<4x256xf32>
    %18 = tpu.matmul %15, %17, %cst_18 {dimension_numbers = #tpu.dot_dimension_numbers<[1], [0], [0], [1], [0, 0, 1, 1], [], []>} : vector<4x128xf32>, vector<128x256xf32>, vector<4x256xf32> -> vector<4x256xf32>
    %19 = arith.addf %13, %18 : vector<4x256xf32>
    %c0_19 = arith.constant 0 : index
    %c0_20 = arith.constant 0 : index
    %c0_21 = arith.constant 0 : index
    %20 = vector.load %arg4[%c0_19, %c0_20, %c0_21] : memref<1x4x256xf32, #tpu.memory_space<vmem>>, vector<1x4x256xf32>
    %21 = vector.shape_cast %20 : vector<1x4x256xf32> to vector<4x256xf32>
    %22 = vector.shape_cast %19 : vector<4x256xf32> to vector<1x4x256xf32>
    tpu.vector_store %arg4[%c0_19, %c0_20, %c0_21], %22 {strides = array<i32>} : memref<1x4x256xf32, #tpu.memory_space<vmem>>, vector<1x4x256xf32>,
    return
  }
  func.func @transform_0(%arg0: i32) -> (i32, i32, i32) {
    %c0_i32 = arith.constant 0 : i32
    %c0_i32_0 = arith.constant 0 : i32
    %c0_i32_1 = arith.constant 0 : i32
    return %arg0, %c0_i32, %c0_i32_0 : i32, i32, i32
  }
  func.func @transform_1(%arg0: i32) -> (i32, i32, i32) {
    %c0_i32 = arith.constant 0 : i32
    %c0_i32_0 = arith.constant 0 : i32
    %c0_i32_1 = arith.constant 0 : i32
    %c0_i32_2 = arith.constant 0 : i32
    return %c0_i32, %c0_i32_0, %c0_i32_1 : i32, i32, i32
  }
  func.func @transform_2(%arg0: i32) -> (i32, i32) {
    %c0_i32 = arith.constant 0 : i32
    %c0_i32_0 = arith.constant 0 : i32
    %c0_i32_1 = arith.constant 0 : i32
    return %c0_i32, %c0_i32_0 : i32, i32
  }
  func.func @transform_3(%arg0: i32) -> (i32, i32, i32) {
    %c0_i32 = arith.constant 0 : i32
    %c0_i32_0 = arith.constant 0 : i32
    %c0_i32_1 = arith.constant 0 : i32
    return %arg0, %c0_i32, %c0_i32_0 : i32, i32, i32
  }
}

module attributes {stable_mosaic.version = 11 : i64} {
  func.func @_tapconv_kernel(%arg0: i32, %arg1: memref<1x10x128xf32, #tpu.memory_space<vmem>>, %arg2: memref<3x128x256xf32, #tpu.memory_space<vmem>>, %arg3: memref<1x256xf32, #tpu.memory_space<vmem>>, %arg4: memref<1x8x256xf32, #tpu.memory_space<vmem>>) attributes {dimension_semantics = [#tpu.dimension_semantics<parallel>], iteration_bounds = array<i64: 2>, scalar_prefetch = 0 : i64, scratch_operands = 0 : i64, tpu.core_type = #tpu.core_type<tc>, window_params = [{transform_indices = @transform_0, window_bounds = array<i64: 1, 10, 128>}, {pipeline_mode = #tpu.pipeline_mode<synchronous>, transform_indices = @transform_1, window_bounds = array<i64: 3, 128, 256>}, {pipeline_mode = #tpu.pipeline_mode<synchronous>, transform_indices = @transform_2, window_bounds = array<i64: 1, 256>}, {transform_indices = @transform_3, window_bounds = array<i64: 1, 8, 256>}]} {
    %c0 = arith.constant 0 : index
    %c0_0 = arith.constant 0 : index
    %c0_1 = arith.constant 0 : index
    %0 = vector.load %arg1[%c0, %c0_0, %c0_1] : memref<1x10x128xf32, #tpu.memory_space<vmem>>, vector<1x8x128xf32>
    %1 = vector.shape_cast %0 : vector<1x8x128xf32> to vector<8x128xf32>
    %c0_2 = arith.constant 0 : index
    %c0_3 = arith.constant 0 : index
    %c0_4 = arith.constant 0 : index
    %2 = vector.load %arg2[%c0_2, %c0_3, %c0_4] : memref<3x128x256xf32, #tpu.memory_space<vmem>>, vector<1x128x256xf32>
    %3 = vector.shape_cast %2 : vector<1x128x256xf32> to vector<128x256xf32>
    %cst = arith.constant dense<0.000000e+00> : vector<8x256xf32>
    %4 = tpu.matmul %1, %3, %cst {dimension_numbers = #tpu.dot_dimension_numbers<[1], [0], [0], [1], [0, 0, 1, 1], [], []>} : vector<8x128xf32>, vector<128x256xf32>, vector<8x256xf32> -> vector<8x256xf32>
    %c0_5 = arith.constant 0 : index
    %c0_6 = arith.constant 0 : index
    %5 = vector.load %arg3[%c0_5, %c0_6] : memref<1x256xf32, #tpu.memory_space<vmem>>, vector<1x256xf32>
    %6 = vector.broadcast %5 : vector<1x256xf32> to vector<8x256xf32>
    %7 = arith.addf %4, %6 : vector<8x256xf32>
    %c0_7 = arith.constant 0 : index
    %c1 = arith.constant 1 : index
    %c0_8 = arith.constant 0 : index
    %8 = vector.load %arg1[%c0_7, %c1, %c0_8] : memref<1x10x128xf32, #tpu.memory_space<vmem>>, vector<1x8x128xf32>
    %9 = vector.shape_cast %8 : vector<1x8x128xf32> to vector<8x128xf32>
    %c1_9 = arith.constant 1 : index
    %c0_10 = arith.constant 0 : index
    %c0_11 = arith.constant 0 : index
    %10 = vector.load %arg2[%c1_9, %c0_10, %c0_11] : memref<3x128x256xf32, #tpu.memory_space<vmem>>, vector<1x128x256xf32>
    %11 = vector.shape_cast %10 : vector<1x128x256xf32> to vector<128x256xf32>
    %cst_12 = arith.constant dense<0.000000e+00> : vector<8x256xf32>
    %12 = tpu.matmul %9, %11, %cst_12 {dimension_numbers = #tpu.dot_dimension_numbers<[1], [0], [0], [1], [0, 0, 1, 1], [], []>} : vector<8x128xf32>, vector<128x256xf32>, vector<8x256xf32> -> vector<8x256xf32>
    %13 = arith.addf %7, %12 : vector<8x256xf32>
    %c0_13 = arith.constant 0 : index
    %c2 = arith.constant 2 : index
    %c0_14 = arith.constant 0 : index
    %14 = vector.load %arg1[%c0_13, %c2, %c0_14] : memref<1x10x128xf32, #tpu.memory_space<vmem>>, vector<1x8x128xf32>
    %15 = vector.shape_cast %14 : vector<1x8x128xf32> to vector<8x128xf32>
    %c2_15 = arith.constant 2 : index
    %c0_16 = arith.constant 0 : index
    %c0_17 = arith.constant 0 : index
    %16 = vector.load %arg2[%c2_15, %c0_16, %c0_17] : memref<3x128x256xf32, #tpu.memory_space<vmem>>, vector<1x128x256xf32>
    %17 = vector.shape_cast %16 : vector<1x128x256xf32> to vector<128x256xf32>
    %cst_18 = arith.constant dense<0.000000e+00> : vector<8x256xf32>
    %18 = tpu.matmul %15, %17, %cst_18 {dimension_numbers = #tpu.dot_dimension_numbers<[1], [0], [0], [1], [0, 0, 1, 1], [], []>} : vector<8x128xf32>, vector<128x256xf32>, vector<8x256xf32> -> vector<8x256xf32>
    %19 = arith.addf %13, %18 : vector<8x256xf32>
    %c0_19 = arith.constant 0 : index
    %c0_20 = arith.constant 0 : index
    %c0_21 = arith.constant 0 : index
    %20 = vector.load %arg4[%c0_19, %c0_20, %c0_21] : memref<1x8x256xf32, #tpu.memory_space<vmem>>, vector<1x8x256xf32>
    %21 = vector.shape_cast %20 : vector<1x8x256xf32> to vector<8x256xf32>
    %22 = vector.shape_cast %19 : vector<8x256xf32> to vector<1x8x256xf32>
    tpu.vector_store %arg4[%c0_19, %c0_20, %c0_21], %22 {strides = array<i32>} : memref<1x8x256xf32, #tpu.memory_space<vmem>>, vector<1x8x256xf32>,
    return
  }
  func.func @transform_0(%arg0: i32) -> (i32, i32, i32) {
    %c0_i32 = arith.constant 0 : i32
    %c0_i32_0 = arith.constant 0 : i32
    %c0_i32_1 = arith.constant 0 : i32
    return %arg0, %c0_i32, %c0_i32_0 : i32, i32, i32
  }
  func.func @transform_1(%arg0: i32) -> (i32, i32, i32) {
    %c0_i32 = arith.constant 0 : i32
    %c0_i32_0 = arith.constant 0 : i32
    %c0_i32_1 = arith.constant 0 : i32
    %c0_i32_2 = arith.constant 0 : i32
    return %c0_i32, %c0_i32_0, %c0_i32_1 : i32, i32, i32
  }
  func.func @transform_2(%arg0: i32) -> (i32, i32) {
    %c0_i32 = arith.constant 0 : i32
    %c0_i32_0 = arith.constant 0 : i32
    %c0_i32_1 = arith.constant 0 : i32
    return %c0_i32, %c0_i32_0 : i32, i32
  }
  func.func @transform_3(%arg0: i32) -> (i32, i32, i32) {
    %c0_i32 = arith.constant 0 : i32
    %c0_i32_0 = arith.constant 0 : i32
    %c0_i32_1 = arith.constant 0 : i32
    return %arg0, %c0_i32, %c0_i32_0 : i32, i32, i32
  }
}

module attributes {stable_mosaic.version = 11 : i64} {
  func.func @_lstm_kernel(%arg0: i32, %arg1: memref<8x8x128xf32, #tpu.memory_space<vmem>>, %arg2: memref<128x512xf32, #tpu.memory_space<vmem>>, %arg3: memref<128x512xf32, #tpu.memory_space<vmem>>, %arg4: memref<1x512xf32, #tpu.memory_space<vmem>>, %arg5: memref<8x8x128xf32, #tpu.memory_space<vmem>>, %arg6: memref<8x8x512xf32, #tpu.memory_space<vmem>>, %arg7: memref<8x128xf32, #tpu.memory_space<vmem>>, %arg8: memref<8x128xf32, #tpu.memory_space<vmem>>) attributes {dimension_semantics = [#tpu.dimension_semantics<arbitrary>], iteration_bounds = array<i64: 2>, scalar_prefetch = 0 : i64, scratch_operands = 3 : i64, tpu.core_type = #tpu.core_type<tc>, window_params = [{transform_indices = @transform_0, window_bounds = array<i64: 8, 8, 128>}, {pipeline_mode = #tpu.pipeline_mode<synchronous>, transform_indices = @transform_1, window_bounds = array<i64: 128, 512>}, {pipeline_mode = #tpu.pipeline_mode<synchronous>, transform_indices = @transform_2, window_bounds = array<i64: 128, 512>}, {pipeline_mode = #tpu.pipeline_mode<synchronous>, transform_indices = @transform_3, window_bounds = array<i64: 1, 512>}, {transform_indices = @transform_4, window_bounds = array<i64: 8, 8, 128>}]} {
    %c0_i32 = arith.constant 0 : i32
    %0 = arith.cmpi eq, %arg0, %c0_i32 : i32
    %1 = arith.extui %0 : i1 to i32
    %c0_i32_0 = arith.constant 0 : i32
    %2 = arith.cmpi ne, %1, %c0_i32_0 : i32
    scf.if %2 {
      %cst_99 = arith.constant 0.000000e+00 : f32
      %296 = vector.broadcast %cst_99 : f32 to vector<8x128xf32>
      %c0_100 = arith.constant 0 : index
      %c0_101 = arith.constant 0 : index
      %297 = vector.load %arg7[%c0_100, %c0_101] : memref<8x128xf32, #tpu.memory_space<vmem>>, vector<8x128xf32>
      tpu.vector_store %arg7[%c0_100, %c0_101], %296 {strides = array<i32>} : memref<8x128xf32, #tpu.memory_space<vmem>>, vector<8x128xf32>,
      %cst_102 = arith.constant 0.000000e+00 : f32
      %298 = vector.broadcast %cst_102 : f32 to vector<8x128xf32>
      %c0_103 = arith.constant 0 : index
      %c0_104 = arith.constant 0 : index
      %299 = vector.load %arg8[%c0_103, %c0_104] : memref<8x128xf32, #tpu.memory_space<vmem>>, vector<8x128xf32>
      tpu.vector_store %arg8[%c0_103, %c0_104], %298 {strides = array<i32>} : memref<8x128xf32, #tpu.memory_space<vmem>>, vector<8x128xf32>,
    } else {
    }
    %c0 = arith.constant 0 : index
    %c0_1 = arith.constant 0 : index
    %c0_2 = arith.constant 0 : index
    %3 = vector.load %arg1[%c0, %c0_1, %c0_2] : memref<8x8x128xf32, #tpu.memory_space<vmem>>, vector<8x8x128xf32>
    %4 = vector.shape_cast %3 : vector<8x8x128xf32> to vector<64x128xf32>
    %c0_3 = arith.constant 0 : index
    %c0_4 = arith.constant 0 : index
    %5 = vector.load %arg2[%c0_3, %c0_4] : memref<128x512xf32, #tpu.memory_space<vmem>>, vector<128x512xf32>
    %cst = arith.constant dense<0.000000e+00> : vector<64x512xf32>
    %6 = tpu.matmul %4, %5, %cst {dimension_numbers = #tpu.dot_dimension_numbers<[1], [0], [0], [1], [0, 0, 1, 1], [], []>} : vector<64x128xf32>, vector<128x512xf32>, vector<64x512xf32> -> vector<64x512xf32>
    %c0_5 = arith.constant 0 : index
    %c0_6 = arith.constant 0 : index
    %7 = vector.load %arg4[%c0_5, %c0_6] : memref<1x512xf32, #tpu.memory_space<vmem>>, vector<1x512xf32>
    %8 = vector.broadcast %7 : vector<1x512xf32> to vector<64x512xf32>
    %9 = arith.addf %6, %8 : vector<64x512xf32>
    %10 = vector.shape_cast %9 : vector<64x512xf32> to vector<8x8x512xf32>
    %c0_7 = arith.constant 0 : index
    %c0_8 = arith.constant 0 : index
    %c0_9 = arith.constant 0 : index
    %11 = vector.load %arg6[%c0_7, %c0_8, %c0_9] : memref<8x8x512xf32, #tpu.memory_space<vmem>>, vector<8x8x512xf32>
    tpu.vector_store %arg6[%c0_7, %c0_8, %c0_9], %10 {strides = array<i32>} : memref<8x8x512xf32, #tpu.memory_space<vmem>>, vector<8x8x512xf32>,
    %c0_10 = arith.constant 0 : index
    %c0_11 = arith.constant 0 : index
    %12 = vector.load %arg7[%c0_10, %c0_11] : memref<8x128xf32, #tpu.memory_space<vmem>>, vector<8x128xf32>
    %c0_12 = arith.constant 0 : index
    %c0_13 = arith.constant 0 : index
    %13 = vector.load %arg8[%c0_12, %c0_13] : memref<8x128xf32, #tpu.memory_space<vmem>>, vector<8x128xf32>
    %c0_i32_14 = arith.constant 0 : i32
    %14 = arith.index_cast %c0_i32_14 : i32 to index
    %c0_15 = arith.constant 0 : index
    %c0_16 = arith.constant 0 : index
    %15 = vector.load %arg6[%14, %c0_15, %c0_16] : memref<8x8x512xf32, #tpu.memory_space<vmem>>, vector<1x8x512xf32>
    %16 = vector.shape_cast %15 : vector<1x8x512xf32> to vector<8x512xf32>
    %c0_17 = arith.constant 0 : index
    %c0_18 = arith.constant 0 : index
    %17 = vector.load %arg3[%c0_17, %c0_18] : memref<128x512xf32, #tpu.memory_space<vmem>>, vector<128x512xf32>
    %cst_19 = arith.constant dense<0.000000e+00> : vector<8x512xf32>
    %18 = tpu.matmul %12, %17, %cst_19 {dimension_numbers = #tpu.dot_dimension_numbers<[1], [0], [0], [1], [0, 0, 1, 1], [], []>} : vector<8x128xf32>, vector<128x512xf32>, vector<8x512xf32> -> vector<8x512xf32>
    %19 = arith.addf %16, %18 : vector<8x512xf32>
    %20 = vector.extract_strided_slice %19 {offsets = [0, 0], sizes = [8, 128], strides = [1, 1]} : vector<8x512xf32> to vector<8x128xf32>
    %21 = arith.negf %20 : vector<8x128xf32>
    %22 = math.exp %21 : vector<8x128xf32>
    %cst_20 = arith.constant 1.000000e+00 : f32
    %23 = vector.broadcast %cst_20 : f32 to vector<8x128xf32>
    %24 = arith.addf %23, %22 : vector<8x128xf32>
    %25 = arith.divf %23, %24 : vector<8x128xf32>
    %26 = vector.extract_strided_slice %19 {offsets = [0, 128], sizes = [8, 128], strides = [1, 1]} : vector<8x512xf32> to vector<8x128xf32>
    %27 = arith.negf %26 : vector<8x128xf32>
    %28 = math.exp %27 : vector<8x128xf32>
    %cst_21 = arith.constant 1.000000e+00 : f32
    %29 = vector.broadcast %cst_21 : f32 to vector<8x128xf32>
    %30 = arith.addf %29, %28 : vector<8x128xf32>
    %31 = arith.divf %29, %30 : vector<8x128xf32>
    %32 = vector.extract_strided_slice %19 {offsets = [0, 256], sizes = [8, 128], strides = [1, 1]} : vector<8x512xf32> to vector<8x128xf32>
    %33 = math.tanh %32 : vector<8x128xf32>
    %34 = vector.extract_strided_slice %19 {offsets = [0, 384], sizes = [8, 128], strides = [1, 1]} : vector<8x512xf32> to vector<8x128xf32>
    %35 = arith.negf %34 : vector<8x128xf32>
    %36 = math.exp %35 : vector<8x128xf32>
    %cst_22 = arith.constant 1.000000e+00 : f32
    %37 = vector.broadcast %cst_22 : f32 to vector<8x128xf32>
    %38 = arith.addf %37, %36 : vector<8x128xf32>
    %39 = arith.divf %37, %38 : vector<8x128xf32>
    %40 = arith.mulf %31, %13 : vector<8x128xf32>
    %41 = arith.mulf %25, %33 : vector<8x128xf32>
    %42 = arith.addf %40, %41 : vector<8x128xf32>
    %43 = math.tanh %42 : vector<8x128xf32>
    %44 = arith.mulf %39, %43 : vector<8x128xf32>
    %45 = arith.index_cast %c0_i32_14 : i32 to index
    %c0_23 = arith.constant 0 : index
    %c0_24 = arith.constant 0 : index
    %46 = vector.load %arg5[%45, %c0_23, %c0_24] : memref<8x8x128xf32, #tpu.memory_space<vmem>>, vector<1x8x128xf32>
    %47 = vector.shape_cast %46 : vector<1x8x128xf32> to vector<8x128xf32>
    %48 = vector.shape_cast %44 : vector<8x128xf32> to vector<1x8x128xf32>
    tpu.vector_store %arg5[%45, %c0_23, %c0_24], %48 {strides = array<i32>} : memref<8x8x128xf32, #tpu.memory_space<vmem>>, vector<1x8x128xf32>,
    %c1_i32 = arith.constant 1 : i32
    %49 = arith.index_cast %c1_i32 : i32 to index
    %c0_25 = arith.constant 0 : index
    %c0_26 = arith.constant 0 : index
    %50 = vector.load %arg6[%49, %c0_25, %c0_26] : memref<8x8x512xf32, #tpu.memory_space<vmem>>, vector<1x8x512xf32>
    %51 = vector.shape_cast %50 : vector<1x8x512xf32> to vector<8x512xf32>
    %c0_27 = arith.constant 0 : index
    %c0_28 = arith.constant 0 : index
    %52 = vector.load %arg3[%c0_27, %c0_28] : memref<128x512xf32, #tpu.memory_space<vmem>>, vector<128x512xf32>
    %cst_29 = arith.constant dense<0.000000e+00> : vector<8x512xf32>
    %53 = tpu.matmul %44, %52, %cst_29 {dimension_numbers = #tpu.dot_dimension_numbers<[1], [0], [0], [1], [0, 0, 1, 1], [], []>} : vector<8x128xf32>, vector<128x512xf32>, vector<8x512xf32> -> vector<8x512xf32>
    %54 = arith.addf %51, %53 : vector<8x512xf32>
    %55 = vector.extract_strided_slice %54 {offsets = [0, 0], sizes = [8, 128], strides = [1, 1]} : vector<8x512xf32> to vector<8x128xf32>
    %56 = arith.negf %55 : vector<8x128xf32>
    %57 = math.exp %56 : vector<8x128xf32>
    %cst_30 = arith.constant 1.000000e+00 : f32
    %58 = vector.broadcast %cst_30 : f32 to vector<8x128xf32>
    %59 = arith.addf %58, %57 : vector<8x128xf32>
    %60 = arith.divf %58, %59 : vector<8x128xf32>
    %61 = vector.extract_strided_slice %54 {offsets = [0, 128], sizes = [8, 128], strides = [1, 1]} : vector<8x512xf32> to vector<8x128xf32>
    %62 = arith.negf %61 : vector<8x128xf32>
    %63 = math.exp %62 : vector<8x128xf32>
    %cst_31 = arith.constant 1.000000e+00 : f32
    %64 = vector.broadcast %cst_31 : f32 to vector<8x128xf32>
    %65 = arith.addf %64, %63 : vector<8x128xf32>
    %66 = arith.divf %64, %65 : vector<8x128xf32>
    %67 = vector.extract_strided_slice %54 {offsets = [0, 256], sizes = [8, 128], strides = [1, 1]} : vector<8x512xf32> to vector<8x128xf32>
    %68 = math.tanh %67 : vector<8x128xf32>
    %69 = vector.extract_strided_slice %54 {offsets = [0, 384], sizes = [8, 128], strides = [1, 1]} : vector<8x512xf32> to vector<8x128xf32>
    %70 = arith.negf %69 : vector<8x128xf32>
    %71 = math.exp %70 : vector<8x128xf32>
    %cst_32 = arith.constant 1.000000e+00 : f32
    %72 = vector.broadcast %cst_32 : f32 to vector<8x128xf32>
    %73 = arith.addf %72, %71 : vector<8x128xf32>
    %74 = arith.divf %72, %73 : vector<8x128xf32>
    %75 = arith.mulf %66, %42 : vector<8x128xf32>
    %76 = arith.mulf %60, %68 : vector<8x128xf32>
    %77 = arith.addf %75, %76 : vector<8x128xf32>
    %78 = math.tanh %77 : vector<8x128xf32>
    %79 = arith.mulf %74, %78 : vector<8x128xf32>
    %80 = arith.index_cast %c1_i32 : i32 to index
    %c0_33 = arith.constant 0 : index
    %c0_34 = arith.constant 0 : index
    %81 = vector.load %arg5[%80, %c0_33, %c0_34] : memref<8x8x128xf32, #tpu.memory_space<vmem>>, vector<1x8x128xf32>
    %82 = vector.shape_cast %81 : vector<1x8x128xf32> to vector<8x128xf32>
    %83 = vector.shape_cast %79 : vector<8x128xf32> to vector<1x8x128xf32>
    tpu.vector_store %arg5[%80, %c0_33, %c0_34], %83 {strides = array<i32>} : memref<8x8x128xf32, #tpu.memory_space<vmem>>, vector<1x8x128xf32>,
    %c2_i32 = arith.constant 2 : i32
    %84 = arith.index_cast %c2_i32 : i32 to index
    %c0_35 = arith.constant 0 : index
    %c0_36 = arith.constant 0 : index
    %85 = vector.load %arg6[%84, %c0_35, %c0_36] : memref<8x8x512xf32, #tpu.memory_space<vmem>>, vector<1x8x512xf32>
    %86 = vector.shape_cast %85 : vector<1x8x512xf32> to vector<8x512xf32>
    %c0_37 = arith.constant 0 : index
    %c0_38 = arith.constant 0 : index
    %87 = vector.load %arg3[%c0_37, %c0_38] : memref<128x512xf32, #tpu.memory_space<vmem>>, vector<128x512xf32>
    %cst_39 = arith.constant dense<0.000000e+00> : vector<8x512xf32>
    %88 = tpu.matmul %79, %87, %cst_39 {dimension_numbers = #tpu.dot_dimension_numbers<[1], [0], [0], [1], [0, 0, 1, 1], [], []>} : vector<8x128xf32>, vector<128x512xf32>, vector<8x512xf32> -> vector<8x512xf32>
    %89 = arith.addf %86, %88 : vector<8x512xf32>
    %90 = vector.extract_strided_slice %89 {offsets = [0, 0], sizes = [8, 128], strides = [1, 1]} : vector<8x512xf32> to vector<8x128xf32>
    %91 = arith.negf %90 : vector<8x128xf32>
    %92 = math.exp %91 : vector<8x128xf32>
    %cst_40 = arith.constant 1.000000e+00 : f32
    %93 = vector.broadcast %cst_40 : f32 to vector<8x128xf32>
    %94 = arith.addf %93, %92 : vector<8x128xf32>
    %95 = arith.divf %93, %94 : vector<8x128xf32>
    %96 = vector.extract_strided_slice %89 {offsets = [0, 128], sizes = [8, 128], strides = [1, 1]} : vector<8x512xf32> to vector<8x128xf32>
    %97 = arith.negf %96 : vector<8x128xf32>
    %98 = math.exp %97 : vector<8x128xf32>
    %cst_41 = arith.constant 1.000000e+00 : f32
    %99 = vector.broadcast %cst_41 : f32 to vector<8x128xf32>
    %100 = arith.addf %99, %98 : vector<8x128xf32>
    %101 = arith.divf %99, %100 : vector<8x128xf32>
    %102 = vector.extract_strided_slice %89 {offsets = [0, 256], sizes = [8, 128], strides = [1, 1]} : vector<8x512xf32> to vector<8x128xf32>
    %103 = math.tanh %102 : vector<8x128xf32>
    %104 = vector.extract_strided_slice %89 {offsets = [0, 384], sizes = [8, 128], strides = [1, 1]} : vector<8x512xf32> to vector<8x128xf32>
    %105 = arith.negf %104 : vector<8x128xf32>
    %106 = math.exp %105 : vector<8x128xf32>
    %cst_42 = arith.constant 1.000000e+00 : f32
    %107 = vector.broadcast %cst_42 : f32 to vector<8x128xf32>
    %108 = arith.addf %107, %106 : vector<8x128xf32>
    %109 = arith.divf %107, %108 : vector<8x128xf32>
    %110 = arith.mulf %101, %77 : vector<8x128xf32>
    %111 = arith.mulf %95, %103 : vector<8x128xf32>
    %112 = arith.addf %110, %111 : vector<8x128xf32>
    %113 = math.tanh %112 : vector<8x128xf32>
    %114 = arith.mulf %109, %113 : vector<8x128xf32>
    %115 = arith.index_cast %c2_i32 : i32 to index
    %c0_43 = arith.constant 0 : index
    %c0_44 = arith.constant 0 : index
    %116 = vector.load %arg5[%115, %c0_43, %c0_44] : memref<8x8x128xf32, #tpu.memory_space<vmem>>, vector<1x8x128xf32>
    %117 = vector.shape_cast %116 : vector<1x8x128xf32> to vector<8x128xf32>
    %118 = vector.shape_cast %114 : vector<8x128xf32> to vector<1x8x128xf32>
    tpu.vector_store %arg5[%115, %c0_43, %c0_44], %118 {strides = array<i32>} : memref<8x8x128xf32, #tpu.memory_space<vmem>>, vector<1x8x128xf32>,
    %c3_i32 = arith.constant 3 : i32
    %119 = arith.index_cast %c3_i32 : i32 to index
    %c0_45 = arith.constant 0 : index
    %c0_46 = arith.constant 0 : index
    %120 = vector.load %arg6[%119, %c0_45, %c0_46] : memref<8x8x512xf32, #tpu.memory_space<vmem>>, vector<1x8x512xf32>
    %121 = vector.shape_cast %120 : vector<1x8x512xf32> to vector<8x512xf32>
    %c0_47 = arith.constant 0 : index
    %c0_48 = arith.constant 0 : index
    %122 = vector.load %arg3[%c0_47, %c0_48] : memref<128x512xf32, #tpu.memory_space<vmem>>, vector<128x512xf32>
    %cst_49 = arith.constant dense<0.000000e+00> : vector<8x512xf32>
    %123 = tpu.matmul %114, %122, %cst_49 {dimension_numbers = #tpu.dot_dimension_numbers<[1], [0], [0], [1], [0, 0, 1, 1], [], []>} : vector<8x128xf32>, vector<128x512xf32>, vector<8x512xf32> -> vector<8x512xf32>
    %124 = arith.addf %121, %123 : vector<8x512xf32>
    %125 = vector.extract_strided_slice %124 {offsets = [0, 0], sizes = [8, 128], strides = [1, 1]} : vector<8x512xf32> to vector<8x128xf32>
    %126 = arith.negf %125 : vector<8x128xf32>
    %127 = math.exp %126 : vector<8x128xf32>
    %cst_50 = arith.constant 1.000000e+00 : f32
    %128 = vector.broadcast %cst_50 : f32 to vector<8x128xf32>
    %129 = arith.addf %128, %127 : vector<8x128xf32>
    %130 = arith.divf %128, %129 : vector<8x128xf32>
    %131 = vector.extract_strided_slice %124 {offsets = [0, 128], sizes = [8, 128], strides = [1, 1]} : vector<8x512xf32> to vector<8x128xf32>
    %132 = arith.negf %131 : vector<8x128xf32>
    %133 = math.exp %132 : vector<8x128xf32>
    %cst_51 = arith.constant 1.000000e+00 : f32
    %134 = vector.broadcast %cst_51 : f32 to vector<8x128xf32>
    %135 = arith.addf %134, %133 : vector<8x128xf32>
    %136 = arith.divf %134, %135 : vector<8x128xf32>
    %137 = vector.extract_strided_slice %124 {offsets = [0, 256], sizes = [8, 128], strides = [1, 1]} : vector<8x512xf32> to vector<8x128xf32>
    %138 = math.tanh %137 : vector<8x128xf32>
    %139 = vector.extract_strided_slice %124 {offsets = [0, 384], sizes = [8, 128], strides = [1, 1]} : vector<8x512xf32> to vector<8x128xf32>
    %140 = arith.negf %139 : vector<8x128xf32>
    %141 = math.exp %140 : vector<8x128xf32>
    %cst_52 = arith.constant 1.000000e+00 : f32
    %142 = vector.broadcast %cst_52 : f32 to vector<8x128xf32>
    %143 = arith.addf %142, %141 : vector<8x128xf32>
    %144 = arith.divf %142, %143 : vector<8x128xf32>
    %145 = arith.mulf %136, %112 : vector<8x128xf32>
    %146 = arith.mulf %130, %138 : vector<8x128xf32>
    %147 = arith.addf %145, %146 : vector<8x128xf32>
    %148 = math.tanh %147 : vector<8x128xf32>
    %149 = arith.mulf %144, %148 : vector<8x128xf32>
    %150 = arith.index_cast %c3_i32 : i32 to index
    %c0_53 = arith.constant 0 : index
    %c0_54 = arith.constant 0 : index
    %151 = vector.load %arg5[%150, %c0_53, %c0_54] : memref<8x8x128xf32, #tpu.memory_space<vmem>>, vector<1x8x128xf32>
    %152 = vector.shape_cast %151 : vector<1x8x128xf32> to vector<8x128xf32>
    %153 = vector.shape_cast %149 : vector<8x128xf32> to vector<1x8x128xf32>
    tpu.vector_store %arg5[%150, %c0_53, %c0_54], %153 {strides = array<i32>} : memref<8x8x128xf32, #tpu.memory_space<vmem>>, vector<1x8x128xf32>,
    %c4_i32 = arith.constant 4 : i32
    %154 = arith.index_cast %c4_i32 : i32 to index
    %c0_55 = arith.constant 0 : index
    %c0_56 = arith.constant 0 : index
    %155 = vector.load %arg6[%154, %c0_55, %c0_56] : memref<8x8x512xf32, #tpu.memory_space<vmem>>, vector<1x8x512xf32>
    %156 = vector.shape_cast %155 : vector<1x8x512xf32> to vector<8x512xf32>
    %c0_57 = arith.constant 0 : index
    %c0_58 = arith.constant 0 : index
    %157 = vector.load %arg3[%c0_57, %c0_58] : memref<128x512xf32, #tpu.memory_space<vmem>>, vector<128x512xf32>
    %cst_59 = arith.constant dense<0.000000e+00> : vector<8x512xf32>
    %158 = tpu.matmul %149, %157, %cst_59 {dimension_numbers = #tpu.dot_dimension_numbers<[1], [0], [0], [1], [0, 0, 1, 1], [], []>} : vector<8x128xf32>, vector<128x512xf32>, vector<8x512xf32> -> vector<8x512xf32>
    %159 = arith.addf %156, %158 : vector<8x512xf32>
    %160 = vector.extract_strided_slice %159 {offsets = [0, 0], sizes = [8, 128], strides = [1, 1]} : vector<8x512xf32> to vector<8x128xf32>
    %161 = arith.negf %160 : vector<8x128xf32>
    %162 = math.exp %161 : vector<8x128xf32>
    %cst_60 = arith.constant 1.000000e+00 : f32
    %163 = vector.broadcast %cst_60 : f32 to vector<8x128xf32>
    %164 = arith.addf %163, %162 : vector<8x128xf32>
    %165 = arith.divf %163, %164 : vector<8x128xf32>
    %166 = vector.extract_strided_slice %159 {offsets = [0, 128], sizes = [8, 128], strides = [1, 1]} : vector<8x512xf32> to vector<8x128xf32>
    %167 = arith.negf %166 : vector<8x128xf32>
    %168 = math.exp %167 : vector<8x128xf32>
    %cst_61 = arith.constant 1.000000e+00 : f32
    %169 = vector.broadcast %cst_61 : f32 to vector<8x128xf32>
    %170 = arith.addf %169, %168 : vector<8x128xf32>
    %171 = arith.divf %169, %170 : vector<8x128xf32>
    %172 = vector.extract_strided_slice %159 {offsets = [0, 256], sizes = [8, 128], strides = [1, 1]} : vector<8x512xf32> to vector<8x128xf32>
    %173 = math.tanh %172 : vector<8x128xf32>
    %174 = vector.extract_strided_slice %159 {offsets = [0, 384], sizes = [8, 128], strides = [1, 1]} : vector<8x512xf32> to vector<8x128xf32>
    %175 = arith.negf %174 : vector<8x128xf32>
    %176 = math.exp %175 : vector<8x128xf32>
    %cst_62 = arith.constant 1.000000e+00 : f32
    %177 = vector.broadcast %cst_62 : f32 to vector<8x128xf32>
    %178 = arith.addf %177, %176 : vector<8x128xf32>
    %179 = arith.divf %177, %178 : vector<8x128xf32>
    %180 = arith.mulf %171, %147 : vector<8x128xf32>
    %181 = arith.mulf %165, %173 : vector<8x128xf32>
    %182 = arith.addf %180, %181 : vector<8x128xf32>
    %183 = math.tanh %182 : vector<8x128xf32>
    %184 = arith.mulf %179, %183 : vector<8x128xf32>
    %185 = arith.index_cast %c4_i32 : i32 to index
    %c0_63 = arith.constant 0 : index
    %c0_64 = arith.constant 0 : index
    %186 = vector.load %arg5[%185, %c0_63, %c0_64] : memref<8x8x128xf32, #tpu.memory_space<vmem>>, vector<1x8x128xf32>
    %187 = vector.shape_cast %186 : vector<1x8x128xf32> to vector<8x128xf32>
    %188 = vector.shape_cast %184 : vector<8x128xf32> to vector<1x8x128xf32>
    tpu.vector_store %arg5[%185, %c0_63, %c0_64], %188 {strides = array<i32>} : memref<8x8x128xf32, #tpu.memory_space<vmem>>, vector<1x8x128xf32>,
    %c5_i32 = arith.constant 5 : i32
    %189 = arith.index_cast %c5_i32 : i32 to index
    %c0_65 = arith.constant 0 : index
    %c0_66 = arith.constant 0 : index
    %190 = vector.load %arg6[%189, %c0_65, %c0_66] : memref<8x8x512xf32, #tpu.memory_space<vmem>>, vector<1x8x512xf32>
    %191 = vector.shape_cast %190 : vector<1x8x512xf32> to vector<8x512xf32>
    %c0_67 = arith.constant 0 : index
    %c0_68 = arith.constant 0 : index
    %192 = vector.load %arg3[%c0_67, %c0_68] : memref<128x512xf32, #tpu.memory_space<vmem>>, vector<128x512xf32>
    %cst_69 = arith.constant dense<0.000000e+00> : vector<8x512xf32>
    %193 = tpu.matmul %184, %192, %cst_69 {dimension_numbers = #tpu.dot_dimension_numbers<[1], [0], [0], [1], [0, 0, 1, 1], [], []>} : vector<8x128xf32>, vector<128x512xf32>, vector<8x512xf32> -> vector<8x512xf32>
    %194 = arith.addf %191, %193 : vector<8x512xf32>
    %195 = vector.extract_strided_slice %194 {offsets = [0, 0], sizes = [8, 128], strides = [1, 1]} : vector<8x512xf32> to vector<8x128xf32>
    %196 = arith.negf %195 : vector<8x128xf32>
    %197 = math.exp %196 : vector<8x128xf32>
    %cst_70 = arith.constant 1.000000e+00 : f32
    %198 = vector.broadcast %cst_70 : f32 to vector<8x128xf32>
    %199 = arith.addf %198, %197 : vector<8x128xf32>
    %200 = arith.divf %198, %199 : vector<8x128xf32>
    %201 = vector.extract_strided_slice %194 {offsets = [0, 128], sizes = [8, 128], strides = [1, 1]} : vector<8x512xf32> to vector<8x128xf32>
    %202 = arith.negf %201 : vector<8x128xf32>
    %203 = math.exp %202 : vector<8x128xf32>
    %cst_71 = arith.constant 1.000000e+00 : f32
    %204 = vector.broadcast %cst_71 : f32 to vector<8x128xf32>
    %205 = arith.addf %204, %203 : vector<8x128xf32>
    %206 = arith.divf %204, %205 : vector<8x128xf32>
    %207 = vector.extract_strided_slice %194 {offsets = [0, 256], sizes = [8, 128], strides = [1, 1]} : vector<8x512xf32> to vector<8x128xf32>
    %208 = math.tanh %207 : vector<8x128xf32>
    %209 = vector.extract_strided_slice %194 {offsets = [0, 384], sizes = [8, 128], strides = [1, 1]} : vector<8x512xf32> to vector<8x128xf32>
    %210 = arith.negf %209 : vector<8x128xf32>
    %211 = math.exp %210 : vector<8x128xf32>
    %cst_72 = arith.constant 1.000000e+00 : f32
    %212 = vector.broadcast %cst_72 : f32 to vector<8x128xf32>
    %213 = arith.addf %212, %211 : vector<8x128xf32>
    %214 = arith.divf %212, %213 : vector<8x128xf32>
    %215 = arith.mulf %206, %182 : vector<8x128xf32>
    %216 = arith.mulf %200, %208 : vector<8x128xf32>
    %217 = arith.addf %215, %216 : vector<8x128xf32>
    %218 = math.tanh %217 : vector<8x128xf32>
    %219 = arith.mulf %214, %218 : vector<8x128xf32>
    %220 = arith.index_cast %c5_i32 : i32 to index
    %c0_73 = arith.constant 0 : index
    %c0_74 = arith.constant 0 : index
    %221 = vector.load %arg5[%220, %c0_73, %c0_74] : memref<8x8x128xf32, #tpu.memory_space<vmem>>, vector<1x8x128xf32>
    %222 = vector.shape_cast %221 : vector<1x8x128xf32> to vector<8x128xf32>
    %223 = vector.shape_cast %219 : vector<8x128xf32> to vector<1x8x128xf32>
    tpu.vector_store %arg5[%220, %c0_73, %c0_74], %223 {strides = array<i32>} : memref<8x8x128xf32, #tpu.memory_space<vmem>>, vector<1x8x128xf32>,
    %c6_i32 = arith.constant 6 : i32
    %224 = arith.index_cast %c6_i32 : i32 to index
    %c0_75 = arith.constant 0 : index
    %c0_76 = arith.constant 0 : index
    %225 = vector.load %arg6[%224, %c0_75, %c0_76] : memref<8x8x512xf32, #tpu.memory_space<vmem>>, vector<1x8x512xf32>
    %226 = vector.shape_cast %225 : vector<1x8x512xf32> to vector<8x512xf32>
    %c0_77 = arith.constant 0 : index
    %c0_78 = arith.constant 0 : index
    %227 = vector.load %arg3[%c0_77, %c0_78] : memref<128x512xf32, #tpu.memory_space<vmem>>, vector<128x512xf32>
    %cst_79 = arith.constant dense<0.000000e+00> : vector<8x512xf32>
    %228 = tpu.matmul %219, %227, %cst_79 {dimension_numbers = #tpu.dot_dimension_numbers<[1], [0], [0], [1], [0, 0, 1, 1], [], []>} : vector<8x128xf32>, vector<128x512xf32>, vector<8x512xf32> -> vector<8x512xf32>
    %229 = arith.addf %226, %228 : vector<8x512xf32>
    %230 = vector.extract_strided_slice %229 {offsets = [0, 0], sizes = [8, 128], strides = [1, 1]} : vector<8x512xf32> to vector<8x128xf32>
    %231 = arith.negf %230 : vector<8x128xf32>
    %232 = math.exp %231 : vector<8x128xf32>
    %cst_80 = arith.constant 1.000000e+00 : f32
    %233 = vector.broadcast %cst_80 : f32 to vector<8x128xf32>
    %234 = arith.addf %233, %232 : vector<8x128xf32>
    %235 = arith.divf %233, %234 : vector<8x128xf32>
    %236 = vector.extract_strided_slice %229 {offsets = [0, 128], sizes = [8, 128], strides = [1, 1]} : vector<8x512xf32> to vector<8x128xf32>
    %237 = arith.negf %236 : vector<8x128xf32>
    %238 = math.exp %237 : vector<8x128xf32>
    %cst_81 = arith.constant 1.000000e+00 : f32
    %239 = vector.broadcast %cst_81 : f32 to vector<8x128xf32>
    %240 = arith.addf %239, %238 : vector<8x128xf32>
    %241 = arith.divf %239, %240 : vector<8x128xf32>
    %242 = vector.extract_strided_slice %229 {offsets = [0, 256], sizes = [8, 128], strides = [1, 1]} : vector<8x512xf32> to vector<8x128xf32>
    %243 = math.tanh %242 : vector<8x128xf32>
    %244 = vector.extract_strided_slice %229 {offsets = [0, 384], sizes = [8, 128], strides = [1, 1]} : vector<8x512xf32> to vector<8x128xf32>
    %245 = arith.negf %244 : vector<8x128xf32>
    %246 = math.exp %245 : vector<8x128xf32>
    %cst_82 = arith.constant 1.000000e+00 : f32
    %247 = vector.broadcast %cst_82 : f32 to vector<8x128xf32>
    %248 = arith.addf %247, %246 : vector<8x128xf32>
    %249 = arith.divf %247, %248 : vector<8x128xf32>
    %250 = arith.mulf %241, %217 : vector<8x128xf32>
    %251 = arith.mulf %235, %243 : vector<8x128xf32>
    %252 = arith.addf %250, %251 : vector<8x128xf32>
    %253 = math.tanh %252 : vector<8x128xf32>
    %254 = arith.mulf %249, %253 : vector<8x128xf32>
    %255 = arith.index_cast %c6_i32 : i32 to index
    %c0_83 = arith.constant 0 : index
    %c0_84 = arith.constant 0 : index
    %256 = vector.load %arg5[%255, %c0_83, %c0_84] : memref<8x8x128xf32, #tpu.memory_space<vmem>>, vector<1x8x128xf32>
    %257 = vector.shape_cast %256 : vector<1x8x128xf32> to vector<8x128xf32>
    %258 = vector.shape_cast %254 : vector<8x128xf32> to vector<1x8x128xf32>
    tpu.vector_store %arg5[%255, %c0_83, %c0_84], %258 {strides = array<i32>} : memref<8x8x128xf32, #tpu.memory_space<vmem>>, vector<1x8x128xf32>,
    %c7_i32 = arith.constant 7 : i32
    %259 = arith.index_cast %c7_i32 : i32 to index
    %c0_85 = arith.constant 0 : index
    %c0_86 = arith.constant 0 : index
    %260 = vector.load %arg6[%259, %c0_85, %c0_86] : memref<8x8x512xf32, #tpu.memory_space<vmem>>, vector<1x8x512xf32>
    %261 = vector.shape_cast %260 : vector<1x8x512xf32> to vector<8x512xf32>
    %c0_87 = arith.constant 0 : index
    %c0_88 = arith.constant 0 : index
    %262 = vector.load %arg3[%c0_87, %c0_88] : memref<128x512xf32, #tpu.memory_space<vmem>>, vector<128x512xf32>
    %cst_89 = arith.constant dense<0.000000e+00> : vector<8x512xf32>
    %263 = tpu.matmul %254, %262, %cst_89 {dimension_numbers = #tpu.dot_dimension_numbers<[1], [0], [0], [1], [0, 0, 1, 1], [], []>} : vector<8x128xf32>, vector<128x512xf32>, vector<8x512xf32> -> vector<8x512xf32>
    %264 = arith.addf %261, %263 : vector<8x512xf32>
    %265 = vector.extract_strided_slice %264 {offsets = [0, 0], sizes = [8, 128], strides = [1, 1]} : vector<8x512xf32> to vector<8x128xf32>
    %266 = arith.negf %265 : vector<8x128xf32>
    %267 = math.exp %266 : vector<8x128xf32>
    %cst_90 = arith.constant 1.000000e+00 : f32
    %268 = vector.broadcast %cst_90 : f32 to vector<8x128xf32>
    %269 = arith.addf %268, %267 : vector<8x128xf32>
    %270 = arith.divf %268, %269 : vector<8x128xf32>
    %271 = vector.extract_strided_slice %264 {offsets = [0, 128], sizes = [8, 128], strides = [1, 1]} : vector<8x512xf32> to vector<8x128xf32>
    %272 = arith.negf %271 : vector<8x128xf32>
    %273 = math.exp %272 : vector<8x128xf32>
    %cst_91 = arith.constant 1.000000e+00 : f32
    %274 = vector.broadcast %cst_91 : f32 to vector<8x128xf32>
    %275 = arith.addf %274, %273 : vector<8x128xf32>
    %276 = arith.divf %274, %275 : vector<8x128xf32>
    %277 = vector.extract_strided_slice %264 {offsets = [0, 256], sizes = [8, 128], strides = [1, 1]} : vector<8x512xf32> to vector<8x128xf32>
    %278 = math.tanh %277 : vector<8x128xf32>
    %279 = vector.extract_strided_slice %264 {offsets = [0, 384], sizes = [8, 128], strides = [1, 1]} : vector<8x512xf32> to vector<8x128xf32>
    %280 = arith.negf %279 : vector<8x128xf32>
    %281 = math.exp %280 : vector<8x128xf32>
    %cst_92 = arith.constant 1.000000e+00 : f32
    %282 = vector.broadcast %cst_92 : f32 to vector<8x128xf32>
    %283 = arith.addf %282, %281 : vector<8x128xf32>
    %284 = arith.divf %282, %283 : vector<8x128xf32>
    %285 = arith.mulf %276, %252 : vector<8x128xf32>
    %286 = arith.mulf %270, %278 : vector<8x128xf32>
    %287 = arith.addf %285, %286 : vector<8x128xf32>
    %288 = math.tanh %287 : vector<8x128xf32>
    %289 = arith.mulf %284, %288 : vector<8x128xf32>
    %290 = arith.index_cast %c7_i32 : i32 to index
    %c0_93 = arith.constant 0 : index
    %c0_94 = arith.constant 0 : index
    %291 = vector.load %arg5[%290, %c0_93, %c0_94] : memref<8x8x128xf32, #tpu.memory_space<vmem>>, vector<1x8x128xf32>
    %292 = vector.shape_cast %291 : vector<1x8x128xf32> to vector<8x128xf32>
    %293 = vector.shape_cast %289 : vector<8x128xf32> to vector<1x8x128xf32>
    tpu.vector_store %arg5[%290, %c0_93, %c0_94], %293 {strides = array<i32>} : memref<8x8x128xf32, #tpu.memory_space<vmem>>, vector<1x8x128xf32>,
    %c8_i32 = arith.constant 8 : i32
    %c0_95 = arith.constant 0 : index
    %c0_96 = arith.constant 0 : index
    %294 = vector.load %arg7[%c0_95, %c0_96] : memref<8x128xf32, #tpu.memory_space<vmem>>, vector<8x128xf32>
    tpu.vector_store %arg7[%c0_95, %c0_96], %289 {strides = array<i32>} : memref<8x128xf32, #tpu.memory_space<vmem>>, vector<8x128xf32>,
    %c0_97 = arith.constant 0 : index
    %c0_98 = arith.constant 0 : index
    %295 = vector.load %arg8[%c0_97, %c0_98] : memref<8x128xf32, #tpu.memory_space<vmem>>, vector<8x128xf32>
    tpu.vector_store %arg8[%c0_97, %c0_98], %287 {strides = array<i32>} : memref<8x128xf32, #tpu.memory_space<vmem>>, vector<8x128xf32>,
    return
  }
  func.func @transform_0(%arg0: i32) -> (i32, i32, i32) {
    %c0_i32 = arith.constant 0 : i32
    %c0_i32_0 = arith.constant 0 : i32
    %c0_i32_1 = arith.constant 0 : i32
    return %arg0, %c0_i32, %c0_i32_0 : i32, i32, i32
  }
  func.func @transform_1(%arg0: i32) -> (i32, i32) {
    %c0_i32 = arith.constant 0 : i32
    %c0_i32_0 = arith.constant 0 : i32
    %c0_i32_1 = arith.constant 0 : i32
    return %c0_i32, %c0_i32_0 : i32, i32
  }
  func.func @transform_2(%arg0: i32) -> (i32, i32) {
    %c0_i32 = arith.constant 0 : i32
    %c0_i32_0 = arith.constant 0 : i32
    %c0_i32_1 = arith.constant 0 : i32
    return %c0_i32, %c0_i32_0 : i32, i32
  }
  func.func @transform_3(%arg0: i32) -> (i32, i32) {
    %c0_i32 = arith.constant 0 : i32
    %c0_i32_0 = arith.constant 0 : i32
    %c0_i32_1 = arith.constant 0 : i32
    return %c0_i32, %c0_i32_0 : i32, i32
  }
  func.func @transform_4(%arg0: i32) -> (i32, i32, i32) {
    %c0_i32 = arith.constant 0 : i32
    %c0_i32_0 = arith.constant 0 : i32
    %c0_i32_1 = arith.constant 0 : i32
    return %arg0, %c0_i32, %c0_i32_0 : i32, i32, i32
  }
}

</mosaic_0001>

<llo_original>
// kernel: forward.8
$region0: #{forward.8}
  #allocation0 [shape = 'u32[]', space=smem, size = 0x4, offset = 0x4, fixed_abs, tag = 'smem constant byte address 0x4 - core index']
  #allocation1 [shape = 'u32[144,128]{1,0:T(1,128)}', space=vmem, size = 0x12000, scoped, tag = 'internal scratch']
  %s0 = inlined_call_operand.vmem [shape: f32[2,6,256], index: 0, kind: input, shape index: {}]
  %s1 = inlined_call_operand.hbm [shape: f32[3,256,128], index: 1, kind: input, shape index: {}]
  %s2 = inlined_call_operand.hbm [shape: f32[1,128], index: 2, kind: input, shape index: {}]
  %s3 = inlined_call_operand.vmem [shape: f32[2,4,128], index: 3, kind: output, shape index: {}]
  %s4 = sld [smem:[#allocation0]]
  $region53: #{forward.8} parent=0
    _
  %s6 = ssub.s32 1, %s4
  %s7 = scalar_select 0, %s6, %s4
  $region1: #{forward.8} parent=0
    #allocation2 [shape = 'u8[393216]{0}', space=vmem, size = 0x60000, scoped, tag = 'input window, operand 1, single buffered']
    #allocation3 [shape = 's32[2]{0}', space=sflag, size = 0x8, scoped, tag = 'scoped memory for forward.8']
    #allocation4 [shape = 'u8[512]{0}', space=vmem, size = 0x400, scoped, tag = 'input window, operand 2, single buffered']
    #allocation5 [shape = 's32[1]{0}', space=sflag, size = 0x4, scoped, tag = 'scoped memory for forward.8']
    %8 = vsyncpa [#allocation3], 0
    %9 = vsyncpa [#allocation5], 0
    loop: start=0, step=1, limit=4
    $region2: #{forward.8} parent=1 // loop_pre_header
      _
    $region3: #{forward.8} parent=1 // loop_header
      %s11 = sphi 0, %s15
      %p12 = scmp.ge.s32.totalorder %s11, 4
      %s21 = sphi 0, %s23
      %s24 = sphi 0, %s21
      %s25 = sphi 0, %s24
      %s41 = sphi 0, %s25
      %s45 = sphi 0, %s45
      %s47 = sphi 0, %s45
      %s48 = sphi 0, %s47
      %s62 = sphi 0, %s48
      %s66 = sphi 0, %s66
      %s68 = sphi 0, %s66
      %s69 = sphi 0, %s68
      %s83 = sphi 0, %s69
      %s89 = sphi 0, %s91
      %s92 = sphi 0, %s89
      %s93 = sphi 0, %s92
      %s109 = sphi 0, %s93
    $region4: #{forward.8} parent=1 // loop_header_branch
      %14 = sbr.rel (%p12) target = $region8
    $region5: #{forward.8} parent=1 // loop_body
      %s16 = ssub.s32 %s11, 1
      %s17 = ssub.s32 %s11, 2
      %s18 = sadd.s32 %s11, 1
      %s19 = ssub.s32 %s11, %s18
      %p20 = scmp.eq.s32.totalorder %s19, 0
      %s22 = sadd.s32 %s21, 1
      %s23 = scalar_select %p20, %s21, %s22
      %p26 = pneg %p20
      %p27 = scmp.eq.s32.totalorder %s11, 1
      %p28 = por %p26, %p27
      %p29 = scmp.ne.s32.totalorder %s21, %s24
      %p30 = scmp.eq.s32.totalorder %s11, 0
      %p31 = por %p29, %p30
      %p32 = scmp.ne.s32.totalorder %s21, %s24
      %p33 = scmp.eq.s32.totalorder %s16, 1
      %p34 = por %p32, %p33
      %p35 = scmp.ne.s32.totalorder %s24, %s25
      %p36 = scmp.eq.s32.totalorder %s16, 0
      %p37 = por %p35, %p36
      %p38 = scmp.ne.s32.totalorder %s24, %s25
      %p39 = scmp.eq.s32.totalorder %s17, 1
      %p40 = por %p38, %p39
      %p42 = scmp.ne.s32.totalorder %s25, %s41
      %p43 = scmp.eq.s32.totalorder %s17, 0
      %p44 = por %p42, %p43
      %s46 = sadd.s32 %s45, 1
      %p49 = scmp.eq.s32.totalorder %s11, 1
      %p50 = scmp.ne.s32.totalorder %s45, %s47
      %p51 = scmp.eq.s32.totalorder %s11, 0
      %p52 = por %p50, %p51
      %p53 = scmp.ne.s32.totalorder %s45, %s47
      %p54 = scmp.eq.s32.totalorder %s16, 1
      %p55 = por %p53, %p54
      %p56 = scmp.ne.s32.totalorder %s47, %s48
      %p57 = scmp.eq.s32.totalorder %s16, 0
      %p58 = por %p56, %p57
      %p59 = scmp.ne.s32.totalorder %s47, %s48
      %p60 = scmp.eq.s32.totalorder %s17, 1
      %p61 = por %p59, %p60
      %p63 = scmp.ne.s32.totalorder %s48, %s62
      %p64 = scmp.eq.s32.totalorder %s17, 0
      %p65 = por %p63, %p64
      %s67 = sadd.s32 %s66, 1
      %p70 = scmp.eq.s32.totalorder %s11, 1
      %p71 = scmp.ne.s32.totalorder %s66, %s68
      %p72 = scmp.eq.s32.totalorder %s11, 0
      %p73 = por %p71, %p72
      %p74 = scmp.ne.s32.totalorder %s66, %s68
      %p75 = scmp.eq.s32.totalorder %s16, 1
      %p76 = por %p74, %p75
      %p77 = scmp.ne.s32.totalorder %s68, %s69
      %p78 = scmp.eq.s32.totalorder %s16, 0
      %p79 = por %p77, %p78
      %p80 = scmp.ne.s32.totalorder %s68, %s69
      %p81 = scmp.eq.s32.totalorder %s17, 1
      %p82 = por %p80, %p81
      %p84 = scmp.ne.s32.totalorder %s69, %s83
      %p85 = scmp.eq.s32.totalorder %s17, 0
      %p86 = por %p84, %p85
      %s87 = ssub.s32 %s11, %s18
      %p88 = scmp.eq.s32.totalorder %s87, 0
      %s90 = sadd.s32 %s89, 1
      %s91 = scalar_select %p88, %s89, %s90
      %p94 = pneg %p88
      %p95 = scmp.eq.s32.totalorder %s11, 1
      %p96 = por %p94, %p95
      %p97 = scmp.ne.s32.totalorder %s89, %s92
      %p98 = scmp.eq.s32.totalorder %s11, 0
      %p99 = por %p97, %p98
      %p100 = scmp.ne.s32.totalorder %s89, %s92
      %p101 = scmp.eq.s32.totalorder %s16, 1
      %p102 = por %p100, %p101
      %p103 = scmp.ne.s32.totalorder %s92, %s93
      %p104 = scmp.eq.s32.totalorder %s16, 0
      %p105 = por %p103, %p104
      %p106 = scmp.ne.s32.totalorder %s92, %s93
      %p107 = scmp.eq.s32.totalorder %s17, 1
      %p108 = por %p106, %p107
      %p110 = scmp.ne.s32.totalorder %s93, %s109
      %p111 = scmp.eq.s32.totalorder %s17, 0
      %p112 = por %p110, %p111
      %p113 = scmp.le.s32.totalorder 1, %s11
      %p114 = scmp.lt.s32.totalorder %s11, 3
      %p115 = pnand %p113, %p114
      %p116 = pneg %p115
      // Predicated region
      $region9: #{forward.8} parent=5 // pred_check
        _
      $region10: #{forward.8} parent=5 // pred_check_branch
        %118 = sbr.rel (%p115) target = $region12
      $region11: #{forward.8} parent=5 // pred_region
        %s119 = ssub.s32 %s11, 1
        // Predicated region
        $region13: #{forward.8} parent=11 // pred_check
          %p120 = pneg %p58
        $region14: #{forward.8} parent=11 // pred_check_branch
          %122 = sbr.rel (%p120) target = $region16
        $region15: #{forward.8} parent=11 // pred_region
          %s124 = ssub.s32 12288, 12288
          %125 = vsyncadd [#allocation3], %s124
          %s126 = sshll.u32 [#allocation2], 4
          %s127 = int_to_ptr.vmem [resolvable:$true] %s126
          %132 = dma.hbm_to_vmem [thread:$0]  %s1, 12288, %s127, [#allocation3], 128, 128, 8
        $region16: #{forward.8} parent=11 // pred_fallthru
          _
        // Predicated region
        $region17: #{forward.8} parent=11 // pred_check
          %p133 = pneg %p79
        $region18: #{forward.8} parent=11 // pred_check_branch
          %135 = sbr.rel (%p133) target = $region20
        $region19: #{forward.8} parent=11 // pred_region
          %s137 = ssub.s32 16, 16
          %138 = vsyncadd [#allocation5], %s137
          %s140 = sshll.u32 [#allocation4], 4
          %s141 = int_to_ptr.vmem [resolvable:$true] %s140
          %143 = dma.hbm_to_vmem [thread:$0]  %s2, 16, %s141, [#allocation5]
        $region20: #{forward.8} parent=11 // pred_fallthru
          _
      $region12: #{forward.8} parent=5 // pred_fallthru
        _
      %p144 = scmp.lt.s32.totalorder %s11, 2
      // Predicated region
      $region21: #{forward.8} parent=5 // pred_check
        %p145 = pneg %p144
      $region22: #{forward.8} parent=5 // pred_check_branch
        %147 = sbr.rel (%p145) target = $region24
      $region23: #{forward.8} parent=5 // pred_region
        // Predicated region
        $region25: #{forward.8} parent=23 // pred_check
          %p148 = pneg %p31
        $region26: #{forward.8} parent=23 // pred_check_branch
          %150 = sbr.rel (%p148) target = $region28
        $region27: #{forward.8} parent=23 // pred_region
          %p151 = scmp.lt.s32.totalorder %s11, 1
          %s152 = scalar_select %p151, %s11, 1
          %s153 = smul.addr %s152, 2
          %s154 = smul.addr %s153, 8
          %s155 = scalar_lea.vmem %s0, %s154
        $region28: #{forward.8} parent=23 // pred_fallthru
          _
      $region24: #{forward.8} parent=5 // pred_fallthru
        _
      %p156 = scmp.le.s32.totalorder 1, %s11
      %p157 = scmp.lt.s32.totalorder %s11, 3
      %p158 = pnand %p156, %p157
      %p159 = pneg %p158
      // Predicated region
      $region29: #{forward.8} parent=5 // pred_check
        _
      $region30: #{forward.8} parent=5 // pred_check_branch
        %161 = sbr.rel (%p158) target = $region32
      $region31: #{forward.8} parent=5 // pred_region
        %s162 = ssub.s32 %s11, 1
        // Predicated region
        $region33: #{forward.8} parent=31 // pred_check
          %p163 = pneg %p58
        $region34: #{forward.8} parent=31 // pred_check_branch
          %165 = sbr.rel (%p163) target = $region36
        $region35: #{forward.8} parent=31 // pred_region
          %166 = dma.done [#allocation3], 12288
        $region36: #{forward.8} parent=31 // pred_fallthru
          _
        // Predicated region
        $region37: #{forward.8} parent=31 // pred_check
          %p167 = pneg %p79
        $region38: #{forward.8} parent=31 // pred_check_branch
          %169 = sbr.rel (%p167) target = $region40
        $region39: #{forward.8} parent=31 // pred_region
          %170 = dma.done [#allocation5], 16
        $region40: #{forward.8} parent=31 // pred_fallthru
          _
        %p171 = scmp.lt.s32.totalorder %s16, 1
        %s172 = scalar_select %p171, %s16, 1
        %s173 = smul.addr %s172, 2
        %s174 = smul.addr %s173, 8
        %s175 = scalar_lea.vmem %s0, %s174
        %p176 = pneg %p37
        %p177 = pneg %p34
        %p178 = pneg %p58
        %p179 = pneg %p55
        %p180 = pneg %p79
        %p181 = pneg %p76
        %p182 = pneg %p105
        %p183 = pneg %p102
        %p184 = scmp.lt.s32.totalorder %s16, 1
        %s185 = scalar_select %p184, %s16, 1
        %s186 = smul.addr %s185, 4
        %s187 = scalar_lea.vmem %s3, %s186
        %p188 = scmp.lt.s32.totalorder %s16, 1
        %s189 = scalar_select %p188, %s16, 1
        %s190 = smul.addr %s189, 2
        %s191 = smul.addr %s190, 8
        %s192 = scalar_lea.vmem %s0, %s191
        %p193 = scmp.lt.s32.totalorder %s16, 1
        %s194 = scalar_select %p193, %s16, 1
        %s195 = smul.addr %s194, 4
        %s196 = scalar_lea.vmem %s3, %s195
        %v197 = vld [vmem:[%s192] sm:$0xf]
        %v198 = vld [vmem:[%s192 + $0x8] sm:$0xf]
        %v199 = vld [vmem:[#allocation2] sm:$0xff]
        %v200 = vld [vmem:[#allocation2 + $0x8] sm:$0xff]
        %v201 = vld [vmem:[#allocation2 + $0x10] sm:$0xff]
        %v202 = vld [vmem:[#allocation2 + $0x18] sm:$0xff]
        %v203 = vld [vmem:[#allocation2 + $0x20] sm:$0xff]
        %v204 = vld [vmem:[#allocation2 + $0x28] sm:$0xff]
        %v205 = vld [vmem:[#allocation2 + $0x30] sm:$0xff]
        %v206 = vld [vmem:[#allocation2 + $0x38] sm:$0xff]
        %v207 = vld [vmem:[#allocation2 + $0x40] sm:$0xff]
        %v208 = vld [vmem:[#allocation2 + $0x48] sm:$0xff]
        %v209 = vld [vmem:[#allocation2 + $0x50] sm:$0xff]
        %v210 = vld [vmem:[#allocation2 + $0x58] sm:$0xff]
        %v211 = vld [vmem:[#allocation2 + $0x60] sm:$0xff]
        %v212 = vld [vmem:[#allocation2 + $0x68] sm:$0xff]
        %v213 = vld [vmem:[#allocation2 + $0x70] sm:$0xff]
        %v214 = vld [vmem:[#allocation2 + $0x78] sm:$0xff]
        %v215 = vld [vmem:[#allocation2 + $0x80] sm:$0xff]
        %v216 = vld [vmem:[#allocation2 + $0x88] sm:$0xff]
        %v217 = vld [vmem:[#allocation2 + $0x90] sm:$0xff]
        %v218 = vld [vmem:[#allocation2 + $0x98] sm:$0xff]
        %v219 = vld [vmem:[#allocation2 + $0xa0] sm:$0xff]
        %v220 = vld [vmem:[#allocation2 + $0xa8] sm:$0xff]
        %v221 = vld [vmem:[#allocation2 + $0xb0] sm:$0xff]
        %v222 = vld [vmem:[#allocation2 + $0xb8] sm:$0xff]
        %v223 = vld [vmem:[#allocation2 + $0xc0] sm:$0xff]
        %v224 = vld [vmem:[#allocation2 + $0xc8] sm:$0xff]
        %v225 = vld [vmem:[#allocation2 + $0xd0] sm:$0xff]
        %v226 = vld [vmem:[#allocation2 + $0xd8] sm:$0xff]
        %v227 = vld [vmem:[#allocation2 + $0xe0] sm:$0xff]
        %v228 = vld [vmem:[#allocation2 + $0xe8] sm:$0xff]
        %v229 = vld [vmem:[#allocation2 + $0xf0] sm:$0xff]
        %v230 = vld [vmem:[#allocation2 + $0xf8] sm:$0xff]
        %v231 = vld [vmem:[#allocation4] sm:$0x1]
        %v233 = vlaneseq
        %v234 = vshrl.u32 %v233, 7
        %v235 = vsub.s32 0, %v234
        %v236 = vrot.slane %v231, %v235
        %238 = vmatprep.subr.mxu0 0.0
        %239 = vmatpush1.msra.mxu0 %v199
        %240 = vmatprep.subr.mxu0 0.0
        %241 = vmatpush1.msra.mxu0 %v200
        %242 = vmatprep.subr.mxu0 0.0
        %243 = vmatpush1.msra.mxu0 %v201
        %244 = vmatprep.subr.mxu0 0.0
        %245 = vmatpush1.msra.mxu0 %v202
        %246 = vmatprep.subr.mxu0 0.0
        %247 = vmatpush1.msra.mxu0 %v203
        %248 = vmatprep.subr.mxu0 0.0
        %249 = vmatpush1.msra.mxu0 %v204
        %250 = vmatprep.subr.mxu0 0.0
        %251 = vmatpush1.msra.mxu0 %v205
        %252 = vmatprep.subr.mxu0 0.0
        %253 = vmatpush1.msra.mxu0 %v206
        %254 = vmatprep.subr.mxu0 0.0
        %255 = vmatpush1.msra.mxu0 %v207
        %256 = vmatprep.subr.mxu0 0.0
        %257 = vmatpush1.msra.mxu0 %v208
        %258 = vmatprep.subr.mxu0 0.0
        %259 = vmatpush1.msra.mxu0 %v209
        %260 = vmatprep.subr.mxu0 0.0
        %261 = vmatpush1.msra.mxu0 %v210
        %262 = vmatprep.subr.mxu0 0.0
        %263 = vmatpush1.msra.mxu0 %v211
        %264 = vmatprep.subr.mxu0 0.0
        %265 = vmatpush1.msra.mxu0 %v212
        %266 = vmatprep.subr.mxu0 0.0
        %267 = vmatpush1.msra.mxu0 %v213
        %268 = vmatprep.subr.mxu0 0.0
        %269 = vmatpush1.msra.mxu0 %v214
        %270 = vmatprep.subr.mxu0 0.0
        %271 = vmatpush1.msra.mxu0 %v215
        %272 = vmatprep.subr.mxu0 0.0
        %273 = vmatpush1.msra.mxu0 %v216
        %274 = vmatprep.subr.mxu0 0.0
        %275 = vmatpush1.msra.mxu0 %v217
        %276 = vmatprep.subr.mxu0 0.0
        %277 = vmatpush1.msra.mxu0 %v218
        %278 = vmatprep.subr.mxu0 0.0
        %279 = vmatpush1.msra.mxu0 %v219
        %280 = vmatprep.subr.mxu0 0.0
        %281 = vmatpush1.msra.mxu0 %v220
        %282 = vmatprep.subr.mxu0 0.0
        %283 = vmatpush1.msra.mxu0 %v221
        %284 = vmatprep.subr.mxu0 0.0
        %285 = vmatpush1.msra.mxu0 %v222
        %286 = vmatprep.subr.mxu0 0.0
        %287 = vmatpush1.msra.mxu0 %v223
        %288 = vmatprep.subr.mxu0 0.0
        %289 = vmatpush1.msra.mxu0 %v224
        %290 = vmatprep.subr.mxu0 0.0
        %291 = vmatpush1.msra.mxu0 %v225
        %292 = vmatprep.subr.mxu0 0.0
        %293 = vmatpush1.msra.mxu0 %v226
        %294 = vmatprep.subr.mxu0 0.0
        %295 = vmatpush1.msra.mxu0 %v227
        %296 = vmatprep.subr.mxu0 0.0
        %297 = vmatpush1.msra.mxu0 %v228
        %298 = vmatprep.subr.mxu0 0.0
        %299 = vmatpush1.msra.mxu0 %v229
        %300 = vmatprep.subr.mxu0 0.0
        %301 = vmatpush1.msra.mxu0 %v230
        %302 = vmatprep.mubr.f32.mxu0 %v198
        %303 = vmatmul.mubr.f32.gmra.mrb[0].mxu0 %v197
        %v304 = vpop.f32.mrb[0].mxu0
        %v305 = vadd.f32 %v236, %v304
        %v306 = vpop.f32.mrb[0].mxu0
        %307 = vdwg.mxu0
        %v308 = vld [vmem:[%s192] sm:$0x1e]
        %v309 = vld [vmem:[%s192 + $0x8] sm:$0x1e]
        %s310 = scalar_lea.vmem [#allocation2], 256
        %v311 = vld [vmem:[%s310] sm:$0xff]
        %v312 = vld [vmem:[%s310 + $0x8] sm:$0xff]
        %v313 = vld [vmem:[%s310 + $0x10] sm:$0xff]
        %v314 = vld [vmem:[%s310 + $0x18] sm:$0xff]
        %v315 = vld [vmem:[%s310 + $0x20] sm:$0xff]
        %v316 = vld [vmem:[%s310 + $0x28] sm:$0xff]
        %v317 = vld [vmem:[%s310 + $0x30] sm:$0xff]
        %v318 = vld [vmem:[%s310 + $0x38] sm:$0xff]
        %v319 = vld [vmem:[%s310 + $0x40] sm:$0xff]
        %v320 = vld [vmem:[%s310 + $0x48] sm:$0xff]
        %v321 = vld [vmem:[%s310 + $0x50] sm:$0xff]
        %v322 = vld [vmem:[%s310 + $0x58] sm:$0xff]
        %v323 = vld [vmem:[%s310 + $0x60] sm:$0xff]
        %v324 = vld [vmem:[%s310 + $0x68] sm:$0xff]
        %v325 = vld [vmem:[%s310 + $0x70] sm:$0xff]
        %v326 = vld [vmem:[%s310 + $0x78] sm:$0xff]
        %v327 = vld [vmem:[%s310 + $0x80] sm:$0xff]
        %v328 = vld [vmem:[%s310 + $0x88] sm:$0xff]
        %v329 = vld [vmem:[%s310 + $0x90] sm:$0xff]
        %v330 = vld [vmem:[%s310 + $0x98] sm:$0xff]
        %v331 = vld [vmem:[%s310 + $0xa0] sm:$0xff]
        %v332 = vld [vmem:[%s310 + $0xa8] sm:$0xff]
        %v333 = vld [vmem:[%s310 + $0xb0] sm:$0xff]
        %v334 = vld [vmem:[%s310 + $0xb8] sm:$0xff]
        %v335 = vld [vmem:[%s310 + $0xc0] sm:$0xff]
        %v336 = vld [vmem:[%s310 + $0xc8] sm:$0xff]
        %v337 = vld [vmem:[%s310 + $0xd0] sm:$0xff]
        %v338 = vld [vmem:[%s310 + $0xd8] sm:$0xff]
        %v339 = vld [vmem:[%s310 + $0xe0] sm:$0xff]
        %v340 = vld [vmem:[%s310 + $0xe8] sm:$0xff]
        %v341 = vld [vmem:[%s310 + $0xf0] sm:$0xff]
        %v342 = vld [vmem:[%s310 + $0xf8] sm:$0xff]
        %v345 = vrot.slane %v308, 1
        %v346 = vrot.slane %v309, 1
        %349 = vmatprep.subr.mxu0 0.0
        %350 = vmatpush1.msra.mxu0 %v311
        %351 = vmatprep.subr.mxu0 0.0
        %352 = vmatpush1.msra.mxu0 %v312
        %353 = vmatprep.subr.mxu0 0.0
        %354 = vmatpush1.msra.mxu0 %v313
        %355 = vmatprep.subr.mxu0 0.0
        %356 = vmatpush1.msra.mxu0 %v314
        %357 = vmatprep.subr.mxu0 0.0
        %358 = vmatpush1.msra.mxu0 %v315
        %359 = vmatprep.subr.mxu0 0.0
        %360 = vmatpush1.msra.mxu0 %v316
        %361 = vmatprep.subr.mxu0 0.0
        %362 = vmatpush1.msra.mxu0 %v317
        %363 = vmatprep.subr.mxu0 0.0
        %364 = vmatpush1.msra.mxu0 %v318
        %365 = vmatprep.subr.mxu0 0.0
        %366 = vmatpush1.msra.mxu0 %v319
        %367 = vmatprep.subr.mxu0 0.0
        %368 = vmatpush1.msra.mxu0 %v320
        %369 = vmatprep.subr.mxu0 0.0
        %370 = vmatpush1.msra.mxu0 %v321
        %371 = vmatprep.subr.mxu0 0.0
        %372 = vmatpush1.msra.mxu0 %v322
        %373 = vmatprep.subr.mxu0 0.0
        %374 = vmatpush1.msra.mxu0 %v323
        %375 = vmatprep.subr.mxu0 0.0
        %376 = vmatpush1.msra.mxu0 %v324
        %377 = vmatprep.subr.mxu0 0.0
        %378 = vmatpush1.msra.mxu0 %v325
        %379 = vmatprep.subr.mxu0 0.0
        %380 = vmatpush1.msra.mxu0 %v326
        %381 = vmatprep.subr.mxu0 0.0
        %382 = vmatpush1.msra.mxu0 %v327
        %383 = vmatprep.subr.mxu0 0.0
        %384 = vmatpush1.msra.mxu0 %v328
        %385 = vmatprep.subr.mxu0 0.0
        %386 = vmatpush1.msra.mxu0 %v329
        %387 = vmatprep.subr.mxu0 0.0
        %388 = vmatpush1.msra.mxu0 %v330
        %389 = vmatprep.subr.mxu0 0.0
        %390 = vmatpush1.msra.mxu0 %v331
        %391 = vmatprep.subr.mxu0 0.0
        %392 = vmatpush1.msra.mxu0 %v332
        %393 = vmatprep.subr.mxu0 0.0
        %394 = vmatpush1.msra.mxu0 %v333
        %395 = vmatprep.subr.mxu0 0.0
        %396 = vmatpush1.msra.mxu0 %v334
        %397 = vmatprep.subr.mxu0 0.0
        %398 = vmatpush1.msra.mxu0 %v335
        %399 = vmatprep.subr.mxu0 0.0
        %400 = vmatpush1.msra.mxu0 %v336
        %401 = vmatprep.subr.mxu0 0.0
        %402 = vmatpush1.msra.mxu0 %v337
        %403 = vmatprep.subr.mxu0 0.0
        %404 = vmatpush1.msra.mxu0 %v338
        %405 = vmatprep.subr.mxu0 0.0
        %406 = vmatpush1.msra.mxu0 %v339
        %407 = vmatprep.subr.mxu0 0.0
        %408 = vmatpush1.msra.mxu0 %v340
        %409 = vmatprep.subr.mxu0 0.0
        %410 = vmatpush1.msra.mxu0 %v341
        %411 = vmatprep.subr.mxu0 0.0
        %412 = vmatpush1.msra.mxu0 %v342
        %413 = vmatprep.mubr.f32.mxu0 %v346
        %414 = vmatmul.mubr.f32.gmra.mrb[0].mxu0 %v345
        %v415 = vpop.f32.mrb[0].mxu0
        %v416 = vadd.f32 0.0, %v415
        %v417 = vpop.f32.mrb[0].mxu0
        %418 = vdwg.mxu0
        %v419 = vadd.f32 %v305, %v416
        %v420 = vld [vmem:[%s192] sm:$0x3c]
        %v421 = vld [vmem:[%s192 + $0x8] sm:$0x3c]
        %s422 = scalar_lea.vmem [#allocation2], 512
        %v423 = vld [vmem:[%s422] sm:$0xff]
        %v424 = vld [vmem:[%s422 + $0x8] sm:$0xff]
        %v425 = vld [vmem:[%s422 + $0x10] sm:$0xff]
        %v426 = vld [vmem:[%s422 + $0x18] sm:$0xff]
        %v427 = vld [vmem:[%s422 + $0x20] sm:$0xff]
        %v428 = vld [vmem:[%s422 + $0x28] sm:$0xff]
        %v429 = vld [vmem:[%s422 + $0x30] sm:$0xff]
        %v430 = vld [vmem:[%s422 + $0x38] sm:$0xff]
        %v431 = vld [vmem:[%s422 + $0x40] sm:$0xff]
        %v432 = vld [vmem:[%s422 + $0x48] sm:$0xff]
        %v433 = vld [vmem:[%s422 + $0x50] sm:$0xff]
        %v434 = vld [vmem:[%s422 + $0x58] sm:$0xff]
        %v435 = vld [vmem:[%s422 + $0x60] sm:$0xff]
        %v436 = vld [vmem:[%s422 + $0x68] sm:$0xff]
        %v437 = vld [vmem:[%s422 + $0x70] sm:$0xff]
        %v438 = vld [vmem:[%s422 + $0x78] sm:$0xff]
        %v439 = vld [vmem:[%s422 + $0x80] sm:$0xff]
        %v440 = vld [vmem:[%s422 + $0x88] sm:$0xff]
        %v441 = vld [vmem:[%s422 + $0x90] sm:$0xff]
        %v442 = vld [vmem:[%s422 + $0x98] sm:$0xff]
        %v443 = vld [vmem:[%s422 + $0xa0] sm:$0xff]
        %v444 = vld [vmem:[%s422 + $0xa8] sm:$0xff]
        %v445 = vld [vmem:[%s422 + $0xb0] sm:$0xff]
        %v446 = vld [vmem:[%s422 + $0xb8] sm:$0xff]
        %v447 = vld [vmem:[%s422 + $0xc0] sm:$0xff]
        %v448 = vld [vmem:[%s422 + $0xc8] sm:$0xff]
        %v449 = vld [vmem:[%s422 + $0xd0] sm:$0xff]
        %v450 = vld [vmem:[%s422 + $0xd8] sm:$0xff]
        %v451 = vld [vmem:[%s422 + $0xe0] sm:$0xff]
        %v452 = vld [vmem:[%s422 + $0xe8] sm:$0xff]
        %v453 = vld [vmem:[%s422 + $0xf0] sm:$0xff]
        %v454 = vld [vmem:[%s422 + $0xf8] sm:$0xff]
        %v457 = vrot.slane %v420, 2
        %v458 = vrot.slane %v421, 2
        %461 = vmatprep.subr.mxu0 0.0
        %462 = vmatpush1.msra.mxu0 %v423
        %463 = vmatprep.subr.mxu0 0.0
        %464 = vmatpush1.msra.mxu0 %v424
        %465 = vmatprep.subr.mxu0 0.0
        %466 = vmatpush1.msra.mxu0 %v425
        %467 = vmatprep.subr.mxu0 0.0
        %468 = vmatpush1.msra.mxu0 %v426
        %469 = vmatprep.subr.mxu0 0.0
        %470 = vmatpush1.msra.mxu0 %v427
        %471 = vmatprep.subr.mxu0 0.0
        %472 = vmatpush1.msra.mxu0 %v428
        %473 = vmatprep.subr.mxu0 0.0
        %474 = vmatpush1.msra.mxu0 %v429
        %475 = vmatprep.subr.mxu0 0.0
        %476 = vmatpush1.msra.mxu0 %v430
        %477 = vmatprep.subr.mxu0 0.0
        %478 = vmatpush1.msra.mxu0 %v431
        %479 = vmatprep.subr.mxu0 0.0
        %480 = vmatpush1.msra.mxu0 %v432
        %481 = vmatprep.subr.mxu0 0.0
        %482 = vmatpush1.msra.mxu0 %v433
        %483 = vmatprep.subr.mxu0 0.0
        %484 = vmatpush1.msra.mxu0 %v434
        %485 = vmatprep.subr.mxu0 0.0
        %486 = vmatpush1.msra.mxu0 %v435
        %487 = vmatprep.subr.mxu0 0.0
        %488 = vmatpush1.msra.mxu0 %v436
        %489 = vmatprep.subr.mxu0 0.0
        %490 = vmatpush1.msra.mxu0 %v437
        %491 = vmatprep.subr.mxu0 0.0
        %492 = vmatpush1.msra.mxu0 %v438
        %493 = vmatprep.subr.mxu0 0.0
        %494 = vmatpush1.msra.mxu0 %v439
        %495 = vmatprep.subr.mxu0 0.0
        %496 = vmatpush1.msra.mxu0 %v440
        %497 = vmatprep.subr.mxu0 0.0
        %498 = vmatpush1.msra.mxu0 %v441
        %499 = vmatprep.subr.mxu0 0.0
        %500 = vmatpush1.msra.mxu0 %v442
        %501 = vmatprep.subr.mxu0 0.0
        %502 = vmatpush1.msra.mxu0 %v443
        %503 = vmatprep.subr.mxu0 0.0
        %504 = vmatpush1.msra.mxu0 %v444
        %505 = vmatprep.subr.mxu0 0.0
        %506 = vmatpush1.msra.mxu0 %v445
        %507 = vmatprep.subr.mxu0 0.0
        %508 = vmatpush1.msra.mxu0 %v446
        %509 = vmatprep.subr.mxu0 0.0
        %510 = vmatpush1.msra.mxu0 %v447
        %511 = vmatprep.subr.mxu0 0.0
        %512 = vmatpush1.msra.mxu0 %v448
        %513 = vmatprep.subr.mxu0 0.0
        %514 = vmatpush1.msra.mxu0 %v449
        %515 = vmatprep.subr.mxu0 0.0
        %516 = vmatpush1.msra.mxu0 %v450
        %517 = vmatprep.subr.mxu0 0.0
        %518 = vmatpush1.msra.mxu0 %v451
        %519 = vmatprep.subr.mxu0 0.0
        %520 = vmatpush1.msra.mxu0 %v452
        %521 = vmatprep.subr.mxu0 0.0
        %522 = vmatpush1.msra.mxu0 %v453
        %523 = vmatprep.subr.mxu0 0.0
        %524 = vmatpush1.msra.mxu0 %v454
        %525 = vmatprep.mubr.f32.mxu0 %v458
        %526 = vmatmul.mubr.f32.gmra.mrb[0].mxu0 %v457
        %v527 = vpop.f32.mrb[0].mxu0
        %v528 = vadd.f32 0.0, %v527
        %v529 = vpop.f32.mrb[0].mxu0
        %530 = vdwg.mxu0
        %v531 = vadd.f32 %v419, %v528
        %532 = vst [vmem:[%s196] sm:$0xf] %v531
        %p533 = scmp.lt.s32.totalorder %s16, 1
        %s534 = scalar_select %p533, %s16, 1
        %s535 = smul.addr %s534, 4
        %s536 = scalar_lea.vmem %s3, %s535
        // Predicated region
        $region41: #{forward.8} parent=31 // pred_check
          %p537 = pneg %p102
        $region42: #{forward.8} parent=31 // pred_check_branch
          %539 = sbr.rel (%p537) target = $region44
        $region43: #{forward.8} parent=31 // pred_region
          _
        $region44: #{forward.8} parent=31 // pred_fallthru
          _
      $region32: #{forward.8} parent=5 // pred_fallthru
        _
      %p540 = scmp.le.s32.totalorder 2, %s11
      // Predicated region
      $region45: #{forward.8} parent=5 // pred_check
        %p541 = pneg %p540
      $region46: #{forward.8} parent=5 // pred_check_branch
        %543 = sbr.rel (%p541) target = $region48
      $region47: #{forward.8} parent=5 // pred_region
        %s544 = ssub.s32 %s11, 2
        // Predicated region
        $region49: #{forward.8} parent=47 // pred_check
          %p545 = pneg %p108
        $region50: #{forward.8} parent=47 // pred_check_branch
          %547 = sbr.rel (%p545) target = $region52
        $region51: #{forward.8} parent=47 // pred_region
          %p548 = scmp.lt.s32.totalorder %s17, 1
          %s549 = scalar_select %p548, %s17, 1
          %s550 = smul.addr %s549, 4
          %s551 = scalar_lea.vmem %s3, %s550
        $region52: #{forward.8} parent=47 // pred_fallthru
          _
      $region48: #{forward.8} parent=5 // pred_fallthru
        _
    $region6: #{forward.8} parent=1 // loop_footer
      %s15 = sadd.s32 1, %s11
    $region7: #{forward.8} parent=1 // loop_footer_branch
      %10 = sbr.rel target = $region3
    $region8: #{forward.8} parent=1 // loop_exit
      _
    %552 = vsyncpa [#allocation3], 1
    %s553 = scalar_lea.sflag [#allocation3], 1
    %554 = vsyncpa %s553, 1
    %555 = vsyncpa [#allocation5], 1

// kernel: forward.7
$region0: #{forward.7}
  #allocation0 [shape = 'u32[]', space=smem, size = 0x4, offset = 0x4, fixed_abs, tag = 'smem constant byte address 0x4 - core index']
  #allocation1 [shape = 'u32[144,128]{1,0:T(1,128)}', space=vmem, size = 0x12000, scoped, tag = 'internal scratch']
  %s0 = inlined_call_operand.vmem [shape: f32[2,10,256], index: 0, kind: input, shape index: {}]
  %s1 = inlined_call_operand.hbm [shape: f32[3,256,128], index: 1, kind: input, shape index: {}]
  %s2 = inlined_call_operand.hbm [shape: f32[1,128], index: 2, kind: input, shape index: {}]
  %s3 = inlined_call_operand.vmem [shape: f32[2,8,128], index: 3, kind: output, shape index: {}]
  %s4 = sld [smem:[#allocation0]]
  $region53: #{forward.7} parent=0
    _
  %s6 = ssub.s32 1, %s4
  %s7 = scalar_select 0, %s6, %s4
  $region1: #{forward.7} parent=0
    #allocation2 [shape = 'u8[393216]{0}', space=vmem, size = 0x60000, scoped, tag = 'input window, operand 1, single buffered']
    #allocation3 [shape = 's32[2]{0}', space=sflag, size = 0x8, scoped, tag = 'scoped memory for forward.7']
    #allocation4 [shape = 'u8[512]{0}', space=vmem, size = 0x400, scoped, tag = 'input window, operand 2, single buffered']
    #allocation5 [shape = 's32[1]{0}', space=sflag, size = 0x4, scoped, tag = 'scoped memory for forward.7']
    %8 = vsyncpa [#allocation3], 0
    %9 = vsyncpa [#allocation5], 0
    loop: start=0, step=1, limit=4
    $region2: #{forward.7} parent=1 // loop_pre_header
      _
    $region3: #{forward.7} parent=1 // loop_header
      %s11 = sphi 0, %s15
      %p12 = scmp.ge.s32.totalorder %s11, 4
      %s21 = sphi 0, %s23
      %s24 = sphi 0, %s21
      %s25 = sphi 0, %s24
      %s41 = sphi 0, %s25
      %s45 = sphi 0, %s45
      %s47 = sphi 0, %s45
      %s48 = sphi 0, %s47
      %s62 = sphi 0, %s48
      %s66 = sphi 0, %s66
      %s68 = sphi 0, %s66
      %s69 = sphi 0, %s68
      %s83 = sphi 0, %s69
      %s89 = sphi 0, %s91
      %s92 = sphi 0, %s89
      %s93 = sphi 0, %s92
      %s109 = sphi 0, %s93
    $region4: #{forward.7} parent=1 // loop_header_branch
      %14 = sbr.rel (%p12) target = $region8
    $region5: #{forward.7} parent=1 // loop_body
      %s16 = ssub.s32 %s11, 1
      %s17 = ssub.s32 %s11, 2
      %s18 = sadd.s32 %s11, 1
      %s19 = ssub.s32 %s11, %s18
      %p20 = scmp.eq.s32.totalorder %s19, 0
      %s22 = sadd.s32 %s21, 1
      %s23 = scalar_select %p20, %s21, %s22
      %p26 = pneg %p20
      %p27 = scmp.eq.s32.totalorder %s11, 1
      %p28 = por %p26, %p27
      %p29 = scmp.ne.s32.totalorder %s21, %s24
      %p30 = scmp.eq.s32.totalorder %s11, 0
      %p31 = por %p29, %p30
      %p32 = scmp.ne.s32.totalorder %s21, %s24
      %p33 = scmp.eq.s32.totalorder %s16, 1
      %p34 = por %p32, %p33
      %p35 = scmp.ne.s32.totalorder %s24, %s25
      %p36 = scmp.eq.s32.totalorder %s16, 0
      %p37 = por %p35, %p36
      %p38 = scmp.ne.s32.totalorder %s24, %s25
      %p39 = scmp.eq.s32.totalorder %s17, 1
      %p40 = por %p38, %p39
      %p42 = scmp.ne.s32.totalorder %s25, %s41
      %p43 = scmp.eq.s32.totalorder %s17, 0
      %p44 = por %p42, %p43
      %s46 = sadd.s32 %s45, 1
      %p49 = scmp.eq.s32.totalorder %s11, 1
      %p50 = scmp.ne.s32.totalorder %s45, %s47
      %p51 = scmp.eq.s32.totalorder %s11, 0
      %p52 = por %p50, %p51
      %p53 = scmp.ne.s32.totalorder %s45, %s47
      %p54 = scmp.eq.s32.totalorder %s16, 1
      %p55 = por %p53, %p54
      %p56 = scmp.ne.s32.totalorder %s47, %s48
      %p57 = scmp.eq.s32.totalorder %s16, 0
      %p58 = por %p56, %p57
      %p59 = scmp.ne.s32.totalorder %s47, %s48
      %p60 = scmp.eq.s32.totalorder %s17, 1
      %p61 = por %p59, %p60
      %p63 = scmp.ne.s32.totalorder %s48, %s62
      %p64 = scmp.eq.s32.totalorder %s17, 0
      %p65 = por %p63, %p64
      %s67 = sadd.s32 %s66, 1
      %p70 = scmp.eq.s32.totalorder %s11, 1
      %p71 = scmp.ne.s32.totalorder %s66, %s68
      %p72 = scmp.eq.s32.totalorder %s11, 0
      %p73 = por %p71, %p72
      %p74 = scmp.ne.s32.totalorder %s66, %s68
      %p75 = scmp.eq.s32.totalorder %s16, 1
      %p76 = por %p74, %p75
      %p77 = scmp.ne.s32.totalorder %s68, %s69
      %p78 = scmp.eq.s32.totalorder %s16, 0
      %p79 = por %p77, %p78
      %p80 = scmp.ne.s32.totalorder %s68, %s69
      %p81 = scmp.eq.s32.totalorder %s17, 1
      %p82 = por %p80, %p81
      %p84 = scmp.ne.s32.totalorder %s69, %s83
      %p85 = scmp.eq.s32.totalorder %s17, 0
      %p86 = por %p84, %p85
      %s87 = ssub.s32 %s11, %s18
      %p88 = scmp.eq.s32.totalorder %s87, 0
      %s90 = sadd.s32 %s89, 1
      %s91 = scalar_select %p88, %s89, %s90
      %p94 = pneg %p88
      %p95 = scmp.eq.s32.totalorder %s11, 1
      %p96 = por %p94, %p95
      %p97 = scmp.ne.s32.totalorder %s89, %s92
      %p98 = scmp.eq.s32.totalorder %s11, 0
      %p99 = por %p97, %p98
      %p100 = scmp.ne.s32.totalorder %s89, %s92
      %p101 = scmp.eq.s32.totalorder %s16, 1
      %p102 = por %p100, %p101
      %p103 = scmp.ne.s32.totalorder %s92, %s93
      %p104 = scmp.eq.s32.totalorder %s16, 0
      %p105 = por %p103, %p104
      %p106 = scmp.ne.s32.totalorder %s92, %s93
      %p107 = scmp.eq.s32.totalorder %s17, 1
      %p108 = por %p106, %p107
      %p110 = scmp.ne.s32.totalorder %s93, %s109
      %p111 = scmp.eq.s32.totalorder %s17, 0
      %p112 = por %p110, %p111
      %p113 = scmp.le.s32.totalorder 1, %s11
      %p114 = scmp.lt.s32.totalorder %s11, 3
      %p115 = pnand %p113, %p114
      %p116 = pneg %p115
      // Predicated region
      $region9: #{forward.7} parent=5 // pred_check
        _
      $region10: #{forward.7} parent=5 // pred_check_branch
        %118 = sbr.rel (%p115) target = $region12
      $region11: #{forward.7} parent=5 // pred_region
        %s119 = ssub.s32 %s11, 1
        // Predicated region
        $region13: #{forward.7} parent=11 // pred_check
          %p120 = pneg %p58
        $region14: #{forward.7} parent=11 // pred_check_branch
          %122 = sbr.rel (%p120) target = $region16
        $region15: #{forward.7} parent=11 // pred_region
          %s124 = ssub.s32 12288, 12288
          %125 = vsyncadd [#allocation3], %s124
          %s126 = sshll.u32 [#allocation2], 4
          %s127 = int_to_ptr.vmem [resolvable:$true] %s126
          %132 = dma.hbm_to_vmem [thread:$0]  %s1, 12288, %s127, [#allocation3], 128, 128, 8
        $region16: #{forward.7} parent=11 // pred_fallthru
          _
        // Predicated region
        $region17: #{forward.7} parent=11 // pred_check
          %p133 = pneg %p79
        $region18: #{forward.7} parent=11 // pred_check_branch
          %135 = sbr.rel (%p133) target = $region20
        $region19: #{forward.7} parent=11 // pred_region
          %s137 = ssub.s32 16, 16
          %138 = vsyncadd [#allocation5], %s137
          %s140 = sshll.u32 [#allocation4], 4
          %s141 = int_to_ptr.vmem [resolvable:$true] %s140
          %143 = dma.hbm_to_vmem [thread:$0]  %s2, 16, %s141, [#allocation5]
        $region20: #{forward.7} parent=11 // pred_fallthru
          _
      $region12: #{forward.7} parent=5 // pred_fallthru
        _
      %p144 = scmp.lt.s32.totalorder %s11, 2
      // Predicated region
      $region21: #{forward.7} parent=5 // pred_check
        %p145 = pneg %p144
      $region22: #{forward.7} parent=5 // pred_check_branch
        %147 = sbr.rel (%p145) target = $region24
      $region23: #{forward.7} parent=5 // pred_region
        // Predicated region
        $region25: #{forward.7} parent=23 // pred_check
          %p148 = pneg %p31
        $region26: #{forward.7} parent=23 // pred_check_branch
          %150 = sbr.rel (%p148) target = $region28
        $region27: #{forward.7} parent=23 // pred_region
          %p151 = scmp.lt.s32.totalorder %s11, 1
          %s152 = scalar_select %p151, %s11, 1
          %s153 = smul.addr %s152, 4
          %s154 = smul.addr %s153, 8
          %s155 = scalar_lea.vmem %s0, %s154
        $region28: #{forward.7} parent=23 // pred_fallthru
          _
      $region24: #{forward.7} parent=5 // pred_fallthru
        _
      %p156 = scmp.le.s32.totalorder 1, %s11
      %p157 = scmp.lt.s32.totalorder %s11, 3
      %p158 = pnand %p156, %p157
      %p159 = pneg %p158
      // Predicated region
      $region29: #{forward.7} parent=5 // pred_check
        _
      $region30: #{forward.7} parent=5 // pred_check_branch
        %161 = sbr.rel (%p158) target = $region32
      $region31: #{forward.7} parent=5 // pred_region
        %s162 = ssub.s32 %s11, 1
        // Predicated region
        $region33: #{forward.7} parent=31 // pred_check
          %p163 = pneg %p58
        $region34: #{forward.7} parent=31 // pred_check_branch
          %165 = sbr.rel (%p163) target = $region36
        $region35: #{forward.7} parent=31 // pred_region
          %166 = dma.done [#allocation3], 12288
        $region36: #{forward.7} parent=31 // pred_fallthru
          _
        // Predicated region
        $region37: #{forward.7} parent=31 // pred_check
          %p167 = pneg %p79
        $region38: #{forward.7} parent=31 // pred_check_branch
          %169 = sbr.rel (%p167) target = $region40
        $region39: #{forward.7} parent=31 // pred_region
          %170 = dma.done [#allocation5], 16
        $region40: #{forward.7} parent=31 // pred_fallthru
          _
        %p171 = scmp.lt.s32.totalorder %s16, 1
        %s172 = scalar_select %p171, %s16, 1
        %s173 = smul.addr %s172, 4
        %s174 = smul.addr %s173, 8
        %s175 = scalar_lea.vmem %s0, %s174
        %p176 = pneg %p37
        %p177 = pneg %p34
        %p178 = pneg %p58
        %p179 = pneg %p55
        %p180 = pneg %p79
        %p181 = pneg %p76
        %p182 = pneg %p105
        %p183 = pneg %p102
        %p184 = scmp.lt.s32.totalorder %s16, 1
        %s185 = scalar_select %p184, %s16, 1
        %s186 = smul.addr %s185, 8
        %s187 = scalar_lea.vmem %s3, %s186
        %p188 = scmp.lt.s32.totalorder %s16, 1
        %s189 = scalar_select %p188, %s16, 1
        %s190 = smul.addr %s189, 4
        %s191 = smul.addr %s190, 8
        %s192 = scalar_lea.vmem %s0, %s191
        %p193 = scmp.lt.s32.totalorder %s16, 1
        %s194 = scalar_select %p193, %s16, 1
        %s195 = smul.addr %s194, 8
        %s196 = scalar_lea.vmem %s3, %s195
        %v197 = vld [vmem:[%s192] sm:$0xff]
        %v198 = vld [vmem:[%s192 + $0x8] sm:$0xff]
        %v199 = vld [vmem:[#allocation2] sm:$0xff]
        %v200 = vld [vmem:[#allocation2 + $0x8] sm:$0xff]
        %v201 = vld [vmem:[#allocation2 + $0x10] sm:$0xff]
        %v202 = vld [vmem:[#allocation2 + $0x18] sm:$0xff]
        %v203 = vld [vmem:[#allocation2 + $0x20] sm:$0xff]
        %v204 = vld [vmem:[#allocation2 + $0x28] sm:$0xff]
        %v205 = vld [vmem:[#allocation2 + $0x30] sm:$0xff]
        %v206 = vld [vmem:[#allocation2 + $0x38] sm:$0xff]
        %v207 = vld [vmem:[#allocation2 + $0x40] sm:$0xff]
        %v208 = vld [vmem:[#allocation2 + $0x48] sm:$0xff]
        %v209 = vld [vmem:[#allocation2 + $0x50] sm:$0xff]
        %v210 = vld [vmem:[#allocation2 + $0x58] sm:$0xff]
        %v211 = vld [vmem:[#allocation2 + $0x60] sm:$0xff]
        %v212 = vld [vmem:[#allocation2 + $0x68] sm:$0xff]
        %v213 = vld [vmem:[#allocation2 + $0x70] sm:$0xff]
        %v214 = vld [vmem:[#allocation2 + $0x78] sm:$0xff]
        %v215 = vld [vmem:[#allocation2 + $0x80] sm:$0xff]
        %v216 = vld [vmem:[#allocation2 + $0x88] sm:$0xff]
        %v217 = vld [vmem:[#allocation2 + $0x90] sm:$0xff]
        %v218 = vld [vmem:[#allocation2 + $0x98] sm:$0xff]
        %v219 = vld [vmem:[#allocation2 + $0xa0] sm:$0xff]
        %v220 = vld [vmem:[#allocation2 + $0xa8] sm:$0xff]
        %v221 = vld [vmem:[#allocation2 + $0xb0] sm:$0xff]
        %v222 = vld [vmem:[#allocation2 + $0xb8] sm:$0xff]
        %v223 = vld [vmem:[#allocation2 + $0xc0] sm:$0xff]
        %v224 = vld [vmem:[#allocation2 + $0xc8] sm:$0xff]
        %v225 = vld [vmem:[#allocation2 + $0xd0] sm:$0xff]
        %v226 = vld [vmem:[#allocation2 + $0xd8] sm:$0xff]
        %v227 = vld [vmem:[#allocation2 + $0xe0] sm:$0xff]
        %v228 = vld [vmem:[#allocation2 + $0xe8] sm:$0xff]
        %v229 = vld [vmem:[#allocation2 + $0xf0] sm:$0xff]
        %v230 = vld [vmem:[#allocation2 + $0xf8] sm:$0xff]
        %v231 = vld [vmem:[#allocation4] sm:$0x1]
        %v233 = vlaneseq
        %v234 = vshrl.u32 %v233, 7
        %v235 = vsub.s32 0, %v234
        %v236 = vrot.slane %v231, %v235
        %238 = vmatprep.subr.mxu0 0.0
        %239 = vmatpush1.msra.mxu0 %v199
        %240 = vmatprep.subr.mxu0 0.0
        %241 = vmatpush1.msra.mxu0 %v200
        %242 = vmatprep.subr.mxu0 0.0
        %243 = vmatpush1.msra.mxu0 %v201
        %244 = vmatprep.subr.mxu0 0.0
        %245 = vmatpush1.msra.mxu0 %v202
        %246 = vmatprep.subr.mxu0 0.0
        %247 = vmatpush1.msra.mxu0 %v203
        %248 = vmatprep.subr.mxu0 0.0
        %249 = vmatpush1.msra.mxu0 %v204
        %250 = vmatprep.subr.mxu0 0.0
        %251 = vmatpush1.msra.mxu0 %v205
        %252 = vmatprep.subr.mxu0 0.0
        %253 = vmatpush1.msra.mxu0 %v206
        %254 = vmatprep.subr.mxu0 0.0
        %255 = vmatpush1.msra.mxu0 %v207
        %256 = vmatprep.subr.mxu0 0.0
        %257 = vmatpush1.msra.mxu0 %v208
        %258 = vmatprep.subr.mxu0 0.0
        %259 = vmatpush1.msra.mxu0 %v209
        %260 = vmatprep.subr.mxu0 0.0
        %261 = vmatpush1.msra.mxu0 %v210
        %262 = vmatprep.subr.mxu0 0.0
        %263 = vmatpush1.msra.mxu0 %v211
        %264 = vmatprep.subr.mxu0 0.0
        %265 = vmatpush1.msra.mxu0 %v212
        %266 = vmatprep.subr.mxu0 0.0
        %267 = vmatpush1.msra.mxu0 %v213
        %268 = vmatprep.subr.mxu0 0.0
        %269 = vmatpush1.msra.mxu0 %v214
        %270 = vmatprep.subr.mxu0 0.0
        %271 = vmatpush1.msra.mxu0 %v215
        %272 = vmatprep.subr.mxu0 0.0
        %273 = vmatpush1.msra.mxu0 %v216
        %274 = vmatprep.subr.mxu0 0.0
        %275 = vmatpush1.msra.mxu0 %v217
        %276 = vmatprep.subr.mxu0 0.0
        %277 = vmatpush1.msra.mxu0 %v218
        %278 = vmatprep.subr.mxu0 0.0
        %279 = vmatpush1.msra.mxu0 %v219
        %280 = vmatprep.subr.mxu0 0.0
        %281 = vmatpush1.msra.mxu0 %v220
        %282 = vmatprep.subr.mxu0 0.0
        %283 = vmatpush1.msra.mxu0 %v221
        %284 = vmatprep.subr.mxu0 0.0
        %285 = vmatpush1.msra.mxu0 %v222
        %286 = vmatprep.subr.mxu0 0.0
        %287 = vmatpush1.msra.mxu0 %v223
        %288 = vmatprep.subr.mxu0 0.0
        %289 = vmatpush1.msra.mxu0 %v224
        %290 = vmatprep.subr.mxu0 0.0
        %291 = vmatpush1.msra.mxu0 %v225
        %292 = vmatprep.subr.mxu0 0.0
        %293 = vmatpush1.msra.mxu0 %v226
        %294 = vmatprep.subr.mxu0 0.0
        %295 = vmatpush1.msra.mxu0 %v227
        %296 = vmatprep.subr.mxu0 0.0
        %297 = vmatpush1.msra.mxu0 %v228
        %298 = vmatprep.subr.mxu0 0.0
        %299 = vmatpush1.msra.mxu0 %v229
        %300 = vmatprep.subr.mxu0 0.0
        %301 = vmatpush1.msra.mxu0 %v230
        %302 = vmatprep.mubr.f32.mxu0 %v198
        %303 = vmatmul.mubr.f32.gmra.mrb[0].mxu0 %v197
        %v304 = vpop.f32.mrb[0].mxu0
        %v305 = vadd.f32 %v236, %v304
        %v306 = vpop.f32.mrb[0].mxu0
        %307 = vdwg.mxu0
        %v308 = vld [vmem:[%s192] sm:$0xfe]
        %v309 = vld [vmem:[%s192 + $0x8] sm:$0xfe]
        %v310 = vld [vmem:[%s192 + $0x10] sm:$0x1]
        %v311 = vld [vmem:[%s192 + $0x18] sm:$0x1]
        %s312 = scalar_lea.vmem [#allocation2], 256
        %v313 = vld [vmem:[%s312] sm:$0xff]
        %v314 = vld [vmem:[%s312 + $0x8] sm:$0xff]
        %v315 = vld [vmem:[%s312 + $0x10] sm:$0xff]
        %v316 = vld [vmem:[%s312 + $0x18] sm:$0xff]
        %v317 = vld [vmem:[%s312 + $0x20] sm:$0xff]
        %v318 = vld [vmem:[%s312 + $0x28] sm:$0xff]
        %v319 = vld [vmem:[%s312 + $0x30] sm:$0xff]
        %v320 = vld [vmem:[%s312 + $0x38] sm:$0xff]
        %v321 = vld [vmem:[%s312 + $0x40] sm:$0xff]
        %v322 = vld [vmem:[%s312 + $0x48] sm:$0xff]
        %v323 = vld [vmem:[%s312 + $0x50] sm:$0xff]
        %v324 = vld [vmem:[%s312 + $0x58] sm:$0xff]
        %v325 = vld [vmem:[%s312 + $0x60] sm:$0xff]
        %v326 = vld [vmem:[%s312 + $0x68] sm:$0xff]
        %v327 = vld [vmem:[%s312 + $0x70] sm:$0xff]
        %v328 = vld [vmem:[%s312 + $0x78] sm:$0xff]
        %v329 = vld [vmem:[%s312 + $0x80] sm:$0xff]
        %v330 = vld [vmem:[%s312 + $0x88] sm:$0xff]
        %v331 = vld [vmem:[%s312 + $0x90] sm:$0xff]
        %v332 = vld [vmem:[%s312 + $0x98] sm:$0xff]
        %v333 = vld [vmem:[%s312 + $0xa0] sm:$0xff]
        %v334 = vld [vmem:[%s312 + $0xa8] sm:$0xff]
        %v335 = vld [vmem:[%s312 + $0xb0] sm:$0xff]
        %v336 = vld [vmem:[%s312 + $0xb8] sm:$0xff]
        %v337 = vld [vmem:[%s312 + $0xc0] sm:$0xff]
        %v338 = vld [vmem:[%s312 + $0xc8] sm:$0xff]
        %v339 = vld [vmem:[%s312 + $0xd0] sm:$0xff]
        %v340 = vld [vmem:[%s312 + $0xd8] sm:$0xff]
        %v341 = vld [vmem:[%s312 + $0xe0] sm:$0xff]
        %v342 = vld [vmem:[%s312 + $0xe8] sm:$0xff]
        %v343 = vld [vmem:[%s312 + $0xf0] sm:$0xff]
        %v344 = vld [vmem:[%s312 + $0xf8] sm:$0xff]
        %vm349 = vcmask 1046528
        %v350 = vrot.slane %v308, 1
        %v351 = vrot.slane %v310, 1
        %v352 = vsel %vm349, %v350, %v351
        %v353 = vrot.slane %v309, 1
        %v354 = vrot.slane %v311, 1
        %v355 = vsel %vm349, %v353, %v354
        %358 = vmatprep.subr.mxu0 0.0
        %359 = vmatpush1.msra.mxu0 %v313
        %360 = vmatprep.subr.mxu0 0.0
        %361 = vmatpush1.msra.mxu0 %v314
        %362 = vmatprep.subr.mxu0 0.0
        %363 = vmatpush1.msra.mxu0 %v315
        %364 = vmatprep.subr.mxu0 0.0
        %365 = vmatpush1.msra.mxu0 %v316
        %366 = vmatprep.subr.mxu0 0.0
        %367 = vmatpush1.msra.mxu0 %v317
        %368 = vmatprep.subr.mxu0 0.0
        %369 = vmatpush1.msra.mxu0 %v318
        %370 = vmatprep.subr.mxu0 0.0
        %371 = vmatpush1.msra.mxu0 %v319
        %372 = vmatprep.subr.mxu0 0.0
        %373 = vmatpush1.msra.mxu0 %v320
        %374 = vmatprep.subr.mxu0 0.0
        %375 = vmatpush1.msra.mxu0 %v321
        %376 = vmatprep.subr.mxu0 0.0
        %377 = vmatpush1.msra.mxu0 %v322
        %378 = vmatprep.subr.mxu0 0.0
        %379 = vmatpush1.msra.mxu0 %v323
        %380 = vmatprep.subr.mxu0 0.0
        %381 = vmatpush1.msra.mxu0 %v324
        %382 = vmatprep.subr.mxu0 0.0
        %383 = vmatpush1.msra.mxu0 %v325
        %384 = vmatprep.subr.mxu0 0.0
        %385 = vmatpush1.msra.mxu0 %v326
        %386 = vmatprep.subr.mxu0 0.0
        %387 = vmatpush1.msra.mxu0 %v327
        %388 = vmatprep.subr.mxu0 0.0
        %389 = vmatpush1.msra.mxu0 %v328
        %390 = vmatprep.subr.mxu0 0.0
        %391 = vmatpush1.msra.mxu0 %v329
        %392 = vmatprep.subr.mxu0 0.0
        %393 = vmatpush1.msra.mxu0 %v330
        %394 = vmatprep.subr.mxu0 0.0
        %395 = vmatpush1.msra.mxu0 %v331
        %396 = vmatprep.subr.mxu0 0.0
        %397 = vmatpush1.msra.mxu0 %v332
        %398 = vmatprep.subr.mxu0 0.0
        %399 = vmatpush1.msra.mxu0 %v333
        %400 = vmatprep.subr.mxu0 0.0
        %401 = vmatpush1.msra.mxu0 %v334
        %402 = vmatprep.subr.mxu0 0.0
        %403 = vmatpush1.msra.mxu0 %v335
        %404 = vmatprep.subr.mxu0 0.0
        %405 = vmatpush1.msra.mxu0 %v336
        %406 = vmatprep.subr.mxu0 0.0
        %407 = vmatpush1.msra.mxu0 %v337
        %408 = vmatprep.subr.mxu0 0.0
        %409 = vmatpush1.msra.mxu0 %v338
        %410 = vmatprep.subr.mxu0 0.0
        %411 = vmatpush1.msra.mxu0 %v339
        %412 = vmatprep.subr.mxu0 0.0
        %413 = vmatpush1.msra.mxu0 %v340
        %414 = vmatprep.subr.mxu0 0.0
        %415 = vmatpush1.msra.mxu0 %v341
        %416 = vmatprep.subr.mxu0 0.0
        %417 = vmatpush1.msra.mxu0 %v342
        %418 = vmatprep.subr.mxu0 0.0
        %419 = vmatpush1.msra.mxu0 %v343
        %420 = vmatprep.subr.mxu0 0.0
        %421 = vmatpush1.msra.mxu0 %v344
        %422 = vmatprep.mubr.f32.mxu0 %v355
        %423 = vmatmul.mubr.f32.gmra.mrb[0].mxu0 %v352
        %v424 = vpop.f32.mrb[0].mxu0
        %v425 = vadd.f32 0.0, %v424
        %v426 = vpop.f32.mrb[0].mxu0
        %427 = vdwg.mxu0
        %v428 = vadd.f32 %v305, %v425
        %v429 = vld [vmem:[%s192] sm:$0xfc]
        %v430 = vld [vmem:[%s192 + $0x8] sm:$0xfc]
        %v431 = vld [vmem:[%s192 + $0x10] sm:$0x3]
        %v432 = vld [vmem:[%s192 + $0x18] sm:$0x3]
        %s433 = scalar_lea.vmem [#allocation2], 512
        %v434 = vld [vmem:[%s433] sm:$0xff]
        %v435 = vld [vmem:[%s433 + $0x8] sm:$0xff]
        %v436 = vld [vmem:[%s433 + $0x10] sm:$0xff]
        %v437 = vld [vmem:[%s433 + $0x18] sm:$0xff]
        %v438 = vld [vmem:[%s433 + $0x20] sm:$0xff]
        %v439 = vld [vmem:[%s433 + $0x28] sm:$0xff]
        %v440 = vld [vmem:[%s433 + $0x30] sm:$0xff]
        %v441 = vld [vmem:[%s433 + $0x38] sm:$0xff]
        %v442 = vld [vmem:[%s433 + $0x40] sm:$0xff]
        %v443 = vld [vmem:[%s433 + $0x48] sm:$0xff]
        %v444 = vld [vmem:[%s433 + $0x50] sm:$0xff]
        %v445 = vld [vmem:[%s433 + $0x58] sm:$0xff]
        %v446 = vld [vmem:[%s433 + $0x60] sm:$0xff]
        %v447 = vld [vmem:[%s433 + $0x68] sm:$0xff]
        %v448 = vld [vmem:[%s433 + $0x70] sm:$0xff]
        %v449 = vld [vmem:[%s433 + $0x78] sm:$0xff]
        %v450 = vld [vmem:[%s433 + $0x80] sm:$0xff]
        %v451 = vld [vmem:[%s433 + $0x88] sm:$0xff]
        %v452 = vld [vmem:[%s433 + $0x90] sm:$0xff]
        %v453 = vld [vmem:[%s433 + $0x98] sm:$0xff]
        %v454 = vld [vmem:[%s433 + $0xa0] sm:$0xff]
        %v455 = vld [vmem:[%s433 + $0xa8] sm:$0xff]
        %v456 = vld [vmem:[%s433 + $0xb0] sm:$0xff]
        %v457 = vld [vmem:[%s433 + $0xb8] sm:$0xff]
        %v458 = vld [vmem:[%s433 + $0xc0] sm:$0xff]
        %v459 = vld [vmem:[%s433 + $0xc8] sm:$0xff]
        %v460 = vld [vmem:[%s433 + $0xd0] sm:$0xff]
        %v461 = vld [vmem:[%s433 + $0xd8] sm:$0xff]
        %v462 = vld [vmem:[%s433 + $0xe0] sm:$0xff]
        %v463 = vld [vmem:[%s433 + $0xe8] sm:$0xff]
        %v464 = vld [vmem:[%s433 + $0xf0] sm:$0xff]
        %v465 = vld [vmem:[%s433 + $0xf8] sm:$0xff]
        %vm470 = vcmask 1045504
        %v471 = vrot.slane %v429, 2
        %v472 = vrot.slane %v431, 2
        %v473 = vsel %vm470, %v471, %v472
        %v474 = vrot.slane %v430, 2
        %v475 = vrot.slane %v432, 2
        %v476 = vsel %vm470, %v474, %v475
        %479 = vmatprep.subr.mxu0 0.0
        %480 = vmatpush1.msra.mxu0 %v434
        %481 = vmatprep.subr.mxu0 0.0
        %482 = vmatpush1.msra.mxu0 %v435
        %483 = vmatprep.subr.mxu0 0.0
        %484 = vmatpush1.msra.mxu0 %v436
        %485 = vmatprep.subr.mxu0 0.0
        %486 = vmatpush1.msra.mxu0 %v437
        %487 = vmatprep.subr.mxu0 0.0
        %488 = vmatpush1.msra.mxu0 %v438
        %489 = vmatprep.subr.mxu0 0.0
        %490 = vmatpush1.msra.mxu0 %v439
        %491 = vmatprep.subr.mxu0 0.0
        %492 = vmatpush1.msra.mxu0 %v440
        %493 = vmatprep.subr.mxu0 0.0
        %494 = vmatpush1.msra.mxu0 %v441
        %495 = vmatprep.subr.mxu0 0.0
        %496 = vmatpush1.msra.mxu0 %v442
        %497 = vmatprep.subr.mxu0 0.0
        %498 = vmatpush1.msra.mxu0 %v443
        %499 = vmatprep.subr.mxu0 0.0
        %500 = vmatpush1.msra.mxu0 %v444
        %501 = vmatprep.subr.mxu0 0.0
        %502 = vmatpush1.msra.mxu0 %v445
        %503 = vmatprep.subr.mxu0 0.0
        %504 = vmatpush1.msra.mxu0 %v446
        %505 = vmatprep.subr.mxu0 0.0
        %506 = vmatpush1.msra.mxu0 %v447
        %507 = vmatprep.subr.mxu0 0.0
        %508 = vmatpush1.msra.mxu0 %v448
        %509 = vmatprep.subr.mxu0 0.0
        %510 = vmatpush1.msra.mxu0 %v449
        %511 = vmatprep.subr.mxu0 0.0
        %512 = vmatpush1.msra.mxu0 %v450
        %513 = vmatprep.subr.mxu0 0.0
        %514 = vmatpush1.msra.mxu0 %v451
        %515 = vmatprep.subr.mxu0 0.0
        %516 = vmatpush1.msra.mxu0 %v452
        %517 = vmatprep.subr.mxu0 0.0
        %518 = vmatpush1.msra.mxu0 %v453
        %519 = vmatprep.subr.mxu0 0.0
        %520 = vmatpush1.msra.mxu0 %v454
        %521 = vmatprep.subr.mxu0 0.0
        %522 = vmatpush1.msra.mxu0 %v455
        %523 = vmatprep.subr.mxu0 0.0
        %524 = vmatpush1.msra.mxu0 %v456
        %525 = vmatprep.subr.mxu0 0.0
        %526 = vmatpush1.msra.mxu0 %v457
        %527 = vmatprep.subr.mxu0 0.0
        %528 = vmatpush1.msra.mxu0 %v458
        %529 = vmatprep.subr.mxu0 0.0
        %530 = vmatpush1.msra.mxu0 %v459
        %531 = vmatprep.subr.mxu0 0.0
        %532 = vmatpush1.msra.mxu0 %v460
        %533 = vmatprep.subr.mxu0 0.0
        %534 = vmatpush1.msra.mxu0 %v461
        %535 = vmatprep.subr.mxu0 0.0
        %536 = vmatpush1.msra.mxu0 %v462
        %537 = vmatprep.subr.mxu0 0.0
        %538 = vmatpush1.msra.mxu0 %v463
        %539 = vmatprep.subr.mxu0 0.0
        %540 = vmatpush1.msra.mxu0 %v464
        %541 = vmatprep.subr.mxu0 0.0
        %542 = vmatpush1.msra.mxu0 %v465
        %543 = vmatprep.mubr.f32.mxu0 %v476
        %544 = vmatmul.mubr.f32.gmra.mrb[0].mxu0 %v473
        %v545 = vpop.f32.mrb[0].mxu0
        %v546 = vadd.f32 0.0, %v545
        %v547 = vpop.f32.mrb[0].mxu0
        %548 = vdwg.mxu0
        %v549 = vadd.f32 %v428, %v546
        %550 = vst [vmem:[%s196] sm:$0xff] %v549
        %p551 = scmp.lt.s32.totalorder %s16, 1
        %s552 = scalar_select %p551, %s16, 1
        %s553 = smul.addr %s552, 8
        %s554 = scalar_lea.vmem %s3, %s553
        // Predicated region
        $region41: #{forward.7} parent=31 // pred_check
          %p555 = pneg %p102
        $region42: #{forward.7} parent=31 // pred_check_branch
          %557 = sbr.rel (%p555) target = $region44
        $region43: #{forward.7} parent=31 // pred_region
          _
        $region44: #{forward.7} parent=31 // pred_fallthru
          _
      $region32: #{forward.7} parent=5 // pred_fallthru
        _
      %p558 = scmp.le.s32.totalorder 2, %s11
      // Predicated region
      $region45: #{forward.7} parent=5 // pred_check
        %p559 = pneg %p558
      $region46: #{forward.7} parent=5 // pred_check_branch
        %561 = sbr.rel (%p559) target = $region48
      $region47: #{forward.7} parent=5 // pred_region
        %s562 = ssub.s32 %s11, 2
        // Predicated region
        $region49: #{forward.7} parent=47 // pred_check
          %p563 = pneg %p108
        $region50: #{forward.7} parent=47 // pred_check_branch
          %565 = sbr.rel (%p563) target = $region52
        $region51: #{forward.7} parent=47 // pred_region
          %p566 = scmp.lt.s32.totalorder %s17, 1
          %s567 = scalar_select %p566, %s17, 1
          %s568 = smul.addr %s567, 8
          %s569 = scalar_lea.vmem %s3, %s568
        $region52: #{forward.7} parent=47 // pred_fallthru
          _
      $region48: #{forward.7} parent=5 // pred_fallthru
        _
    $region6: #{forward.7} parent=1 // loop_footer
      %s15 = sadd.s32 1, %s11
    $region7: #{forward.7} parent=1 // loop_footer_branch
      %10 = sbr.rel target = $region3
    $region8: #{forward.7} parent=1 // loop_exit
      _
    %570 = vsyncpa [#allocation3], 1
    %s571 = scalar_lea.sflag [#allocation3], 1
    %572 = vsyncpa %s571, 1
    %573 = vsyncpa [#allocation5], 1

// kernel: forward.11
$region0: #{forward.11}
  #allocation0 [shape = 'u32[]', space=smem, size = 0x4, offset = 0x4, fixed_abs, tag = 'smem constant byte address 0x4 - core index']
  #allocation1 [shape = 'u32[144,128]{1,0:T(1,128)}', space=vmem, size = 0x12000, scoped, tag = 'internal scratch']
  %s0 = inlined_call_operand.vmem [shape: f32[2,6,128], index: 0, kind: input, shape index: {}]
  %s1 = inlined_call_operand.vmem [shape: f32[3,128,256], index: 1, kind: input, shape index: {}]
  %s2 = inlined_call_operand.vmem [shape: f32[1,256], index: 2, kind: input, shape index: {}]
  %s3 = inlined_call_operand.vmem [shape: f32[2,4,256], index: 3, kind: output, shape index: {}]
  %s4 = sld [smem:[#allocation0]]
  $region45: #{forward.11} parent=0
    _
  %s6 = ssub.s32 1, %s4
  %s7 = scalar_select 0, %s6, %s4
  loop: start=0, step=1, limit=4
  $region2: #{forward.11} parent=0 // loop_pre_header
    _
  $region3: #{forward.11} parent=0 // loop_header
    %s9 = sphi 0, %s13
    %p10 = scmp.ge.s32.totalorder %s9, 4
    %s19 = sphi 0, %s21
    %s22 = sphi 0, %s19
    %s23 = sphi 0, %s22
    %s39 = sphi 0, %s23
    %s43 = sphi 0, %s43
    %s45 = sphi 0, %s43
    %s46 = sphi 0, %s45
    %s60 = sphi 0, %s46
    %s64 = sphi 0, %s64
    %s66 = sphi 0, %s64
    %s67 = sphi 0, %s66
    %s81 = sphi 0, %s67
    %s87 = sphi 0, %s89
    %s90 = sphi 0, %s87
    %s91 = sphi 0, %s90
    %s107 = sphi 0, %s91
  $region4: #{forward.11} parent=0 // loop_header_branch
    %12 = sbr.rel (%p10) target = $region8
  $region5: #{forward.11} parent=0 // loop_body
    %s14 = ssub.s32 %s9, 1
    %s15 = ssub.s32 %s9, 2
    %s16 = sadd.s32 %s9, 1
    %s17 = ssub.s32 %s9, %s16
    %p18 = scmp.eq.s32.totalorder %s17, 0
    %s20 = sadd.s32 %s19, 1
    %s21 = scalar_select %p18, %s19, %s20
    %p24 = pneg %p18
    %p25 = scmp.eq.s32.totalorder %s9, 1
    %p26 = por %p24, %p25
    %p27 = scmp.ne.s32.totalorder %s19, %s22
    %p28 = scmp.eq.s32.totalorder %s9, 0
    %p29 = por %p27, %p28
    %p30 = scmp.ne.s32.totalorder %s19, %s22
    %p31 = scmp.eq.s32.totalorder %s14, 1
    %p32 = por %p30, %p31
    %p33 = scmp.ne.s32.totalorder %s22, %s23
    %p34 = scmp.eq.s32.totalorder %s14, 0
    %p35 = por %p33, %p34
    %p36 = scmp.ne.s32.totalorder %s22, %s23
    %p37 = scmp.eq.s32.totalorder %s15, 1
    %p38 = por %p36, %p37
    %p40 = scmp.ne.s32.totalorder %s23, %s39
    %p41 = scmp.eq.s32.totalorder %s15, 0
    %p42 = por %p40, %p41
    %s44 = sadd.s32 %s43, 1
    %p47 = scmp.eq.s32.totalorder %s9, 1
    %p48 = scmp.ne.s32.totalorder %s43, %s45
    %p49 = scmp.eq.s32.totalorder %s9, 0
    %p50 = por %p48, %p49
    %p51 = scmp.ne.s32.totalorder %s43, %s45
    %p52 = scmp.eq.s32.totalorder %s14, 1
    %p53 = por %p51, %p52
    %p54 = scmp.ne.s32.totalorder %s45, %s46
    %p55 = scmp.eq.s32.totalorder %s14, 0
    %p56 = por %p54, %p55
    %p57 = scmp.ne.s32.totalorder %s45, %s46
    %p58 = scmp.eq.s32.totalorder %s15, 1
    %p59 = por %p57, %p58
    %p61 = scmp.ne.s32.totalorder %s46, %s60
    %p62 = scmp.eq.s32.totalorder %s15, 0
    %p63 = por %p61, %p62
    %s65 = sadd.s32 %s64, 1
    %p68 = scmp.eq.s32.totalorder %s9, 1
    %p69 = scmp.ne.s32.totalorder %s64, %s66
    %p70 = scmp.eq.s32.totalorder %s9, 0
    %p71 = por %p69, %p70
    %p72 = scmp.ne.s32.totalorder %s64, %s66
    %p73 = scmp.eq.s32.totalorder %s14, 1
    %p74 = por %p72, %p73
    %p75 = scmp.ne.s32.totalorder %s66, %s67
    %p76 = scmp.eq.s32.totalorder %s14, 0
    %p77 = por %p75, %p76
    %p78 = scmp.ne.s32.totalorder %s66, %s67
    %p79 = scmp.eq.s32.totalorder %s15, 1
    %p80 = por %p78, %p79
    %p82 = scmp.ne.s32.totalorder %s67, %s81
    %p83 = scmp.eq.s32.totalorder %s15, 0
    %p84 = por %p82, %p83
    %s85 = ssub.s32 %s9, %s16
    %p86 = scmp.eq.s32.totalorder %s85, 0
    %s88 = sadd.s32 %s87, 1
    %s89 = scalar_select %p86, %s87, %s88
    %p92 = pneg %p86
    %p93 = scmp.eq.s32.totalorder %s9, 1
    %p94 = por %p92, %p93
    %p95 = scmp.ne.s32.totalorder %s87, %s90
    %p96 = scmp.eq.s32.totalorder %s9, 0
    %p97 = por %p95, %p96
    %p98 = scmp.ne.s32.totalorder %s87, %s90
    %p99 = scmp.eq.s32.totalorder %s14, 1
    %p100 = por %p98, %p99
    %p101 = scmp.ne.s32.totalorder %s90, %s91
    %p102 = scmp.eq.s32.totalorder %s14, 0
    %p103 = por %p101, %p102
    %p104 = scmp.ne.s32.totalorder %s90, %s91
    %p105 = scmp.eq.s32.totalorder %s15, 1
    %p106 = por %p104, %p105
    %p108 = scmp.ne.s32.totalorder %s91, %s107
    %p109 = scmp.eq.s32.totalorder %s15, 0
    %p110 = por %p108, %p109
    %p111 = scmp.le.s32.totalorder 1, %s9
    %p112 = scmp.lt.s32.totalorder %s9, 3
    %p113 = pnand %p111, %p112
    %p114 = pneg %p113
    // Predicated region
    $region9: #{forward.11} parent=5 // pred_check
      _
    $region10: #{forward.11} parent=5 // pred_check_branch
      %116 = sbr.rel (%p113) target = $region12
    $region11: #{forward.11} parent=5 // pred_region
      %s117 = ssub.s32 %s9, 1
      // Predicated region
      $region13: #{forward.11} parent=11 // pred_check
        %p118 = pneg %p56
      $region14: #{forward.11} parent=11 // pred_check_branch
        %120 = sbr.rel (%p118) target = $region16
      $region15: #{forward.11} parent=11 // pred_region
        _
      $region16: #{forward.11} parent=11 // pred_fallthru
        _
      // Predicated region
      $region17: #{forward.11} parent=11 // pred_check
        %p121 = pneg %p77
      $region18: #{forward.11} parent=11 // pred_check_branch
        %123 = sbr.rel (%p121) target = $region20
      $region19: #{forward.11} parent=11 // pred_region
        _
      $region20: #{forward.11} parent=11 // pred_fallthru
        _
    $region12: #{forward.11} parent=5 // pred_fallthru
      _
    %p124 = scmp.lt.s32.totalorder %s9, 2
    // Predicated region
    $region21: #{forward.11} parent=5 // pred_check
      %p125 = pneg %p124
    $region22: #{forward.11} parent=5 // pred_check_branch
      %127 = sbr.rel (%p125) target = $region24
    $region23: #{forward.11} parent=5 // pred_region
      // Predicated region
      $region25: #{forward.11} parent=23 // pred_check
        %p128 = pneg %p29
      $region26: #{forward.11} parent=23 // pred_check_branch
        %130 = sbr.rel (%p128) target = $region28
      $region27: #{forward.11} parent=23 // pred_region
        %p131 = scmp.lt.s32.totalorder %s9, 1
        %s132 = scalar_select %p131, %s9, 1
        %s133 = smul.addr %s132, 8
        %s134 = scalar_lea.vmem %s0, %s133
      $region28: #{forward.11} parent=23 // pred_fallthru
        _
    $region24: #{forward.11} parent=5 // pred_fallthru
      _
    %p135 = scmp.le.s32.totalorder 1, %s9
    %p136 = scmp.lt.s32.totalorder %s9, 3
    %p137 = pnand %p135, %p136
    %p138 = pneg %p137
    // Predicated region
    $region29: #{forward.11} parent=5 // pred_check
      _
    $region30: #{forward.11} parent=5 // pred_check_branch
      %140 = sbr.rel (%p137) target = $region32
    $region31: #{forward.11} parent=5 // pred_region
      %s141 = ssub.s32 %s9, 1
      %p142 = scmp.lt.s32.totalorder %s14, 1
      %s143 = scalar_select %p142, %s14, 1
      %s144 = smul.addr %s143, 8
      %s145 = scalar_lea.vmem %s0, %s144
      %p146 = pneg %p35
      %p147 = pneg %p32
      %p148 = pneg %p56
      %p149 = pneg %p53
      %p150 = pneg %p77
      %p151 = pneg %p74
      %p152 = pneg %p103
      %p153 = pneg %p100
      %p154 = scmp.lt.s32.totalorder %s14, 1
      %s155 = scalar_select %p154, %s14, 1
      %s156 = smul.addr %s155, 2
      %s157 = smul.addr %s156, 4
      %s158 = scalar_lea.vmem %s3, %s157
      %p159 = scmp.lt.s32.totalorder %s14, 1
      %s160 = scalar_select %p159, %s14, 1
      %s161 = smul.addr %s160, 8
      %s162 = scalar_lea.vmem %s0, %s161
      %p163 = scmp.lt.s32.totalorder %s14, 1
      %s164 = scalar_select %p163, %s14, 1
      %s165 = smul.addr %s164, 2
      %s166 = smul.addr %s165, 4
      %s167 = scalar_lea.vmem %s3, %s166
      %v168 = vld [vmem:[%s162] sm:$0xf]
      %v169 = vld [vmem:[%s1] sm:$0xff]
      %v170 = vld [vmem:[%s1 + $0x8] sm:$0xff]
      %v171 = vld [vmem:[%s1 + $0x10] sm:$0xff]
      %v172 = vld [vmem:[%s1 + $0x18] sm:$0xff]
      %v173 = vld [vmem:[%s1 + $0x20] sm:$0xff]
      %v174 = vld [vmem:[%s1 + $0x28] sm:$0xff]
      %v175 = vld [vmem:[%s1 + $0x30] sm:$0xff]
      %v176 = vld [vmem:[%s1 + $0x38] sm:$0xff]
      %v177 = vld [vmem:[%s1 + $0x40] sm:$0xff]
      %v178 = vld [vmem:[%s1 + $0x48] sm:$0xff]
      %v179 = vld [vmem:[%s1 + $0x50] sm:$0xff]
      %v180 = vld [vmem:[%s1 + $0x58] sm:$0xff]
      %v181 = vld [vmem:[%s1 + $0x60] sm:$0xff]
      %v182 = vld [vmem:[%s1 + $0x68] sm:$0xff]
      %v183 = vld [vmem:[%s1 + $0x70] sm:$0xff]
      %v184 = vld [vmem:[%s1 + $0x78] sm:$0xff]
      %v185 = vld [vmem:[%s1 + $0x80] sm:$0xff]
      %v186 = vld [vmem:[%s1 + $0x88] sm:$0xff]
      %v187 = vld [vmem:[%s1 + $0x90] sm:$0xff]
      %v188 = vld [vmem:[%s1 + $0x98] sm:$0xff]
      %v189 = vld [vmem:[%s1 + $0xa0] sm:$0xff]
      %v190 = vld [vmem:[%s1 + $0xa8] sm:$0xff]
      %v191 = vld [vmem:[%s1 + $0xb0] sm:$0xff]
      %v192 = vld [vmem:[%s1 + $0xb8] sm:$0xff]
      %v193 = vld [vmem:[%s1 + $0xc0] sm:$0xff]
      %v194 = vld [vmem:[%s1 + $0xc8] sm:$0xff]
      %v195 = vld [vmem:[%s1 + $0xd0] sm:$0xff]
      %v196 = vld [vmem:[%s1 + $0xd8] sm:$0xff]
      %v197 = vld [vmem:[%s1 + $0xe0] sm:$0xff]
      %v198 = vld [vmem:[%s1 + $0xe8] sm:$0xff]
      %v199 = vld [vmem:[%s1 + $0xf0] sm:$0xff]
      %v200 = vld [vmem:[%s1 + $0xf8] sm:$0xff]
      %v201 = vld [vmem:[%s2] sm:$0x3]
      %v203 = vlaneseq
      %v204 = vshrl.u32 %v203, 7
      %v205 = vsub.s32 0, %v204
      %v206 = vrot.slane %v201, %v205
      %v207 = vlaneseq
      %v208 = vshrl.u32 %v207, 7
      %v209 = vsub.s32 1, %v208
      %v210 = vrot.slane %v201, %v209
      %213 = vmatprep.subr.mxu0 %v170
      %214 = vmatpush1.msra.mxu0 %v169
      %215 = vmatprep.subr.mxu0 %v172
      %216 = vmatpush1.msra.mxu0 %v171
      %217 = vmatprep.subr.mxu0 %v174
      %218 = vmatpush1.msra.mxu0 %v173
      %219 = vmatprep.subr.mxu0 %v176
      %220 = vmatpush1.msra.mxu0 %v175
      %221 = vmatprep.subr.mxu0 %v178
      %222 = vmatpush1.msra.mxu0 %v177
      %223 = vmatprep.subr.mxu0 %v180
      %224 = vmatpush1.msra.mxu0 %v179
      %225 = vmatprep.subr.mxu0 %v182
      %226 = vmatpush1.msra.mxu0 %v181
      %227 = vmatprep.subr.mxu0 %v184
      %228 = vmatpush1.msra.mxu0 %v183
      %229 = vmatprep.subr.mxu0 %v186
      %230 = vmatpush1.msra.mxu0 %v185
      %231 = vmatprep.subr.mxu0 %v188
      %232 = vmatpush1.msra.mxu0 %v187
      %233 = vmatprep.subr.mxu0 %v190
      %234 = vmatpush1.msra.mxu0 %v189
      %235 = vmatprep.subr.mxu0 %v192
      %236 = vmatpush1.msra.mxu0 %v191
      %237 = vmatprep.subr.mxu0 %v194
      %238 = vmatpush1.msra.mxu0 %v193
      %239 = vmatprep.subr.mxu0 %v196
      %240 = vmatpush1.msra.mxu0 %v195
      %241 = vmatprep.subr.mxu0 %v198
      %242 = vmatpush1.msra.mxu0 %v197
      %243 = vmatprep.subr.mxu0 %v200
      %244 = vmatpush1.msra.mxu0 %v199
      %245 = vmatprep.subr.mxu0 0.0
      %246 = vmatpush1.msra.mxu0 0.0
      %247 = vmatprep.subr.mxu0 0.0
      %248 = vmatpush1.msra.mxu0 0.0
      %249 = vmatprep.subr.mxu0 0.0
      %250 = vmatpush1.msra.mxu0 0.0
      %251 = vmatprep.subr.mxu0 0.0
      %252 = vmatpush1.msra.mxu0 0.0
      %253 = vmatprep.subr.mxu0 0.0
      %254 = vmatpush1.msra.mxu0 0.0
      %255 = vmatprep.subr.mxu0 0.0
      %256 = vmatpush1.msra.mxu0 0.0
      %257 = vmatprep.subr.mxu0 0.0
      %258 = vmatpush1.msra.mxu0 0.0
      %259 = vmatprep.subr.mxu0 0.0
      %260 = vmatpush1.msra.mxu0 0.0
      %261 = vmatprep.subr.mxu0 0.0
      %262 = vmatpush1.msra.mxu0 0.0
      %263 = vmatprep.subr.mxu0 0.0
      %264 = vmatpush1.msra.mxu0 0.0
      %265 = vmatprep.subr.mxu0 0.0
      %266 = vmatpush1.msra.mxu0 0.0
      %267 = vmatprep.subr.mxu0 0.0
      %268 = vmatpush1.msra.mxu0 0.0
      %269 = vmatprep.subr.mxu0 0.0
      %270 = vmatpush1.msra.mxu0 0.0
      %271 = vmatprep.subr.mxu0 0.0
      %272 = vmatpush1.msra.mxu0 0.0
      %273 = vmatprep.subr.mxu0 0.0
      %274 = vmatpush1.msra.mxu0 0.0
      %275 = vmatprep.subr.mxu0 0.0
      %276 = vmatpush1.msra.mxu0 0.0
      %277 = vmatprep.mubr.f32.mxu0 0.0
      %278 = vmatmul.mubr.f32.gmra.mrb[0].mxu0 %v168
      %v279 = vpop.f32.mrb[0].mxu0
      %v280 = vadd.f32 %v206, %v279
      %v281 = vpop.f32.mrb[0].mxu0
      %v282 = vadd.f32 %v210, %v281
      %283 = vdwg.mxu0
      %v284 = vld [vmem:[%s162 + $0x1] sm:$0xf]
      %s285 = scalar_lea.vmem %s1, 256
      %v286 = vld [vmem:[%s285] sm:$0xff]
      %v287 = vld [vmem:[%s285 + $0x8] sm:$0xff]
      %v288 = vld [vmem:[%s285 + $0x10] sm:$0xff]
      %v289 = vld [vmem:[%s285 + $0x18] sm:$0xff]
      %v290 = vld [vmem:[%s285 + $0x20] sm:$0xff]
      %v291 = vld [vmem:[%s285 + $0x28] sm:$0xff]
      %v292 = vld [vmem:[%s285 + $0x30] sm:$0xff]
      %v293 = vld [vmem:[%s285 + $0x38] sm:$0xff]
      %v294 = vld [vmem:[%s285 + $0x40] sm:$0xff]
      %v295 = vld [vmem:[%s285 + $0x48] sm:$0xff]
      %v296 = vld [vmem:[%s285 + $0x50] sm:$0xff]
      %v297 = vld [vmem:[%s285 + $0x58] sm:$0xff]
      %v298 = vld [vmem:[%s285 + $0x60] sm:$0xff]
      %v299 = vld [vmem:[%s285 + $0x68] sm:$0xff]
      %v300 = vld [vmem:[%s285 + $0x70] sm:$0xff]
      %v301 = vld [vmem:[%s285 + $0x78] sm:$0xff]
      %v302 = vld [vmem:[%s285 + $0x80] sm:$0xff]
      %v303 = vld [vmem:[%s285 + $0x88] sm:$0xff]
      %v304 = vld [vmem:[%s285 + $0x90] sm:$0xff]
      %v305 = vld [vmem:[%s285 + $0x98] sm:$0xff]
      %v306 = vld [vmem:[%s285 + $0xa0] sm:$0xff]
      %v307 = vld [vmem:[%s285 + $0xa8] sm:$0xff]
      %v308 = vld [vmem:[%s285 + $0xb0] sm:$0xff]
      %v309 = vld [vmem:[%s285 + $0xb8] sm:$0xff]
      %v310 = vld [vmem:[%s285 + $0xc0] sm:$0xff]
      %v311 = vld [vmem:[%s285 + $0xc8] sm:$0xff]
      %v312 = vld [vmem:[%s285 + $0xd0] sm:$0xff]
      %v313 = vld [vmem:[%s285 + $0xd8] sm:$0xff]
      %v314 = vld [vmem:[%s285 + $0xe0] sm:$0xff]
      %v315 = vld [vmem:[%s285 + $0xe8] sm:$0xff]
      %v316 = vld [vmem:[%s285 + $0xf0] sm:$0xff]
      %v317 = vld [vmem:[%s285 + $0xf8] sm:$0xff]
      %318 = vmatprep.subr.mxu0 %v287
      %319 = vmatpush1.msra.mxu0 %v286
      %320 = vmatprep.subr.mxu0 %v289
      %321 = vmatpush1.msra.mxu0 %v288
      %322 = vmatprep.subr.mxu0 %v291
      %323 = vmatpush1.msra.mxu0 %v290
      %324 = vmatprep.subr.mxu0 %v293
      %325 = vmatpush1.msra.mxu0 %v292
      %326 = vmatprep.subr.mxu0 %v295
      %327 = vmatpush1.msra.mxu0 %v294
      %328 = vmatprep.subr.mxu0 %v297
      %329 = vmatpush1.msra.mxu0 %v296
      %330 = vmatprep.subr.mxu0 %v299
      %331 = vmatpush1.msra.mxu0 %v298
      %332 = vmatprep.subr.mxu0 %v301
      %333 = vmatpush1.msra.mxu0 %v300
      %334 = vmatprep.subr.mxu0 %v303
      %335 = vmatpush1.msra.mxu0 %v302
      %336 = vmatprep.subr.mxu0 %v305
      %337 = vmatpush1.msra.mxu0 %v304
      %338 = vmatprep.subr.mxu0 %v307
      %339 = vmatpush1.msra.mxu0 %v306
      %340 = vmatprep.subr.mxu0 %v309
      %341 = vmatpush1.msra.mxu0 %v308
      %342 = vmatprep.subr.mxu0 %v311
      %343 = vmatpush1.msra.mxu0 %v310
      %344 = vmatprep.subr.mxu0 %v313
      %345 = vmatpush1.msra.mxu0 %v312
      %346 = vmatprep.subr.mxu0 %v315
      %347 = vmatpush1.msra.mxu0 %v314
      %348 = vmatprep.subr.mxu0 %v317
      %349 = vmatpush1.msra.mxu0 %v316
      %350 = vmatprep.subr.mxu0 0.0
      %351 = vmatpush1.msra.mxu0 0.0
      %352 = vmatprep.subr.mxu0 0.0
      %353 = vmatpush1.msra.mxu0 0.0
      %354 = vmatprep.subr.mxu0 0.0
      %355 = vmatpush1.msra.mxu0 0.0
      %356 = vmatprep.subr.mxu0 0.0
      %357 = vmatpush1.msra.mxu0 0.0
      %358 = vmatprep.subr.mxu0 0.0
      %359 = vmatpush1.msra.mxu0 0.0
      %360 = vmatprep.subr.mxu0 0.0
      %361 = vmatpush1.msra.mxu0 0.0
      %362 = vmatprep.subr.mxu0 0.0
      %363 = vmatpush1.msra.mxu0 0.0
      %364 = vmatprep.subr.mxu0 0.0
      %365 = vmatpush1.msra.mxu0 0.0
      %366 = vmatprep.subr.mxu0 0.0
      %367 = vmatpush1.msra.mxu0 0.0
      %368 = vmatprep.subr.mxu0 0.0
      %369 = vmatpush1.msra.mxu0 0.0
      %370 = vmatprep.subr.mxu0 0.0
      %371 = vmatpush1.msra.mxu0 0.0
      %372 = vmatprep.subr.mxu0 0.0
      %373 = vmatpush1.msra.mxu0 0.0
      %374 = vmatprep.subr.mxu0 0.0
      %375 = vmatpush1.msra.mxu0 0.0
      %376 = vmatprep.subr.mxu0 0.0
      %377 = vmatpush1.msra.mxu0 0.0
      %378 = vmatprep.subr.mxu0 0.0
      %379 = vmatpush1.msra.mxu0 0.0
      %380 = vmatprep.subr.mxu0 0.0
      %381 = vmatpush1.msra.mxu0 0.0
      %382 = vmatprep.mubr.f32.mxu0 0.0
      %383 = vmatmul.mubr.f32.gmra.mrb[0].mxu0 %v284
      %v384 = vpop.f32.mrb[0].mxu0
      %v385 = vadd.f32 0.0, %v384
      %v386 = vpop.f32.mrb[0].mxu0
      %v387 = vadd.f32 0.0, %v386
      %388 = vdwg.mxu0
      %v389 = vadd.f32 %v280, %v385
      %v390 = vadd.f32 %v282, %v387
      %v391 = vld [vmem:[%s162 + $0x2] sm:$0xf]
      %s392 = scalar_lea.vmem %s1, 512
      %v393 = vld [vmem:[%s392] sm:$0xff]
      %v394 = vld [vmem:[%s392 + $0x8] sm:$0xff]
      %v395 = vld [vmem:[%s392 + $0x10] sm:$0xff]
      %v396 = vld [vmem:[%s392 + $0x18] sm:$0xff]
      %v397 = vld [vmem:[%s392 + $0x20] sm:$0xff]
      %v398 = vld [vmem:[%s392 + $0x28] sm:$0xff]
      %v399 = vld [vmem:[%s392 + $0x30] sm:$0xff]
      %v400 = vld [vmem:[%s392 + $0x38] sm:$0xff]
      %v401 = vld [vmem:[%s392 + $0x40] sm:$0xff]
      %v402 = vld [vmem:[%s392 + $0x48] sm:$0xff]
      %v403 = vld [vmem:[%s392 + $0x50] sm:$0xff]
      %v404 = vld [vmem:[%s392 + $0x58] sm:$0xff]
      %v405 = vld [vmem:[%s392 + $0x60] sm:$0xff]
      %v406 = vld [vmem:[%s392 + $0x68] sm:$0xff]
      %v407 = vld [vmem:[%s392 + $0x70] sm:$0xff]
      %v408 = vld [vmem:[%s392 + $0x78] sm:$0xff]
      %v409 = vld [vmem:[%s392 + $0x80] sm:$0xff]
      %v410 = vld [vmem:[%s392 + $0x88] sm:$0xff]
      %v411 = vld [vmem:[%s392 + $0x90] sm:$0xff]
      %v412 = vld [vmem:[%s392 + $0x98] sm:$0xff]
      %v413 = vld [vmem:[%s392 + $0xa0] sm:$0xff]
      %v414 = vld [vmem:[%s392 + $0xa8] sm:$0xff]
      %v415 = vld [vmem:[%s392 + $0xb0] sm:$0xff]
      %v416 = vld [vmem:[%s392 + $0xb8] sm:$0xff]
      %v417 = vld [vmem:[%s392 + $0xc0] sm:$0xff]
      %v418 = vld [vmem:[%s392 + $0xc8] sm:$0xff]
      %v419 = vld [vmem:[%s392 + $0xd0] sm:$0xff]
      %v420 = vld [vmem:[%s392 + $0xd8] sm:$0xff]
      %v421 = vld [vmem:[%s392 + $0xe0] sm:$0xff]
      %v422 = vld [vmem:[%s392 + $0xe8] sm:$0xff]
      %v423 = vld [vmem:[%s392 + $0xf0] sm:$0xff]
      %v424 = vld [vmem:[%s392 + $0xf8] sm:$0xff]
      %425 = vmatprep.subr.mxu0 %v394
      %426 = vmatpush1.msra.mxu0 %v393
      %427 = vmatprep.subr.mxu0 %v396
      %428 = vmatpush1.msra.mxu0 %v395
      %429 = vmatprep.subr.mxu0 %v398
      %430 = vmatpush1.msra.mxu0 %v397
      %431 = vmatprep.subr.mxu0 %v400
      %432 = vmatpush1.msra.mxu0 %v399
      %433 = vmatprep.subr.mxu0 %v402
      %434 = vmatpush1.msra.mxu0 %v401
      %435 = vmatprep.subr.mxu0 %v404
      %436 = vmatpush1.msra.mxu0 %v403
      %437 = vmatprep.subr.mxu0 %v406
      %438 = vmatpush1.msra.mxu0 %v405
      %439 = vmatprep.subr.mxu0 %v408
      %440 = vmatpush1.msra.mxu0 %v407
      %441 = vmatprep.subr.mxu0 %v410
      %442 = vmatpush1.msra.mxu0 %v409
      %443 = vmatprep.subr.mxu0 %v412
      %444 = vmatpush1.msra.mxu0 %v411
      %445 = vmatprep.subr.mxu0 %v414
      %446 = vmatpush1.msra.mxu0 %v413
      %447 = vmatprep.subr.mxu0 %v416
      %448 = vmatpush1.msra.mxu0 %v415
      %449 = vmatprep.subr.mxu0 %v418
      %450 = vmatpush1.msra.mxu0 %v417
      %451 = vmatprep.subr.mxu0 %v420
      %452 = vmatpush1.msra.mxu0 %v419
      %453 = vmatprep.subr.mxu0 %v422
      %454 = vmatpush1.msra.mxu0 %v421
      %455 = vmatprep.subr.mxu0 %v424
      %456 = vmatpush1.msra.mxu0 %v423
      %457 = vmatprep.subr.mxu0 0.0
      %458 = vmatpush1.msra.mxu0 0.0
      %459 = vmatprep.subr.mxu0 0.0
      %460 = vmatpush1.msra.mxu0 0.0
      %461 = vmatprep.subr.mxu0 0.0
      %462 = vmatpush1.msra.mxu0 0.0
      %463 = vmatprep.subr.mxu0 0.0
      %464 = vmatpush1.msra.mxu0 0.0
      %465 = vmatprep.subr.mxu0 0.0
      %466 = vmatpush1.msra.mxu0 0.0
      %467 = vmatprep.subr.mxu0 0.0
      %468 = vmatpush1.msra.mxu0 0.0
      %469 = vmatprep.subr.mxu0 0.0
      %470 = vmatpush1.msra.mxu0 0.0
      %471 = vmatprep.subr.mxu0 0.0
      %472 = vmatpush1.msra.mxu0 0.0
      %473 = vmatprep.subr.mxu0 0.0
      %474 = vmatpush1.msra.mxu0 0.0
      %475 = vmatprep.subr.mxu0 0.0
      %476 = vmatpush1.msra.mxu0 0.0
      %477 = vmatprep.subr.mxu0 0.0
      %478 = vmatpush1.msra.mxu0 0.0
      %479 = vmatprep.subr.mxu0 0.0
      %480 = vmatpush1.msra.mxu0 0.0
      %481 = vmatprep.subr.mxu0 0.0
      %482 = vmatpush1.msra.mxu0 0.0
      %483 = vmatprep.subr.mxu0 0.0
      %484 = vmatpush1.msra.mxu0 0.0
      %485 = vmatprep.subr.mxu0 0.0
      %486 = vmatpush1.msra.mxu0 0.0
      %487 = vmatprep.subr.mxu0 0.0
      %488 = vmatpush1.msra.mxu0 0.0
      %489 = vmatprep.mubr.f32.mxu0 0.0
      %490 = vmatmul.mubr.f32.gmra.mrb[0].mxu0 %v391
      %v491 = vpop.f32.mrb[0].mxu0
      %v492 = vadd.f32 0.0, %v491
      %v493 = vpop.f32.mrb[0].mxu0
      %v494 = vadd.f32 0.0, %v493
      %495 = vdwg.mxu0
      %v496 = vadd.f32 %v389, %v492
      %v497 = vadd.f32 %v390, %v494
      %v500 = vcombine.low %v496, %v497
      %502 = vst [vmem:[%s167] sm:$0xff] %v500
      %p503 = scmp.lt.s32.totalorder %s14, 1
      %s504 = scalar_select %p503, %s14, 1
      %s505 = smul.addr %s504, 2
      %s506 = smul.addr %s505, 4
      %s507 = scalar_lea.vmem %s3, %s506
      // Predicated region
      $region33: #{forward.11} parent=31 // pred_check
        %p508 = pneg %p100
      $region34: #{forward.11} parent=31 // pred_check_branch
        %510 = sbr.rel (%p508) target = $region36
      $region35: #{forward.11} parent=31 // pred_region
        _
      $region36: #{forward.11} parent=31 // pred_fallthru
        _
    $region32: #{forward.11} parent=5 // pred_fallthru
      _
    %p511 = scmp.le.s32.totalorder 2, %s9
    // Predicated region
    $region37: #{forward.11} parent=5 // pred_check
      %p512 = pneg %p511
    $region38: #{forward.11} parent=5 // pred_check_branch
      %514 = sbr.rel (%p512) target = $region40
    $region39: #{forward.11} parent=5 // pred_region
      %s515 = ssub.s32 %s9, 2
      // Predicated region
      $region41: #{forward.11} parent=39 // pred_check
        %p516 = pneg %p106
      $region42: #{forward.11} parent=39 // pred_check_branch
        %518 = sbr.rel (%p516) target = $region44
      $region43: #{forward.11} parent=39 // pred_region
        %p519 = scmp.lt.s32.totalorder %s15, 1
        %s520 = scalar_select %p519, %s15, 1
        %s521 = smul.addr %s520, 2
        %s522 = smul.addr %s521, 4
        %s523 = scalar_lea.vmem %s3, %s522
      $region44: #{forward.11} parent=39 // pred_fallthru
        _
    $region40: #{forward.11} parent=5 // pred_fallthru
      _
  $region6: #{forward.11} parent=0 // loop_footer
    %s13 = sadd.s32 1, %s9
  $region7: #{forward.11} parent=0 // loop_footer_branch
    %8 = sbr.rel target = $region3
  $region8: #{forward.11} parent=0 // loop_exit
    _

// kernel: forward.9
$region0: #{forward.9}
  #allocation0 [shape = 'u32[]', space=smem, size = 0x4, offset = 0x4, fixed_abs, tag = 'smem constant byte address 0x4 - core index']
  #allocation1 [shape = 'u32[144,128]{1,0:T(1,128)}', space=vmem, size = 0x12000, scoped, tag = 'internal scratch']
  %s0 = inlined_call_operand.vmem [shape: f32[2,4,256], index: 0, kind: input, shape index: {}]
  %s1 = inlined_call_operand.vmem [shape: f32[3,256,256], index: 1, kind: input, shape index: {}]
  %s2 = inlined_call_operand.vmem [shape: f32[1,256], index: 2, kind: input, shape index: {}]
  %s3 = inlined_call_operand.vmem [shape: f32[2,2,256], index: 3, kind: output, shape index: {}]
  %s4 = sld [smem:[#allocation0]]
  $region45: #{forward.9} parent=0
    _
  %s6 = ssub.s32 1, %s4
  %s7 = scalar_select 0, %s6, %s4
  loop: start=0, step=1, limit=4
  $region2: #{forward.9} parent=0 // loop_pre_header
    _
  $region3: #{forward.9} parent=0 // loop_header
    %s9 = sphi 0, %s13
    %p10 = scmp.ge.s32.totalorder %s9, 4
    %s19 = sphi 0, %s21
    %s22 = sphi 0, %s19
    %s23 = sphi 0, %s22
    %s39 = sphi 0, %s23
    %s43 = sphi 0, %s43
    %s45 = sphi 0, %s43
    %s46 = sphi 0, %s45
    %s60 = sphi 0, %s46
    %s64 = sphi 0, %s64
    %s66 = sphi 0, %s64
    %s67 = sphi 0, %s66
    %s81 = sphi 0, %s67
    %s87 = sphi 0, %s89
    %s90 = sphi 0, %s87
    %s91 = sphi 0, %s90
    %s107 = sphi 0, %s91
  $region4: #{forward.9} parent=0 // loop_header_branch
    %12 = sbr.rel (%p10) target = $region8
  $region5: #{forward.9} parent=0 // loop_body
    %s14 = ssub.s32 %s9, 1
    %s15 = ssub.s32 %s9, 2
    %s16 = sadd.s32 %s9, 1
    %s17 = ssub.s32 %s9, %s16
    %p18 = scmp.eq.s32.totalorder %s17, 0
    %s20 = sadd.s32 %s19, 1
    %s21 = scalar_select %p18, %s19, %s20
    %p24 = pneg %p18
    %p25 = scmp.eq.s32.totalorder %s9, 1
    %p26 = por %p24, %p25
    %p27 = scmp.ne.s32.totalorder %s19, %s22
    %p28 = scmp.eq.s32.totalorder %s9, 0
    %p29 = por %p27, %p28
    %p30 = scmp.ne.s32.totalorder %s19, %s22
    %p31 = scmp.eq.s32.totalorder %s14, 1
    %p32 = por %p30, %p31
    %p33 = scmp.ne.s32.totalorder %s22, %s23
    %p34 = scmp.eq.s32.totalorder %s14, 0
    %p35 = por %p33, %p34
    %p36 = scmp.ne.s32.totalorder %s22, %s23
    %p37 = scmp.eq.s32.totalorder %s15, 1
    %p38 = por %p36, %p37
    %p40 = scmp.ne.s32.totalorder %s23, %s39
    %p41 = scmp.eq.s32.totalorder %s15, 0
    %p42 = por %p40, %p41
    %s44 = sadd.s32 %s43, 1
    %p47 = scmp.eq.s32.totalorder %s9, 1
    %p48 = scmp.ne.s32.totalorder %s43, %s45
    %p49 = scmp.eq.s32.totalorder %s9, 0
    %p50 = por %p48, %p49
    %p51 = scmp.ne.s32.totalorder %s43, %s45
    %p52 = scmp.eq.s32.totalorder %s14, 1
    %p53 = por %p51, %p52
    %p54 = scmp.ne.s32.totalorder %s45, %s46
    %p55 = scmp.eq.s32.totalorder %s14, 0
    %p56 = por %p54, %p55
    %p57 = scmp.ne.s32.totalorder %s45, %s46
    %p58 = scmp.eq.s32.totalorder %s15, 1
    %p59 = por %p57, %p58
    %p61 = scmp.ne.s32.totalorder %s46, %s60
    %p62 = scmp.eq.s32.totalorder %s15, 0
    %p63 = por %p61, %p62
    %s65 = sadd.s32 %s64, 1
    %p68 = scmp.eq.s32.totalorder %s9, 1
    %p69 = scmp.ne.s32.totalorder %s64, %s66
    %p70 = scmp.eq.s32.totalorder %s9, 0
    %p71 = por %p69, %p70
    %p72 = scmp.ne.s32.totalorder %s64, %s66
    %p73 = scmp.eq.s32.totalorder %s14, 1
    %p74 = por %p72, %p73
    %p75 = scmp.ne.s32.totalorder %s66, %s67
    %p76 = scmp.eq.s32.totalorder %s14, 0
    %p77 = por %p75, %p76
    %p78 = scmp.ne.s32.totalorder %s66, %s67
    %p79 = scmp.eq.s32.totalorder %s15, 1
    %p80 = por %p78, %p79
    %p82 = scmp.ne.s32.totalorder %s67, %s81
    %p83 = scmp.eq.s32.totalorder %s15, 0
    %p84 = por %p82, %p83
    %s85 = ssub.s32 %s9, %s16
    %p86 = scmp.eq.s32.totalorder %s85, 0
    %s88 = sadd.s32 %s87, 1
    %s89 = scalar_select %p86, %s87, %s88
    %p92 = pneg %p86
    %p93 = scmp.eq.s32.totalorder %s9, 1
    %p94 = por %p92, %p93
    %p95 = scmp.ne.s32.totalorder %s87, %s90
    %p96 = scmp.eq.s32.totalorder %s9, 0
    %p97 = por %p95, %p96
    %p98 = scmp.ne.s32.totalorder %s87, %s90
    %p99 = scmp.eq.s32.totalorder %s14, 1
    %p100 = por %p98, %p99
    %p101 = scmp.ne.s32.totalorder %s90, %s91
    %p102 = scmp.eq.s32.totalorder %s14, 0
    %p103 = por %p101, %p102
    %p104 = scmp.ne.s32.totalorder %s90, %s91
    %p105 = scmp.eq.s32.totalorder %s15, 1
    %p106 = por %p104, %p105
    %p108 = scmp.ne.s32.totalorder %s91, %s107
    %p109 = scmp.eq.s32.totalorder %s15, 0
    %p110 = por %p108, %p109
    %p111 = scmp.le.s32.totalorder 1, %s9
    %p112 = scmp.lt.s32.totalorder %s9, 3
    %p113 = pnand %p111, %p112
    %p114 = pneg %p113
    // Predicated region
    $region9: #{forward.9} parent=5 // pred_check
      _
    $region10: #{forward.9} parent=5 // pred_check_branch
      %116 = sbr.rel (%p113) target = $region12
    $region11: #{forward.9} parent=5 // pred_region
      %s117 = ssub.s32 %s9, 1
      // Predicated region
      $region13: #{forward.9} parent=11 // pred_check
        %p118 = pneg %p56
      $region14: #{forward.9} parent=11 // pred_check_branch
        %120 = sbr.rel (%p118) target = $region16
      $region15: #{forward.9} parent=11 // pred_region
        _
      $region16: #{forward.9} parent=11 // pred_fallthru
        _
      // Predicated region
      $region17: #{forward.9} parent=11 // pred_check
        %p121 = pneg %p77
      $region18: #{forward.9} parent=11 // pred_check_branch
        %123 = sbr.rel (%p121) target = $region20
      $region19: #{forward.9} parent=11 // pred_region
        _
      $region20: #{forward.9} parent=11 // pred_fallthru
        _
    $region12: #{forward.9} parent=5 // pred_fallthru
      _
    %p124 = scmp.lt.s32.totalorder %s9, 2
    // Predicated region
    $region21: #{forward.9} parent=5 // pred_check
      %p125 = pneg %p124
    $region22: #{forward.9} parent=5 // pred_check_branch
      %127 = sbr.rel (%p125) target = $region24
    $region23: #{forward.9} parent=5 // pred_region
      // Predicated region
      $region25: #{forward.9} parent=23 // pred_check
        %p128 = pneg %p29
      $region26: #{forward.9} parent=23 // pred_check_branch
        %130 = sbr.rel (%p128) target = $region28
      $region27: #{forward.9} parent=23 // pred_region
        %p131 = scmp.lt.s32.totalorder %s9, 1
        %s132 = scalar_select %p131, %s9, 1
        %s133 = smul.addr %s132, 2
        %s134 = smul.addr %s133, 4
        %s135 = scalar_lea.vmem %s0, %s134
      $region28: #{forward.9} parent=23 // pred_fallthru
        _
    $region24: #{forward.9} parent=5 // pred_fallthru
      _
    %p136 = scmp.le.s32.totalorder 1, %s9
    %p137 = scmp.lt.s32.totalorder %s9, 3
    %p138 = pnand %p136, %p137
    %p139 = pneg %p138
    // Predicated region
    $region29: #{forward.9} parent=5 // pred_check
      _
    $region30: #{forward.9} parent=5 // pred_check_branch
      %141 = sbr.rel (%p138) target = $region32
    $region31: #{forward.9} parent=5 // pred_region
      %s142 = ssub.s32 %s9, 1
      %p143 = scmp.lt.s32.totalorder %s14, 1
      %s144 = scalar_select %p143, %s14, 1
      %s145 = smul.addr %s144, 2
      %s146 = smul.addr %s145, 4
      %s147 = scalar_lea.vmem %s0, %s146
      %p148 = pneg %p35
      %p149 = pneg %p32
      %p150 = pneg %p56
      %p151 = pneg %p53
      %p152 = pneg %p77
      %p153 = pneg %p74
      %p154 = pneg %p103
      %p155 = pneg %p100
      %p156 = scmp.lt.s32.totalorder %s14, 1
      %s157 = scalar_select %p156, %s14, 1
      %s158 = smul.addr %s157, 2
      %s159 = smul.addr %s158, 2
      %s160 = scalar_lea.vmem %s3, %s159
      %p161 = scmp.lt.s32.totalorder %s14, 1
      %s162 = scalar_select %p161, %s14, 1
      %s163 = smul.addr %s162, 2
      %s164 = smul.addr %s163, 4
      %s165 = scalar_lea.vmem %s0, %s164
      %p166 = scmp.lt.s32.totalorder %s14, 1
      %s167 = scalar_select %p166, %s14, 1
      %s168 = smul.addr %s167, 2
      %s169 = smul.addr %s168, 2
      %s170 = scalar_lea.vmem %s3, %s169
      %v171 = vld [vmem:[%s165] sm:$0x33]
      %v172 = vld [vmem:[%s1] sm:$0xff]
      %v173 = vld [vmem:[%s1 + $0x8] sm:$0xff]
      %v174 = vld [vmem:[%s1 + $0x10] sm:$0xff]
      %v175 = vld [vmem:[%s1 + $0x18] sm:$0xff]
      %v176 = vld [vmem:[%s1 + $0x20] sm:$0xff]
      %v177 = vld [vmem:[%s1 + $0x28] sm:$0xff]
      %v178 = vld [vmem:[%s1 + $0x30] sm:$0xff]
      %v179 = vld [vmem:[%s1 + $0x38] sm:$0xff]
      %v180 = vld [vmem:[%s1 + $0x40] sm:$0xff]
      %v181 = vld [vmem:[%s1 + $0x48] sm:$0xff]
      %v182 = vld [vmem:[%s1 + $0x50] sm:$0xff]
      %v183 = vld [vmem:[%s1 + $0x58] sm:$0xff]
      %v184 = vld [vmem:[%s1 + $0x60] sm:$0xff]
      %v185 = vld [vmem:[%s1 + $0x68] sm:$0xff]
      %v186 = vld [vmem:[%s1 + $0x70] sm:$0xff]
      %v187 = vld [vmem:[%s1 + $0x78] sm:$0xff]
      %v188 = vld [vmem:[%s1 + $0x80] sm:$0xff]
      %v189 = vld [vmem:[%s1 + $0x88] sm:$0xff]
      %v190 = vld [vmem:[%s1 + $0x90] sm:$0xff]
      %v191 = vld [vmem:[%s1 + $0x98] sm:$0xff]
      %v192 = vld [vmem:[%s1 + $0xa0] sm:$0xff]
      %v193 = vld [vmem:[%s1 + $0xa8] sm:$0xff]
      %v194 = vld [vmem:[%s1 + $0xb0] sm:$0xff]
      %v195 = vld [vmem:[%s1 + $0xb8] sm:$0xff]
      %v196 = vld [vmem:[%s1 + $0xc0] sm:$0xff]
      %v197 = vld [vmem:[%s1 + $0xc8] sm:$0xff]
      %v198 = vld [vmem:[%s1 + $0xd0] sm:$0xff]
      %v199 = vld [vmem:[%s1 + $0xd8] sm:$0xff]
      %v200 = vld [vmem:[%s1 + $0xe0] sm:$0xff]
      %v201 = vld [vmem:[%s1 + $0xe8] sm:$0xff]
      %v202 = vld [vmem:[%s1 + $0xf0] sm:$0xff]
      %v203 = vld [vmem:[%s1 + $0xf8] sm:$0xff]
      %v204 = vld [vmem:[%s1 + $0x100] sm:$0xff]
      %v205 = vld [vmem:[%s1 + $0x108] sm:$0xff]
      %v206 = vld [vmem:[%s1 + $0x110] sm:$0xff]
      %v207 = vld [vmem:[%s1 + $0x118] sm:$0xff]
      %v208 = vld [vmem:[%s1 + $0x120] sm:$0xff]
      %v209 = vld [vmem:[%s1 + $0x128] sm:$0xff]
      %v210 = vld [vmem:[%s1 + $0x130] sm:$0xff]
      %v211 = vld [vmem:[%s1 + $0x138] sm:$0xff]
      %v212 = vld [vmem:[%s1 + $0x140] sm:$0xff]
      %v213 = vld [vmem:[%s1 + $0x148] sm:$0xff]
      %v214 = vld [vmem:[%s1 + $0x150] sm:$0xff]
      %v215 = vld [vmem:[%s1 + $0x158] sm:$0xff]
      %v216 = vld [vmem:[%s1 + $0x160] sm:$0xff]
      %v217 = vld [vmem:[%s1 + $0x168] sm:$0xff]
      %v218 = vld [vmem:[%s1 + $0x170] sm:$0xff]
      %v219 = vld [vmem:[%s1 + $0x178] sm:$0xff]
      %v220 = vld [vmem:[%s1 + $0x180] sm:$0xff]
      %v221 = vld [vmem:[%s1 + $0x188] sm:$0xff]
      %v222 = vld [vmem:[%s1 + $0x190] sm:$0xff]
      %v223 = vld [vmem:[%s1 + $0x198] sm:$0xff]
      %v224 = vld [vmem:[%s1 + $0x1a0] sm:$0xff]
      %v225 = vld [vmem:[%s1 + $0x1a8] sm:$0xff]
      %v226 = vld [vmem:[%s1 + $0x1b0] sm:$0xff]
      %v227 = vld [vmem:[%s1 + $0x1b8] sm:$0xff]
      %v228 = vld [vmem:[%s1 + $0x1c0] sm:$0xff]
      %v229 = vld [vmem:[%s1 + $0x1c8] sm:$0xff]
      %v230 = vld [vmem:[%s1 + $0x1d0] sm:$0xff]
      %v231 = vld [vmem:[%s1 + $0x1d8] sm:$0xff]
      %v232 = vld [vmem:[%s1 + $0x1e0] sm:$0xff]
      %v233 = vld [vmem:[%s1 + $0x1e8] sm:$0xff]
      %v234 = vld [vmem:[%s1 + $0x1f0] sm:$0xff]
      %v235 = vld [vmem:[%s1 + $0x1f8] sm:$0xff]
      %v236 = vld [vmem:[%s2] sm:$0x3]
      %v238 = vlaneseq
      %v239 = vshrl.u32 %v238, 7
      %v240 = vsub.s32 0, %v239
      %v241 = vrot.slane %v236, %v240
      %v242 = vlaneseq
      %v243 = vshrl.u32 %v242, 7
      %v244 = vsub.s32 1, %v243
      %v245 = vrot.slane %v236, %v244
      %v249 = vcombine.high %v171, %v171
      %251 = vmatprep.subr.mxu0 %v173
      %252 = vmatpush1.msra.mxu0 %v172
      %253 = vmatprep.subr.mxu0 %v175
      %254 = vmatpush1.msra.mxu0 %v174
      %255 = vmatprep.subr.mxu0 %v177
      %256 = vmatpush1.msra.mxu0 %v176
      %257 = vmatprep.subr.mxu0 %v179
      %258 = vmatpush1.msra.mxu0 %v178
      %259 = vmatprep.subr.mxu0 %v181
      %260 = vmatpush1.msra.mxu0 %v180
      %261 = vmatprep.subr.mxu0 %v183
      %262 = vmatpush1.msra.mxu0 %v182
      %263 = vmatprep.subr.mxu0 %v185
      %264 = vmatpush1.msra.mxu0 %v184
      %265 = vmatprep.subr.mxu0 %v187
      %266 = vmatpush1.msra.mxu0 %v186
      %267 = vmatprep.subr.mxu0 %v189
      %268 = vmatpush1.msra.mxu0 %v188
      %269 = vmatprep.subr.mxu0 %v191
      %270 = vmatpush1.msra.mxu0 %v190
      %271 = vmatprep.subr.mxu0 %v193
      %272 = vmatpush1.msra.mxu0 %v192
      %273 = vmatprep.subr.mxu0 %v195
      %274 = vmatpush1.msra.mxu0 %v194
      %275 = vmatprep.subr.mxu0 %v197
      %276 = vmatpush1.msra.mxu0 %v196
      %277 = vmatprep.subr.mxu0 %v199
      %278 = vmatpush1.msra.mxu0 %v198
      %279 = vmatprep.subr.mxu0 %v201
      %280 = vmatpush1.msra.mxu0 %v200
      %281 = vmatprep.subr.mxu0 %v203
      %282 = vmatpush1.msra.mxu0 %v202
      %283 = vmatprep.subr.mxu0 %v205
      %284 = vmatpush1.msra.mxu0 %v204
      %285 = vmatprep.subr.mxu0 %v207
      %286 = vmatpush1.msra.mxu0 %v206
      %287 = vmatprep.subr.mxu0 %v209
      %288 = vmatpush1.msra.mxu0 %v208
      %289 = vmatprep.subr.mxu0 %v211
      %290 = vmatpush1.msra.mxu0 %v210
      %291 = vmatprep.subr.mxu0 %v213
      %292 = vmatpush1.msra.mxu0 %v212
      %293 = vmatprep.subr.mxu0 %v215
      %294 = vmatpush1.msra.mxu0 %v214
      %295 = vmatprep.subr.mxu0 %v217
      %296 = vmatpush1.msra.mxu0 %v216
      %297 = vmatprep.subr.mxu0 %v219
      %298 = vmatpush1.msra.mxu0 %v218
      %299 = vmatprep.subr.mxu0 %v221
      %300 = vmatpush1.msra.mxu0 %v220
      %301 = vmatprep.subr.mxu0 %v223
      %302 = vmatpush1.msra.mxu0 %v222
      %303 = vmatprep.subr.mxu0 %v225
      %304 = vmatpush1.msra.mxu0 %v224
      %305 = vmatprep.subr.mxu0 %v227
      %306 = vmatpush1.msra.mxu0 %v226
      %307 = vmatprep.subr.mxu0 %v229
      %308 = vmatpush1.msra.mxu0 %v228
      %309 = vmatprep.subr.mxu0 %v231
      %310 = vmatpush1.msra.mxu0 %v230
      %311 = vmatprep.subr.mxu0 %v233
      %312 = vmatpush1.msra.mxu0 %v232
      %313 = vmatprep.subr.mxu0 %v235
      %314 = vmatpush1.msra.mxu0 %v234
      %315 = vmatprep.mubr.f32.mxu0 %v249
      %316 = vmatmul.mubr.f32.gmra.mrb[0].mxu0 %v171
      %v317 = vpop.f32.mrb[0].mxu0
      %v318 = vadd.f32 %v241, %v317
      %v319 = vpop.f32.mrb[0].mxu0
      %v320 = vadd.f32 %v245, %v319
      %321 = vdwg.mxu0
      %v322 = vld [vmem:[%s165] sm:$0x66]
      %s323 = scalar_lea.vmem %s1, 512
      %v324 = vld [vmem:[%s323] sm:$0xff]
      %v325 = vld [vmem:[%s323 + $0x8] sm:$0xff]
      %v326 = vld [vmem:[%s323 + $0x10] sm:$0xff]
      %v327 = vld [vmem:[%s323 + $0x18] sm:$0xff]
      %v328 = vld [vmem:[%s323 + $0x20] sm:$0xff]
      %v329 = vld [vmem:[%s323 + $0x28] sm:$0xff]
      %v330 = vld [vmem:[%s323 + $0x30] sm:$0xff]
      %v331 = vld [vmem:[%s323 + $0x38] sm:$0xff]
      %v332 = vld [vmem:[%s323 + $0x40] sm:$0xff]
      %v333 = vld [vmem:[%s323 + $0x48] sm:$0xff]
      %v334 = vld [vmem:[%s323 + $0x50] sm:$0xff]
      %v335 = vld [vmem:[%s323 + $0x58] sm:$0xff]
      %v336 = vld [vmem:[%s323 + $0x60] sm:$0xff]
      %v337 = vld [vmem:[%s323 + $0x68] sm:$0xff]
      %v338 = vld [vmem:[%s323 + $0x70] sm:$0xff]
      %v339 = vld [vmem:[%s323 + $0x78] sm:$0xff]
      %v340 = vld [vmem:[%s323 + $0x80] sm:$0xff]
      %v341 = vld [vmem:[%s323 + $0x88] sm:$0xff]
      %v342 = vld [vmem:[%s323 + $0x90] sm:$0xff]
      %v343 = vld [vmem:[%s323 + $0x98] sm:$0xff]
      %v344 = vld [vmem:[%s323 + $0xa0] sm:$0xff]
      %v345 = vld [vmem:[%s323 + $0xa8] sm:$0xff]
      %v346 = vld [vmem:[%s323 + $0xb0] sm:$0xff]
      %v347 = vld [vmem:[%s323 + $0xb8] sm:$0xff]
      %v348 = vld [vmem:[%s323 + $0xc0] sm:$0xff]
      %v349 = vld [vmem:[%s323 + $0xc8] sm:$0xff]
      %v350 = vld [vmem:[%s323 + $0xd0] sm:$0xff]
      %v351 = vld [vmem:[%s323 + $0xd8] sm:$0xff]
      %v352 = vld [vmem:[%s323 + $0xe0] sm:$0xff]
      %v353 = vld [vmem:[%s323 + $0xe8] sm:$0xff]
      %v354 = vld [vmem:[%s323 + $0xf0] sm:$0xff]
      %v355 = vld [vmem:[%s323 + $0xf8] sm:$0xff]
      %v356 = vld [vmem:[%s323 + $0x100] sm:$0xff]
      %v357 = vld [vmem:[%s323 + $0x108] sm:$0xff]
      %v358 = vld [vmem:[%s323 + $0x110] sm:$0xff]
      %v359 = vld [vmem:[%s323 + $0x118] sm:$0xff]
      %v360 = vld [vmem:[%s323 + $0x120] sm:$0xff]
      %v361 = vld [vmem:[%s323 + $0x128] sm:$0xff]
      %v362 = vld [vmem:[%s323 + $0x130] sm:$0xff]
      %v363 = vld [vmem:[%s323 + $0x138] sm:$0xff]
      %v364 = vld [vmem:[%s323 + $0x140] sm:$0xff]
      %v365 = vld [vmem:[%s323 + $0x148] sm:$0xff]
      %v366 = vld [vmem:[%s323 + $0x150] sm:$0xff]
      %v367 = vld [vmem:[%s323 + $0x158] sm:$0xff]
      %v368 = vld [vmem:[%s323 + $0x160] sm:$0xff]
      %v369 = vld [vmem:[%s323 + $0x168] sm:$0xff]
      %v370 = vld [vmem:[%s323 + $0x170] sm:$0xff]
      %v371 = vld [vmem:[%s323 + $0x178] sm:$0xff]
      %v372 = vld [vmem:[%s323 + $0x180] sm:$0xff]
      %v373 = vld [vmem:[%s323 + $0x188] sm:$0xff]
      %v374 = vld [vmem:[%s323 + $0x190] sm:$0xff]
      %v375 = vld [vmem:[%s323 + $0x198] sm:$0xff]
      %v376 = vld [vmem:[%s323 + $0x1a0] sm:$0xff]
      %v377 = vld [vmem:[%s323 + $0x1a8] sm:$0xff]
      %v378 = vld [vmem:[%s323 + $0x1b0] sm:$0xff]
      %v379 = vld [vmem:[%s323 + $0x1b8] sm:$0xff]
      %v380 = vld [vmem:[%s323 + $0x1c0] sm:$0xff]
      %v381 = vld [vmem:[%s323 + $0x1c8] sm:$0xff]
      %v382 = vld [vmem:[%s323 + $0x1d0] sm:$0xff]
      %v383 = vld [vmem:[%s323 + $0x1d8] sm:$0xff]
      %v384 = vld [vmem:[%s323 + $0x1e0] sm:$0xff]
      %v385 = vld [vmem:[%s323 + $0x1e8] sm:$0xff]
      %v386 = vld [vmem:[%s323 + $0x1f0] sm:$0xff]
      %v387 = vld [vmem:[%s323 + $0x1f8] sm:$0xff]
      %v389 = vcombine.high %v322, %v322
      %v390 = vrot.slane %v322, 1
      %v391 = vrot.slane %v389, 1
      %394 = vmatprep.subr.mxu0 %v325
      %395 = vmatpush1.msra.mxu0 %v324
      %396 = vmatprep.subr.mxu0 %v327
      %397 = vmatpush1.msra.mxu0 %v326
      %398 = vmatprep.subr.mxu0 %v329
      %399 = vmatpush1.msra.mxu0 %v328
      %400 = vmatprep.subr.mxu0 %v331
      %401 = vmatpush1.msra.mxu0 %v330
      %402 = vmatprep.subr.mxu0 %v333
      %403 = vmatpush1.msra.mxu0 %v332
      %404 = vmatprep.subr.mxu0 %v335
      %405 = vmatpush1.msra.mxu0 %v334
      %406 = vmatprep.subr.mxu0 %v337
      %407 = vmatpush1.msra.mxu0 %v336
      %408 = vmatprep.subr.mxu0 %v339
      %409 = vmatpush1.msra.mxu0 %v338
      %410 = vmatprep.subr.mxu0 %v341
      %411 = vmatpush1.msra.mxu0 %v340
      %412 = vmatprep.subr.mxu0 %v343
      %413 = vmatpush1.msra.mxu0 %v342
      %414 = vmatprep.subr.mxu0 %v345
      %415 = vmatpush1.msra.mxu0 %v344
      %416 = vmatprep.subr.mxu0 %v347
      %417 = vmatpush1.msra.mxu0 %v346
      %418 = vmatprep.subr.mxu0 %v349
      %419 = vmatpush1.msra.mxu0 %v348
      %420 = vmatprep.subr.mxu0 %v351
      %421 = vmatpush1.msra.mxu0 %v350
      %422 = vmatprep.subr.mxu0 %v353
      %423 = vmatpush1.msra.mxu0 %v352
      %424 = vmatprep.subr.mxu0 %v355
      %425 = vmatpush1.msra.mxu0 %v354
      %426 = vmatprep.subr.mxu0 %v357
      %427 = vmatpush1.msra.mxu0 %v356
      %428 = vmatprep.subr.mxu0 %v359
      %429 = vmatpush1.msra.mxu0 %v358
      %430 = vmatprep.subr.mxu0 %v361
      %431 = vmatpush1.msra.mxu0 %v360
      %432 = vmatprep.subr.mxu0 %v363
      %433 = vmatpush1.msra.mxu0 %v362
      %434 = vmatprep.subr.mxu0 %v365
      %435 = vmatpush1.msra.mxu0 %v364
      %436 = vmatprep.subr.mxu0 %v367
      %437 = vmatpush1.msra.mxu0 %v366
      %438 = vmatprep.subr.mxu0 %v369
      %439 = vmatpush1.msra.mxu0 %v368
      %440 = vmatprep.subr.mxu0 %v371
      %441 = vmatpush1.msra.mxu0 %v370
      %442 = vmatprep.subr.mxu0 %v373
      %443 = vmatpush1.msra.mxu0 %v372
      %444 = vmatprep.subr.mxu0 %v375
      %445 = vmatpush1.msra.mxu0 %v374
      %446 = vmatprep.subr.mxu0 %v377
      %447 = vmatpush1.msra.mxu0 %v376
      %448 = vmatprep.subr.mxu0 %v379
      %449 = vmatpush1.msra.mxu0 %v378
      %450 = vmatprep.subr.mxu0 %v381
      %451 = vmatpush1.msra.mxu0 %v380
      %452 = vmatprep.subr.mxu0 %v383
      %453 = vmatpush1.msra.mxu0 %v382
      %454 = vmatprep.subr.mxu0 %v385
      %455 = vmatpush1.msra.mxu0 %v384
      %456 = vmatprep.subr.mxu0 %v387
      %457 = vmatpush1.msra.mxu0 %v386
      %458 = vmatprep.mubr.f32.mxu0 %v391
      %459 = vmatmul.mubr.f32.gmra.mrb[0].mxu0 %v390
      %v460 = vpop.f32.mrb[0].mxu0
      %v461 = vadd.f32 0.0, %v460
      %v462 = vpop.f32.mrb[0].mxu0
      %v463 = vadd.f32 0.0, %v462
      %464 = vdwg.mxu0
      %v465 = vadd.f32 %v318, %v461
      %v466 = vadd.f32 %v320, %v463
      %v467 = vld [vmem:[%s165] sm:$0xcc]
      %s468 = scalar_lea.vmem %s1, 1024
      %v469 = vld [vmem:[%s468] sm:$0xff]
      %v470 = vld [vmem:[%s468 + $0x8] sm:$0xff]
      %v471 = vld [vmem:[%s468 + $0x10] sm:$0xff]
      %v472 = vld [vmem:[%s468 + $0x18] sm:$0xff]
      %v473 = vld [vmem:[%s468 + $0x20] sm:$0xff]
      %v474 = vld [vmem:[%s468 + $0x28] sm:$0xff]
      %v475 = vld [vmem:[%s468 + $0x30] sm:$0xff]
      %v476 = vld [vmem:[%s468 + $0x38] sm:$0xff]
      %v477 = vld [vmem:[%s468 + $0x40] sm:$0xff]
      %v478 = vld [vmem:[%s468 + $0x48] sm:$0xff]
      %v479 = vld [vmem:[%s468 + $0x50] sm:$0xff]
      %v480 = vld [vmem:[%s468 + $0x58] sm:$0xff]
      %v481 = vld [vmem:[%s468 + $0x60] sm:$0xff]
      %v482 = vld [vmem:[%s468 + $0x68] sm:$0xff]
      %v483 = vld [vmem:[%s468 + $0x70] sm:$0xff]
      %v484 = vld [vmem:[%s468 + $0x78] sm:$0xff]
      %v485 = vld [vmem:[%s468 + $0x80] sm:$0xff]
      %v486 = vld [vmem:[%s468 + $0x88] sm:$0xff]
      %v487 = vld [vmem:[%s468 + $0x90] sm:$0xff]
      %v488 = vld [vmem:[%s468 + $0x98] sm:$0xff]
      %v489 = vld [vmem:[%s468 + $0xa0] sm:$0xff]
      %v490 = vld [vmem:[%s468 + $0xa8] sm:$0xff]
      %v491 = vld [vmem:[%s468 + $0xb0] sm:$0xff]
      %v492 = vld [vmem:[%s468 + $0xb8] sm:$0xff]
      %v493 = vld [vmem:[%s468 + $0xc0] sm:$0xff]
      %v494 = vld [vmem:[%s468 + $0xc8] sm:$0xff]
      %v495 = vld [vmem:[%s468 + $0xd0] sm:$0xff]
      %v496 = vld [vmem:[%s468 + $0xd8] sm:$0xff]
      %v497 = vld [vmem:[%s468 + $0xe0] sm:$0xff]
      %v498 = vld [vmem:[%s468 + $0xe8] sm:$0xff]
      %v499 = vld [vmem:[%s468 + $0xf0] sm:$0xff]
      %v500 = vld [vmem:[%s468 + $0xf8] sm:$0xff]
      %v501 = vld [vmem:[%s468 + $0x100] sm:$0xff]
      %v502 = vld [vmem:[%s468 + $0x108] sm:$0xff]
      %v503 = vld [vmem:[%s468 + $0x110] sm:$0xff]
      %v504 = vld [vmem:[%s468 + $0x118] sm:$0xff]
      %v505 = vld [vmem:[%s468 + $0x120] sm:$0xff]
      %v506 = vld [vmem:[%s468 + $0x128] sm:$0xff]
      %v507 = vld [vmem:[%s468 + $0x130] sm:$0xff]
      %v508 = vld [vmem:[%s468 + $0x138] sm:$0xff]
      %v509 = vld [vmem:[%s468 + $0x140] sm:$0xff]
      %v510 = vld [vmem:[%s468 + $0x148] sm:$0xff]
      %v511 = vld [vmem:[%s468 + $0x150] sm:$0xff]
      %v512 = vld [vmem:[%s468 + $0x158] sm:$0xff]
      %v513 = vld [vmem:[%s468 + $0x160] sm:$0xff]
      %v514 = vld [vmem:[%s468 + $0x168] sm:$0xff]
      %v515 = vld [vmem:[%s468 + $0x170] sm:$0xff]
      %v516 = vld [vmem:[%s468 + $0x178] sm:$0xff]
      %v517 = vld [vmem:[%s468 + $0x180] sm:$0xff]
      %v518 = vld [vmem:[%s468 + $0x188] sm:$0xff]
      %v519 = vld [vmem:[%s468 + $0x190] sm:$0xff]
      %v520 = vld [vmem:[%s468 + $0x198] sm:$0xff]
      %v521 = vld [vmem:[%s468 + $0x1a0] sm:$0xff]
      %v522 = vld [vmem:[%s468 + $0x1a8] sm:$0xff]
      %v523 = vld [vmem:[%s468 + $0x1b0] sm:$0xff]
      %v524 = vld [vmem:[%s468 + $0x1b8] sm:$0xff]
      %v525 = vld [vmem:[%s468 + $0x1c0] sm:$0xff]
      %v526 = vld [vmem:[%s468 + $0x1c8] sm:$0xff]
      %v527 = vld [vmem:[%s468 + $0x1d0] sm:$0xff]
      %v528 = vld [vmem:[%s468 + $0x1d8] sm:$0xff]
      %v529 = vld [vmem:[%s468 + $0x1e0] sm:$0xff]
      %v530 = vld [vmem:[%s468 + $0x1e8] sm:$0xff]
      %v531 = vld [vmem:[%s468 + $0x1f0] sm:$0xff]
      %v532 = vld [vmem:[%s468 + $0x1f8] sm:$0xff]
      %v534 = vcombine.high %v467, %v467
      %v535 = vrot.slane %v467, 2
      %v536 = vrot.slane %v534, 2
      %539 = vmatprep.subr.mxu0 %v470
      %540 = vmatpush1.msra.mxu0 %v469
      %541 = vmatprep.subr.mxu0 %v472
      %542 = vmatpush1.msra.mxu0 %v471
      %543 = vmatprep.subr.mxu0 %v474
      %544 = vmatpush1.msra.mxu0 %v473
      %545 = vmatprep.subr.mxu0 %v476
      %546 = vmatpush1.msra.mxu0 %v475
      %547 = vmatprep.subr.mxu0 %v478
      %548 = vmatpush1.msra.mxu0 %v477
      %549 = vmatprep.subr.mxu0 %v480
      %550 = vmatpush1.msra.mxu0 %v479
      %551 = vmatprep.subr.mxu0 %v482
      %552 = vmatpush1.msra.mxu0 %v481
      %553 = vmatprep.subr.mxu0 %v484
      %554 = vmatpush1.msra.mxu0 %v483
      %555 = vmatprep.subr.mxu0 %v486
      %556 = vmatpush1.msra.mxu0 %v485
      %557 = vmatprep.subr.mxu0 %v488
      %558 = vmatpush1.msra.mxu0 %v487
      %559 = vmatprep.subr.mxu0 %v490
      %560 = vmatpush1.msra.mxu0 %v489
      %561 = vmatprep.subr.mxu0 %v492
      %562 = vmatpush1.msra.mxu0 %v491
      %563 = vmatprep.subr.mxu0 %v494
      %564 = vmatpush1.msra.mxu0 %v493
      %565 = vmatprep.subr.mxu0 %v496
      %566 = vmatpush1.msra.mxu0 %v495
      %567 = vmatprep.subr.mxu0 %v498
      %568 = vmatpush1.msra.mxu0 %v497
      %569 = vmatprep.subr.mxu0 %v500
      %570 = vmatpush1.msra.mxu0 %v499
      %571 = vmatprep.subr.mxu0 %v502
      %572 = vmatpush1.msra.mxu0 %v501
      %573 = vmatprep.subr.mxu0 %v504
      %574 = vmatpush1.msra.mxu0 %v503
      %575 = vmatprep.subr.mxu0 %v506
      %576 = vmatpush1.msra.mxu0 %v505
      %577 = vmatprep.subr.mxu0 %v508
      %578 = vmatpush1.msra.mxu0 %v507
      %579 = vmatprep.subr.mxu0 %v510
      %580 = vmatpush1.msra.mxu0 %v509
      %581 = vmatprep.subr.mxu0 %v512
      %582 = vmatpush1.msra.mxu0 %v511
      %583 = vmatprep.subr.mxu0 %v514
      %584 = vmatpush1.msra.mxu0 %v513
      %585 = vmatprep.subr.mxu0 %v516
      %586 = vmatpush1.msra.mxu0 %v515
      %587 = vmatprep.subr.mxu0 %v518
      %588 = vmatpush1.msra.mxu0 %v517
      %589 = vmatprep.subr.mxu0 %v520
      %590 = vmatpush1.msra.mxu0 %v519
      %591 = vmatprep.subr.mxu0 %v522
      %592 = vmatpush1.msra.mxu0 %v521
      %593 = vmatprep.subr.mxu0 %v524
      %594 = vmatpush1.msra.mxu0 %v523
      %595 = vmatprep.subr.mxu0 %v526
      %596 = vmatpush1.msra.mxu0 %v525
      %597 = vmatprep.subr.mxu0 %v528
      %598 = vmatpush1.msra.mxu0 %v527
      %599 = vmatprep.subr.mxu0 %v530
      %600 = vmatpush1.msra.mxu0 %v529
      %601 = vmatprep.subr.mxu0 %v532
      %602 = vmatpush1.msra.mxu0 %v531
      %603 = vmatprep.mubr.f32.mxu0 %v536
      %604 = vmatmul.mubr.f32.gmra.mrb[0].mxu0 %v535
      %v605 = vpop.f32.mrb[0].mxu0
      %v606 = vadd.f32 0.0, %v605
      %v607 = vpop.f32.mrb[0].mxu0
      %v608 = vadd.f32 0.0, %v607
      %609 = vdwg.mxu0
      %v610 = vadd.f32 %v465, %v606
      %v611 = vadd.f32 %v466, %v608
      %v614 = vcombine.low %v610, %v611
      %v616 = vunpack.c.l.s4 1983009808
      %v617 = vunpack.c.0.s8 %v616
      %v618 = vlaneseq
      %v619 = vshrl.u32 %v618, 7
      %v620 = vsub.s32 %v617, %v619
      %v621 = vrot.slane %v614, %v620
      %623 = vst [vmem:[%s170] sm:$0xf] %v621
      %p624 = scmp.lt.s32.totalorder %s14, 1
      %s625 = scalar_select %p624, %s14, 1
      %s626 = smul.addr %s625, 2
      %s627 = smul.addr %s626, 2
      %s628 = scalar_lea.vmem %s3, %s627
      // Predicated region
      $region33: #{forward.9} parent=31 // pred_check
        %p629 = pneg %p100
      $region34: #{forward.9} parent=31 // pred_check_branch
        %631 = sbr.rel (%p629) target = $region36
      $region35: #{forward.9} parent=31 // pred_region
        _
      $region36: #{forward.9} parent=31 // pred_fallthru
        _
    $region32: #{forward.9} parent=5 // pred_fallthru
      _
    %p632 = scmp.le.s32.totalorder 2, %s9
    // Predicated region
    $region37: #{forward.9} parent=5 // pred_check
      %p633 = pneg %p632
    $region38: #{forward.9} parent=5 // pred_check_branch
      %635 = sbr.rel (%p633) target = $region40
    $region39: #{forward.9} parent=5 // pred_region
      %s636 = ssub.s32 %s9, 2
      // Predicated region
      $region41: #{forward.9} parent=39 // pred_check
        %p637 = pneg %p106
      $region42: #{forward.9} parent=39 // pred_check_branch
        %639 = sbr.rel (%p637) target = $region44
      $region43: #{forward.9} parent=39 // pred_region
        %p640 = scmp.lt.s32.totalorder %s15, 1
        %s641 = scalar_select %p640, %s15, 1
        %s642 = smul.addr %s641, 2
        %s643 = smul.addr %s642, 2
        %s644 = scalar_lea.vmem %s3, %s643
      $region44: #{forward.9} parent=39 // pred_fallthru
        _
    $region40: #{forward.9} parent=5 // pred_fallthru
      _
  $region6: #{forward.9} parent=0 // loop_footer
    %s13 = sadd.s32 1, %s9
  $region7: #{forward.9} parent=0 // loop_footer_branch
    %8 = sbr.rel target = $region3
  $region8: #{forward.9} parent=0 // loop_exit
    _

// kernel: forward.12
$region0: #{forward.12}
  #allocation0 [shape = 'u32[]', space=smem, size = 0x4, offset = 0x4, fixed_abs, tag = 'smem constant byte address 0x4 - core index']
  #allocation1 [shape = 'u32[144,128]{1,0:T(1,128)}', space=vmem, size = 0x12000, scoped, tag = 'internal scratch']
  %s0 = inlined_call_operand.vmem [shape: f32[2,10,128], index: 0, kind: input, shape index: {}]
  %s1 = inlined_call_operand.vmem [shape: f32[3,128,256], index: 1, kind: input, shape index: {}]
  %s2 = inlined_call_operand.vmem [shape: f32[1,256], index: 2, kind: input, shape index: {}]
  %s3 = inlined_call_operand.vmem [shape: f32[2,8,256], index: 3, kind: output, shape index: {}]
  %s4 = sld [smem:[#allocation0]]
  $region45: #{forward.12} parent=0
    _
  %s6 = ssub.s32 1, %s4
  %s7 = scalar_select 0, %s6, %s4
  loop: start=0, step=1, limit=4
  $region2: #{forward.12} parent=0 // loop_pre_header
    _
  $region3: #{forward.12} parent=0 // loop_header
    %s9 = sphi 0, %s13
    %p10 = scmp.ge.s32.totalorder %s9, 4
    %s19 = sphi 0, %s21
    %s22 = sphi 0, %s19
    %s23 = sphi 0, %s22
    %s39 = sphi 0, %s23
    %s43 = sphi 0, %s43
    %s45 = sphi 0, %s43
    %s46 = sphi 0, %s45
    %s60 = sphi 0, %s46
    %s64 = sphi 0, %s64
    %s66 = sphi 0, %s64
    %s67 = sphi 0, %s66
    %s81 = sphi 0, %s67
    %s87 = sphi 0, %s89
    %s90 = sphi 0, %s87
    %s91 = sphi 0, %s90
    %s107 = sphi 0, %s91
  $region4: #{forward.12} parent=0 // loop_header_branch
    %12 = sbr.rel (%p10) target = $region8
  $region5: #{forward.12} parent=0 // loop_body
    %s14 = ssub.s32 %s9, 1
    %s15 = ssub.s32 %s9, 2
    %s16 = sadd.s32 %s9, 1
    %s17 = ssub.s32 %s9, %s16
    %p18 = scmp.eq.s32.totalorder %s17, 0
    %s20 = sadd.s32 %s19, 1
    %s21 = scalar_select %p18, %s19, %s20
    %p24 = pneg %p18
    %p25 = scmp.eq.s32.totalorder %s9, 1
    %p26 = por %p24, %p25
    %p27 = scmp.ne.s32.totalorder %s19, %s22
    %p28 = scmp.eq.s32.totalorder %s9, 0
    %p29 = por %p27, %p28
    %p30 = scmp.ne.s32.totalorder %s19, %s22
    %p31 = scmp.eq.s32.totalorder %s14, 1
    %p32 = por %p30, %p31
    %p33 = scmp.ne.s32.totalorder %s22, %s23
    %p34 = scmp.eq.s32.totalorder %s14, 0
    %p35 = por %p33, %p34
    %p36 = scmp.ne.s32.totalorder %s22, %s23
    %p37 = scmp.eq.s32.totalorder %s15, 1
    %p38 = por %p36, %p37
    %p40 = scmp.ne.s32.totalorder %s23, %s39
    %p41 = scmp.eq.s32.totalorder %s15, 0
    %p42 = por %p40, %p41
    %s44 = sadd.s32 %s43, 1
    %p47 = scmp.eq.s32.totalorder %s9, 1
    %p48 = scmp.ne.s32.totalorder %s43, %s45
    %p49 = scmp.eq.s32.totalorder %s9, 0
    %p50 = por %p48, %p49
    %p51 = scmp.ne.s32.totalorder %s43, %s45
    %p52 = scmp.eq.s32.totalorder %s14, 1
    %p53 = por %p51, %p52
    %p54 = scmp.ne.s32.totalorder %s45, %s46
    %p55 = scmp.eq.s32.totalorder %s14, 0
    %p56 = por %p54, %p55
    %p57 = scmp.ne.s32.totalorder %s45, %s46
    %p58 = scmp.eq.s32.totalorder %s15, 1
    %p59 = por %p57, %p58
    %p61 = scmp.ne.s32.totalorder %s46, %s60
    %p62 = scmp.eq.s32.totalorder %s15, 0
    %p63 = por %p61, %p62
    %s65 = sadd.s32 %s64, 1
    %p68 = scmp.eq.s32.totalorder %s9, 1
    %p69 = scmp.ne.s32.totalorder %s64, %s66
    %p70 = scmp.eq.s32.totalorder %s9, 0
    %p71 = por %p69, %p70
    %p72 = scmp.ne.s32.totalorder %s64, %s66
    %p73 = scmp.eq.s32.totalorder %s14, 1
    %p74 = por %p72, %p73
    %p75 = scmp.ne.s32.totalorder %s66, %s67
    %p76 = scmp.eq.s32.totalorder %s14, 0
    %p77 = por %p75, %p76
    %p78 = scmp.ne.s32.totalorder %s66, %s67
    %p79 = scmp.eq.s32.totalorder %s15, 1
    %p80 = por %p78, %p79
    %p82 = scmp.ne.s32.totalorder %s67, %s81
    %p83 = scmp.eq.s32.totalorder %s15, 0
    %p84 = por %p82, %p83
    %s85 = ssub.s32 %s9, %s16
    %p86 = scmp.eq.s32.totalorder %s85, 0
    %s88 = sadd.s32 %s87, 1
    %s89 = scalar_select %p86, %s87, %s88
    %p92 = pneg %p86
    %p93 = scmp.eq.s32.totalorder %s9, 1
    %p94 = por %p92, %p93
    %p95 = scmp.ne.s32.totalorder %s87, %s90
    %p96 = scmp.eq.s32.totalorder %s9, 0
    %p97 = por %p95, %p96
    %p98 = scmp.ne.s32.totalorder %s87, %s90
    %p99 = scmp.eq.s32.totalorder %s14, 1
    %p100 = por %p98, %p99
    %p101 = scmp.ne.s32.totalorder %s90, %s91
    %p102 = scmp.eq.s32.totalorder %s14, 0
    %p103 = por %p101, %p102
    %p104 = scmp.ne.s32.totalorder %s90, %s91
    %p105 = scmp.eq.s32.totalorder %s15, 1
    %p106 = por %p104, %p105
    %p108 = scmp.ne.s32.totalorder %s91, %s107
    %p109 = scmp.eq.s32.totalorder %s15, 0
    %p110 = por %p108, %p109
    %p111 = scmp.le.s32.totalorder 1, %s9
    %p112 = scmp.lt.s32.totalorder %s9, 3
    %p113 = pnand %p111, %p112
    %p114 = pneg %p113
    // Predicated region
    $region9: #{forward.12} parent=5 // pred_check
      _
    $region10: #{forward.12} parent=5 // pred_check_branch
      %116 = sbr.rel (%p113) target = $region12
    $region11: #{forward.12} parent=5 // pred_region
      %s117 = ssub.s32 %s9, 1
      // Predicated region
      $region13: #{forward.12} parent=11 // pred_check
        %p118 = pneg %p56
      $region14: #{forward.12} parent=11 // pred_check_branch
        %120 = sbr.rel (%p118) target = $region16
      $region15: #{forward.12} parent=11 // pred_region
        _
      $region16: #{forward.12} parent=11 // pred_fallthru
        _
      // Predicated region
      $region17: #{forward.12} parent=11 // pred_check
        %p121 = pneg %p77
      $region18: #{forward.12} parent=11 // pred_check_branch
        %123 = sbr.rel (%p121) target = $region20
      $region19: #{forward.12} parent=11 // pred_region
        _
      $region20: #{forward.12} parent=11 // pred_fallthru
        _
    $region12: #{forward.12} parent=5 // pred_fallthru
      _
    %p124 = scmp.lt.s32.totalorder %s9, 2
    // Predicated region
    $region21: #{forward.12} parent=5 // pred_check
      %p125 = pneg %p124
    $region22: #{forward.12} parent=5 // pred_check_branch
      %127 = sbr.rel (%p125) target = $region24
    $region23: #{forward.12} parent=5 // pred_region
      // Predicated region
      $region25: #{forward.12} parent=23 // pred_check
        %p128 = pneg %p29
      $region26: #{forward.12} parent=23 // pred_check_branch
        %130 = sbr.rel (%p128) target = $region28
      $region27: #{forward.12} parent=23 // pred_region
        %p131 = scmp.lt.s32.totalorder %s9, 1
        %s132 = scalar_select %p131, %s9, 1
        %s133 = smul.addr %s132, 2
        %s134 = smul.addr %s133, 8
        %s135 = scalar_lea.vmem %s0, %s134
      $region28: #{forward.12} parent=23 // pred_fallthru
        _
    $region24: #{forward.12} parent=5 // pred_fallthru
      _
    %p136 = scmp.le.s32.totalorder 1, %s9
    %p137 = scmp.lt.s32.totalorder %s9, 3
    %p138 = pnand %p136, %p137
    %p139 = pneg %p138
    // Predicated region
    $region29: #{forward.12} parent=5 // pred_check
      _
    $region30: #{forward.12} parent=5 // pred_check_branch
      %141 = sbr.rel (%p138) target = $region32
    $region31: #{forward.12} parent=5 // pred_region
      %s142 = ssub.s32 %s9, 1
      %p143 = scmp.lt.s32.totalorder %s14, 1
      %s144 = scalar_select %p143, %s14, 1
      %s145 = smul.addr %s144, 2
      %s146 = smul.addr %s145, 8
      %s147 = scalar_lea.vmem %s0, %s146
      %p148 = pneg %p35
      %p149 = pneg %p32
      %p150 = pneg %p56
      %p151 = pneg %p53
      %p152 = pneg %p77
      %p153 = pneg %p74
      %p154 = pneg %p103
      %p155 = pneg %p100
      %p156 = scmp.lt.s32.totalorder %s14, 1
      %s157 = scalar_select %p156, %s14, 1
      %s158 = smul.addr %s157, 2
      %s159 = smul.addr %s158, 8
      %s160 = scalar_lea.vmem %s3, %s159
      %p161 = scmp.lt.s32.totalorder %s14, 1
      %s162 = scalar_select %p161, %s14, 1
      %s163 = smul.addr %s162, 2
      %s164 = smul.addr %s163, 8
      %s165 = scalar_lea.vmem %s0, %s164
      %p166 = scmp.lt.s32.totalorder %s14, 1
      %s167 = scalar_select %p166, %s14, 1
      %s168 = smul.addr %s167, 2
      %s169 = smul.addr %s168, 8
      %s170 = scalar_lea.vmem %s3, %s169
      %v171 = vld [vmem:[%s165] sm:$0xff]
      %v172 = vld [vmem:[%s1] sm:$0xff]
      %v173 = vld [vmem:[%s1 + $0x8] sm:$0xff]
      %v174 = vld [vmem:[%s1 + $0x10] sm:$0xff]
      %v175 = vld [vmem:[%s1 + $0x18] sm:$0xff]
      %v176 = vld [vmem:[%s1 + $0x20] sm:$0xff]
      %v177 = vld [vmem:[%s1 + $0x28] sm:$0xff]
      %v178 = vld [vmem:[%s1 + $0x30] sm:$0xff]
      %v179 = vld [vmem:[%s1 + $0x38] sm:$0xff]
      %v180 = vld [vmem:[%s1 + $0x40] sm:$0xff]
      %v181 = vld [vmem:[%s1 + $0x48] sm:$0xff]
      %v182 = vld [vmem:[%s1 + $0x50] sm:$0xff]
      %v183 = vld [vmem:[%s1 + $0x58] sm:$0xff]
      %v184 = vld [vmem:[%s1 + $0x60] sm:$0xff]
      %v185 = vld [vmem:[%s1 + $0x68] sm:$0xff]
      %v186 = vld [vmem:[%s1 + $0x70] sm:$0xff]
      %v187 = vld [vmem:[%s1 + $0x78] sm:$0xff]
      %v188 = vld [vmem:[%s1 + $0x80] sm:$0xff]
      %v189 = vld [vmem:[%s1 + $0x88] sm:$0xff]
      %v190 = vld [vmem:[%s1 + $0x90] sm:$0xff]
      %v191 = vld [vmem:[%s1 + $0x98] sm:$0xff]
      %v192 = vld [vmem:[%s1 + $0xa0] sm:$0xff]
      %v193 = vld [vmem:[%s1 + $0xa8] sm:$0xff]
      %v194 = vld [vmem:[%s1 + $0xb0] sm:$0xff]
      %v195 = vld [vmem:[%s1 + $0xb8] sm:$0xff]
      %v196 = vld [vmem:[%s1 + $0xc0] sm:$0xff]
      %v197 = vld [vmem:[%s1 + $0xc8] sm:$0xff]
      %v198 = vld [vmem:[%s1 + $0xd0] sm:$0xff]
      %v199 = vld [vmem:[%s1 + $0xd8] sm:$0xff]
      %v200 = vld [vmem:[%s1 + $0xe0] sm:$0xff]
      %v201 = vld [vmem:[%s1 + $0xe8] sm:$0xff]
      %v202 = vld [vmem:[%s1 + $0xf0] sm:$0xff]
      %v203 = vld [vmem:[%s1 + $0xf8] sm:$0xff]
      %v204 = vld [vmem:[%s2] sm:$0x3]
      %v206 = vlaneseq
      %v207 = vshrl.u32 %v206, 7
      %v208 = vsub.s32 0, %v207
      %v209 = vrot.slane %v204, %v208
      %v210 = vlaneseq
      %v211 = vshrl.u32 %v210, 7
      %v212 = vsub.s32 1, %v211
      %v213 = vrot.slane %v204, %v212
      %216 = vmatprep.subr.mxu0 %v173
      %217 = vmatpush1.msra.mxu0 %v172
      %218 = vmatprep.subr.mxu0 %v175
      %219 = vmatpush1.msra.mxu0 %v174
      %220 = vmatprep.subr.mxu0 %v177
      %221 = vmatpush1.msra.mxu0 %v176
      %222 = vmatprep.subr.mxu0 %v179
      %223 = vmatpush1.msra.mxu0 %v178
      %224 = vmatprep.subr.mxu0 %v181
      %225 = vmatpush1.msra.mxu0 %v180
      %226 = vmatprep.subr.mxu0 %v183
      %227 = vmatpush1.msra.mxu0 %v182
      %228 = vmatprep.subr.mxu0 %v185
      %229 = vmatpush1.msra.mxu0 %v184
      %230 = vmatprep.subr.mxu0 %v187
      %231 = vmatpush1.msra.mxu0 %v186
      %232 = vmatprep.subr.mxu0 %v189
      %233 = vmatpush1.msra.mxu0 %v188
      %234 = vmatprep.subr.mxu0 %v191
      %235 = vmatpush1.msra.mxu0 %v190
      %236 = vmatprep.subr.mxu0 %v193
      %237 = vmatpush1.msra.mxu0 %v192
      %238 = vmatprep.subr.mxu0 %v195
      %239 = vmatpush1.msra.mxu0 %v194
      %240 = vmatprep.subr.mxu0 %v197
      %241 = vmatpush1.msra.mxu0 %v196
      %242 = vmatprep.subr.mxu0 %v199
      %243 = vmatpush1.msra.mxu0 %v198
      %244 = vmatprep.subr.mxu0 %v201
      %245 = vmatpush1.msra.mxu0 %v200
      %246 = vmatprep.subr.mxu0 %v203
      %247 = vmatpush1.msra.mxu0 %v202
      %248 = vmatprep.subr.mxu0 0.0
      %249 = vmatpush1.msra.mxu0 0.0
      %250 = vmatprep.subr.mxu0 0.0
      %251 = vmatpush1.msra.mxu0 0.0
      %252 = vmatprep.subr.mxu0 0.0
      %253 = vmatpush1.msra.mxu0 0.0
      %254 = vmatprep.subr.mxu0 0.0
      %255 = vmatpush1.msra.mxu0 0.0
      %256 = vmatprep.subr.mxu0 0.0
      %257 = vmatpush1.msra.mxu0 0.0
      %258 = vmatprep.subr.mxu0 0.0
      %259 = vmatpush1.msra.mxu0 0.0
      %260 = vmatprep.subr.mxu0 0.0
      %261 = vmatpush1.msra.mxu0 0.0
      %262 = vmatprep.subr.mxu0 0.0
      %263 = vmatpush1.msra.mxu0 0.0
      %264 = vmatprep.subr.mxu0 0.0
      %265 = vmatpush1.msra.mxu0 0.0
      %266 = vmatprep.subr.mxu0 0.0
      %267 = vmatpush1.msra.mxu0 0.0
      %268 = vmatprep.subr.mxu0 0.0
      %269 = vmatpush1.msra.mxu0 0.0
      %270 = vmatprep.subr.mxu0 0.0
      %271 = vmatpush1.msra.mxu0 0.0
      %272 = vmatprep.subr.mxu0 0.0
      %273 = vmatpush1.msra.mxu0 0.0
      %274 = vmatprep.subr.mxu0 0.0
      %275 = vmatpush1.msra.mxu0 0.0
      %276 = vmatprep.subr.mxu0 0.0
      %277 = vmatpush1.msra.mxu0 0.0
      %278 = vmatprep.subr.mxu0 0.0
      %279 = vmatpush1.msra.mxu0 0.0
      %280 = vmatprep.mubr.f32.mxu0 0.0
      %281 = vmatmul.mubr.f32.gmra.mrb[0].mxu0 %v171
      %v282 = vpop.f32.mrb[0].mxu0
      %v283 = vadd.f32 %v209, %v282
      %v284 = vpop.f32.mrb[0].mxu0
      %v285 = vadd.f32 %v213, %v284
      %286 = vdwg.mxu0
      %v287 = vld [vmem:[%s165 + $0x1] sm:$0xff]
      %s288 = scalar_lea.vmem %s1, 256
      %v289 = vld [vmem:[%s288] sm:$0xff]
      %v290 = vld [vmem:[%s288 + $0x8] sm:$0xff]
      %v291 = vld [vmem:[%s288 + $0x10] sm:$0xff]
      %v292 = vld [vmem:[%s288 + $0x18] sm:$0xff]
      %v293 = vld [vmem:[%s288 + $0x20] sm:$0xff]
      %v294 = vld [vmem:[%s288 + $0x28] sm:$0xff]
      %v295 = vld [vmem:[%s288 + $0x30] sm:$0xff]
      %v296 = vld [vmem:[%s288 + $0x38] sm:$0xff]
      %v297 = vld [vmem:[%s288 + $0x40] sm:$0xff]
      %v298 = vld [vmem:[%s288 + $0x48] sm:$0xff]
      %v299 = vld [vmem:[%s288 + $0x50] sm:$0xff]
      %v300 = vld [vmem:[%s288 + $0x58] sm:$0xff]
      %v301 = vld [vmem:[%s288 + $0x60] sm:$0xff]
      %v302 = vld [vmem:[%s288 + $0x68] sm:$0xff]
      %v303 = vld [vmem:[%s288 + $0x70] sm:$0xff]
      %v304 = vld [vmem:[%s288 + $0x78] sm:$0xff]
      %v305 = vld [vmem:[%s288 + $0x80] sm:$0xff]
      %v306 = vld [vmem:[%s288 + $0x88] sm:$0xff]
      %v307 = vld [vmem:[%s288 + $0x90] sm:$0xff]
      %v308 = vld [vmem:[%s288 + $0x98] sm:$0xff]
      %v309 = vld [vmem:[%s288 + $0xa0] sm:$0xff]
      %v310 = vld [vmem:[%s288 + $0xa8] sm:$0xff]
      %v311 = vld [vmem:[%s288 + $0xb0] sm:$0xff]
      %v312 = vld [vmem:[%s288 + $0xb8] sm:$0xff]
      %v313 = vld [vmem:[%s288 + $0xc0] sm:$0xff]
      %v314 = vld [vmem:[%s288 + $0xc8] sm:$0xff]
      %v315 = vld [vmem:[%s288 + $0xd0] sm:$0xff]
      %v316 = vld [vmem:[%s288 + $0xd8] sm:$0xff]
      %v317 = vld [vmem:[%s288 + $0xe0] sm:$0xff]
      %v318 = vld [vmem:[%s288 + $0xe8] sm:$0xff]
      %v319 = vld [vmem:[%s288 + $0xf0] sm:$0xff]
      %v320 = vld [vmem:[%s288 + $0xf8] sm:$0xff]
      %321 = vmatprep.subr.mxu0 %v290
      %322 = vmatpush1.msra.mxu0 %v289
      %323 = vmatprep.subr.mxu0 %v292
      %324 = vmatpush1.msra.mxu0 %v291
      %325 = vmatprep.subr.mxu0 %v294
      %326 = vmatpush1.msra.mxu0 %v293
      %327 = vmatprep.subr.mxu0 %v296
      %328 = vmatpush1.msra.mxu0 %v295
      %329 = vmatprep.subr.mxu0 %v298
      %330 = vmatpush1.msra.mxu0 %v297
      %331 = vmatprep.subr.mxu0 %v300
      %332 = vmatpush1.msra.mxu0 %v299
      %333 = vmatprep.subr.mxu0 %v302
      %334 = vmatpush1.msra.mxu0 %v301
      %335 = vmatprep.subr.mxu0 %v304
      %336 = vmatpush1.msra.mxu0 %v303
      %337 = vmatprep.subr.mxu0 %v306
      %338 = vmatpush1.msra.mxu0 %v305
      %339 = vmatprep.subr.mxu0 %v308
      %340 = vmatpush1.msra.mxu0 %v307
      %341 = vmatprep.subr.mxu0 %v310
      %342 = vmatpush1.msra.mxu0 %v309
      %343 = vmatprep.subr.mxu0 %v312
      %344 = vmatpush1.msra.mxu0 %v311
      %345 = vmatprep.subr.mxu0 %v314
      %346 = vmatpush1.msra.mxu0 %v313
      %347 = vmatprep.subr.mxu0 %v316
      %348 = vmatpush1.msra.mxu0 %v315
      %349 = vmatprep.subr.mxu0 %v318
      %350 = vmatpush1.msra.mxu0 %v317
      %351 = vmatprep.subr.mxu0 %v320
      %352 = vmatpush1.msra.mxu0 %v319
      %353 = vmatprep.subr.mxu0 0.0
      %354 = vmatpush1.msra.mxu0 0.0
      %355 = vmatprep.subr.mxu0 0.0
      %356 = vmatpush1.msra.mxu0 0.0
      %357 = vmatprep.subr.mxu0 0.0
      %358 = vmatpush1.msra.mxu0 0.0
      %359 = vmatprep.subr.mxu0 0.0
      %360 = vmatpush1.msra.mxu0 0.0
      %361 = vmatprep.subr.mxu0 0.0
      %362 = vmatpush1.msra.mxu0 0.0
      %363 = vmatprep.subr.mxu0 0.0
      %364 = vmatpush1.msra.mxu0 0.0
      %365 = vmatprep.subr.mxu0 0.0
      %366 = vmatpush1.msra.mxu0 0.0
      %367 = vmatprep.subr.mxu0 0.0
      %368 = vmatpush1.msra.mxu0 0.0
      %369 = vmatprep.subr.mxu0 0.0
      %370 = vmatpush1.msra.mxu0 0.0
      %371 = vmatprep.subr.mxu0 0.0
      %372 = vmatpush1.msra.mxu0 0.0
      %373 = vmatprep.subr.mxu0 0.0
      %374 = vmatpush1.msra.mxu0 0.0
      %375 = vmatprep.subr.mxu0 0.0
      %376 = vmatpush1.msra.mxu0 0.0
      %377 = vmatprep.subr.mxu0 0.0
      %378 = vmatpush1.msra.mxu0 0.0
      %379 = vmatprep.subr.mxu0 0.0
      %380 = vmatpush1.msra.mxu0 0.0
      %381 = vmatprep.subr.mxu0 0.0
      %382 = vmatpush1.msra.mxu0 0.0
      %383 = vmatprep.subr.mxu0 0.0
      %384 = vmatpush1.msra.mxu0 0.0
      %385 = vmatprep.mubr.f32.mxu0 0.0
      %386 = vmatmul.mubr.f32.gmra.mrb[0].mxu0 %v287
      %v387 = vpop.f32.mrb[0].mxu0
      %v388 = vadd.f32 0.0, %v387
      %v389 = vpop.f32.mrb[0].mxu0
      %v390 = vadd.f32 0.0, %v389
      %391 = vdwg.mxu0
      %v392 = vadd.f32 %v283, %v388
      %v393 = vadd.f32 %v285, %v390
      %v394 = vld [vmem:[%s165 + $0x2] sm:$0xff]
      %s395 = scalar_lea.vmem %s1, 512
      %v396 = vld [vmem:[%s395] sm:$0xff]
      %v397 = vld [vmem:[%s395 + $0x8] sm:$0xff]
      %v398 = vld [vmem:[%s395 + $0x10] sm:$0xff]
      %v399 = vld [vmem:[%s395 + $0x18] sm:$0xff]
      %v400 = vld [vmem:[%s395 + $0x20] sm:$0xff]
      %v401 = vld [vmem:[%s395 + $0x28] sm:$0xff]
      %v402 = vld [vmem:[%s395 + $0x30] sm:$0xff]
      %v403 = vld [vmem:[%s395 + $0x38] sm:$0xff]
      %v404 = vld [vmem:[%s395 + $0x40] sm:$0xff]
      %v405 = vld [vmem:[%s395 + $0x48] sm:$0xff]
      %v406 = vld [vmem:[%s395 + $0x50] sm:$0xff]
      %v407 = vld [vmem:[%s395 + $0x58] sm:$0xff]
      %v408 = vld [vmem:[%s395 + $0x60] sm:$0xff]
      %v409 = vld [vmem:[%s395 + $0x68] sm:$0xff]
      %v410 = vld [vmem:[%s395 + $0x70] sm:$0xff]
      %v411 = vld [vmem:[%s395 + $0x78] sm:$0xff]
      %v412 = vld [vmem:[%s395 + $0x80] sm:$0xff]
      %v413 = vld [vmem:[%s395 + $0x88] sm:$0xff]
      %v414 = vld [vmem:[%s395 + $0x90] sm:$0xff]
      %v415 = vld [vmem:[%s395 + $0x98] sm:$0xff]
      %v416 = vld [vmem:[%s395 + $0xa0] sm:$0xff]
      %v417 = vld [vmem:[%s395 + $0xa8] sm:$0xff]
      %v418 = vld [vmem:[%s395 + $0xb0] sm:$0xff]
      %v419 = vld [vmem:[%s395 + $0xb8] sm:$0xff]
      %v420 = vld [vmem:[%s395 + $0xc0] sm:$0xff]
      %v421 = vld [vmem:[%s395 + $0xc8] sm:$0xff]
      %v422 = vld [vmem:[%s395 + $0xd0] sm:$0xff]
      %v423 = vld [vmem:[%s395 + $0xd8] sm:$0xff]
      %v424 = vld [vmem:[%s395 + $0xe0] sm:$0xff]
      %v425 = vld [vmem:[%s395 + $0xe8] sm:$0xff]
      %v426 = vld [vmem:[%s395 + $0xf0] sm:$0xff]
      %v427 = vld [vmem:[%s395 + $0xf8] sm:$0xff]
      %428 = vmatprep.subr.mxu0 %v397
      %429 = vmatpush1.msra.mxu0 %v396
      %430 = vmatprep.subr.mxu0 %v399
      %431 = vmatpush1.msra.mxu0 %v398
      %432 = vmatprep.subr.mxu0 %v401
      %433 = vmatpush1.msra.mxu0 %v400
      %434 = vmatprep.subr.mxu0 %v403
      %435 = vmatpush1.msra.mxu0 %v402
      %436 = vmatprep.subr.mxu0 %v405
      %437 = vmatpush1.msra.mxu0 %v404
      %438 = vmatprep.subr.mxu0 %v407
      %439 = vmatpush1.msra.mxu0 %v406
      %440 = vmatprep.subr.mxu0 %v409
      %441 = vmatpush1.msra.mxu0 %v408
      %442 = vmatprep.subr.mxu0 %v411
      %443 = vmatpush1.msra.mxu0 %v410
      %444 = vmatprep.subr.mxu0 %v413
      %445 = vmatpush1.msra.mxu0 %v412
      %446 = vmatprep.subr.mxu0 %v415
      %447 = vmatpush1.msra.mxu0 %v414
      %448 = vmatprep.subr.mxu0 %v417
      %449 = vmatpush1.msra.mxu0 %v416
      %450 = vmatprep.subr.mxu0 %v419
      %451 = vmatpush1.msra.mxu0 %v418
      %452 = vmatprep.subr.mxu0 %v421
      %453 = vmatpush1.msra.mxu0 %v420
      %454 = vmatprep.subr.mxu0 %v423
      %455 = vmatpush1.msra.mxu0 %v422
      %456 = vmatprep.subr.mxu0 %v425
      %457 = vmatpush1.msra.mxu0 %v424
      %458 = vmatprep.subr.mxu0 %v427
      %459 = vmatpush1.msra.mxu0 %v426
      %460 = vmatprep.subr.mxu0 0.0
      %461 = vmatpush1.msra.mxu0 0.0
      %462 = vmatprep.subr.mxu0 0.0
      %463 = vmatpush1.msra.mxu0 0.0
      %464 = vmatprep.subr.mxu0 0.0
      %465 = vmatpush1.msra.mxu0 0.0
      %466 = vmatprep.subr.mxu0 0.0
      %467 = vmatpush1.msra.mxu0 0.0
      %468 = vmatprep.subr.mxu0 0.0
      %469 = vmatpush1.msra.mxu0 0.0
      %470 = vmatprep.subr.mxu0 0.0
      %471 = vmatpush1.msra.mxu0 0.0
      %472 = vmatprep.subr.mxu0 0.0
      %473 = vmatpush1.msra.mxu0 0.0
      %474 = vmatprep.subr.mxu0 0.0
      %475 = vmatpush1.msra.mxu0 0.0
      %476 = vmatprep.subr.mxu0 0.0
      %477 = vmatpush1.msra.mxu0 0.0
      %478 = vmatprep.subr.mxu0 0.0
      %479 = vmatpush1.msra.mxu0 0.0
      %480 = vmatprep.subr.mxu0 0.0
      %481 = vmatpush1.msra.mxu0 0.0
      %482 = vmatprep.subr.mxu0 0.0
      %483 = vmatpush1.msra.mxu0 0.0
      %484 = vmatprep.subr.mxu0 0.0
      %485 = vmatpush1.msra.mxu0 0.0
      %486 = vmatprep.subr.mxu0 0.0
      %487 = vmatpush1.msra.mxu0 0.0
      %488 = vmatprep.subr.mxu0 0.0
      %489 = vmatpush1.msra.mxu0 0.0
      %490 = vmatprep.subr.mxu0 0.0
      %491 = vmatpush1.msra.mxu0 0.0
      %492 = vmatprep.mubr.f32.mxu0 0.0
      %493 = vmatmul.mubr.f32.gmra.mrb[0].mxu0 %v394
      %v494 = vpop.f32.mrb[0].mxu0
      %v495 = vadd.f32 0.0, %v494
      %v496 = vpop.f32.mrb[0].mxu0
      %v497 = vadd.f32 0.0, %v496
      %498 = vdwg.mxu0
      %v499 = vadd.f32 %v392, %v495
      %v500 = vadd.f32 %v393, %v497
      %501 = vst [vmem:[%s170] sm:$0xff] %v499
      %502 = vst [vmem:[%s170 + $0x8] sm:$0xff] %v500
      %p503 = scmp.lt.s32.totalorder %s14, 1
      %s504 = scalar_select %p503, %s14, 1
      %s505 = smul.addr %s504, 2
      %s506 = smul.addr %s505, 8
      %s507 = scalar_lea.vmem %s3, %s506
      // Predicated region
      $region33: #{forward.12} parent=31 // pred_check
        %p508 = pneg %p100
      $region34: #{forward.12} parent=31 // pred_check_branch
        %510 = sbr.rel (%p508) target = $region36
      $region35: #{forward.12} parent=31 // pred_region
        _
      $region36: #{forward.12} parent=31 // pred_fallthru
        _
    $region32: #{forward.12} parent=5 // pred_fallthru
      _
    %p511 = scmp.le.s32.totalorder 2, %s9
    // Predicated region
    $region37: #{forward.12} parent=5 // pred_check
      %p512 = pneg %p511
    $region38: #{forward.12} parent=5 // pred_check_branch
      %514 = sbr.rel (%p512) target = $region40
    $region39: #{forward.12} parent=5 // pred_region
      %s515 = ssub.s32 %s9, 2
      // Predicated region
      $region41: #{forward.12} parent=39 // pred_check
        %p516 = pneg %p106
      $region42: #{forward.12} parent=39 // pred_check_branch
        %518 = sbr.rel (%p516) target = $region44
      $region43: #{forward.12} parent=39 // pred_region
        %p519 = scmp.lt.s32.totalorder %s15, 1
        %s520 = scalar_select %p519, %s15, 1
        %s521 = smul.addr %s520, 2
        %s522 = smul.addr %s521, 8
        %s523 = scalar_lea.vmem %s3, %s522
      $region44: #{forward.12} parent=39 // pred_fallthru
        _
    $region40: #{forward.12} parent=5 // pred_fallthru
      _
  $region6: #{forward.12} parent=0 // loop_footer
    %s13 = sadd.s32 1, %s9
  $region7: #{forward.12} parent=0 // loop_footer_branch
    %8 = sbr.rel target = $region3
  $region8: #{forward.12} parent=0 // loop_exit
    _

// kernel: forward.13
$region0: #{forward.13}
  #allocation0 [shape = 'u32[]', space=smem, size = 0x4, offset = 0x4, fixed_abs, tag = 'smem constant byte address 0x4 - core index']
  #allocation1 [shape = 'u32[144,128]{1,0:T(1,128)}', space=vmem, size = 0x12000, scoped, tag = 'internal scratch']
  #allocation2 [shape = 'f32[8,8,512]{2,1,0:T(8,128)}', space=vmem, size = 0x20000, scoped, tag = 'scratch operand']
  #allocation3 [shape = 'f32[8,128]{1,0:T(8,128)}', space=vmem, size = 0x1000, scoped, tag = 'scratch operand']
  #allocation4 [shape = 'f32[8,128]{1,0:T(8,128)}', space=vmem, size = 0x1000, scoped, tag = 'scratch operand']
  %s0 = inlined_call_operand.vmem [shape: f32[16,8,128], index: 0, kind: input, shape index: {}]
  %s1 = inlined_call_operand.vmem [shape: f32[128,512], index: 1, kind: input, shape index: {}]
  %s2 = inlined_call_operand.vmem [shape: f32[128,512], index: 2, kind: input, shape index: {}]
  %s3 = inlined_call_operand.vmem [shape: f32[1,512], index: 3, kind: input, shape index: {}]
  %s4 = inlined_call_operand.vmem [shape: f32[16,8,128], index: 4, kind: output, shape index: {}]
  %s5 = sld [smem:[#allocation0]]
  $region53: #{forward.13} parent=0
    _
  %s7 = ssub.s32 1, %s5
  %s8 = scalar_select 0, %s7, %s5
  loop: start=0, step=1, limit=4
  $region2: #{forward.13} parent=0 // loop_pre_header
    _
  $region3: #{forward.13} parent=0 // loop_header
    %s10 = sphi 0, %s14
    %p11 = scmp.ge.s32.totalorder %s10, 4
    %s20 = sphi 0, %s22
    %s23 = sphi 0, %s20
    %s24 = sphi 0, %s23
    %s40 = sphi 0, %s24
    %s44 = sphi 0, %s44
    %s46 = sphi 0, %s44
    %s47 = sphi 0, %s46
    %s61 = sphi 0, %s47
    %s65 = sphi 0, %s65
    %s67 = sphi 0, %s65
    %s68 = sphi 0, %s67
    %s82 = sphi 0, %s68
    %s86 = sphi 0, %s86
    %s88 = sphi 0, %s86
    %s89 = sphi 0, %s88
    %s103 = sphi 0, %s89
    %s109 = sphi 0, %s111
    %s112 = sphi 0, %s109
    %s113 = sphi 0, %s112
    %s129 = sphi 0, %s113
  $region4: #{forward.13} parent=0 // loop_header_branch
    %13 = sbr.rel (%p11) target = $region8
  $region5: #{forward.13} parent=0 // loop_body
    %s15 = ssub.s32 %s10, 1
    %s16 = ssub.s32 %s10, 2
    %s17 = sadd.s32 %s10, 1
    %s18 = ssub.s32 %s10, %s17
    %p19 = scmp.eq.s32.totalorder %s18, 0
    %s21 = sadd.s32 %s20, 1
    %s22 = scalar_select %p19, %s20, %s21
    %p25 = pneg %p19
    %p26 = scmp.eq.s32.totalorder %s10, 1
    %p27 = por %p25, %p26
    %p28 = scmp.ne.s32.totalorder %s20, %s23
    %p29 = scmp.eq.s32.totalorder %s10, 0
    %p30 = por %p28, %p29
    %p31 = scmp.ne.s32.totalorder %s20, %s23
    %p32 = scmp.eq.s32.totalorder %s15, 1
    %p33 = por %p31, %p32
    %p34 = scmp.ne.s32.totalorder %s23, %s24
    %p35 = scmp.eq.s32.totalorder %s15, 0
    %p36 = por %p34, %p35
    %p37 = scmp.ne.s32.totalorder %s23, %s24
    %p38 = scmp.eq.s32.totalorder %s16, 1
    %p39 = por %p37, %p38
    %p41 = scmp.ne.s32.totalorder %s24, %s40
    %p42 = scmp.eq.s32.totalorder %s16, 0
    %p43 = por %p41, %p42
    %s45 = sadd.s32 %s44, 1
    %p48 = scmp.eq.s32.totalorder %s10, 1
    %p49 = scmp.ne.s32.totalorder %s44, %s46
    %p50 = scmp.eq.s32.totalorder %s10, 0
    %p51 = por %p49, %p50
    %p52 = scmp.ne.s32.totalorder %s44, %s46
    %p53 = scmp.eq.s32.totalorder %s15, 1
    %p54 = por %p52, %p53
    %p55 = scmp.ne.s32.totalorder %s46, %s47
    %p56 = scmp.eq.s32.totalorder %s15, 0
    %p57 = por %p55, %p56
    %p58 = scmp.ne.s32.totalorder %s46, %s47
    %p59 = scmp.eq.s32.totalorder %s16, 1
    %p60 = por %p58, %p59
    %p62 = scmp.ne.s32.totalorder %s47, %s61
    %p63 = scmp.eq.s32.totalorder %s16, 0
    %p64 = por %p62, %p63
    %s66 = sadd.s32 %s65, 1
    %p69 = scmp.eq.s32.totalorder %s10, 1
    %p70 = scmp.ne.s32.totalorder %s65, %s67
    %p71 = scmp.eq.s32.totalorder %s10, 0
    %p72 = por %p70, %p71
    %p73 = scmp.ne.s32.totalorder %s65, %s67
    %p74 = scmp.eq.s32.totalorder %s15, 1
    %p75 = por %p73, %p74
    %p76 = scmp.ne.s32.totalorder %s67, %s68
    %p77 = scmp.eq.s32.totalorder %s15, 0
    %p78 = por %p76, %p77
    %p79 = scmp.ne.s32.totalorder %s67, %s68
    %p80 = scmp.eq.s32.totalorder %s16, 1
    %p81 = por %p79, %p80
    %p83 = scmp.ne.s32.totalorder %s68, %s82
    %p84 = scmp.eq.s32.totalorder %s16, 0
    %p85 = por %p83, %p84
    %s87 = sadd.s32 %s86, 1
    %p90 = scmp.eq.s32.totalorder %s10, 1
    %p91 = scmp.ne.s32.totalorder %s86, %s88
    %p92 = scmp.eq.s32.totalorder %s10, 0
    %p93 = por %p91, %p92
    %p94 = scmp.ne.s32.totalorder %s86, %s88
    %p95 = scmp.eq.s32.totalorder %s15, 1
    %p96 = por %p94, %p95
    %p97 = scmp.ne.s32.totalorder %s88, %s89
    %p98 = scmp.eq.s32.totalorder %s15, 0
    %p99 = por %p97, %p98
    %p100 = scmp.ne.s32.totalorder %s88, %s89
    %p101 = scmp.eq.s32.totalorder %s16, 1
    %p102 = por %p100, %p101
    %p104 = scmp.ne.s32.totalorder %s89, %s103
    %p105 = scmp.eq.s32.totalorder %s16, 0
    %p106 = por %p104, %p105
    %s107 = ssub.s32 %s10, %s17
    %p108 = scmp.eq.s32.totalorder %s107, 0
    %s110 = sadd.s32 %s109, 1
    %s111 = scalar_select %p108, %s109, %s110
    %p114 = pneg %p108
    %p115 = scmp.eq.s32.totalorder %s10, 1
    %p116 = por %p114, %p115
    %p117 = scmp.ne.s32.totalorder %s109, %s112
    %p118 = scmp.eq.s32.totalorder %s10, 0
    %p119 = por %p117, %p118
    %p120 = scmp.ne.s32.totalorder %s109, %s112
    %p121 = scmp.eq.s32.totalorder %s15, 1
    %p122 = por %p120, %p121
    %p123 = scmp.ne.s32.totalorder %s112, %s113
    %p124 = scmp.eq.s32.totalorder %s15, 0
    %p125 = por %p123, %p124
    %p126 = scmp.ne.s32.totalorder %s112, %s113
    %p127 = scmp.eq.s32.totalorder %s16, 1
    %p128 = por %p126, %p127
    %p130 = scmp.ne.s32.totalorder %s113, %s129
    %p131 = scmp.eq.s32.totalorder %s16, 0
    %p132 = por %p130, %p131
    %p133 = scmp.le.s32.totalorder 1, %s10
    %p134 = scmp.lt.s32.totalorder %s10, 3
    %p135 = pnand %p133, %p134
    %p136 = pneg %p135
    // Predicated region
    $region9: #{forward.13} parent=5 // pred_check
      _
    $region10: #{forward.13} parent=5 // pred_check_branch
      %138 = sbr.rel (%p135) target = $region12
    $region11: #{forward.13} parent=5 // pred_region
      %s139 = ssub.s32 %s10, 1
      // Predicated region
      $region13: #{forward.13} parent=11 // pred_check
        %p140 = pneg %p57
      $region14: #{forward.13} parent=11 // pred_check_branch
        %142 = sbr.rel (%p140) target = $region16
      $region15: #{forward.13} parent=11 // pred_region
        _
      $region16: #{forward.13} parent=11 // pred_fallthru
        _
      // Predicated region
      $region17: #{forward.13} parent=11 // pred_check
        %p143 = pneg %p78
      $region18: #{forward.13} parent=11 // pred_check_branch
        %145 = sbr.rel (%p143) target = $region20
      $region19: #{forward.13} parent=11 // pred_region
        _
      $region20: #{forward.13} parent=11 // pred_fallthru
        _
      // Predicated region
      $region21: #{forward.13} parent=11 // pred_check
        %p146 = pneg %p99
      $region22: #{forward.13} parent=11 // pred_check_branch
        %148 = sbr.rel (%p146) target = $region24
      $region23: #{forward.13} parent=11 // pred_region
        _
      $region24: #{forward.13} parent=11 // pred_fallthru
        _
    $region12: #{forward.13} parent=5 // pred_fallthru
      _
    %p149 = scmp.lt.s32.totalorder %s10, 2
    // Predicated region
    $region25: #{forward.13} parent=5 // pred_check
      %p150 = pneg %p149
    $region26: #{forward.13} parent=5 // pred_check_branch
      %152 = sbr.rel (%p150) target = $region28
    $region27: #{forward.13} parent=5 // pred_region
      // Predicated region
      $region29: #{forward.13} parent=27 // pred_check
        %p153 = pneg %p30
      $region30: #{forward.13} parent=27 // pred_check_branch
        %155 = sbr.rel (%p153) target = $region32
      $region31: #{forward.13} parent=27 // pred_region
        %s156 = smul.u32 8, %s10
        %p157 = scmp.lt.s32.totalorder %s156, 15
        %s158 = scalar_select %p157, %s156, 15
        %s159 = smul.addr %s158, 8
        %s160 = scalar_lea.vmem %s0, %s159
        %s161 = smul.u32 8, %s10
      $region32: #{forward.13} parent=27 // pred_fallthru
        _
    $region28: #{forward.13} parent=5 // pred_fallthru
      _
    %p162 = scmp.le.s32.totalorder 1, %s10
    %p163 = scmp.lt.s32.totalorder %s10, 3
    %p164 = pnand %p162, %p163
    %p165 = pneg %p164
    // Predicated region
    $region33: #{forward.13} parent=5 // pred_check
      _
    $region34: #{forward.13} parent=5 // pred_check_branch
      %167 = sbr.rel (%p164) target = $region36
    $region35: #{forward.13} parent=5 // pred_region
      %s168 = ssub.s32 %s10, 1
      %s169 = smul.u32 8, %s15
      %p170 = scmp.lt.s32.totalorder %s169, 15
      %s171 = scalar_select %p170, %s169, 15
      %s172 = smul.addr %s171, 8
      %s173 = scalar_lea.vmem %s0, %s172
      %p174 = pneg %p36
      %p175 = pneg %p33
      %p176 = pneg %p57
      %p177 = pneg %p54
      %p178 = pneg %p78
      %p179 = pneg %p75
      %p180 = pneg %p99
      %p181 = pneg %p96
      %p182 = pneg %p125
      %p183 = pneg %p122
      %s184 = smul.u32 8, %s15
      %p185 = scmp.lt.s32.totalorder %s184, 15
      %s186 = scalar_select %p185, %s184, 15
      %s187 = smul.addr %s186, 8
      %s188 = scalar_lea.vmem %s4, %s187
      %s189 = smul.u32 8, %s15
      %p190 = scmp.lt.s32.totalorder %s189, 15
      %s191 = scalar_select %p190, %s189, 15
      %s192 = smul.addr %s191, 8
      %s193 = scalar_lea.vmem %s0, %s192
      %s194 = smul.u32 8, %s15
      %s195 = smul.u32 8, %s15
      %p196 = scmp.lt.s32.totalorder %s195, 15
      %s197 = scalar_select %p196, %s195, 15
      %s198 = smul.addr %s197, 8
      %s199 = scalar_lea.vmem %s4, %s198
      %s200 = smul.u32 8, %s15
      %p201 = scmp.eq.s32.totalorder %s15, 0
      // Predicated region
      $region37: #{forward.13} parent=35 // pred_check
        %p202 = pneg %p201
      $region38: #{forward.13} parent=35 // pred_check_branch
        %204 = sbr.rel (%p202) target = $region40
      $region39: #{forward.13} parent=35 // pred_region
        %205 = vst [vmem:[#allocation3] sm:$0xff] 0.0
        %206 = vst [vmem:[#allocation4] sm:$0xff] 0.0
      $region40: #{forward.13} parent=35 // pred_fallthru
        _
      %v207 = vld [vmem:[%s193] sm:$0xff]
      %v208 = vld [vmem:[%s193 + $0x8] sm:$0xff]
      %v209 = vld [vmem:[%s193 + $0x10] sm:$0xff]
      %v210 = vld [vmem:[%s193 + $0x18] sm:$0xff]
      %v211 = vld [vmem:[%s193 + $0x20] sm:$0xff]
      %v212 = vld [vmem:[%s193 + $0x28] sm:$0xff]
      %v213 = vld [vmem:[%s193 + $0x30] sm:$0xff]
      %v214 = vld [vmem:[%s193 + $0x38] sm:$0xff]
      %v215 = vld [vmem:[%s1] sm:$0xff]
      %v216 = vld [vmem:[%s1 + $0x8] sm:$0xff]
      %v217 = vld [vmem:[%s1 + $0x10] sm:$0xff]
      %v218 = vld [vmem:[%s1 + $0x18] sm:$0xff]
      %v219 = vld [vmem:[%s1 + $0x20] sm:$0xff]
      %v220 = vld [vmem:[%s1 + $0x28] sm:$0xff]
      %v221 = vld [vmem:[%s1 + $0x30] sm:$0xff]
      %v222 = vld [vmem:[%s1 + $0x38] sm:$0xff]
      %v223 = vld [vmem:[%s1 + $0x40] sm:$0xff]
      %v224 = vld [vmem:[%s1 + $0x48] sm:$0xff]
      %v225 = vld [vmem:[%s1 + $0x50] sm:$0xff]
      %v226 = vld [vmem:[%s1 + $0x58] sm:$0xff]
      %v227 = vld [vmem:[%s1 + $0x60] sm:$0xff]
      %v228 = vld [vmem:[%s1 + $0x68] sm:$0xff]
      %v229 = vld [vmem:[%s1 + $0x70] sm:$0xff]
      %v230 = vld [vmem:[%s1 + $0x78] sm:$0xff]
      %v231 = vld [vmem:[%s1 + $0x80] sm:$0xff]
      %v232 = vld [vmem:[%s1 + $0x88] sm:$0xff]
      %v233 = vld [vmem:[%s1 + $0x90] sm:$0xff]
      %v234 = vld [vmem:[%s1 + $0x98] sm:$0xff]
      %v235 = vld [vmem:[%s1 + $0xa0] sm:$0xff]
      %v236 = vld [vmem:[%s1 + $0xa8] sm:$0xff]
      %v237 = vld [vmem:[%s1 + $0xb0] sm:$0xff]
      %v238 = vld [vmem:[%s1 + $0xb8] sm:$0xff]
      %v239 = vld [vmem:[%s1 + $0xc0] sm:$0xff]
      %v240 = vld [vmem:[%s1 + $0xc8] sm:$0xff]
      %v241 = vld [vmem:[%s1 + $0xd0] sm:$0xff]
      %v242 = vld [vmem:[%s1 + $0xd8] sm:$0xff]
      %v243 = vld [vmem:[%s1 + $0xe0] sm:$0xff]
      %v244 = vld [vmem:[%s1 + $0xe8] sm:$0xff]
      %v245 = vld [vmem:[%s1 + $0xf0] sm:$0xff]
      %v246 = vld [vmem:[%s1 + $0xf8] sm:$0xff]
      %v247 = vld [vmem:[%s1 + $0x100] sm:$0xff]
      %v248 = vld [vmem:[%s1 + $0x108] sm:$0xff]
      %v249 = vld [vmem:[%s1 + $0x110] sm:$0xff]
      %v250 = vld [vmem:[%s1 + $0x118] sm:$0xff]
      %v251 = vld [vmem:[%s1 + $0x120] sm:$0xff]
      %v252 = vld [vmem:[%s1 + $0x128] sm:$0xff]
      %v253 = vld [vmem:[%s1 + $0x130] sm:$0xff]
      %v254 = vld [vmem:[%s1 + $0x138] sm:$0xff]
      %v255 = vld [vmem:[%s1 + $0x140] sm:$0xff]
      %v256 = vld [vmem:[%s1 + $0x148] sm:$0xff]
      %v257 = vld [vmem:[%s1 + $0x150] sm:$0xff]
      %v258 = vld [vmem:[%s1 + $0x158] sm:$0xff]
      %v259 = vld [vmem:[%s1 + $0x160] sm:$0xff]
      %v260 = vld [vmem:[%s1 + $0x168] sm:$0xff]
      %v261 = vld [vmem:[%s1 + $0x170] sm:$0xff]
      %v262 = vld [vmem:[%s1 + $0x178] sm:$0xff]
      %v263 = vld [vmem:[%s1 + $0x180] sm:$0xff]
      %v264 = vld [vmem:[%s1 + $0x188] sm:$0xff]
      %v265 = vld [vmem:[%s1 + $0x190] sm:$0xff]
      %v266 = vld [vmem:[%s1 + $0x198] sm:$0xff]
      %v267 = vld [vmem:[%s1 + $0x1a0] sm:$0xff]
      %v268 = vld [vmem:[%s1 + $0x1a8] sm:$0xff]
      %v269 = vld [vmem:[%s1 + $0x1b0] sm:$0xff]
      %v270 = vld [vmem:[%s1 + $0x1b8] sm:$0xff]
      %v271 = vld [vmem:[%s1 + $0x1c0] sm:$0xff]
      %v272 = vld [vmem:[%s1 + $0x1c8] sm:$0xff]
      %v273 = vld [vmem:[%s1 + $0x1d0] sm:$0xff]
      %v274 = vld [vmem:[%s1 + $0x1d8] sm:$0xff]
      %v275 = vld [vmem:[%s1 + $0x1e0] sm:$0xff]
      %v276 = vld [vmem:[%s1 + $0x1e8] sm:$0xff]
      %v277 = vld [vmem:[%s1 + $0x1f0] sm:$0xff]
      %v278 = vld [vmem:[%s1 + $0x1f8] sm:$0xff]
      %v279 = vld [vmem:[%s3] sm:$0xf]
      %v281 = vlaneseq
      %v282 = vshrl.u32 %v281, 7
      %v283 = vsub.s32 0, %v282
      %v284 = vrot.slane %v279, %v283
      %v285 = vlaneseq
      %v286 = vshrl.u32 %v285, 7
      %v287 = vsub.s32 1, %v286
      %v288 = vrot.slane %v279, %v287
      %v289 = vlaneseq
      %v290 = vshrl.u32 %v289, 7
      %v291 = vsub.s32 2, %v290
      %v292 = vrot.slane %v279, %v291
      %v293 = vlaneseq
      %v294 = vshrl.u32 %v293, 7
      %v295 = vsub.s32 3, %v294
      %v296 = vrot.slane %v279, %v295
      %301 = vmatprep.subr.mxu0 %v216
      %302 = vmatpush1.msra.mxu0 %v215
      %303 = vmatprep.subr.mxu0 %v220
      %304 = vmatpush1.msra.mxu0 %v219
      %305 = vmatprep.subr.mxu0 %v224
      %306 = vmatpush1.msra.mxu0 %v223
      %307 = vmatprep.subr.mxu0 %v228
      %308 = vmatpush1.msra.mxu0 %v227
      %309 = vmatprep.subr.mxu0 %v232
      %310 = vmatpush1.msra.mxu0 %v231
      %311 = vmatprep.subr.mxu0 %v236
      %312 = vmatpush1.msra.mxu0 %v235
      %313 = vmatprep.subr.mxu0 %v240
      %314 = vmatpush1.msra.mxu0 %v239
      %315 = vmatprep.subr.mxu0 %v244
      %316 = vmatpush1.msra.mxu0 %v243
      %317 = vmatprep.subr.mxu0 %v248
      %318 = vmatpush1.msra.mxu0 %v247
      %319 = vmatprep.subr.mxu0 %v252
      %320 = vmatpush1.msra.mxu0 %v251
      %321 = vmatprep.subr.mxu0 %v256
      %322 = vmatpush1.msra.mxu0 %v255
      %323 = vmatprep.subr.mxu0 %v260
      %324 = vmatpush1.msra.mxu0 %v259
      %325 = vmatprep.subr.mxu0 %v264
      %326 = vmatpush1.msra.mxu0 %v263
      %327 = vmatprep.subr.mxu0 %v268
      %328 = vmatpush1.msra.mxu0 %v267
      %329 = vmatprep.subr.mxu0 %v272
      %330 = vmatpush1.msra.mxu0 %v271
      %331 = vmatprep.subr.mxu0 %v276
      %332 = vmatpush1.msra.mxu0 %v275
      %333 = vmatprep.subr.mxu0 0.0
      %334 = vmatpush1.msra.mxu0 0.0
      %335 = vmatprep.subr.mxu0 0.0
      %336 = vmatpush1.msra.mxu0 0.0
      %337 = vmatprep.subr.mxu0 0.0
      %338 = vmatpush1.msra.mxu0 0.0
      %339 = vmatprep.subr.mxu0 0.0
      %340 = vmatpush1.msra.mxu0 0.0
      %341 = vmatprep.subr.mxu0 0.0
      %342 = vmatpush1.msra.mxu0 0.0
      %343 = vmatprep.subr.mxu0 0.0
      %344 = vmatpush1.msra.mxu0 0.0
      %345 = vmatprep.subr.mxu0 0.0
      %346 = vmatpush1.msra.mxu0 0.0
      %347 = vmatprep.subr.mxu0 0.0
      %348 = vmatpush1.msra.mxu0 0.0
      %349 = vmatprep.subr.mxu0 0.0
      %350 = vmatpush1.msra.mxu0 0.0
      %351 = vmatprep.subr.mxu0 0.0
      %352 = vmatpush1.msra.mxu0 0.0
      %353 = vmatprep.subr.mxu0 0.0
      %354 = vmatpush1.msra.mxu0 0.0
      %355 = vmatprep.subr.mxu0 0.0
      %356 = vmatpush1.msra.mxu0 0.0
      %357 = vmatprep.subr.mxu0 0.0
      %358 = vmatpush1.msra.mxu0 0.0
      %359 = vmatprep.subr.mxu0 0.0
      %360 = vmatpush1.msra.mxu0 0.0
      %361 = vmatprep.subr.mxu0 0.0
      %362 = vmatpush1.msra.mxu0 0.0
      %363 = vmatprep.subr.mxu0 0.0
      %364 = vmatpush1.msra.mxu0 0.0
      %365 = vmatprep.mubr.f32.mxu0 0.0
      %366 = vmatmul.mubr.f32.gmra.mrb[0].mxu0 %v207
      %v367 = vpop.f32.mrb[0].mxu0
      %v368 = vadd.f32 %v284, %v367
      %v369 = vpop.f32.mrb[0].mxu0
      %v370 = vadd.f32 %v288, %v369
      %371 = vmatprep.mubr.f32.mxu0 0.0
      %372 = vmatmul.mubr.f32.gmra.mrb[0].mxu0 %v208
      %v373 = vpop.f32.mrb[0].mxu0
      %v374 = vadd.f32 %v284, %v373
      %v375 = vpop.f32.mrb[0].mxu0
      %v376 = vadd.f32 %v288, %v375
      %377 = vmatprep.mubr.f32.mxu0 0.0
      %378 = vmatmul.mubr.f32.gmra.mrb[0].mxu0 %v209
      %v379 = vpop.f32.mrb[0].mxu0
      %v380 = vadd.f32 %v284, %v379
      %v381 = vpop.f32.mrb[0].mxu0
      %v382 = vadd.f32 %v288, %v381
      %383 = vmatprep.mubr.f32.mxu0 0.0
      %384 = vmatmul.mubr.f32.gmra.mrb[0].mxu0 %v210
      %v385 = vpop.f32.mrb[0].mxu0
      %v386 = vadd.f32 %v284, %v385
      %v387 = vpop.f32.mrb[0].mxu0
      %v388 = vadd.f32 %v288, %v387
      %389 = vmatprep.mubr.f32.mxu0 0.0
      %390 = vmatmul.mubr.f32.gmra.mrb[0].mxu0 %v211
      %v391 = vpop.f32.mrb[0].mxu0
      %v392 = vadd.f32 %v284, %v391
      %v393 = vpop.f32.mrb[0].mxu0
      %v394 = vadd.f32 %v288, %v393
      %395 = vmatprep.mubr.f32.mxu0 0.0
      %396 = vmatmul.mubr.f32.gmra.mrb[0].mxu0 %v212
      %v397 = vpop.f32.mrb[0].mxu0
      %v398 = vadd.f32 %v284, %v397
      %v399 = vpop.f32.mrb[0].mxu0
      %v400 = vadd.f32 %v288, %v399
      %401 = vmatprep.mubr.f32.mxu0 0.0
      %402 = vmatmul.mubr.f32.gmra.mrb[0].mxu0 %v213
      %v403 = vpop.f32.mrb[0].mxu0
      %v404 = vadd.f32 %v284, %v403
      %v405 = vpop.f32.mrb[0].mxu0
      %v406 = vadd.f32 %v288, %v405
      %407 = vmatprep.mubr.f32.mxu0 0.0
      %408 = vmatmul.mubr.f32.gmra.mrb[0].mxu0 %v214
      %v409 = vpop.f32.mrb[0].mxu0
      %v410 = vadd.f32 %v284, %v409
      %v411 = vpop.f32.mrb[0].mxu0
      %v412 = vadd.f32 %v288, %v411
      %413 = vdwg.mxu0
      %414 = vmatprep.subr.mxu0 %v218
      %415 = vmatpush1.msra.mxu0 %v217
      %416 = vmatprep.subr.mxu0 %v222
      %417 = vmatpush1.msra.mxu0 %v221
      %418 = vmatprep.subr.mxu0 %v226
      %419 = vmatpush1.msra.mxu0 %v225
      %420 = vmatprep.subr.mxu0 %v230
      %421 = vmatpush1.msra.mxu0 %v229
      %422 = vmatprep.subr.mxu0 %v234
      %423 = vmatpush1.msra.mxu0 %v233
      %424 = vmatprep.subr.mxu0 %v238
      %425 = vmatpush1.msra.mxu0 %v237
      %426 = vmatprep.subr.mxu0 %v242
      %427 = vmatpush1.msra.mxu0 %v241
      %428 = vmatprep.subr.mxu0 %v246
      %429 = vmatpush1.msra.mxu0 %v245
      %430 = vmatprep.subr.mxu0 %v250
      %431 = vmatpush1.msra.mxu0 %v249
      %432 = vmatprep.subr.mxu0 %v254
      %433 = vmatpush1.msra.mxu0 %v253
      %434 = vmatprep.subr.mxu0 %v258
      %435 = vmatpush1.msra.mxu0 %v257
      %436 = vmatprep.subr.mxu0 %v262
      %437 = vmatpush1.msra.mxu0 %v261
      %438 = vmatprep.subr.mxu0 %v266
      %439 = vmatpush1.msra.mxu0 %v265
      %440 = vmatprep.subr.mxu0 %v270
      %441 = vmatpush1.msra.mxu0 %v269
      %442 = vmatprep.subr.mxu0 %v274
      %443 = vmatpush1.msra.mxu0 %v273
      %444 = vmatprep.subr.mxu0 %v278
      %445 = vmatpush1.msra.mxu0 %v277
      %446 = vmatprep.subr.mxu0 0.0
      %447 = vmatpush1.msra.mxu0 0.0
      %448 = vmatprep.subr.mxu0 0.0
      %449 = vmatpush1.msra.mxu0 0.0
      %450 = vmatprep.subr.mxu0 0.0
      %451 = vmatpush1.msra.mxu0 0.0
      %452 = vmatprep.subr.mxu0 0.0
      %453 = vmatpush1.msra.mxu0 0.0
      %454 = vmatprep.subr.mxu0 0.0
      %455 = vmatpush1.msra.mxu0 0.0
      %456 = vmatprep.subr.mxu0 0.0
      %457 = vmatpush1.msra.mxu0 0.0
      %458 = vmatprep.subr.mxu0 0.0
      %459 = vmatpush1.msra.mxu0 0.0
      %460 = vmatprep.subr.mxu0 0.0
      %461 = vmatpush1.msra.mxu0 0.0
      %462 = vmatprep.subr.mxu0 0.0
      %463 = vmatpush1.msra.mxu0 0.0
      %464 = vmatprep.subr.mxu0 0.0
      %465 = vmatpush1.msra.mxu0 0.0
      %466 = vmatprep.subr.mxu0 0.0
      %467 = vmatpush1.msra.mxu0 0.0
      %468 = vmatprep.subr.mxu0 0.0
      %469 = vmatpush1.msra.mxu0 0.0
      %470 = vmatprep.subr.mxu0 0.0
      %471 = vmatpush1.msra.mxu0 0.0
      %472 = vmatprep.subr.mxu0 0.0
      %473 = vmatpush1.msra.mxu0 0.0
      %474 = vmatprep.subr.mxu0 0.0
      %475 = vmatpush1.msra.mxu0 0.0
      %476 = vmatprep.subr.mxu0 0.0
      %477 = vmatpush1.msra.mxu0 0.0
      %478 = vmatprep.mubr.f32.mxu0 0.0
      %479 = vmatmul.mubr.f32.gmra.mrb[0].mxu0 %v207
      %v480 = vpop.f32.mrb[0].mxu0
      %v481 = vadd.f32 %v292, %v480
      %v482 = vpop.f32.mrb[0].mxu0
      %v483 = vadd.f32 %v296, %v482
      %484 = vmatprep.mubr.f32.mxu0 0.0
      %485 = vmatmul.mubr.f32.gmra.mrb[0].mxu0 %v208
      %v486 = vpop.f32.mrb[0].mxu0
      %v487 = vadd.f32 %v292, %v486
      %v488 = vpop.f32.mrb[0].mxu0
      %v489 = vadd.f32 %v296, %v488
      %490 = vmatprep.mubr.f32.mxu0 0.0
      %491 = vmatmul.mubr.f32.gmra.mrb[0].mxu0 %v209
      %v492 = vpop.f32.mrb[0].mxu0
      %v493 = vadd.f32 %v292, %v492
      %v494 = vpop.f32.mrb[0].mxu0
      %v495 = vadd.f32 %v296, %v494
      %496 = vmatprep.mubr.f32.mxu0 0.0
      %497 = vmatmul.mubr.f32.gmra.mrb[0].mxu0 %v210
      %v498 = vpop.f32.mrb[0].mxu0
      %v499 = vadd.f32 %v292, %v498
      %v500 = vpop.f32.mrb[0].mxu0
      %v501 = vadd.f32 %v296, %v500
      %502 = vmatprep.mubr.f32.mxu0 0.0
      %503 = vmatmul.mubr.f32.gmra.mrb[0].mxu0 %v211
      %v504 = vpop.f32.mrb[0].mxu0
      %v505 = vadd.f32 %v292, %v504
      %v506 = vpop.f32.mrb[0].mxu0
      %v507 = vadd.f32 %v296, %v506
      %508 = vmatprep.mubr.f32.mxu0 0.0
      %509 = vmatmul.mubr.f32.gmra.mrb[0].mxu0 %v212
      %v510 = vpop.f32.mrb[0].mxu0
      %v511 = vadd.f32 %v292, %v510
      %v512 = vpop.f32.mrb[0].mxu0
      %v513 = vadd.f32 %v296, %v512
      %514 = vmatprep.mubr.f32.mxu0 0.0
      %515 = vmatmul.mubr.f32.gmra.mrb[0].mxu0 %v213
      %v516 = vpop.f32.mrb[0].mxu0
      %v517 = vadd.f32 %v292, %v516
      %v518 = vpop.f32.mrb[0].mxu0
      %v519 = vadd.f32 %v296, %v518
      %520 = vmatprep.mubr.f32.mxu0 0.0
      %521 = vmatmul.mubr.f32.gmra.mrb[0].mxu0 %v214
      %v522 = vpop.f32.mrb[0].mxu0
      %v523 = vadd.f32 %v292, %v522
      %v524 = vpop.f32.mrb[0].mxu0
      %v525 = vadd.f32 %v296, %v524
      %526 = vdwg.mxu0
      %527 = vst [vmem:[#allocation2] sm:$0xff] %v368
      %528 = vst [vmem:[#allocation2 + $0x8] sm:$0xff] %v370
      %529 = vst [vmem:[#allocation2 + $0x10] sm:$0xff] %v481
      %530 = vst [vmem:[#allocation2 + $0x18] sm:$0xff] %v483
      %531 = vst [vmem:[#allocation2 + $0x20] sm:$0xff] %v374
      %532 = vst [vmem:[#allocation2 + $0x28] sm:$0xff] %v376
      %533 = vst [vmem:[#allocation2 + $0x30] sm:$0xff] %v487
      %534 = vst [vmem:[#allocation2 + $0x38] sm:$0xff] %v489
      %535 = vst [vmem:[#allocation2 + $0x40] sm:$0xff] %v380
      %536 = vst [vmem:[#allocation2 + $0x48] sm:$0xff] %v382
      %537 = vst [vmem:[#allocation2 + $0x50] sm:$0xff] %v493
      %538 = vst [vmem:[#allocation2 + $0x58] sm:$0xff] %v495
      %539 = vst [vmem:[#allocation2 + $0x60] sm:$0xff] %v386
      %540 = vst [vmem:[#allocation2 + $0x68] sm:$0xff] %v388
      %541 = vst [vmem:[#allocation2 + $0x70] sm:$0xff] %v499
      %542 = vst [vmem:[#allocation2 + $0x78] sm:$0xff] %v501
      %543 = vst [vmem:[#allocation2 + $0x80] sm:$0xff] %v392
      %544 = vst [vmem:[#allocation2 + $0x88] sm:$0xff] %v394
      %545 = vst [vmem:[#allocation2 + $0x90] sm:$0xff] %v505
      %546 = vst [vmem:[#allocation2 + $0x98] sm:$0xff] %v507
      %547 = vst [vmem:[#allocation2 + $0xa0] sm:$0xff] %v398
      %548 = vst [vmem:[#allocation2 + $0xa8] sm:$0xff] %v400
      %549 = vst [vmem:[#allocation2 + $0xb0] sm:$0xff] %v511
      %550 = vst [vmem:[#allocation2 + $0xb8] sm:$0xff] %v513
      %551 = vst [vmem:[#allocation2 + $0xc0] sm:$0xff] %v404
      %552 = vst [vmem:[#allocation2 + $0xc8] sm:$0xff] %v406
      %553 = vst [vmem:[#allocation2 + $0xd0] sm:$0xff] %v517
      %554 = vst [vmem:[#allocation2 + $0xd8] sm:$0xff] %v519
      %555 = vst [vmem:[#allocation2 + $0xe0] sm:$0xff] %v410
      %556 = vst [vmem:[#allocation2 + $0xe8] sm:$0xff] %v412
      %557 = vst [vmem:[#allocation2 + $0xf0] sm:$0xff] %v523
      %558 = vst [vmem:[#allocation2 + $0xf8] sm:$0xff] %v525
      %v559 = vld [vmem:[#allocation3] sm:$0xff]
      %v560 = vld [vmem:[#allocation4] sm:$0xff]
      %v561 = vld [vmem:[#allocation2] sm:$0xff]
      %v562 = vld [vmem:[#allocation2 + $0x8] sm:$0xff]
      %v563 = vld [vmem:[#allocation2 + $0x10] sm:$0xff]
      %v564 = vld [vmem:[#allocation2 + $0x18] sm:$0xff]
      %v565 = vld [vmem:[%s2] sm:$0xff]
      %v566 = vld [vmem:[%s2 + $0x8] sm:$0xff]
      %v567 = vld [vmem:[%s2 + $0x10] sm:$0xff]
      %v568 = vld [vmem:[%s2 + $0x18] sm:$0xff]
      %v569 = vld [vmem:[%s2 + $0x20] sm:$0xff]
      %v570 = vld [vmem:[%s2 + $0x28] sm:$0xff]
      %v571 = vld [vmem:[%s2 + $0x30] sm:$0xff]
      %v572 = vld [vmem:[%s2 + $0x38] sm:$0xff]
      %v573 = vld [vmem:[%s2 + $0x40] sm:$0xff]
      %v574 = vld [vmem:[%s2 + $0x48] sm:$0xff]
      %v575 = vld [vmem:[%s2 + $0x50] sm:$0xff]
      %v576 = vld [vmem:[%s2 + $0x58] sm:$0xff]
      %v577 = vld [vmem:[%s2 + $0x60] sm:$0xff]
      %v578 = vld [vmem:[%s2 + $0x68] sm:$0xff]
      %v579 = vld [vmem:[%s2 + $0x70] sm:$0xff]
      %v580 = vld [vmem:[%s2 + $0x78] sm:$0xff]
      %v581 = vld [vmem:[%s2 + $0x80] sm:$0xff]
      %v582 = vld [vmem:[%s2 + $0x88] sm:$0xff]
      %v583 = vld [vmem:[%s2 + $0x90] sm:$0xff]
      %v584 = vld [vmem:[%s2 + $0x98] sm:$0xff]
      %v585 = vld [vmem:[%s2 + $0xa0] sm:$0xff]
      %v586 = vld [vmem:[%s2 + $0xa8] sm:$0xff]
      %v587 = vld [vmem:[%s2 + $0xb0] sm:$0xff]
      %v588 = vld [vmem:[%s2 + $0xb8] sm:$0xff]
      %v589 = vld [vmem:[%s2 + $0xc0] sm:$0xff]
      %v590 = vld [vmem:[%s2 + $0xc8] sm:$0xff]
      %v591 = vld [vmem:[%s2 + $0xd0] sm:$0xff]
      %v592 = vld [vmem:[%s2 + $0xd8] sm:$0xff]
      %v593 = vld [vmem:[%s2 + $0xe0] sm:$0xff]
      %v594 = vld [vmem:[%s2 + $0xe8] sm:$0xff]
      %v595 = vld [vmem:[%s2 + $0xf0] sm:$0xff]
      %v596 = vld [vmem:[%s2 + $0xf8] sm:$0xff]
      %v597 = vld [vmem:[%s2 + $0x100] sm:$0xff]
      %v598 = vld [vmem:[%s2 + $0x108] sm:$0xff]
      %v599 = vld [vmem:[%s2 + $0x110] sm:$0xff]
      %v600 = vld [vmem:[%s2 + $0x118] sm:$0xff]
      %v601 = vld [vmem:[%s2 + $0x120] sm:$0xff]
      %v602 = vld [vmem:[%s2 + $0x128] sm:$0xff]
      %v603 = vld [vmem:[%s2 + $0x130] sm:$0xff]
      %v604 = vld [vmem:[%s2 + $0x138] sm:$0xff]
      %v605 = vld [vmem:[%s2 + $0x140] sm:$0xff]
      %v606 = vld [vmem:[%s2 + $0x148] sm:$0xff]
      %v607 = vld [vmem:[%s2 + $0x150] sm:$0xff]
      %v608 = vld [vmem:[%s2 + $0x158] sm:$0xff]
      %v609 = vld [vmem:[%s2 + $0x160] sm:$0xff]
      %v610 = vld [vmem:[%s2 + $0x168] sm:$0xff]
      %v611 = vld [vmem:[%s2 + $0x170] sm:$0xff]
      %v612 = vld [vmem:[%s2 + $0x178] sm:$0xff]
      %v613 = vld [vmem:[%s2 + $0x180] sm:$0xff]
      %v614 = vld [vmem:[%s2 + $0x188] sm:$0xff]
      %v615 = vld [vmem:[%s2 + $0x190] sm:$0xff]
      %v616 = vld [vmem:[%s2 + $0x198] sm:$0xff]
      %v617 = vld [vmem:[%s2 + $0x1a0] sm:$0xff]
      %v618 = vld [vmem:[%s2 + $0x1a8] sm:$0xff]
      %v619 = vld [vmem:[%s2 + $0x1b0] sm:$0xff]
      %v620 = vld [vmem:[%s2 + $0x1b8] sm:$0xff]
      %v621 = vld [vmem:[%s2 + $0x1c0] sm:$0xff]
      %v622 = vld [vmem:[%s2 + $0x1c8] sm:$0xff]
      %v623 = vld [vmem:[%s2 + $0x1d0] sm:$0xff]
      %v624 = vld [vmem:[%s2 + $0x1d8] sm:$0xff]
      %v625 = vld [vmem:[%s2 + $0x1e0] sm:$0xff]
      %v626 = vld [vmem:[%s2 + $0x1e8] sm:$0xff]
      %v627 = vld [vmem:[%s2 + $0x1f0] sm:$0xff]
      %v628 = vld [vmem:[%s2 + $0x1f8] sm:$0xff]
      %629 = vmatprep.subr.mxu0 %v566
      %630 = vmatpush1.msra.mxu0 %v565
      %631 = vmatprep.subr.mxu0 %v570
      %632 = vmatpush1.msra.mxu0 %v569
      %633 = vmatprep.subr.mxu0 %v574
      %634 = vmatpush1.msra.mxu0 %v573
      %635 = vmatprep.subr.mxu0 %v578
      %636 = vmatpush1.msra.mxu0 %v577
      %637 = vmatprep.subr.mxu0 %v582
      %638 = vmatpush1.msra.mxu0 %v581
      %639 = vmatprep.subr.mxu0 %v586
      %640 = vmatpush1.msra.mxu0 %v585
      %641 = vmatprep.subr.mxu0 %v590
      %642 = vmatpush1.msra.mxu0 %v589
      %643 = vmatprep.subr.mxu0 %v594
      %644 = vmatpush1.msra.mxu0 %v593
      %645 = vmatprep.subr.mxu0 %v598
      %646 = vmatpush1.msra.mxu0 %v597
      %647 = vmatprep.subr.mxu0 %v602
      %648 = vmatpush1.msra.mxu0 %v601
      %649 = vmatprep.subr.mxu0 %v606
      %650 = vmatpush1.msra.mxu0 %v605
      %651 = vmatprep.subr.mxu0 %v610
      %652 = vmatpush1.msra.mxu0 %v609
      %653 = vmatprep.subr.mxu0 %v614
      %654 = vmatpush1.msra.mxu0 %v613
      %655 = vmatprep.subr.mxu0 %v618
      %656 = vmatpush1.msra.mxu0 %v617
      %657 = vmatprep.subr.mxu0 %v622
      %658 = vmatpush1.msra.mxu0 %v621
      %659 = vmatprep.subr.mxu0 %v626
      %660 = vmatpush1.msra.mxu0 %v625
      %661 = vmatprep.subr.mxu0 0.0
      %662 = vmatpush1.msra.mxu0 0.0
      %663 = vmatprep.subr.mxu0 0.0
      %664 = vmatpush1.msra.mxu0 0.0
      %665 = vmatprep.subr.mxu0 0.0
      %666 = vmatpush1.msra.mxu0 0.0
      %667 = vmatprep.subr.mxu0 0.0
      %668 = vmatpush1.msra.mxu0 0.0
      %669 = vmatprep.subr.mxu0 0.0
      %670 = vmatpush1.msra.mxu0 0.0
      %671 = vmatprep.subr.mxu0 0.0
      %672 = vmatpush1.msra.mxu0 0.0
      %673 = vmatprep.subr.mxu0 0.0
      %674 = vmatpush1.msra.mxu0 0.0
      %675 = vmatprep.subr.mxu0 0.0
      %676 = vmatpush1.msra.mxu0 0.0
      %677 = vmatprep.subr.mxu0 0.0
      %678 = vmatpush1.msra.mxu0 0.0
      %679 = vmatprep.subr.mxu0 0.0
      %680 = vmatpush1.msra.mxu0 0.0
      %681 = vmatprep.subr.mxu0 0.0
      %682 = vmatpush1.msra.mxu0 0.0
      %683 = vmatprep.subr.mxu0 0.0
      %684 = vmatpush1.msra.mxu0 0.0
      %685 = vmatprep.subr.mxu0 0.0
      %686 = vmatpush1.msra.mxu0 0.0
      %687 = vmatprep.subr.mxu0 0.0
      %688 = vmatpush1.msra.mxu0 0.0
      %689 = vmatprep.subr.mxu0 0.0
      %690 = vmatpush1.msra.mxu0 0.0
      %691 = vmatprep.subr.mxu0 0.0
      %692 = vmatpush1.msra.mxu0 0.0
      %693 = vmatprep.mubr.f32.mxu0 0.0
      %694 = vmatmul.mubr.f32.gmra.mrb[0].mxu0 %v559
      %v695 = vpop.f32.mrb[0].mxu0
      %v696 = vadd.f32 0.0, %v695
      %v697 = vpop.f32.mrb[0].mxu0
      %v698 = vadd.f32 0.0, %v697
      %699 = vdwg.mxu0
      %700 = vmatprep.subr.mxu0 %v568
      %701 = vmatpush1.msra.mxu0 %v567
      %702 = vmatprep.subr.mxu0 %v572
      %703 = vmatpush1.msra.mxu0 %v571
      %704 = vmatprep.subr.mxu0 %v576
      %705 = vmatpush1.msra.mxu0 %v575
      %706 = vmatprep.subr.mxu0 %v580
      %707 = vmatpush1.msra.mxu0 %v579
      %708 = vmatprep.subr.mxu0 %v584
      %709 = vmatpush1.msra.mxu0 %v583
      %710 = vmatprep.subr.mxu0 %v588
      %711 = vmatpush1.msra.mxu0 %v587
      %712 = vmatprep.subr.mxu0 %v592
      %713 = vmatpush1.msra.mxu0 %v591
      %714 = vmatprep.subr.mxu0 %v596
      %715 = vmatpush1.msra.mxu0 %v595
      %716 = vmatprep.subr.mxu0 %v600
      %717 = vmatpush1.msra.mxu0 %v599
      %718 = vmatprep.subr.mxu0 %v604
      %719 = vmatpush1.msra.mxu0 %v603
      %720 = vmatprep.subr.mxu0 %v608
      %721 = vmatpush1.msra.mxu0 %v607
      %722 = vmatprep.subr.mxu0 %v612
      %723 = vmatpush1.msra.mxu0 %v611
      %724 = vmatprep.subr.mxu0 %v616
      %725 = vmatpush1.msra.mxu0 %v615
      %726 = vmatprep.subr.mxu0 %v620
      %727 = vmatpush1.msra.mxu0 %v619
      %728 = vmatprep.subr.mxu0 %v624
      %729 = vmatpush1.msra.mxu0 %v623
      %730 = vmatprep.subr.mxu0 %v628
      %731 = vmatpush1.msra.mxu0 %v627
      %732 = vmatprep.subr.mxu0 0.0
      %733 = vmatpush1.msra.mxu0 0.0
      %734 = vmatprep.subr.mxu0 0.0
      %735 = vmatpush1.msra.mxu0 0.0
      %736 = vmatprep.subr.mxu0 0.0
      %737 = vmatpush1.msra.mxu0 0.0
      %738 = vmatprep.subr.mxu0 0.0
      %739 = vmatpush1.msra.mxu0 0.0
      %740 = vmatprep.subr.mxu0 0.0
      %741 = vmatpush1.msra.mxu0 0.0
      %742 = vmatprep.subr.mxu0 0.0
      %743 = vmatpush1.msra.mxu0 0.0
      %744 = vmatprep.subr.mxu0 0.0
      %745 = vmatpush1.msra.mxu0 0.0
      %746 = vmatprep.subr.mxu0 0.0
      %747 = vmatpush1.msra.mxu0 0.0
      %748 = vmatprep.subr.mxu0 0.0
      %749 = vmatpush1.msra.mxu0 0.0
      %750 = vmatprep.subr.mxu0 0.0
      %751 = vmatpush1.msra.mxu0 0.0
      %752 = vmatprep.subr.mxu0 0.0
      %753 = vmatpush1.msra.mxu0 0.0
      %754 = vmatprep.subr.mxu0 0.0
      %755 = vmatpush1.msra.mxu0 0.0
      %756 = vmatprep.subr.mxu0 0.0
      %757 = vmatpush1.msra.mxu0 0.0
      %758 = vmatprep.subr.mxu0 0.0
      %759 = vmatpush1.msra.mxu0 0.0
      %760 = vmatprep.subr.mxu0 0.0
      %761 = vmatpush1.msra.mxu0 0.0
      %762 = vmatprep.subr.mxu0 0.0
      %763 = vmatpush1.msra.mxu0 0.0
      %764 = vmatprep.mubr.f32.mxu0 0.0
      %765 = vmatmul.mubr.f32.gmra.mrb[0].mxu0 %v559
      %v766 = vpop.f32.mrb[0].mxu0
      %v767 = vadd.f32 0.0, %v766
      %v768 = vpop.f32.mrb[0].mxu0
      %v769 = vadd.f32 0.0, %v768
      %770 = vdwg.mxu0
      %v771 = vadd.f32 %v561, %v696
      %v772 = vadd.f32 %v562, %v698
      %v773 = vadd.f32 %v563, %v767
      %v774 = vadd.f32 %v564, %v769
      %v775 = vxor.u32 %v771, 2147483648
      %v776 = vmul.f32 %v775, 1.442695
      %v777 = vpow.pop %v776
      %v778 = vadd.f32 %v777, 1.0
      %v779 = vrcp.pop %v778
      %v780 = vmul.f32 1.0, %v779
      %v781 = vxor.u32 %v772, 2147483648
      %v782 = vmul.f32 %v781, 1.442695
      %v783 = vpow.pop %v782
      %v784 = vadd.f32 %v783, 1.0
      %v785 = vrcp.pop %v784
      %v786 = vmul.f32 1.0, %v785
      %v787 = vtanh.pop %v773
      %v788 = vxor.u32 %v774, 2147483648
      %v789 = vmul.f32 %v788, 1.442695
      %v790 = vpow.pop %v789
      %v791 = vadd.f32 %v790, 1.0
      %v792 = vrcp.pop %v791
      %v793 = vmul.f32 1.0, %v792
      %v794 = vmul.f32 %v786, %v560
      %v795 = vmul.f32 %v780, %v787
      %v796 = vadd.f32 %v794, %v795
      %v797 = vtanh.pop %v796
      %v798 = vmul.f32 %v793, %v797
      %799 = vst [vmem:[%s199] sm:$0xff] %v798
      %s800 = scalar_lea.vmem [#allocation2], 32
      %v801 = vld [vmem:[%s800] sm:$0xff]
      %v802 = vld [vmem:[%s800 + $0x8] sm:$0xff]
      %v803 = vld [vmem:[%s800 + $0x10] sm:$0xff]
      %v804 = vld [vmem:[%s800 + $0x18] sm:$0xff]
      %v805 = vld [vmem:[%s2] sm:$0xff]
      %v806 = vld [vmem:[%s2 + $0x8] sm:$0xff]
      %v807 = vld [vmem:[%s2 + $0x10] sm:$0xff]
      %v808 = vld [vmem:[%s2 + $0x18] sm:$0xff]
      %v809 = vld [vmem:[%s2 + $0x20] sm:$0xff]
      %v810 = vld [vmem:[%s2 + $0x28] sm:$0xff]
      %v811 = vld [vmem:[%s2 + $0x30] sm:$0xff]
      %v812 = vld [vmem:[%s2 + $0x38] sm:$0xff]
      %v813 = vld [vmem:[%s2 + $0x40] sm:$0xff]
      %v814 = vld [vmem:[%s2 + $0x48] sm:$0xff]
      %v815 = vld [vmem:[%s2 + $0x50] sm:$0xff]
      %v816 = vld [vmem:[%s2 + $0x58] sm:$0xff]
      %v817 = vld [vmem:[%s2 + $0x60] sm:$0xff]
      %v818 = vld [vmem:[%s2 + $0x68] sm:$0xff]
      %v819 = vld [vmem:[%s2 + $0x70] sm:$0xff]
      %v820 = vld [vmem:[%s2 + $0x78] sm:$0xff]
      %v821 = vld [vmem:[%s2 + $0x80] sm:$0xff]
      %v822 = vld [vmem:[%s2 + $0x88] sm:$0xff]
      %v823 = vld [vmem:[%s2 + $0x90] sm:$0xff]
      %v824 = vld [vmem:[%s2 + $0x98] sm:$0xff]
      %v825 = vld [vmem:[%s2 + $0xa0] sm:$0xff]
      %v826 = vld [vmem:[%s2 + $0xa8] sm:$0xff]
      %v827 = vld [vmem:[%s2 + $0xb0] sm:$0xff]
      %v828 = vld [vmem:[%s2 + $0xb8] sm:$0xff]
      %v829 = vld [vmem:[%s2 + $0xc0] sm:$0xff]
      %v830 = vld [vmem:[%s2 + $0xc8] sm:$0xff]
      %v831 = vld [vmem:[%s2 + $0xd0] sm:$0xff]
      %v832 = vld [vmem:[%s2 + $0xd8] sm:$0xff]
      %v833 = vld [vmem:[%s2 + $0xe0] sm:$0xff]
      %v834 = vld [vmem:[%s2 + $0xe8] sm:$0xff]
      %v835 = vld [vmem:[%s2 + $0xf0] sm:$0xff]
      %v836 = vld [vmem:[%s2 + $0xf8] sm:$0xff]
      %v837 = vld [vmem:[%s2 + $0x100] sm:$0xff]
      %v838 = vld [vmem:[%s2 + $0x108] sm:$0xff]
      %v839 = vld [vmem:[%s2 + $0x110] sm:$0xff]
      %v840 = vld [vmem:[%s2 + $0x118] sm:$0xff]
      %v841 = vld [vmem:[%s2 + $0x120] sm:$0xff]
      %v842 = vld [vmem:[%s2 + $0x128] sm:$0xff]
      %v843 = vld [vmem:[%s2 + $0x130] sm:$0xff]
      %v844 = vld [vmem:[%s2 + $0x138] sm:$0xff]
      %v845 = vld [vmem:[%s2 + $0x140] sm:$0xff]
      %v846 = vld [vmem:[%s2 + $0x148] sm:$0xff]
      %v847 = vld [vmem:[%s2 + $0x150] sm:$0xff]
      %v848 = vld [vmem:[%s2 + $0x158] sm:$0xff]
      %v849 = vld [vmem:[%s2 + $0x160] sm:$0xff]
      %v850 = vld [vmem:[%s2 + $0x168] sm:$0xff]
      %v851 = vld [vmem:[%s2 + $0x170] sm:$0xff]
      %v852 = vld [vmem:[%s2 + $0x178] sm:$0xff]
      %v853 = vld [vmem:[%s2 + $0x180] sm:$0xff]
      %v854 = vld [vmem:[%s2 + $0x188] sm:$0xff]
      %v855 = vld [vmem:[%s2 + $0x190] sm:$0xff]
      %v856 = vld [vmem:[%s2 + $0x198] sm:$0xff]
      %v857 = vld [vmem:[%s2 + $0x1a0] sm:$0xff]
      %v858 = vld [vmem:[%s2 + $0x1a8] sm:$0xff]
      %v859 = vld [vmem:[%s2 + $0x1b0] sm:$0xff]
      %v860 = vld [vmem:[%s2 + $0x1b8] sm:$0xff]
      %v861 = vld [vmem:[%s2 + $0x1c0] sm:$0xff]
      %v862 = vld [vmem:[%s2 + $0x1c8] sm:$0xff]
      %v863 = vld [vmem:[%s2 + $0x1d0] sm:$0xff]
      %v864 = vld [vmem:[%s2 + $0x1d8] sm:$0xff]
      %v865 = vld [vmem:[%s2 + $0x1e0] sm:$0xff]
      %v866 = vld [vmem:[%s2 + $0x1e8] sm:$0xff]
      %v867 = vld [vmem:[%s2 + $0x1f0] sm:$0xff]
      %v868 = vld [vmem:[%s2 + $0x1f8] sm:$0xff]
      %869 = vmatprep.subr.mxu0 %v806
      %870 = vmatpush1.msra.mxu0 %v805
      %871 = vmatprep.subr.mxu0 %v810
      %872 = vmatpush1.msra.mxu0 %v809
      %873 = vmatprep.subr.mxu0 %v814
      %874 = vmatpush1.msra.mxu0 %v813
      %875 = vmatprep.subr.mxu0 %v818
      %876 = vmatpush1.msra.mxu0 %v817
      %877 = vmatprep.subr.mxu0 %v822
      %878 = vmatpush1.msra.mxu0 %v821
      %879 = vmatprep.subr.mxu0 %v826
      %880 = vmatpush1.msra.mxu0 %v825
      %881 = vmatprep.subr.mxu0 %v830
      %882 = vmatpush1.msra.mxu0 %v829
      %883 = vmatprep.subr.mxu0 %v834
      %884 = vmatpush1.msra.mxu0 %v833
      %885 = vmatprep.subr.mxu0 %v838
      %886 = vmatpush1.msra.mxu0 %v837
      %887 = vmatprep.subr.mxu0 %v842
      %888 = vmatpush1.msra.mxu0 %v841
      %889 = vmatprep.subr.mxu0 %v846
      %890 = vmatpush1.msra.mxu0 %v845
      %891 = vmatprep.subr.mxu0 %v850
      %892 = vmatpush1.msra.mxu0 %v849
      %893 = vmatprep.subr.mxu0 %v854
      %894 = vmatpush1.msra.mxu0 %v853
      %895 = vmatprep.subr.mxu0 %v858
      %896 = vmatpush1.msra.mxu0 %v857
      %897 = vmatprep.subr.mxu0 %v862
      %898 = vmatpush1.msra.mxu0 %v861
      %899 = vmatprep.subr.mxu0 %v866
      %900 = vmatpush1.msra.mxu0 %v865
      %901 = vmatprep.subr.mxu0 0.0
      %902 = vmatpush1.msra.mxu0 0.0
      %903 = vmatprep.subr.mxu0 0.0
      %904 = vmatpush1.msra.mxu0 0.0
      %905 = vmatprep.subr.mxu0 0.0
      %906 = vmatpush1.msra.mxu0 0.0
      %907 = vmatprep.subr.mxu0 0.0
      %908 = vmatpush1.msra.mxu0 0.0
      %909 = vmatprep.subr.mxu0 0.0
      %910 = vmatpush1.msra.mxu0 0.0
      %911 = vmatprep.subr.mxu0 0.0
      %912 = vmatpush1.msra.mxu0 0.0
      %913 = vmatprep.subr.mxu0 0.0
      %914 = vmatpush1.msra.mxu0 0.0
      %915 = vmatprep.subr.mxu0 0.0
      %916 = vmatpush1.msra.mxu0 0.0
      %917 = vmatprep.subr.mxu0 0.0
      %918 = vmatpush1.msra.mxu0 0.0
      %919 = vmatprep.subr.mxu0 0.0
      %920 = vmatpush1.msra.mxu0 0.0
      %921 = vmatprep.subr.mxu0 0.0
      %922 = vmatpush1.msra.mxu0 0.0
      %923 = vmatprep.subr.mxu0 0.0
      %924 = vmatpush1.msra.mxu0 0.0
      %925 = vmatprep.subr.mxu0 0.0
      %926 = vmatpush1.msra.mxu0 0.0
      %927 = vmatprep.subr.mxu0 0.0
      %928 = vmatpush1.msra.mxu0 0.0
      %929 = vmatprep.subr.mxu0 0.0
      %930 = vmatpush1.msra.mxu0 0.0
      %931 = vmatprep.subr.mxu0 0.0
      %932 = vmatpush1.msra.mxu0 0.0
      %933 = vmatprep.mubr.f32.mxu0 0.0
      %934 = vmatmul.mubr.f32.gmra.mrb[0].mxu0 %v798
      %v935 = vpop.f32.mrb[0].mxu0
      %v936 = vadd.f32 0.0, %v935
      %v937 = vpop.f32.mrb[0].mxu0
      %v938 = vadd.f32 0.0, %v937
      %939 = vdwg.mxu0
      %940 = vmatprep.subr.mxu0 %v808
      %941 = vmatpush1.msra.mxu0 %v807
      %942 = vmatprep.subr.mxu0 %v812
      %943 = vmatpush1.msra.mxu0 %v811
      %944 = vmatprep.subr.mxu0 %v816
      %945 = vmatpush1.msra.mxu0 %v815
      %946 = vmatprep.subr.mxu0 %v820
      %947 = vmatpush1.msra.mxu0 %v819
      %948 = vmatprep.subr.mxu0 %v824
      %949 = vmatpush1.msra.mxu0 %v823
      %950 = vmatprep.subr.mxu0 %v828
      %951 = vmatpush1.msra.mxu0 %v827
      %952 = vmatprep.subr.mxu0 %v832
      %953 = vmatpush1.msra.mxu0 %v831
      %954 = vmatprep.subr.mxu0 %v836
      %955 = vmatpush1.msra.mxu0 %v835
      %956 = vmatprep.subr.mxu0 %v840
      %957 = vmatpush1.msra.mxu0 %v839
      %958 = vmatprep.subr.mxu0 %v844
      %959 = vmatpush1.msra.mxu0 %v843
      %960 = vmatprep.subr.mxu0 %v848
      %961 = vmatpush1.msra.mxu0 %v847
      %962 = vmatprep.subr.mxu0 %v852
      %963 = vmatpush1.msra.mxu0 %v851
      %964 = vmatprep.subr.mxu0 %v856
      %965 = vmatpush1.msra.mxu0 %v855
      %966 = vmatprep.subr.mxu0 %v860
      %967 = vmatpush1.msra.mxu0 %v859
      %968 = vmatprep.subr.mxu0 %v864
      %969 = vmatpush1.msra.mxu0 %v863
      %970 = vmatprep.subr.mxu0 %v868
      %971 = vmatpush1.msra.mxu0 %v867
      %972 = vmatprep.subr.mxu0 0.0
      %973 = vmatpush1.msra.mxu0 0.0
      %974 = vmatprep.subr.mxu0 0.0
      %975 = vmatpush1.msra.mxu0 0.0
      %976 = vmatprep.subr.mxu0 0.0
      %977 = vmatpush1.msra.mxu0 0.0
      %978 = vmatprep.subr.mxu0 0.0
      %979 = vmatpush1.msra.mxu0 0.0
      %980 = vmatprep.subr.mxu0 0.0
      %981 = vmatpush1.msra.mxu0 0.0
      %982 = vmatprep.subr.mxu0 0.0
      %983 = vmatpush1.msra.mxu0 0.0
      %984 = vmatprep.subr.mxu0 0.0
      %985 = vmatpush1.msra.mxu0 0.0
      %986 = vmatprep.subr.mxu0 0.0
      %987 = vmatpush1.msra.mxu0 0.0
      %988 = vmatprep.subr.mxu0 0.0
      %989 = vmatpush1.msra.mxu0 0.0
      %990 = vmatprep.subr.mxu0 0.0
      %991 = vmatpush1.msra.mxu0 0.0
      %992 = vmatprep.subr.mxu0 0.0
      %993 = vmatpush1.msra.mxu0 0.0
      %994 = vmatprep.subr.mxu0 0.0
      %995 = vmatpush1.msra.mxu0 0.0
      %996 = vmatprep.subr.mxu0 0.0
      %997 = vmatpush1.msra.mxu0 0.0
      %998 = vmatprep.subr.mxu0 0.0
      %999 = vmatpush1.msra.mxu0 0.0
      %1000 = vmatprep.subr.mxu0 0.0
      %1001 = vmatpush1.msra.mxu0 0.0
      %1002 = vmatprep.subr.mxu0 0.0
      %1003 = vmatpush1.msra.mxu0 0.0
      %1004 = vmatprep.mubr.f32.mxu0 0.0
      %1005 = vmatmul.mubr.f32.gmra.mrb[0].mxu0 %v798
      %v1006 = vpop.f32.mrb[0].mxu0
      %v1007 = vadd.f32 0.0, %v1006
      %v1008 = vpop.f32.mrb[0].mxu0
      %v1009 = vadd.f32 0.0, %v1008
      %1010 = vdwg.mxu0
      %v1011 = vadd.f32 %v801, %v936
      %v1012 = vadd.f32 %v802, %v938
      %v1013 = vadd.f32 %v803, %v1007
      %v1014 = vadd.f32 %v804, %v1009
      %v1015 = vxor.u32 %v1011, 2147483648
      %v1016 = vmul.f32 %v1015, 1.442695
      %v1017 = vpow.pop %v1016
      %v1018 = vadd.f32 %v1017, 1.0
      %v1019 = vrcp.pop %v1018
      %v1020 = vmul.f32 1.0, %v1019
      %v1021 = vxor.u32 %v1012, 2147483648
      %v1022 = vmul.f32 %v1021, 1.442695
      %v1023 = vpow.pop %v1022
      %v1024 = vadd.f32 %v1023, 1.0
      %v1025 = vrcp.pop %v1024
      %v1026 = vmul.f32 1.0, %v1025
      %v1027 = vtanh.pop %v1013
      %v1028 = vxor.u32 %v1014, 2147483648
      %v1029 = vmul.f32 %v1028, 1.442695
      %v1030 = vpow.pop %v1029
      %v1031 = vadd.f32 %v1030, 1.0
      %v1032 = vrcp.pop %v1031
      %v1033 = vmul.f32 1.0, %v1032
      %v1034 = vmul.f32 %v1026, %v796
      %v1035 = vmul.f32 %v1020, %v1027
      %v1036 = vadd.f32 %v1034, %v1035
      %v1037 = vtanh.pop %v1036
      %v1038 = vmul.f32 %v1033, %v1037
      %s1039 = scalar_lea.vmem %s199, 8
      %1040 = vst [vmem:[%s1039] sm:$0xff] %v1038
      %s1041 = scalar_lea.vmem [#allocation2], 64
      %v1042 = vld [vmem:[%s1041] sm:$0xff]
      %v1043 = vld [vmem:[%s1041 + $0x8] sm:$0xff]
      %v1044 = vld [vmem:[%s1041 + $0x10] sm:$0xff]
      %v1045 = vld [vmem:[%s1041 + $0x18] sm:$0xff]
      %v1046 = vld [vmem:[%s2] sm:$0xff]
      %v1047 = vld [vmem:[%s2 + $0x8] sm:$0xff]
      %v1048 = vld [vmem:[%s2 + $0x10] sm:$0xff]
      %v1049 = vld [vmem:[%s2 + $0x18] sm:$0xff]
      %v1050 = vld [vmem:[%s2 + $0x20] sm:$0xff]
      %v1051 = vld [vmem:[%s2 + $0x28] sm:$0xff]
      %v1052 = vld [vmem:[%s2 + $0x30] sm:$0xff]
      %v1053 = vld [vmem:[%s2 + $0x38] sm:$0xff]
      %v1054 = vld [vmem:[%s2 + $0x40] sm:$0xff]
      %v1055 = vld [vmem:[%s2 + $0x48] sm:$0xff]
      %v1056 = vld [vmem:[%s2 + $0x50] sm:$0xff]
      %v1057 = vld [vmem:[%s2 + $0x58] sm:$0xff]
      %v1058 = vld [vmem:[%s2 + $0x60] sm:$0xff]
      %v1059 = vld [vmem:[%s2 + $0x68] sm:$0xff]
      %v1060 = vld [vmem:[%s2 + $0x70] sm:$0xff]
      %v1061 = vld [vmem:[%s2 + $0x78] sm:$0xff]
      %v1062 = vld [vmem:[%s2 + $0x80] sm:$0xff]
      %v1063 = vld [vmem:[%s2 + $0x88] sm:$0xff]
      %v1064 = vld [vmem:[%s2 + $0x90] sm:$0xff]
      %v1065 = vld [vmem:[%s2 + $0x98] sm:$0xff]
      %v1066 = vld [vmem:[%s2 + $0xa0] sm:$0xff]
      %v1067 = vld [vmem:[%s2 + $0xa8] sm:$0xff]
      %v1068 = vld [vmem:[%s2 + $0xb0] sm:$0xff]
      %v1069 = vld [vmem:[%s2 + $0xb8] sm:$0xff]
      %v1070 = vld [vmem:[%s2 + $0xc0] sm:$0xff]
      %v1071 = vld [vmem:[%s2 + $0xc8] sm:$0xff]
      %v1072 = vld [vmem:[%s2 + $0xd0] sm:$0xff]
      %v1073 = vld [vmem:[%s2 + $0xd8] sm:$0xff]
      %v1074 = vld [vmem:[%s2 + $0xe0] sm:$0xff]
      %v1075 = vld [vmem:[%s2 + $0xe8] sm:$0xff]
      %v1076 = vld [vmem:[%s2 + $0xf0] sm:$0xff]
      %v1077 = vld [vmem:[%s2 + $0xf8] sm:$0xff]
      %v1078 = vld [vmem:[%s2 + $0x100] sm:$0xff]
      %v1079 = vld [vmem:[%s2 + $0x108] sm:$0xff]
      %v1080 = vld [vmem:[%s2 + $0x110] sm:$0xff]
      %v1081 = vld [vmem:[%s2 + $0x118] sm:$0xff]
      %v1082 = vld [vmem:[%s2 + $0x120] sm:$0xff]
      %v1083 = vld [vmem:[%s2 + $0x128] sm:$0xff]
      %v1084 = vld [vmem:[%s2 + $0x130] sm:$0xff]
      %v1085 = vld [vmem:[%s2 + $0x138] sm:$0xff]
      %v1086 = vld [vmem:[%s2 + $0x140] sm:$0xff]
      %v1087 = vld [vmem:[%s2 + $0x148] sm:$0xff]
      %v1088 = vld [vmem:[%s2 + $0x150] sm:$0xff]
      %v1089 = vld [vmem:[%s2 + $0x158] sm:$0xff]
      %v1090 = vld [vmem:[%s2 + $0x160] sm:$0xff]
      %v1091 = vld [vmem:[%s2 + $0x168] sm:$0xff]
      %v1092 = vld [vmem:[%s2 + $0x170] sm:$0xff]
      %v1093 = vld [vmem:[%s2 + $0x178] sm:$0xff]
      %v1094 = vld [vmem:[%s2 + $0x180] sm:$0xff]
      %v1095 = vld [vmem:[%s2 + $0x188] sm:$0xff]
      %v1096 = vld [vmem:[%s2 + $0x190] sm:$0xff]
      %v1097 = vld [vmem:[%s2 + $0x198] sm:$0xff]
      %v1098 = vld [vmem:[%s2 + $0x1a0] sm:$0xff]
      %v1099 = vld [vmem:[%s2 + $0x1a8] sm:$0xff]
      %v1100 = vld [vmem:[%s2 + $0x1b0] sm:$0xff]
      %v1101 = vld [vmem:[%s2 + $0x1b8] sm:$0xff]
      %v1102 = vld [vmem:[%s2 + $0x1c0] sm:$0xff]
      %v1103 = vld [vmem:[%s2 + $0x1c8] sm:$0xff]
      %v1104 = vld [vmem:[%s2 + $0x1d0] sm:$0xff]
      %v1105 = vld [vmem:[%s2 + $0x1d8] sm:$0xff]
      %v1106 = vld [vmem:[%s2 + $0x1e0] sm:$0xff]
      %v1107 = vld [vmem:[%s2 + $0x1e8] sm:$0xff]
      %v1108 = vld [vmem:[%s2 + $0x1f0] sm:$0xff]
      %v1109 = vld [vmem:[%s2 + $0x1f8] sm:$0xff]
      %1110 = vmatprep.subr.mxu0 %v1047
      %1111 = vmatpush1.msra.mxu0 %v1046
      %1112 = vmatprep.subr.mxu0 %v1051
      %1113 = vmatpush1.msra.mxu0 %v1050
      %1114 = vmatprep.subr.mxu0 %v1055
      %1115 = vmatpush1.msra.mxu0 %v1054
      %1116 = vmatprep.subr.mxu0 %v1059
      %1117 = vmatpush1.msra.mxu0 %v1058
      %1118 = vmatprep.subr.mxu0 %v1063
      %1119 = vmatpush1.msra.mxu0 %v1062
      %1120 = vmatprep.subr.mxu0 %v1067
      %1121 = vmatpush1.msra.mxu0 %v1066
      %1122 = vmatprep.subr.mxu0 %v1071
      %1123 = vmatpush1.msra.mxu0 %v1070
      %1124 = vmatprep.subr.mxu0 %v1075
      %1125 = vmatpush1.msra.mxu0 %v1074
      %1126 = vmatprep.subr.mxu0 %v1079
      %1127 = vmatpush1.msra.mxu0 %v1078
      %1128 = vmatprep.subr.mxu0 %v1083
      %1129 = vmatpush1.msra.mxu0 %v1082
      %1130 = vmatprep.subr.mxu0 %v1087
      %1131 = vmatpush1.msra.mxu0 %v1086
      %1132 = vmatprep.subr.mxu0 %v1091
      %1133 = vmatpush1.msra.mxu0 %v1090
      %1134 = vmatprep.subr.mxu0 %v1095
      %1135 = vmatpush1.msra.mxu0 %v1094
      %1136 = vmatprep.subr.mxu0 %v1099
      %1137 = vmatpush1.msra.mxu0 %v1098
      %1138 = vmatprep.subr.mxu0 %v1103
      %1139 = vmatpush1.msra.mxu0 %v1102
      %1140 = vmatprep.subr.mxu0 %v1107
      %1141 = vmatpush1.msra.mxu0 %v1106
      %1142 = vmatprep.subr.mxu0 0.0
      %1143 = vmatpush1.msra.mxu0 0.0
      %1144 = vmatprep.subr.mxu0 0.0
      %1145 = vmatpush1.msra.mxu0 0.0
      %1146 = vmatprep.subr.mxu0 0.0
      %1147 = vmatpush1.msra.mxu0 0.0
      %1148 = vmatprep.subr.mxu0 0.0
      %1149 = vmatpush1.msra.mxu0 0.0
      %1150 = vmatprep.subr.mxu0 0.0
      %1151 = vmatpush1.msra.mxu0 0.0
      %1152 = vmatprep.subr.mxu0 0.0
      %1153 = vmatpush1.msra.mxu0 0.0
      %1154 = vmatprep.subr.mxu0 0.0
      %1155 = vmatpush1.msra.mxu0 0.0
      %1156 = vmatprep.subr.mxu0 0.0
      %1157 = vmatpush1.msra.mxu0 0.0
      %1158 = vmatprep.subr.mxu0 0.0
      %1159 = vmatpush1.msra.mxu0 0.0
      %1160 = vmatprep.subr.mxu0 0.0
      %1161 = vmatpush1.msra.mxu0 0.0
      %1162 = vmatprep.subr.mxu0 0.0
      %1163 = vmatpush1.msra.mxu0 0.0
      %1164 = vmatprep.subr.mxu0 0.0
      %1165 = vmatpush1.msra.mxu0 0.0
      %1166 = vmatprep.subr.mxu0 0.0
      %1167 = vmatpush1.msra.mxu0 0.0
      %1168 = vmatprep.subr.mxu0 0.0
      %1169 = vmatpush1.msra.mxu0 0.0
      %1170 = vmatprep.subr.mxu0 0.0
      %1171 = vmatpush1.msra.mxu0 0.0
      %1172 = vmatprep.subr.mxu0 0.0
      %1173 = vmatpush1.msra.mxu0 0.0
      %1174 = vmatprep.mubr.f32.mxu0 0.0
      %1175 = vmatmul.mubr.f32.gmra.mrb[0].mxu0 %v1038
      %v1176 = vpop.f32.mrb[0].mxu0
      %v1177 = vadd.f32 0.0, %v1176
      %v1178 = vpop.f32.mrb[0].mxu0
      %v1179 = vadd.f32 0.0, %v1178
      %1180 = vdwg.mxu0
      %1181 = vmatprep.subr.mxu0 %v1049
      %1182 = vmatpush1.msra.mxu0 %v1048
      %1183 = vmatprep.subr.mxu0 %v1053
      %1184 = vmatpush1.msra.mxu0 %v1052
      %1185 = vmatprep.subr.mxu0 %v1057
      %1186 = vmatpush1.msra.mxu0 %v1056
      %1187 = vmatprep.subr.mxu0 %v1061
      %1188 = vmatpush1.msra.mxu0 %v1060
      %1189 = vmatprep.subr.mxu0 %v1065
      %1190 = vmatpush1.msra.mxu0 %v1064
      %1191 = vmatprep.subr.mxu0 %v1069
      %1192 = vmatpush1.msra.mxu0 %v1068
      %1193 = vmatprep.subr.mxu0 %v1073
      %1194 = vmatpush1.msra.mxu0 %v1072
      %1195 = vmatprep.subr.mxu0 %v1077
      %1196 = vmatpush1.msra.mxu0 %v1076
      %1197 = vmatprep.subr.mxu0 %v1081
      %1198 = vmatpush1.msra.mxu0 %v1080
      %1199 = vmatprep.subr.mxu0 %v1085
      %1200 = vmatpush1.msra.mxu0 %v1084
      %1201 = vmatprep.subr.mxu0 %v1089
      %1202 = vmatpush1.msra.mxu0 %v1088
      %1203 = vmatprep.subr.mxu0 %v1093
      %1204 = vmatpush1.msra.mxu0 %v1092
      %1205 = vmatprep.subr.mxu0 %v1097
      %1206 = vmatpush1.msra.mxu0 %v1096
      %1207 = vmatprep.subr.mxu0 %v1101
      %1208 = vmatpush1.msra.mxu0 %v1100
      %1209 = vmatprep.subr.mxu0 %v1105
      %1210 = vmatpush1.msra.mxu0 %v1104
      %1211 = vmatprep.subr.mxu0 %v1109
      %1212 = vmatpush1.msra.mxu0 %v1108
      %1213 = vmatprep.subr.mxu0 0.0
      %1214 = vmatpush1.msra.mxu0 0.0
      %1215 = vmatprep.subr.mxu0 0.0
      %1216 = vmatpush1.msra.mxu0 0.0
      %1217 = vmatprep.subr.mxu0 0.0
      %1218 = vmatpush1.msra.mxu0 0.0
      %1219 = vmatprep.subr.mxu0 0.0
      %1220 = vmatpush1.msra.mxu0 0.0
      %1221 = vmatprep.subr.mxu0 0.0
      %1222 = vmatpush1.msra.mxu0 0.0
      %1223 = vmatprep.subr.mxu0 0.0
      %1224 = vmatpush1.msra.mxu0 0.0
      %1225 = vmatprep.subr.mxu0 0.0
      %1226 = vmatpush1.msra.mxu0 0.0
      %1227 = vmatprep.subr.mxu0 0.0
      %1228 = vmatpush1.msra.mxu0 0.0
      %1229 = vmatprep.subr.mxu0 0.0
      %1230 = vmatpush1.msra.mxu0 0.0
      %1231 = vmatprep.subr.mxu0 0.0
      %1232 = vmatpush1.msra.mxu0 0.0
      %1233 = vmatprep.subr.mxu0 0.0
      %1234 = vmatpush1.msra.mxu0 0.0
      %1235 = vmatprep.subr.mxu0 0.0
      %1236 = vmatpush1.msra.mxu0 0.0
      %1237 = vmatprep.subr.mxu0 0.0
      %1238 = vmatpush1.msra.mxu0 0.0
      %1239 = vmatprep.subr.mxu0 0.0
      %1240 = vmatpush1.msra.mxu0 0.0
      %1241 = vmatprep.subr.mxu0 0.0
      %1242 = vmatpush1.msra.mxu0 0.0
      %1243 = vmatprep.subr.mxu0 0.0
      %1244 = vmatpush1.msra.mxu0 0.0
      %1245 = vmatprep.mubr.f32.mxu0 0.0
      %1246 = vmatmul.mubr.f32.gmra.mrb[0].mxu0 %v1038
      %v1247 = vpop.f32.mrb[0].mxu0
      %v1248 = vadd.f32 0.0, %v1247
      %v1249 = vpop.f32.mrb[0].mxu0
      %v1250 = vadd.f32 0.0, %v1249
      %1251 = vdwg.mxu0
      %v1252 = vadd.f32 %v1042, %v1177
      %v1253 = vadd.f32 %v1043, %v1179
      %v1254 = vadd.f32 %v1044, %v1248
      %v1255 = vadd.f32 %v1045, %v1250
      %v1256 = vxor.u32 %v1252, 2147483648
      %v1257 = vmul.f32 %v1256, 1.442695
      %v1258 = vpow.pop %v1257
      %v1259 = vadd.f32 %v1258, 1.0
      %v1260 = vrcp.pop %v1259
      %v1261 = vmul.f32 1.0, %v1260
      %v1262 = vxor.u32 %v1253, 2147483648
      %v1263 = vmul.f32 %v1262, 1.442695
      %v1264 = vpow.pop %v1263
      %v1265 = vadd.f32 %v1264, 1.0
      %v1266 = vrcp.pop %v1265
      %v1267 = vmul.f32 1.0, %v1266
      %v1268 = vtanh.pop %v1254
      %v1269 = vxor.u32 %v1255, 2147483648
      %v1270 = vmul.f32 %v1269, 1.442695
      %v1271 = vpow.pop %v1270
      %v1272 = vadd.f32 %v1271, 1.0
      %v1273 = vrcp.pop %v1272
      %v1274 = vmul.f32 1.0, %v1273
      %v1275 = vmul.f32 %v1267, %v1036
      %v1276 = vmul.f32 %v1261, %v1268
      %v1277 = vadd.f32 %v1275, %v1276
      %v1278 = vtanh.pop %v1277
      %v1279 = vmul.f32 %v1274, %v1278
      %s1280 = scalar_lea.vmem %s199, 16
      %1281 = vst [vmem:[%s1280] sm:$0xff] %v1279
      %s1282 = scalar_lea.vmem [#allocation2], 96
      %v1283 = vld [vmem:[%s1282] sm:$0xff]
      %v1284 = vld [vmem:[%s1282 + $0x8] sm:$0xff]
      %v1285 = vld [vmem:[%s1282 + $0x10] sm:$0xff]
      %v1286 = vld [vmem:[%s1282 + $0x18] sm:$0xff]
      %v1287 = vld [vmem:[%s2] sm:$0xff]
      %v1288 = vld [vmem:[%s2 + $0x8] sm:$0xff]
      %v1289 = vld [vmem:[%s2 + $0x10] sm:$0xff]
      %v1290 = vld [vmem:[%s2 + $0x18] sm:$0xff]
      %v1291 = vld [vmem:[%s2 + $0x20] sm:$0xff]
      %v1292 = vld [vmem:[%s2 + $0x28] sm:$0xff]
      %v1293 = vld [vmem:[%s2 + $0x30] sm:$0xff]
      %v1294 = vld [vmem:[%s2 + $0x38] sm:$0xff]
      %v1295 = vld [vmem:[%s2 + $0x40] sm:$0xff]
      %v1296 = vld [vmem:[%s2 + $0x48] sm:$0xff]
      %v1297 = vld [vmem:[%s2 + $0x50] sm:$0xff]
      %v1298 = vld [vmem:[%s2 + $0x58] sm:$0xff]
      %v1299 = vld [vmem:[%s2 + $0x60] sm:$0xff]
      %v1300 = vld [vmem:[%s2 + $0x68] sm:$0xff]
      %v1301 = vld [vmem:[%s2 + $0x70] sm:$0xff]
      %v1302 = vld [vmem:[%s2 + $0x78] sm:$0xff]
      %v1303 = vld [vmem:[%s2 + $0x80] sm:$0xff]
      %v1304 = vld [vmem:[%s2 + $0x88] sm:$0xff]
      %v1305 = vld [vmem:[%s2 + $0x90] sm:$0xff]
      %v1306 = vld [vmem:[%s2 + $0x98] sm:$0xff]
      %v1307 = vld [vmem:[%s2 + $0xa0] sm:$0xff]
      %v1308 = vld [vmem:[%s2 + $0xa8] sm:$0xff]
      %v1309 = vld [vmem:[%s2 + $0xb0] sm:$0xff]
      %v1310 = vld [vmem:[%s2 + $0xb8] sm:$0xff]
      %v1311 = vld [vmem:[%s2 + $0xc0] sm:$0xff]
      %v1312 = vld [vmem:[%s2 + $0xc8] sm:$0xff]
      %v1313 = vld [vmem:[%s2 + $0xd0] sm:$0xff]
      %v1314 = vld [vmem:[%s2 + $0xd8] sm:$0xff]
      %v1315 = vld [vmem:[%s2 + $0xe0] sm:$0xff]
      %v1316 = vld [vmem:[%s2 + $0xe8] sm:$0xff]
      %v1317 = vld [vmem:[%s2 + $0xf0] sm:$0xff]
      %v1318 = vld [vmem:[%s2 + $0xf8] sm:$0xff]
      %v1319 = vld [vmem:[%s2 + $0x100] sm:$0xff]
      %v1320 = vld [vmem:[%s2 + $0x108] sm:$0xff]
      %v1321 = vld [vmem:[%s2 + $0x110] sm:$0xff]
      %v1322 = vld [vmem:[%s2 + $0x118] sm:$0xff]
      %v1323 = vld [vmem:[%s2 + $0x120] sm:$0xff]
      %v1324 = vld [vmem:[%s2 + $0x128] sm:$0xff]
      %v1325 = vld [vmem:[%s2 + $0x130] sm:$0xff]
      %v1326 = vld [vmem:[%s2 + $0x138] sm:$0xff]
      %v1327 = vld [vmem:[%s2 + $0x140] sm:$0xff]
      %v1328 = vld [vmem:[%s2 + $0x148] sm:$0xff]
      %v1329 = vld [vmem:[%s2 + $0x150] sm:$0xff]
      %v1330 = vld [vmem:[%s2 + $0x158] sm:$0xff]
      %v1331 = vld [vmem:[%s2 + $0x160] sm:$0xff]
      %v1332 = vld [vmem:[%s2 + $0x168] sm:$0xff]
      %v1333 = vld [vmem:[%s2 + $0x170] sm:$0xff]
      %v1334 = vld [vmem:[%s2 + $0x178] sm:$0xff]
      %v1335 = vld [vmem:[%s2 + $0x180] sm:$0xff]
      %v1336 = vld [vmem:[%s2 + $0x188] sm:$0xff]
      %v1337 = vld [vmem:[%s2 + $0x190] sm:$0xff]
      %v1338 = vld [vmem:[%s2 + $0x198] sm:$0xff]
      %v1339 = vld [vmem:[%s2 + $0x1a0] sm:$0xff]
      %v1340 = vld [vmem:[%s2 + $0x1a8] sm:$0xff]
      %v1341 = vld [vmem:[%s2 + $0x1b0] sm:$0xff]
      %v1342 = vld [vmem:[%s2 + $0x1b8] sm:$0xff]
      %v1343 = vld [vmem:[%s2 + $0x1c0] sm:$0xff]
      %v1344 = vld [vmem:[%s2 + $0x1c8] sm:$0xff]
      %v1345 = vld [vmem:[%s2 + $0x1d0] sm:$0xff]
      %v1346 = vld [vmem:[%s2 + $0x1d8] sm:$0xff]
      %v1347 = vld [vmem:[%s2 + $0x1e0] sm:$0xff]
      %v1348 = vld [vmem:[%s2 + $0x1e8] sm:$0xff]
      %v1349 = vld [vmem:[%s2 + $0x1f0] sm:$0xff]
      %v1350 = vld [vmem:[%s2 + $0x1f8] sm:$0xff]
      %1351 = vmatprep.subr.mxu0 %v1288
      %1352 = vmatpush1.msra.mxu0 %v1287
      %1353 = vmatprep.subr.mxu0 %v1292
      %1354 = vmatpush1.msra.mxu0 %v1291
      %1355 = vmatprep.subr.mxu0 %v1296
      %1356 = vmatpush1.msra.mxu0 %v1295
      %1357 = vmatprep.subr.mxu0 %v1300
      %1358 = vmatpush1.msra.mxu0 %v1299
      %1359 = vmatprep.subr.mxu0 %v1304
      %1360 = vmatpush1.msra.mxu0 %v1303
      %1361 = vmatprep.subr.mxu0 %v1308
      %1362 = vmatpush1.msra.mxu0 %v1307
      %1363 = vmatprep.subr.mxu0 %v1312
      %1364 = vmatpush1.msra.mxu0 %v1311
      %1365 = vmatprep.subr.mxu0 %v1316
      %1366 = vmatpush1.msra.mxu0 %v1315
      %1367 = vmatprep.subr.mxu0 %v1320
      %1368 = vmatpush1.msra.mxu0 %v1319
      %1369 = vmatprep.subr.mxu0 %v1324
      %1370 = vmatpush1.msra.mxu0 %v1323
      %1371 = vmatprep.subr.mxu0 %v1328
      %1372 = vmatpush1.msra.mxu0 %v1327
      %1373 = vmatprep.subr.mxu0 %v1332
      %1374 = vmatpush1.msra.mxu0 %v1331
      %1375 = vmatprep.subr.mxu0 %v1336
      %1376 = vmatpush1.msra.mxu0 %v1335
      %1377 = vmatprep.subr.mxu0 %v1340
      %1378 = vmatpush1.msra.mxu0 %v1339
      %1379 = vmatprep.subr.mxu0 %v1344
      %1380 = vmatpush1.msra.mxu0 %v1343
      %1381 = vmatprep.subr.mxu0 %v1348
      %1382 = vmatpush1.msra.mxu0 %v1347
      %1383 = vmatprep.subr.mxu0 0.0
      %1384 = vmatpush1.msra.mxu0 0.0
      %1385 = vmatprep.subr.mxu0 0.0
      %1386 = vmatpush1.msra.mxu0 0.0
      %1387 = vmatprep.subr.mxu0 0.0
      %1388 = vmatpush1.msra.mxu0 0.0
      %1389 = vmatprep.subr.mxu0 0.0
      %1390 = vmatpush1.msra.mxu0 0.0
      %1391 = vmatprep.subr.mxu0 0.0
      %1392 = vmatpush1.msra.mxu0 0.0
      %1393 = vmatprep.subr.mxu0 0.0
      %1394 = vmatpush1.msra.mxu0 0.0
      %1395 = vmatprep.subr.mxu0 0.0
      %1396 = vmatpush1.msra.mxu0 0.0
      %1397 = vmatprep.subr.mxu0 0.0
      %1398 = vmatpush1.msra.mxu0 0.0
      %1399 = vmatprep.subr.mxu0 0.0
      %1400 = vmatpush1.msra.mxu0 0.0
      %1401 = vmatprep.subr.mxu0 0.0
      %1402 = vmatpush1.msra.mxu0 0.0
      %1403 = vmatprep.subr.mxu0 0.0
      %1404 = vmatpush1.msra.mxu0 0.0
      %1405 = vmatprep.subr.mxu0 0.0
      %1406 = vmatpush1.msra.mxu0 0.0
      %1407 = vmatprep.subr.mxu0 0.0
      %1408 = vmatpush1.msra.mxu0 0.0
      %1409 = vmatprep.subr.mxu0 0.0
      %1410 = vmatpush1.msra.mxu0 0.0
      %1411 = vmatprep.subr.mxu0 0.0
      %1412 = vmatpush1.msra.mxu0 0.0
      %1413 = vmatprep.subr.mxu0 0.0
      %1414 = vmatpush1.msra.mxu0 0.0
      %1415 = vmatprep.mubr.f32.mxu0 0.0
      %1416 = vmatmul.mubr.f32.gmra.mrb[0].mxu0 %v1279
      %v1417 = vpop.f32.mrb[0].mxu0
      %v1418 = vadd.f32 0.0, %v1417
      %v1419 = vpop.f32.mrb[0].mxu0
      %v1420 = vadd.f32 0.0, %v1419
      %1421 = vdwg.mxu0
      %1422 = vmatprep.subr.mxu0 %v1290
      %1423 = vmatpush1.msra.mxu0 %v1289
      %1424 = vmatprep.subr.mxu0 %v1294
      %1425 = vmatpush1.msra.mxu0 %v1293
      %1426 = vmatprep.subr.mxu0 %v1298
      %1427 = vmatpush1.msra.mxu0 %v1297
      %1428 = vmatprep.subr.mxu0 %v1302
      %1429 = vmatpush1.msra.mxu0 %v1301
      %1430 = vmatprep.subr.mxu0 %v1306
      %1431 = vmatpush1.msra.mxu0 %v1305
      %1432 = vmatprep.subr.mxu0 %v1310
      %1433 = vmatpush1.msra.mxu0 %v1309
      %1434 = vmatprep.subr.mxu0 %v1314
      %1435 = vmatpush1.msra.mxu0 %v1313
      %1436 = vmatprep.subr.mxu0 %v1318
      %1437 = vmatpush1.msra.mxu0 %v1317
      %1438 = vmatprep.subr.mxu0 %v1322
      %1439 = vmatpush1.msra.mxu0 %v1321
      %1440 = vmatprep.subr.mxu0 %v1326
      %1441 = vmatpush1.msra.mxu0 %v1325
      %1442 = vmatprep.subr.mxu0 %v1330
      %1443 = vmatpush1.msra.mxu0 %v1329
      %1444 = vmatprep.subr.mxu0 %v1334
      %1445 = vmatpush1.msra.mxu0 %v1333
      %1446 = vmatprep.subr.mxu0 %v1338
      %1447 = vmatpush1.msra.mxu0 %v1337
      %1448 = vmatprep.subr.mxu0 %v1342
      %1449 = vmatpush1.msra.mxu0 %v1341
      %1450 = vmatprep.subr.mxu0 %v1346
      %1451 = vmatpush1.msra.mxu0 %v1345
      %1452 = vmatprep.subr.mxu0 %v1350
      %1453 = vmatpush1.msra.mxu0 %v1349
      %1454 = vmatprep.subr.mxu0 0.0
      %1455 = vmatpush1.msra.mxu0 0.0
      %1456 = vmatprep.subr.mxu0 0.0
      %1457 = vmatpush1.msra.mxu0 0.0
      %1458 = vmatprep.subr.mxu0 0.0
      %1459 = vmatpush1.msra.mxu0 0.0
      %1460 = vmatprep.subr.mxu0 0.0
      %1461 = vmatpush1.msra.mxu0 0.0
      %1462 = vmatprep.subr.mxu0 0.0
      %1463 = vmatpush1.msra.mxu0 0.0
      %1464 = vmatprep.subr.mxu0 0.0
      %1465 = vmatpush1.msra.mxu0 0.0
      %1466 = vmatprep.subr.mxu0 0.0
      %1467 = vmatpush1.msra.mxu0 0.0
      %1468 = vmatprep.subr.mxu0 0.0
      %1469 = vmatpush1.msra.mxu0 0.0
      %1470 = vmatprep.subr.mxu0 0.0
      %1471 = vmatpush1.msra.mxu0 0.0
      %1472 = vmatprep.subr.mxu0 0.0
      %1473 = vmatpush1.msra.mxu0 0.0
      %1474 = vmatprep.subr.mxu0 0.0
      %1475 = vmatpush1.msra.mxu0 0.0
      %1476 = vmatprep.subr.mxu0 0.0
      %1477 = vmatpush1.msra.mxu0 0.0
      %1478 = vmatprep.subr.mxu0 0.0
      %1479 = vmatpush1.msra.mxu0 0.0
      %1480 = vmatprep.subr.mxu0 0.0
      %1481 = vmatpush1.msra.mxu0 0.0
      %1482 = vmatprep.subr.mxu0 0.0
      %1483 = vmatpush1.msra.mxu0 0.0
      %1484 = vmatprep.subr.mxu0 0.0
      %1485 = vmatpush1.msra.mxu0 0.0
      %1486 = vmatprep.mubr.f32.mxu0 0.0
      %1487 = vmatmul.mubr.f32.gmra.mrb[0].mxu0 %v1279
      %v1488 = vpop.f32.mrb[0].mxu0
      %v1489 = vadd.f32 0.0, %v1488
      %v1490 = vpop.f32.mrb[0].mxu0
      %v1491 = vadd.f32 0.0, %v1490
      %1492 = vdwg.mxu0
      %v1493 = vadd.f32 %v1283, %v1418
      %v1494 = vadd.f32 %v1284, %v1420
      %v1495 = vadd.f32 %v1285, %v1489
      %v1496 = vadd.f32 %v1286, %v1491
      %v1497 = vxor.u32 %v1493, 2147483648
      %v1498 = vmul.f32 %v1497, 1.442695
      %v1499 = vpow.pop %v1498
      %v1500 = vadd.f32 %v1499, 1.0
      %v1501 = vrcp.pop %v1500
      %v1502 = vmul.f32 1.0, %v1501
      %v1503 = vxor.u32 %v1494, 2147483648
      %v1504 = vmul.f32 %v1503, 1.442695
      %v1505 = vpow.pop %v1504
      %v1506 = vadd.f32 %v1505, 1.0
      %v1507 = vrcp.pop %v1506
      %v1508 = vmul.f32 1.0, %v1507
      %v1509 = vtanh.pop %v1495
      %v1510 = vxor.u32 %v1496, 2147483648
      %v1511 = vmul.f32 %v1510, 1.442695
      %v1512 = vpow.pop %v1511
      %v1513 = vadd.f32 %v1512, 1.0
      %v1514 = vrcp.pop %v1513
      %v1515 = vmul.f32 1.0, %v1514
      %v1516 = vmul.f32 %v1508, %v1277
      %v1517 = vmul.f32 %v1502, %v1509
      %v1518 = vadd.f32 %v1516, %v1517
      %v1519 = vtanh.pop %v1518
      %v1520 = vmul.f32 %v1515, %v1519
      %s1521 = scalar_lea.vmem %s199, 24
      %1522 = vst [vmem:[%s1521] sm:$0xff] %v1520
      %s1523 = scalar_lea.vmem [#allocation2], 128
      %v1524 = vld [vmem:[%s1523] sm:$0xff]
      %v1525 = vld [vmem:[%s1523 + $0x8] sm:$0xff]
      %v1526 = vld [vmem:[%s1523 + $0x10] sm:$0xff]
      %v1527 = vld [vmem:[%s1523 + $0x18] sm:$0xff]
      %v1528 = vld [vmem:[%s2] sm:$0xff]
      %v1529 = vld [vmem:[%s2 + $0x8] sm:$0xff]
      %v1530 = vld [vmem:[%s2 + $0x10] sm:$0xff]
      %v1531 = vld [vmem:[%s2 + $0x18] sm:$0xff]
      %v1532 = vld [vmem:[%s2 + $0x20] sm:$0xff]
      %v1533 = vld [vmem:[%s2 + $0x28] sm:$0xff]
      %v1534 = vld [vmem:[%s2 + $0x30] sm:$0xff]
      %v1535 = vld [vmem:[%s2 + $0x38] sm:$0xff]
      %v1536 = vld [vmem:[%s2 + $0x40] sm:$0xff]
      %v1537 = vld [vmem:[%s2 + $0x48] sm:$0xff]
      %v1538 = vld [vmem:[%s2 + $0x50] sm:$0xff]
      %v1539 = vld [vmem:[%s2 + $0x58] sm:$0xff]
      %v1540 = vld [vmem:[%s2 + $0x60] sm:$0xff]
      %v1541 = vld [vmem:[%s2 + $0x68] sm:$0xff]
      %v1542 = vld [vmem:[%s2 + $0x70] sm:$0xff]
      %v1543 = vld [vmem:[%s2 + $0x78] sm:$0xff]
      %v1544 = vld [vmem:[%s2 + $0x80] sm:$0xff]
      %v1545 = vld [vmem:[%s2 + $0x88] sm:$0xff]
      %v1546 = vld [vmem:[%s2 + $0x90] sm:$0xff]
      %v1547 = vld [vmem:[%s2 + $0x98] sm:$0xff]
      %v1548 = vld [vmem:[%s2 + $0xa0] sm:$0xff]
      %v1549 = vld [vmem:[%s2 + $0xa8] sm:$0xff]
      %v1550 = vld [vmem:[%s2 + $0xb0] sm:$0xff]
      %v1551 = vld [vmem:[%s2 + $0xb8] sm:$0xff]
      %v1552 = vld [vmem:[%s2 + $0xc0] sm:$0xff]
      %v1553 = vld [vmem:[%s2 + $0xc8] sm:$0xff]
      %v1554 = vld [vmem:[%s2 + $0xd0] sm:$0xff]
      %v1555 = vld [vmem:[%s2 + $0xd8] sm:$0xff]
      %v1556 = vld [vmem:[%s2 + $0xe0] sm:$0xff]
      %v1557 = vld [vmem:[%s2 + $0xe8] sm:$0xff]
      %v1558 = vld [vmem:[%s2 + $0xf0] sm:$0xff]
      %v1559 = vld [vmem:[%s2 + $0xf8] sm:$0xff]
      %v1560 = vld [vmem:[%s2 + $0x100] sm:$0xff]
      %v1561 = vld [vmem:[%s2 + $0x108] sm:$0xff]
      %v1562 = vld [vmem:[%s2 + $0x110] sm:$0xff]
      %v1563 = vld [vmem:[%s2 + $0x118] sm:$0xff]
      %v1564 = vld [vmem:[%s2 + $0x120] sm:$0xff]
      %v1565 = vld [vmem:[%s2 + $0x128] sm:$0xff]
      %v1566 = vld [vmem:[%s2 + $0x130] sm:$0xff]
      %v1567 = vld [vmem:[%s2 + $0x138] sm:$0xff]
      %v1568 = vld [vmem:[%s2 + $0x140] sm:$0xff]
      %v1569 = vld [vmem:[%s2 + $0x148] sm:$0xff]
      %v1570 = vld [vmem:[%s2 + $0x150] sm:$0xff]
      %v1571 = vld [vmem:[%s2 + $0x158] sm:$0xff]
      %v1572 = vld [vmem:[%s2 + $0x160] sm:$0xff]
      %v1573 = vld [vmem:[%s2 + $0x168] sm:$0xff]
      %v1574 = vld [vmem:[%s2 + $0x170] sm:$0xff]
      %v1575 = vld [vmem:[%s2 + $0x178] sm:$0xff]
      %v1576 = vld [vmem:[%s2 + $0x180] sm:$0xff]
      %v1577 = vld [vmem:[%s2 + $0x188] sm:$0xff]
      %v1578 = vld [vmem:[%s2 + $0x190] sm:$0xff]
      %v1579 = vld [vmem:[%s2 + $0x198] sm:$0xff]
      %v1580 = vld [vmem:[%s2 + $0x1a0] sm:$0xff]
      %v1581 = vld [vmem:[%s2 + $0x1a8] sm:$0xff]
      %v1582 = vld [vmem:[%s2 + $0x1b0] sm:$0xff]
      %v1583 = vld [vmem:[%s2 + $0x1b8] sm:$0xff]
      %v1584 = vld [vmem:[%s2 + $0x1c0] sm:$0xff]
      %v1585 = vld [vmem:[%s2 + $0x1c8] sm:$0xff]
      %v1586 = vld [vmem:[%s2 + $0x1d0] sm:$0xff]
      %v1587 = vld [vmem:[%s2 + $0x1d8] sm:$0xff]
      %v1588 = vld [vmem:[%s2 + $0x1e0] sm:$0xff]
      %v1589 = vld [vmem:[%s2 + $0x1e8] sm:$0xff]
      %v1590 = vld [vmem:[%s2 + $0x1f0] sm:$0xff]
      %v1591 = vld [vmem:[%s2 + $0x1f8] sm:$0xff]
      %1592 = vmatprep.subr.mxu0 %v1529
      %1593 = vmatpush1.msra.mxu0 %v1528
      %1594 = vmatprep.subr.mxu0 %v1533
      %1595 = vmatpush1.msra.mxu0 %v1532
      %1596 = vmatprep.subr.mxu0 %v1537
      %1597 = vmatpush1.msra.mxu0 %v1536
      %1598 = vmatprep.subr.mxu0 %v1541
      %1599 = vmatpush1.msra.mxu0 %v1540
      %1600 = vmatprep.subr.mxu0 %v1545
      %1601 = vmatpush1.msra.mxu0 %v1544
      %1602 = vmatprep.subr.mxu0 %v1549
      %1603 = vmatpush1.msra.mxu0 %v1548
      %1604 = vmatprep.subr.mxu0 %v1553
      %1605 = vmatpush1.msra.mxu0 %v1552
      %1606 = vmatprep.subr.mxu0 %v1557
      %1607 = vmatpush1.msra.mxu0 %v1556
      %1608 = vmatprep.subr.mxu0 %v1561
      %1609 = vmatpush1.msra.mxu0 %v1560
      %1610 = vmatprep.subr.mxu0 %v1565
      %1611 = vmatpush1.msra.mxu0 %v1564
      %1612 = vmatprep.subr.mxu0 %v1569
      %1613 = vmatpush1.msra.mxu0 %v1568
      %1614 = vmatprep.subr.mxu0 %v1573
      %1615 = vmatpush1.msra.mxu0 %v1572
      %1616 = vmatprep.subr.mxu0 %v1577
      %1617 = vmatpush1.msra.mxu0 %v1576
      %1618 = vmatprep.subr.mxu0 %v1581
      %1619 = vmatpush1.msra.mxu0 %v1580
      %1620 = vmatprep.subr.mxu0 %v1585
      %1621 = vmatpush1.msra.mxu0 %v1584
      %1622 = vmatprep.subr.mxu0 %v1589
      %1623 = vmatpush1.msra.mxu0 %v1588
      %1624 = vmatprep.subr.mxu0 0.0
      %1625 = vmatpush1.msra.mxu0 0.0
      %1626 = vmatprep.subr.mxu0 0.0
      %1627 = vmatpush1.msra.mxu0 0.0
      %1628 = vmatprep.subr.mxu0 0.0
      %1629 = vmatpush1.msra.mxu0 0.0
      %1630 = vmatprep.subr.mxu0 0.0
      %1631 = vmatpush1.msra.mxu0 0.0
      %1632 = vmatprep.subr.mxu0 0.0
      %1633 = vmatpush1.msra.mxu0 0.0
      %1634 = vmatprep.subr.mxu0 0.0
      %1635 = vmatpush1.msra.mxu0 0.0
      %1636 = vmatprep.subr.mxu0 0.0
      %1637 = vmatpush1.msra.mxu0 0.0
      %1638 = vmatprep.subr.mxu0 0.0
      %1639 = vmatpush1.msra.mxu0 0.0
      %1640 = vmatprep.subr.mxu0 0.0
      %1641 = vmatpush1.msra.mxu0 0.0
      %1642 = vmatprep.subr.mxu0 0.0
      %1643 = vmatpush1.msra.mxu0 0.0
      %1644 = vmatprep.subr.mxu0 0.0
      %1645 = vmatpush1.msra.mxu0 0.0
      %1646 = vmatprep.subr.mxu0 0.0
      %1647 = vmatpush1.msra.mxu0 0.0
      %1648 = vmatprep.subr.mxu0 0.0
      %1649 = vmatpush1.msra.mxu0 0.0
      %1650 = vmatprep.subr.mxu0 0.0
      %1651 = vmatpush1.msra.mxu0 0.0
      %1652 = vmatprep.subr.mxu0 0.0
      %1653 = vmatpush1.msra.mxu0 0.0
      %1654 = vmatprep.subr.mxu0 0.0
      %1655 = vmatpush1.msra.mxu0 0.0
      %1656 = vmatprep.mubr.f32.mxu0 0.0
      %1657 = vmatmul.mubr.f32.gmra.mrb[0].mxu0 %v1520
      %v1658 = vpop.f32.mrb[0].mxu0
      %v1659 = vadd.f32 0.0, %v1658
      %v1660 = vpop.f32.mrb[0].mxu0
      %v1661 = vadd.f32 0.0, %v1660
      %1662 = vdwg.mxu0
      %1663 = vmatprep.subr.mxu0 %v1531
      %1664 = vmatpush1.msra.mxu0 %v1530
      %1665 = vmatprep.subr.mxu0 %v1535
      %1666 = vmatpush1.msra.mxu0 %v1534
      %1667 = vmatprep.subr.mxu0 %v1539
      %1668 = vmatpush1.msra.mxu0 %v1538
      %1669 = vmatprep.subr.mxu0 %v1543
      %1670 = vmatpush1.msra.mxu0 %v1542
      %1671 = vmatprep.subr.mxu0 %v1547
      %1672 = vmatpush1.msra.mxu0 %v1546
      %1673 = vmatprep.subr.mxu0 %v1551
      %1674 = vmatpush1.msra.mxu0 %v1550
      %1675 = vmatprep.subr.mxu0 %v1555
      %1676 = vmatpush1.msra.mxu0 %v1554
      %1677 = vmatprep.subr.mxu0 %v1559
      %1678 = vmatpush1.msra.mxu0 %v1558
      %1679 = vmatprep.subr.mxu0 %v1563
      %1680 = vmatpush1.msra.mxu0 %v1562
      %1681 = vmatprep.subr.mxu0 %v1567
      %1682 = vmatpush1.msra.mxu0 %v1566
      %1683 = vmatprep.subr.mxu0 %v1571
      %1684 = vmatpush1.msra.mxu0 %v1570
      %1685 = vmatprep.subr.mxu0 %v1575
      %1686 = vmatpush1.msra.mxu0 %v1574
      %1687 = vmatprep.subr.mxu0 %v1579
      %1688 = vmatpush1.msra.mxu0 %v1578
      %1689 = vmatprep.subr.mxu0 %v1583
      %1690 = vmatpush1.msra.mxu0 %v1582
      %1691 = vmatprep.subr.mxu0 %v1587
      %1692 = vmatpush1.msra.mxu0 %v1586
      %1693 = vmatprep.subr.mxu0 %v1591
      %1694 = vmatpush1.msra.mxu0 %v1590
      %1695 = vmatprep.subr.mxu0 0.0
      %1696 = vmatpush1.msra.mxu0 0.0
      %1697 = vmatprep.subr.mxu0 0.0
      %1698 = vmatpush1.msra.mxu0 0.0
      %1699 = vmatprep.subr.mxu0 0.0
      %1700 = vmatpush1.msra.mxu0 0.0
      %1701 = vmatprep.subr.mxu0 0.0
      %1702 = vmatpush1.msra.mxu0 0.0
      %1703 = vmatprep.subr.mxu0 0.0
      %1704 = vmatpush1.msra.mxu0 0.0
      %1705 = vmatprep.subr.mxu0 0.0
      %1706 = vmatpush1.msra.mxu0 0.0
      %1707 = vmatprep.subr.mxu0 0.0
      %1708 = vmatpush1.msra.mxu0 0.0
      %1709 = vmatprep.subr.mxu0 0.0
      %1710 = vmatpush1.msra.mxu0 0.0
      %1711 = vmatprep.subr.mxu0 0.0
      %1712 = vmatpush1.msra.mxu0 0.0
      %1713 = vmatprep.subr.mxu0 0.0
      %1714 = vmatpush1.msra.mxu0 0.0
      %1715 = vmatprep.subr.mxu0 0.0
      %1716 = vmatpush1.msra.mxu0 0.0
      %1717 = vmatprep.subr.mxu0 0.0
      %1718 = vmatpush1.msra.mxu0 0.0
      %1719 = vmatprep.subr.mxu0 0.0
      %1720 = vmatpush1.msra.mxu0 0.0
      %1721 = vmatprep.subr.mxu0 0.0
      %1722 = vmatpush1.msra.mxu0 0.0
      %1723 = vmatprep.subr.mxu0 0.0
      %1724 = vmatpush1.msra.mxu0 0.0
      %1725 = vmatprep.subr.mxu0 0.0
      %1726 = vmatpush1.msra.mxu0 0.0
      %1727 = vmatprep.mubr.f32.mxu0 0.0
      %1728 = vmatmul.mubr.f32.gmra.mrb[0].mxu0 %v1520
      %v1729 = vpop.f32.mrb[0].mxu0
      %v1730 = vadd.f32 0.0, %v1729
      %v1731 = vpop.f32.mrb[0].mxu0
      %v1732 = vadd.f32 0.0, %v1731
      %1733 = vdwg.mxu0
      %v1734 = vadd.f32 %v1524, %v1659
      %v1735 = vadd.f32 %v1525, %v1661
      %v1736 = vadd.f32 %v1526, %v1730
      %v1737 = vadd.f32 %v1527, %v1732
      %v1738 = vxor.u32 %v1734, 2147483648
      %v1739 = vmul.f32 %v1738, 1.442695
      %v1740 = vpow.pop %v1739
      %v1741 = vadd.f32 %v1740, 1.0
      %v1742 = vrcp.pop %v1741
      %v1743 = vmul.f32 1.0, %v1742
      %v1744 = vxor.u32 %v1735, 2147483648
      %v1745 = vmul.f32 %v1744, 1.442695
      %v1746 = vpow.pop %v1745
      %v1747 = vadd.f32 %v1746, 1.0
      %v1748 = vrcp.pop %v1747
      %v1749 = vmul.f32 1.0, %v1748
      %v1750 = vtanh.pop %v1736
      %v1751 = vxor.u32 %v1737, 2147483648
      %v1752 = vmul.f32 %v1751, 1.442695
      %v1753 = vpow.pop %v1752
      %v1754 = vadd.f32 %v1753, 1.0
      %v1755 = vrcp.pop %v1754
      %v1756 = vmul.f32 1.0, %v1755
      %v1757 = vmul.f32 %v1749, %v1518
      %v1758 = vmul.f32 %v1743, %v1750
      %v1759 = vadd.f32 %v1757, %v1758
      %v1760 = vtanh.pop %v1759
      %v1761 = vmul.f32 %v1756, %v1760
      %s1762 = scalar_lea.vmem %s199, 32
      %1763 = vst [vmem:[%s1762] sm:$0xff] %v1761
      %s1764 = scalar_lea.vmem [#allocation2], 160
      %v1765 = vld [vmem:[%s1764] sm:$0xff]
      %v1766 = vld [vmem:[%s1764 + $0x8] sm:$0xff]
      %v1767 = vld [vmem:[%s1764 + $0x10] sm:$0xff]
      %v1768 = vld [vmem:[%s1764 + $0x18] sm:$0xff]
      %v1769 = vld [vmem:[%s2] sm:$0xff]
      %v1770 = vld [vmem:[%s2 + $0x8] sm:$0xff]
      %v1771 = vld [vmem:[%s2 + $0x10] sm:$0xff]
      %v1772 = vld [vmem:[%s2 + $0x18] sm:$0xff]
      %v1773 = vld [vmem:[%s2 + $0x20] sm:$0xff]
      %v1774 = vld [vmem:[%s2 + $0x28] sm:$0xff]
      %v1775 = vld [vmem:[%s2 + $0x30] sm:$0xff]
      %v1776 = vld [vmem:[%s2 + $0x38] sm:$0xff]
      %v1777 = vld [vmem:[%s2 + $0x40] sm:$0xff]
      %v1778 = vld [vmem:[%s2 + $0x48] sm:$0xff]
      %v1779 = vld [vmem:[%s2 + $0x50] sm:$0xff]
      %v1780 = vld [vmem:[%s2 + $0x58] sm:$0xff]
      %v1781 = vld [vmem:[%s2 + $0x60] sm:$0xff]
      %v1782 = vld [vmem:[%s2 + $0x68] sm:$0xff]
      %v1783 = vld [vmem:[%s2 + $0x70] sm:$0xff]
      %v1784 = vld [vmem:[%s2 + $0x78] sm:$0xff]
      %v1785 = vld [vmem:[%s2 + $0x80] sm:$0xff]
      %v1786 = vld [vmem:[%s2 + $0x88] sm:$0xff]
      %v1787 = vld [vmem:[%s2 + $0x90] sm:$0xff]
      %v1788 = vld [vmem:[%s2 + $0x98] sm:$0xff]
      %v1789 = vld [vmem:[%s2 + $0xa0] sm:$0xff]
      %v1790 = vld [vmem:[%s2 + $0xa8] sm:$0xff]
      %v1791 = vld [vmem:[%s2 + $0xb0] sm:$0xff]
      %v1792 = vld [vmem:[%s2 + $0xb8] sm:$0xff]
      %v1793 = vld [vmem:[%s2 + $0xc0] sm:$0xff]
      %v1794 = vld [vmem:[%s2 + $0xc8] sm:$0xff]
      %v1795 = vld [vmem:[%s2 + $0xd0] sm:$0xff]
      %v1796 = vld [vmem:[%s2 + $0xd8] sm:$0xff]
      %v1797 = vld [vmem:[%s2 + $0xe0] sm:$0xff]
      %v1798 = vld [vmem:[%s2 + $0xe8] sm:$0xff]
      %v1799 = vld [vmem:[%s2 + $0xf0] sm:$0xff]
      %v1800 = vld [vmem:[%s2 + $0xf8] sm:$0xff]
      %v1801 = vld [vmem:[%s2 + $0x100] sm:$0xff]
      %v1802 = vld [vmem:[%s2 + $0x108] sm:$0xff]
      %v1803 = vld [vmem:[%s2 + $0x110] sm:$0xff]
      %v1804 = vld [vmem:[%s2 + $0x118] sm:$0xff]
      %v1805 = vld [vmem:[%s2 + $0x120] sm:$0xff]
      %v1806 = vld [vmem:[%s2 + $0x128] sm:$0xff]
      %v1807 = vld [vmem:[%s2 + $0x130] sm:$0xff]
      %v1808 = vld [vmem:[%s2 + $0x138] sm:$0xff]
      %v1809 = vld [vmem:[%s2 + $0x140] sm:$0xff]
      %v1810 = vld [vmem:[%s2 + $0x148] sm:$0xff]
      %v1811 = vld [vmem:[%s2 + $0x150] sm:$0xff]
      %v1812 = vld [vmem:[%s2 + $0x158] sm:$0xff]
      %v1813 = vld [vmem:[%s2 + $0x160] sm:$0xff]
      %v1814 = vld [vmem:[%s2 + $0x168] sm:$0xff]
      %v1815 = vld [vmem:[%s2 + $0x170] sm:$0xff]
      %v1816 = vld [vmem:[%s2 + $0x178] sm:$0xff]
      %v1817 = vld [vmem:[%s2 + $0x180] sm:$0xff]
      %v1818 = vld [vmem:[%s2 + $0x188] sm:$0xff]
      %v1819 = vld [vmem:[%s2 + $0x190] sm:$0xff]
      %v1820 = vld [vmem:[%s2 + $0x198] sm:$0xff]
      %v1821 = vld [vmem:[%s2 + $0x1a0] sm:$0xff]
      %v1822 = vld [vmem:[%s2 + $0x1a8] sm:$0xff]
      %v1823 = vld [vmem:[%s2 + $0x1b0] sm:$0xff]
      %v1824 = vld [vmem:[%s2 + $0x1b8] sm:$0xff]
      %v1825 = vld [vmem:[%s2 + $0x1c0] sm:$0xff]
      %v1826 = vld [vmem:[%s2 + $0x1c8] sm:$0xff]
      %v1827 = vld [vmem:[%s2 + $0x1d0] sm:$0xff]
      %v1828 = vld [vmem:[%s2 + $0x1d8] sm:$0xff]
      %v1829 = vld [vmem:[%s2 + $0x1e0] sm:$0xff]
      %v1830 = vld [vmem:[%s2 + $0x1e8] sm:$0xff]
      %v1831 = vld [vmem:[%s2 + $0x1f0] sm:$0xff]
      %v1832 = vld [vmem:[%s2 + $0x1f8] sm:$0xff]
      %1833 = vmatprep.subr.mxu0 %v1770
      %1834 = vmatpush1.msra.mxu0 %v1769
      %1835 = vmatprep.subr.mxu0 %v1774
      %1836 = vmatpush1.msra.mxu0 %v1773
      %1837 = vmatprep.subr.mxu0 %v1778
      %1838 = vmatpush1.msra.mxu0 %v1777
      %1839 = vmatprep.subr.mxu0 %v1782
      %1840 = vmatpush1.msra.mxu0 %v1781
      %1841 = vmatprep.subr.mxu0 %v1786
      %1842 = vmatpush1.msra.mxu0 %v1785
      %1843 = vmatprep.subr.mxu0 %v1790
      %1844 = vmatpush1.msra.mxu0 %v1789
      %1845 = vmatprep.subr.mxu0 %v1794
      %1846 = vmatpush1.msra.mxu0 %v1793
      %1847 = vmatprep.subr.mxu0 %v1798
      %1848 = vmatpush1.msra.mxu0 %v1797
      %1849 = vmatprep.subr.mxu0 %v1802
      %1850 = vmatpush1.msra.mxu0 %v1801
      %1851 = vmatprep.subr.mxu0 %v1806
      %1852 = vmatpush1.msra.mxu0 %v1805
      %1853 = vmatprep.subr.mxu0 %v1810
      %1854 = vmatpush1.msra.mxu0 %v1809
      %1855 = vmatprep.subr.mxu0 %v1814
      %1856 = vmatpush1.msra.mxu0 %v1813
      %1857 = vmatprep.subr.mxu0 %v1818
      %1858 = vmatpush1.msra.mxu0 %v1817
      %1859 = vmatprep.subr.mxu0 %v1822
      %1860 = vmatpush1.msra.mxu0 %v1821
      %1861 = vmatprep.subr.mxu0 %v1826
      %1862 = vmatpush1.msra.mxu0 %v1825
      %1863 = vmatprep.subr.mxu0 %v1830
      %1864 = vmatpush1.msra.mxu0 %v1829
      %1865 = vmatprep.subr.mxu0 0.0
      %1866 = vmatpush1.msra.mxu0 0.0
      %1867 = vmatprep.subr.mxu0 0.0
      %1868 = vmatpush1.msra.mxu0 0.0
      %1869 = vmatprep.subr.mxu0 0.0
      %1870 = vmatpush1.msra.mxu0 0.0
      %1871 = vmatprep.subr.mxu0 0.0
      %1872 = vmatpush1.msra.mxu0 0.0
      %1873 = vmatprep.subr.mxu0 0.0
      %1874 = vmatpush1.msra.mxu0 0.0
      %1875 = vmatprep.subr.mxu0 0.0
      %1876 = vmatpush1.msra.mxu0 0.0
      %1877 = vmatprep.subr.mxu0 0.0
      %1878 = vmatpush1.msra.mxu0 0.0
      %1879 = vmatprep.subr.mxu0 0.0
      %1880 = vmatpush1.msra.mxu0 0.0
      %1881 = vmatprep.subr.mxu0 0.0
      %1882 = vmatpush1.msra.mxu0 0.0
      %1883 = vmatprep.subr.mxu0 0.0
      %1884 = vmatpush1.msra.mxu0 0.0
      %1885 = vmatprep.subr.mxu0 0.0
      %1886 = vmatpush1.msra.mxu0 0.0
      %1887 = vmatprep.subr.mxu0 0.0
      %1888 = vmatpush1.msra.mxu0 0.0
      %1889 = vmatprep.subr.mxu0 0.0
      %1890 = vmatpush1.msra.mxu0 0.0
      %1891 = vmatprep.subr.mxu0 0.0
      %1892 = vmatpush1.msra.mxu0 0.0
      %1893 = vmatprep.subr.mxu0 0.0
      %1894 = vmatpush1.msra.mxu0 0.0
      %1895 = vmatprep.subr.mxu0 0.0
      %1896 = vmatpush1.msra.mxu0 0.0
      %1897 = vmatprep.mubr.f32.mxu0 0.0
      %1898 = vmatmul.mubr.f32.gmra.mrb[0].mxu0 %v1761
      %v1899 = vpop.f32.mrb[0].mxu0
      %v1900 = vadd.f32 0.0, %v1899
      %v1901 = vpop.f32.mrb[0].mxu0
      %v1902 = vadd.f32 0.0, %v1901
      %1903 = vdwg.mxu0
      %1904 = vmatprep.subr.mxu0 %v1772
      %1905 = vmatpush1.msra.mxu0 %v1771
      %1906 = vmatprep.subr.mxu0 %v1776
      %1907 = vmatpush1.msra.mxu0 %v1775
      %1908 = vmatprep.subr.mxu0 %v1780
      %1909 = vmatpush1.msra.mxu0 %v1779
      %1910 = vmatprep.subr.mxu0 %v1784
      %1911 = vmatpush1.msra.mxu0 %v1783
      %1912 = vmatprep.subr.mxu0 %v1788
      %1913 = vmatpush1.msra.mxu0 %v1787
      %1914 = vmatprep.subr.mxu0 %v1792
      %1915 = vmatpush1.msra.mxu0 %v1791
      %1916 = vmatprep.subr.mxu0 %v1796
      %1917 = vmatpush1.msra.mxu0 %v1795
      %1918 = vmatprep.subr.mxu0 %v1800
      %1919 = vmatpush1.msra.mxu0 %v1799
      %1920 = vmatprep.subr.mxu0 %v1804
      %1921 = vmatpush1.msra.mxu0 %v1803
      %1922 = vmatprep.subr.mxu0 %v1808
      %1923 = vmatpush1.msra.mxu0 %v1807
      %1924 = vmatprep.subr.mxu0 %v1812
      %1925 = vmatpush1.msra.mxu0 %v1811
      %1926 = vmatprep.subr.mxu0 %v1816
      %1927 = vmatpush1.msra.mxu0 %v1815
      %1928 = vmatprep.subr.mxu0 %v1820
      %1929 = vmatpush1.msra.mxu0 %v1819
      %1930 = vmatprep.subr.mxu0 %v1824
      %1931 = vmatpush1.msra.mxu0 %v1823
      %1932 = vmatprep.subr.mxu0 %v1828
      %1933 = vmatpush1.msra.mxu0 %v1827
      %1934 = vmatprep.subr.mxu0 %v1832
      %1935 = vmatpush1.msra.mxu0 %v1831
      %1936 = vmatprep.subr.mxu0 0.0
      %1937 = vmatpush1.msra.mxu0 0.0
      %1938 = vmatprep.subr.mxu0 0.0
      %1939 = vmatpush1.msra.mxu0 0.0
      %1940 = vmatprep.subr.mxu0 0.0
      %1941 = vmatpush1.msra.mxu0 0.0
      %1942 = vmatprep.subr.mxu0 0.0
      %1943 = vmatpush1.msra.mxu0 0.0
      %1944 = vmatprep.subr.mxu0 0.0
      %1945 = vmatpush1.msra.mxu0 0.0
      %1946 = vmatprep.subr.mxu0 0.0
      %1947 = vmatpush1.msra.mxu0 0.0
      %1948 = vmatprep.subr.mxu0 0.0
      %1949 = vmatpush1.msra.mxu0 0.0
      %1950 = vmatprep.subr.mxu0 0.0
      %1951 = vmatpush1.msra.mxu0 0.0
      %1952 = vmatprep.subr.mxu0 0.0
      %1953 = vmatpush1.msra.mxu0 0.0
      %1954 = vmatprep.subr.mxu0 0.0
      %1955 = vmatpush1.msra.mxu0 0.0
      %1956 = vmatprep.subr.mxu0 0.0
      %1957 = vmatpush1.msra.mxu0 0.0
      %1958 = vmatprep.subr.mxu0 0.0
      %1959 = vmatpush1.msra.mxu0 0.0
      %1960 = vmatprep.subr.mxu0 0.0
      %1961 = vmatpush1.msra.mxu0 0.0
      %1962 = vmatprep.subr.mxu0 0.0
      %1963 = vmatpush1.msra.mxu0 0.0
      %1964 = vmatprep.subr.mxu0 0.0
      %1965 = vmatpush1.msra.mxu0 0.0
      %1966 = vmatprep.subr.mxu0 0.0
      %1967 = vmatpush1.msra.mxu0 0.0
      %1968 = vmatprep.mubr.f32.mxu0 0.0
      %1969 = vmatmul.mubr.f32.gmra.mrb[0].mxu0 %v1761
      %v1970 = vpop.f32.mrb[0].mxu0
      %v1971 = vadd.f32 0.0, %v1970
      %v1972 = vpop.f32.mrb[0].mxu0
      %v1973 = vadd.f32 0.0, %v1972
      %1974 = vdwg.mxu0
      %v1975 = vadd.f32 %v1765, %v1900
      %v1976 = vadd.f32 %v1766, %v1902
      %v1977 = vadd.f32 %v1767, %v1971
      %v1978 = vadd.f32 %v1768, %v1973
      %v1979 = vxor.u32 %v1975, 2147483648
      %v1980 = vmul.f32 %v1979, 1.442695
      %v1981 = vpow.pop %v1980
      %v1982 = vadd.f32 %v1981, 1.0
      %v1983 = vrcp.pop %v1982
      %v1984 = vmul.f32 1.0, %v1983
      %v1985 = vxor.u32 %v1976, 2147483648
      %v1986 = vmul.f32 %v1985, 1.442695
      %v1987 = vpow.pop %v1986
      %v1988 = vadd.f32 %v1987, 1.0
      %v1989 = vrcp.pop %v1988
      %v1990 = vmul.f32 1.0, %v1989
      %v1991 = vtanh.pop %v1977
      %v1992 = vxor.u32 %v1978, 2147483648
      %v1993 = vmul.f32 %v1992, 1.442695
      %v1994 = vpow.pop %v1993
      %v1995 = vadd.f32 %v1994, 1.0
      %v1996 = vrcp.pop %v1995
      %v1997 = vmul.f32 1.0, %v1996
      %v1998 = vmul.f32 %v1990, %v1759
      %v1999 = vmul.f32 %v1984, %v1991
      %v2000 = vadd.f32 %v1998, %v1999
      %v2001 = vtanh.pop %v2000
      %v2002 = vmul.f32 %v1997, %v2001
      %s2003 = scalar_lea.vmem %s199, 40
      %2004 = vst [vmem:[%s2003] sm:$0xff] %v2002
      %s2005 = scalar_lea.vmem [#allocation2], 192
      %v2006 = vld [vmem:[%s2005] sm:$0xff]
      %v2007 = vld [vmem:[%s2005 + $0x8] sm:$0xff]
      %v2008 = vld [vmem:[%s2005 + $0x10] sm:$0xff]
      %v2009 = vld [vmem:[%s2005 + $0x18] sm:$0xff]
      %v2010 = vld [vmem:[%s2] sm:$0xff]
      %v2011 = vld [vmem:[%s2 + $0x8] sm:$0xff]
      %v2012 = vld [vmem:[%s2 + $0x10] sm:$0xff]
      %v2013 = vld [vmem:[%s2 + $0x18] sm:$0xff]
      %v2014 = vld [vmem:[%s2 + $0x20] sm:$0xff]
      %v2015 = vld [vmem:[%s2 + $0x28] sm:$0xff]
      %v2016 = vld [vmem:[%s2 + $0x30] sm:$0xff]
      %v2017 = vld [vmem:[%s2 + $0x38] sm:$0xff]
      %v2018 = vld [vmem:[%s2 + $0x40] sm:$0xff]
      %v2019 = vld [vmem:[%s2 + $0x48] sm:$0xff]
      %v2020 = vld [vmem:[%s2 + $0x50] sm:$0xff]
      %v2021 = vld [vmem:[%s2 + $0x58] sm:$0xff]
      %v2022 = vld [vmem:[%s2 + $0x60] sm:$0xff]
      %v2023 = vld [vmem:[%s2 + $0x68] sm:$0xff]
      %v2024 = vld [vmem:[%s2 + $0x70] sm:$0xff]
      %v2025 = vld [vmem:[%s2 + $0x78] sm:$0xff]
      %v2026 = vld [vmem:[%s2 + $0x80] sm:$0xff]
      %v2027 = vld [vmem:[%s2 + $0x88] sm:$0xff]
      %v2028 = vld [vmem:[%s2 + $0x90] sm:$0xff]
      %v2029 = vld [vmem:[%s2 + $0x98] sm:$0xff]
      %v2030 = vld [vmem:[%s2 + $0xa0] sm:$0xff]
      %v2031 = vld [vmem:[%s2 + $0xa8] sm:$0xff]
      %v2032 = vld [vmem:[%s2 + $0xb0] sm:$0xff]
      %v2033 = vld [vmem:[%s2 + $0xb8] sm:$0xff]
      %v2034 = vld [vmem:[%s2 + $0xc0] sm:$0xff]
      %v2035 = vld [vmem:[%s2 + $0xc8] sm:$0xff]
      %v2036 = vld [vmem:[%s2 + $0xd0] sm:$0xff]
      %v2037 = vld [vmem:[%s2 + $0xd8] sm:$0xff]
      %v2038 = vld [vmem:[%s2 + $0xe0] sm:$0xff]
      %v2039 = vld [vmem:[%s2 + $0xe8] sm:$0xff]
      %v2040 = vld [vmem:[%s2 + $0xf0] sm:$0xff]
      %v2041 = vld [vmem:[%s2 + $0xf8] sm:$0xff]
      %v2042 = vld [vmem:[%s2 + $0x100] sm:$0xff]
      %v2043 = vld [vmem:[%s2 + $0x108] sm:$0xff]
      %v2044 = vld [vmem:[%s2 + $0x110] sm:$0xff]
      %v2045 = vld [vmem:[%s2 + $0x118] sm:$0xff]
      %v2046 = vld [vmem:[%s2 + $0x120] sm:$0xff]
      %v2047 = vld [vmem:[%s2 + $0x128] sm:$0xff]
      %v2048 = vld [vmem:[%s2 + $0x130] sm:$0xff]
      %v2049 = vld [vmem:[%s2 + $0x138] sm:$0xff]
      %v2050 = vld [vmem:[%s2 + $0x140] sm:$0xff]
      %v2051 = vld [vmem:[%s2 + $0x148] sm:$0xff]
      %v2052 = vld [vmem:[%s2 + $0x150] sm:$0xff]
      %v2053 = vld [vmem:[%s2 + $0x158] sm:$0xff]
      %v2054 = vld [vmem:[%s2 + $0x160] sm:$0xff]
      %v2055 = vld [vmem:[%s2 + $0x168] sm:$0xff]
      %v2056 = vld [vmem:[%s2 + $0x170] sm:$0xff]
      %v2057 = vld [vmem:[%s2 + $0x178] sm:$0xff]
      %v2058 = vld [vmem:[%s2 + $0x180] sm:$0xff]
      %v2059 = vld [vmem:[%s2 + $0x188] sm:$0xff]
      %v2060 = vld [vmem:[%s2 + $0x190] sm:$0xff]
      %v2061 = vld [vmem:[%s2 + $0x198] sm:$0xff]
      %v2062 = vld [vmem:[%s2 + $0x1a0] sm:$0xff]
      %v2063 = vld [vmem:[%s2 + $0x1a8] sm:$0xff]
      %v2064 = vld [vmem:[%s2 + $0x1b0] sm:$0xff]
      %v2065 = vld [vmem:[%s2 + $0x1b8] sm:$0xff]
      %v2066 = vld [vmem:[%s2 + $0x1c0] sm:$0xff]
      %v2067 = vld [vmem:[%s2 + $0x1c8] sm:$0xff]
      %v2068 = vld [vmem:[%s2 + $0x1d0] sm:$0xff]
      %v2069 = vld [vmem:[%s2 + $0x1d8] sm:$0xff]
      %v2070 = vld [vmem:[%s2 + $0x1e0] sm:$0xff]
      %v2071 = vld [vmem:[%s2 + $0x1e8] sm:$0xff]
      %v2072 = vld [vmem:[%s2 + $0x1f0] sm:$0xff]
      %v2073 = vld [vmem:[%s2 + $0x1f8] sm:$0xff]
      %2074 = vmatprep.subr.mxu0 %v2011
      %2075 = vmatpush1.msra.mxu0 %v2010
      %2076 = vmatprep.subr.mxu0 %v2015
      %2077 = vmatpush1.msra.mxu0 %v2014
      %2078 = vmatprep.subr.mxu0 %v2019
      %2079 = vmatpush1.msra.mxu0 %v2018
      %2080 = vmatprep.subr.mxu0 %v2023
      %2081 = vmatpush1.msra.mxu0 %v2022
      %2082 = vmatprep.subr.mxu0 %v2027
      %2083 = vmatpush1.msra.mxu0 %v2026
      %2084 = vmatprep.subr.mxu0 %v2031
      %2085 = vmatpush1.msra.mxu0 %v2030
      %2086 = vmatprep.subr.mxu0 %v2035
      %2087 = vmatpush1.msra.mxu0 %v2034
      %2088 = vmatprep.subr.mxu0 %v2039
      %2089 = vmatpush1.msra.mxu0 %v2038
      %2090 = vmatprep.subr.mxu0 %v2043
      %2091 = vmatpush1.msra.mxu0 %v2042
      %2092 = vmatprep.subr.mxu0 %v2047
      %2093 = vmatpush1.msra.mxu0 %v2046
      %2094 = vmatprep.subr.mxu0 %v2051
      %2095 = vmatpush1.msra.mxu0 %v2050
      %2096 = vmatprep.subr.mxu0 %v2055
      %2097 = vmatpush1.msra.mxu0 %v2054
      %2098 = vmatprep.subr.mxu0 %v2059
      %2099 = vmatpush1.msra.mxu0 %v2058
      %2100 = vmatprep.subr.mxu0 %v2063
      %2101 = vmatpush1.msra.mxu0 %v2062
      %2102 = vmatprep.subr.mxu0 %v2067
      %2103 = vmatpush1.msra.mxu0 %v2066
      %2104 = vmatprep.subr.mxu0 %v2071
      %2105 = vmatpush1.msra.mxu0 %v2070
      %2106 = vmatprep.subr.mxu0 0.0
      %2107 = vmatpush1.msra.mxu0 0.0
      %2108 = vmatprep.subr.mxu0 0.0
      %2109 = vmatpush1.msra.mxu0 0.0
      %2110 = vmatprep.subr.mxu0 0.0
      %2111 = vmatpush1.msra.mxu0 0.0
      %2112 = vmatprep.subr.mxu0 0.0
      %2113 = vmatpush1.msra.mxu0 0.0
      %2114 = vmatprep.subr.mxu0 0.0
      %2115 = vmatpush1.msra.mxu0 0.0
      %2116 = vmatprep.subr.mxu0 0.0
      %2117 = vmatpush1.msra.mxu0 0.0
      %2118 = vmatprep.subr.mxu0 0.0
      %2119 = vmatpush1.msra.mxu0 0.0
      %2120 = vmatprep.subr.mxu0 0.0
      %2121 = vmatpush1.msra.mxu0 0.0
      %2122 = vmatprep.subr.mxu0 0.0
      %2123 = vmatpush1.msra.mxu0 0.0
      %2124 = vmatprep.subr.mxu0 0.0
      %2125 = vmatpush1.msra.mxu0 0.0
      %2126 = vmatprep.subr.mxu0 0.0
      %2127 = vmatpush1.msra.mxu0 0.0
      %2128 = vmatprep.subr.mxu0 0.0
      %2129 = vmatpush1.msra.mxu0 0.0
      %2130 = vmatprep.subr.mxu0 0.0
      %2131 = vmatpush1.msra.mxu0 0.0
      %2132 = vmatprep.subr.mxu0 0.0
      %2133 = vmatpush1.msra.mxu0 0.0
      %2134 = vmatprep.subr.mxu0 0.0
      %2135 = vmatpush1.msra.mxu0 0.0
      %2136 = vmatprep.subr.mxu0 0.0
      %2137 = vmatpush1.msra.mxu0 0.0
      %2138 = vmatprep.mubr.f32.mxu0 0.0
      %2139 = vmatmul.mubr.f32.gmra.mrb[0].mxu0 %v2002
      %v2140 = vpop.f32.mrb[0].mxu0
      %v2141 = vadd.f32 0.0, %v2140
      %v2142 = vpop.f32.mrb[0].mxu0
      %v2143 = vadd.f32 0.0, %v2142
      %2144 = vdwg.mxu0
      %2145 = vmatprep.subr.mxu0 %v2013
      %2146 = vmatpush1.msra.mxu0 %v2012
      %2147 = vmatprep.subr.mxu0 %v2017
      %2148 = vmatpush1.msra.mxu0 %v2016
      %2149 = vmatprep.subr.mxu0 %v2021
      %2150 = vmatpush1.msra.mxu0 %v2020
      %2151 = vmatprep.subr.mxu0 %v2025
      %2152 = vmatpush1.msra.mxu0 %v2024
      %2153 = vmatprep.subr.mxu0 %v2029
      %2154 = vmatpush1.msra.mxu0 %v2028
      %2155 = vmatprep.subr.mxu0 %v2033
      %2156 = vmatpush1.msra.mxu0 %v2032
      %2157 = vmatprep.subr.mxu0 %v2037
      %2158 = vmatpush1.msra.mxu0 %v2036
      %2159 = vmatprep.subr.mxu0 %v2041
      %2160 = vmatpush1.msra.mxu0 %v2040
      %2161 = vmatprep.subr.mxu0 %v2045
      %2162 = vmatpush1.msra.mxu0 %v2044
      %2163 = vmatprep.subr.mxu0 %v2049
      %2164 = vmatpush1.msra.mxu0 %v2048
      %2165 = vmatprep.subr.mxu0 %v2053
      %2166 = vmatpush1.msra.mxu0 %v2052
      %2167 = vmatprep.subr.mxu0 %v2057
      %2168 = vmatpush1.msra.mxu0 %v2056
      %2169 = vmatprep.subr.mxu0 %v2061
      %2170 = vmatpush1.msra.mxu0 %v2060
      %2171 = vmatprep.subr.mxu0 %v2065
      %2172 = vmatpush1.msra.mxu0 %v2064
      %2173 = vmatprep.subr.mxu0 %v2069
      %2174 = vmatpush1.msra.mxu0 %v2068
      %2175 = vmatprep.subr.mxu0 %v2073
      %2176 = vmatpush1.msra.mxu0 %v2072
      %2177 = vmatprep.subr.mxu0 0.0
      %2178 = vmatpush1.msra.mxu0 0.0
      %2179 = vmatprep.subr.mxu0 0.0
      %2180 = vmatpush1.msra.mxu0 0.0
      %2181 = vmatprep.subr.mxu0 0.0
      %2182 = vmatpush1.msra.mxu0 0.0
      %2183 = vmatprep.subr.mxu0 0.0
      %2184 = vmatpush1.msra.mxu0 0.0
      %2185 = vmatprep.subr.mxu0 0.0
      %2186 = vmatpush1.msra.mxu0 0.0
      %2187 = vmatprep.subr.mxu0 0.0
      %2188 = vmatpush1.msra.mxu0 0.0
      %2189 = vmatprep.subr.mxu0 0.0
      %2190 = vmatpush1.msra.mxu0 0.0
      %2191 = vmatprep.subr.mxu0 0.0
      %2192 = vmatpush1.msra.mxu0 0.0
      %2193 = vmatprep.subr.mxu0 0.0
      %2194 = vmatpush1.msra.mxu0 0.0
      %2195 = vmatprep.subr.mxu0 0.0
      %2196 = vmatpush1.msra.mxu0 0.0
      %2197 = vmatprep.subr.mxu0 0.0
      %2198 = vmatpush1.msra.mxu0 0.0
      %2199 = vmatprep.subr.mxu0 0.0
      %2200 = vmatpush1.msra.mxu0 0.0
      %2201 = vmatprep.subr.mxu0 0.0
      %2202 = vmatpush1.msra.mxu0 0.0
      %2203 = vmatprep.subr.mxu0 0.0
      %2204 = vmatpush1.msra.mxu0 0.0
      %2205 = vmatprep.subr.mxu0 0.0
      %2206 = vmatpush1.msra.mxu0 0.0
      %2207 = vmatprep.subr.mxu0 0.0
      %2208 = vmatpush1.msra.mxu0 0.0
      %2209 = vmatprep.mubr.f32.mxu0 0.0
      %2210 = vmatmul.mubr.f32.gmra.mrb[0].mxu0 %v2002
      %v2211 = vpop.f32.mrb[0].mxu0
      %v2212 = vadd.f32 0.0, %v2211
      %v2213 = vpop.f32.mrb[0].mxu0
      %v2214 = vadd.f32 0.0, %v2213
      %2215 = vdwg.mxu0
      %v2216 = vadd.f32 %v2006, %v2141
      %v2217 = vadd.f32 %v2007, %v2143
      %v2218 = vadd.f32 %v2008, %v2212
      %v2219 = vadd.f32 %v2009, %v2214
      %v2220 = vxor.u32 %v2216, 2147483648
      %v2221 = vmul.f32 %v2220, 1.442695
      %v2222 = vpow.pop %v2221
      %v2223 = vadd.f32 %v2222, 1.0
      %v2224 = vrcp.pop %v2223
      %v2225 = vmul.f32 1.0, %v2224
      %v2226 = vxor.u32 %v2217, 2147483648
      %v2227 = vmul.f32 %v2226, 1.442695
      %v2228 = vpow.pop %v2227
      %v2229 = vadd.f32 %v2228, 1.0
      %v2230 = vrcp.pop %v2229
      %v2231 = vmul.f32 1.0, %v2230
      %v2232 = vtanh.pop %v2218
      %v2233 = vxor.u32 %v2219, 2147483648
      %v2234 = vmul.f32 %v2233, 1.442695
      %v2235 = vpow.pop %v2234
      %v2236 = vadd.f32 %v2235, 1.0
      %v2237 = vrcp.pop %v2236
      %v2238 = vmul.f32 1.0, %v2237
      %v2239 = vmul.f32 %v2231, %v2000
      %v2240 = vmul.f32 %v2225, %v2232
      %v2241 = vadd.f32 %v2239, %v2240
      %v2242 = vtanh.pop %v2241
      %v2243 = vmul.f32 %v2238, %v2242
      %s2244 = scalar_lea.vmem %s199, 48
      %2245 = vst [vmem:[%s2244] sm:$0xff] %v2243
      %s2246 = scalar_lea.vmem [#allocation2], 224
      %v2247 = vld [vmem:[%s2246] sm:$0xff]
      %v2248 = vld [vmem:[%s2246 + $0x8] sm:$0xff]
      %v2249 = vld [vmem:[%s2246 + $0x10] sm:$0xff]
      %v2250 = vld [vmem:[%s2246 + $0x18] sm:$0xff]
      %v2251 = vld [vmem:[%s2] sm:$0xff]
      %v2252 = vld [vmem:[%s2 + $0x8] sm:$0xff]
      %v2253 = vld [vmem:[%s2 + $0x10] sm:$0xff]
      %v2254 = vld [vmem:[%s2 + $0x18] sm:$0xff]
      %v2255 = vld [vmem:[%s2 + $0x20] sm:$0xff]
      %v2256 = vld [vmem:[%s2 + $0x28] sm:$0xff]
      %v2257 = vld [vmem:[%s2 + $0x30] sm:$0xff]
      %v2258 = vld [vmem:[%s2 + $0x38] sm:$0xff]
      %v2259 = vld [vmem:[%s2 + $0x40] sm:$0xff]
      %v2260 = vld [vmem:[%s2 + $0x48] sm:$0xff]
      %v2261 = vld [vmem:[%s2 + $0x50] sm:$0xff]
      %v2262 = vld [vmem:[%s2 + $0x58] sm:$0xff]
      %v2263 = vld [vmem:[%s2 + $0x60] sm:$0xff]
      %v2264 = vld [vmem:[%s2 + $0x68] sm:$0xff]
      %v2265 = vld [vmem:[%s2 + $0x70] sm:$0xff]
      %v2266 = vld [vmem:[%s2 + $0x78] sm:$0xff]
      %v2267 = vld [vmem:[%s2 + $0x80] sm:$0xff]
      %v2268 = vld [vmem:[%s2 + $0x88] sm:$0xff]
      %v2269 = vld [vmem:[%s2 + $0x90] sm:$0xff]
      %v2270 = vld [vmem:[%s2 + $0x98] sm:$0xff]
      %v2271 = vld [vmem:[%s2 + $0xa0] sm:$0xff]
      %v2272 = vld [vmem:[%s2 + $0xa8] sm:$0xff]
      %v2273 = vld [vmem:[%s2 + $0xb0] sm:$0xff]
      %v2274 = vld [vmem:[%s2 + $0xb8] sm:$0xff]
      %v2275 = vld [vmem:[%s2 + $0xc0] sm:$0xff]
      %v2276 = vld [vmem:[%s2 + $0xc8] sm:$0xff]
      %v2277 = vld [vmem:[%s2 + $0xd0] sm:$0xff]
      %v2278 = vld [vmem:[%s2 + $0xd8] sm:$0xff]
      %v2279 = vld [vmem:[%s2 + $0xe0] sm:$0xff]
      %v2280 = vld [vmem:[%s2 + $0xe8] sm:$0xff]
      %v2281 = vld [vmem:[%s2 + $0xf0] sm:$0xff]
      %v2282 = vld [vmem:[%s2 + $0xf8] sm:$0xff]
      %v2283 = vld [vmem:[%s2 + $0x100] sm:$0xff]
      %v2284 = vld [vmem:[%s2 + $0x108] sm:$0xff]
      %v2285 = vld [vmem:[%s2 + $0x110] sm:$0xff]
      %v2286 = vld [vmem:[%s2 + $0x118] sm:$0xff]
      %v2287 = vld [vmem:[%s2 + $0x120] sm:$0xff]
      %v2288 = vld [vmem:[%s2 + $0x128] sm:$0xff]
      %v2289 = vld [vmem:[%s2 + $0x130] sm:$0xff]
      %v2290 = vld [vmem:[%s2 + $0x138] sm:$0xff]
      %v2291 = vld [vmem:[%s2 + $0x140] sm:$0xff]
      %v2292 = vld [vmem:[%s2 + $0x148] sm:$0xff]
      %v2293 = vld [vmem:[%s2 + $0x150] sm:$0xff]
      %v2294 = vld [vmem:[%s2 + $0x158] sm:$0xff]
      %v2295 = vld [vmem:[%s2 + $0x160] sm:$0xff]
      %v2296 = vld [vmem:[%s2 + $0x168] sm:$0xff]
      %v2297 = vld [vmem:[%s2 + $0x170] sm:$0xff]
      %v2298 = vld [vmem:[%s2 + $0x178] sm:$0xff]
      %v2299 = vld [vmem:[%s2 + $0x180] sm:$0xff]
      %v2300 = vld [vmem:[%s2 + $0x188] sm:$0xff]
      %v2301 = vld [vmem:[%s2 + $0x190] sm:$0xff]
      %v2302 = vld [vmem:[%s2 + $0x198] sm:$0xff]
      %v2303 = vld [vmem:[%s2 + $0x1a0] sm:$0xff]
      %v2304 = vld [vmem:[%s2 + $0x1a8] sm:$0xff]
      %v2305 = vld [vmem:[%s2 + $0x1b0] sm:$0xff]
      %v2306 = vld [vmem:[%s2 + $0x1b8] sm:$0xff]
      %v2307 = vld [vmem:[%s2 + $0x1c0] sm:$0xff]
      %v2308 = vld [vmem:[%s2 + $0x1c8] sm:$0xff]
      %v2309 = vld [vmem:[%s2 + $0x1d0] sm:$0xff]
      %v2310 = vld [vmem:[%s2 + $0x1d8] sm:$0xff]
      %v2311 = vld [vmem:[%s2 + $0x1e0] sm:$0xff]
      %v2312 = vld [vmem:[%s2 + $0x1e8] sm:$0xff]
      %v2313 = vld [vmem:[%s2 + $0x1f0] sm:$0xff]
      %v2314 = vld [vmem:[%s2 + $0x1f8] sm:$0xff]
      %2315 = vmatprep.subr.mxu0 %v2252
      %2316 = vmatpush1.msra.mxu0 %v2251
      %2317 = vmatprep.subr.mxu0 %v2256
      %2318 = vmatpush1.msra.mxu0 %v2255
      %2319 = vmatprep.subr.mxu0 %v2260
      %2320 = vmatpush1.msra.mxu0 %v2259
      %2321 = vmatprep.subr.mxu0 %v2264
      %2322 = vmatpush1.msra.mxu0 %v2263
      %2323 = vmatprep.subr.mxu0 %v2268
      %2324 = vmatpush1.msra.mxu0 %v2267
      %2325 = vmatprep.subr.mxu0 %v2272
      %2326 = vmatpush1.msra.mxu0 %v2271
      %2327 = vmatprep.subr.mxu0 %v2276
      %2328 = vmatpush1.msra.mxu0 %v2275
      %2329 = vmatprep.subr.mxu0 %v2280
      %2330 = vmatpush1.msra.mxu0 %v2279
      %2331 = vmatprep.subr.mxu0 %v2284
      %2332 = vmatpush1.msra.mxu0 %v2283
      %2333 = vmatprep.subr.mxu0 %v2288
      %2334 = vmatpush1.msra.mxu0 %v2287
      %2335 = vmatprep.subr.mxu0 %v2292
      %2336 = vmatpush1.msra.mxu0 %v2291
      %2337 = vmatprep.subr.mxu0 %v2296
      %2338 = vmatpush1.msra.mxu0 %v2295
      %2339 = vmatprep.subr.mxu0 %v2300
      %2340 = vmatpush1.msra.mxu0 %v2299
      %2341 = vmatprep.subr.mxu0 %v2304
      %2342 = vmatpush1.msra.mxu0 %v2303
      %2343 = vmatprep.subr.mxu0 %v2308
      %2344 = vmatpush1.msra.mxu0 %v2307
      %2345 = vmatprep.subr.mxu0 %v2312
      %2346 = vmatpush1.msra.mxu0 %v2311
      %2347 = vmatprep.subr.mxu0 0.0
      %2348 = vmatpush1.msra.mxu0 0.0
      %2349 = vmatprep.subr.mxu0 0.0
      %2350 = vmatpush1.msra.mxu0 0.0
      %2351 = vmatprep.subr.mxu0 0.0
      %2352 = vmatpush1.msra.mxu0 0.0
      %2353 = vmatprep.subr.mxu0 0.0
      %2354 = vmatpush1.msra.mxu0 0.0
      %2355 = vmatprep.subr.mxu0 0.0
      %2356 = vmatpush1.msra.mxu0 0.0
      %2357 = vmatprep.subr.mxu0 0.0
      %2358 = vmatpush1.msra.mxu0 0.0
      %2359 = vmatprep.subr.mxu0 0.0
      %2360 = vmatpush1.msra.mxu0 0.0
      %2361 = vmatprep.subr.mxu0 0.0
      %2362 = vmatpush1.msra.mxu0 0.0
      %2363 = vmatprep.subr.mxu0 0.0
      %2364 = vmatpush1.msra.mxu0 0.0
      %2365 = vmatprep.subr.mxu0 0.0
      %2366 = vmatpush1.msra.mxu0 0.0
      %2367 = vmatprep.subr.mxu0 0.0
      %2368 = vmatpush1.msra.mxu0 0.0
      %2369 = vmatprep.subr.mxu0 0.0
      %2370 = vmatpush1.msra.mxu0 0.0
      %2371 = vmatprep.subr.mxu0 0.0
      %2372 = vmatpush1.msra.mxu0 0.0
      %2373 = vmatprep.subr.mxu0 0.0
      %2374 = vmatpush1.msra.mxu0 0.0
      %2375 = vmatprep.subr.mxu0 0.0
      %2376 = vmatpush1.msra.mxu0 0.0
      %2377 = vmatprep.subr.mxu0 0.0
      %2378 = vmatpush1.msra.mxu0 0.0
      %2379 = vmatprep.mubr.f32.mxu0 0.0
      %2380 = vmatmul.mubr.f32.gmra.mrb[0].mxu0 %v2243
      %v2381 = vpop.f32.mrb[0].mxu0
      %v2382 = vadd.f32 0.0, %v2381
      %v2383 = vpop.f32.mrb[0].mxu0
      %v2384 = vadd.f32 0.0, %v2383
      %2385 = vdwg.mxu0
      %2386 = vmatprep.subr.mxu0 %v2254
      %2387 = vmatpush1.msra.mxu0 %v2253
      %2388 = vmatprep.subr.mxu0 %v2258
      %2389 = vmatpush1.msra.mxu0 %v2257
      %2390 = vmatprep.subr.mxu0 %v2262
      %2391 = vmatpush1.msra.mxu0 %v2261
      %2392 = vmatprep.subr.mxu0 %v2266
      %2393 = vmatpush1.msra.mxu0 %v2265
      %2394 = vmatprep.subr.mxu0 %v2270
      %2395 = vmatpush1.msra.mxu0 %v2269
      %2396 = vmatprep.subr.mxu0 %v2274
      %2397 = vmatpush1.msra.mxu0 %v2273
      %2398 = vmatprep.subr.mxu0 %v2278
      %2399 = vmatpush1.msra.mxu0 %v2277
      %2400 = vmatprep.subr.mxu0 %v2282
      %2401 = vmatpush1.msra.mxu0 %v2281
      %2402 = vmatprep.subr.mxu0 %v2286
      %2403 = vmatpush1.msra.mxu0 %v2285
      %2404 = vmatprep.subr.mxu0 %v2290
      %2405 = vmatpush1.msra.mxu0 %v2289
      %2406 = vmatprep.subr.mxu0 %v2294
      %2407 = vmatpush1.msra.mxu0 %v2293
      %2408 = vmatprep.subr.mxu0 %v2298
      %2409 = vmatpush1.msra.mxu0 %v2297
      %2410 = vmatprep.subr.mxu0 %v2302
      %2411 = vmatpush1.msra.mxu0 %v2301
      %2412 = vmatprep.subr.mxu0 %v2306
      %2413 = vmatpush1.msra.mxu0 %v2305
      %2414 = vmatprep.subr.mxu0 %v2310
      %2415 = vmatpush1.msra.mxu0 %v2309
      %2416 = vmatprep.subr.mxu0 %v2314
      %2417 = vmatpush1.msra.mxu0 %v2313
      %2418 = vmatprep.subr.mxu0 0.0
      %2419 = vmatpush1.msra.mxu0 0.0
      %2420 = vmatprep.subr.mxu0 0.0
      %2421 = vmatpush1.msra.mxu0 0.0
      %2422 = vmatprep.subr.mxu0 0.0
      %2423 = vmatpush1.msra.mxu0 0.0
      %2424 = vmatprep.subr.mxu0 0.0
      %2425 = vmatpush1.msra.mxu0 0.0
      %2426 = vmatprep.subr.mxu0 0.0
      %2427 = vmatpush1.msra.mxu0 0.0
      %2428 = vmatprep.subr.mxu0 0.0
      %2429 = vmatpush1.msra.mxu0 0.0
      %2430 = vmatprep.subr.mxu0 0.0
      %2431 = vmatpush1.msra.mxu0 0.0
      %2432 = vmatprep.subr.mxu0 0.0
      %2433 = vmatpush1.msra.mxu0 0.0
      %2434 = vmatprep.subr.mxu0 0.0
      %2435 = vmatpush1.msra.mxu0 0.0
      %2436 = vmatprep.subr.mxu0 0.0
      %2437 = vmatpush1.msra.mxu0 0.0
      %2438 = vmatprep.subr.mxu0 0.0
      %2439 = vmatpush1.msra.mxu0 0.0
      %2440 = vmatprep.subr.mxu0 0.0
      %2441 = vmatpush1.msra.mxu0 0.0
      %2442 = vmatprep.subr.mxu0 0.0
      %2443 = vmatpush1.msra.mxu0 0.0
      %2444 = vmatprep.subr.mxu0 0.0
      %2445 = vmatpush1.msra.mxu0 0.0
      %2446 = vmatprep.subr.mxu0 0.0
      %2447 = vmatpush1.msra.mxu0 0.0
      %2448 = vmatprep.subr.mxu0 0.0
      %2449 = vmatpush1.msra.mxu0 0.0
      %2450 = vmatprep.mubr.f32.mxu0 0.0
      %2451 = vmatmul.mubr.f32.gmra.mrb[0].mxu0 %v2243
      %v2452 = vpop.f32.mrb[0].mxu0
      %v2453 = vadd.f32 0.0, %v2452
      %v2454 = vpop.f32.mrb[0].mxu0
      %v2455 = vadd.f32 0.0, %v2454
      %2456 = vdwg.mxu0
      %v2457 = vadd.f32 %v2247, %v2382
      %v2458 = vadd.f32 %v2248, %v2384
      %v2459 = vadd.f32 %v2249, %v2453
      %v2460 = vadd.f32 %v2250, %v2455
      %v2461 = vxor.u32 %v2457, 2147483648
      %v2462 = vmul.f32 %v2461, 1.442695
      %v2463 = vpow.pop %v2462
      %v2464 = vadd.f32 %v2463, 1.0
      %v2465 = vrcp.pop %v2464
      %v2466 = vmul.f32 1.0, %v2465
      %v2467 = vxor.u32 %v2458, 2147483648
      %v2468 = vmul.f32 %v2467, 1.442695
      %v2469 = vpow.pop %v2468
      %v2470 = vadd.f32 %v2469, 1.0
      %v2471 = vrcp.pop %v2470
      %v2472 = vmul.f32 1.0, %v2471
      %v2473 = vtanh.pop %v2459
      %v2474 = vxor.u32 %v2460, 2147483648
      %v2475 = vmul.f32 %v2474, 1.442695
      %v2476 = vpow.pop %v2475
      %v2477 = vadd.f32 %v2476, 1.0
      %v2478 = vrcp.pop %v2477
      %v2479 = vmul.f32 1.0, %v2478
      %v2480 = vmul.f32 %v2472, %v2241
      %v2481 = vmul.f32 %v2466, %v2473
      %v2482 = vadd.f32 %v2480, %v2481
      %v2483 = vtanh.pop %v2482
      %v2484 = vmul.f32 %v2479, %v2483
      %s2485 = scalar_lea.vmem %s199, 56
      %2486 = vst [vmem:[%s2485] sm:$0xff] %v2484
      %2487 = vst [vmem:[#allocation3] sm:$0xff] %v2484
      %2488 = vst [vmem:[#allocation4] sm:$0xff] %v2482
      %s2489 = smul.u32 8, %s15
      %p2490 = scmp.lt.s32.totalorder %s2489, 15
      %s2491 = scalar_select %p2490, %s2489, 15
      %s2492 = smul.addr %s2491, 8
      %s2493 = scalar_lea.vmem %s4, %s2492
      // Predicated region
      $region41: #{forward.13} parent=35 // pred_check
        %p2494 = pneg %p122
      $region42: #{forward.13} parent=35 // pred_check_branch
        %2496 = sbr.rel (%p2494) target = $region44
      $region43: #{forward.13} parent=35 // pred_region
        %s2497 = smul.u32 8, %s15
      $region44: #{forward.13} parent=35 // pred_fallthru
        _
    $region36: #{forward.13} parent=5 // pred_fallthru
      _
    %p2498 = scmp.le.s32.totalorder 2, %s10
    // Predicated region
    $region45: #{forward.13} parent=5 // pred_check
      %p2499 = pneg %p2498
    $region46: #{forward.13} parent=5 // pred_check_branch
      %2501 = sbr.rel (%p2499) target = $region48
    $region47: #{forward.13} parent=5 // pred_region
      %s2502 = ssub.s32 %s10, 2
      // Predicated region
      $region49: #{forward.13} parent=47 // pred_check
        %p2503 = pneg %p128
      $region50: #{forward.13} parent=47 // pred_check_branch
        %2505 = sbr.rel (%p2503) target = $region52
      $region51: #{forward.13} parent=47 // pred_region
        %s2506 = smul.u32 8, %s16
        %p2507 = scmp.lt.s32.totalorder %s2506, 15
        %s2508 = scalar_select %p2507, %s2506, 15
        %s2509 = smul.addr %s2508, 8
        %s2510 = scalar_lea.vmem %s4, %s2509
      $region52: #{forward.13} parent=47 // pred_fallthru
        _
    $region48: #{forward.13} parent=5 // pred_fallthru
      _
  $region6: #{forward.13} parent=0 // loop_footer
    %s14 = sadd.s32 1, %s10
  $region7: #{forward.13} parent=0 // loop_footer_branch
    %9 = sbr.rel target = $region3
  $region8: #{forward.13} parent=0 // loop_exit
    _

</llo_original>
